<compile_context>
chip_gen: v7x
topology: tpu7x:2x2x1
jax: 0.10.0
libtpu: 0.0.40
codegen_flags: <defaults>
</compile_context>

<pallas_src>
import functools
import math

import jax
import jax.numpy as jnp
from jax.experimental import pallas as pl
from jax.experimental.pallas import tpu as pltpu

# ---------------- small synthetic CLIP config ----------------
B = 2                       # batch
C_IN = 3                    # image channels
IMG = 16                    # image resolution (cfg_imsize == clip_imsize)
PATCH = 4
N_PATCH = (IMG // PATCH) ** 2          # 16
PATCH_DIM = C_IN * PATCH * PATCH       # 48
VIS_WIDTH = 32                         # visual transformer width
VIS_SEQ = N_PATCH + 1                  # cls token + patches = 17
VIS_DIM = 32                           # clip_model.visual.output_dim
CTX_DIM = 32                           # clip_model.ln_final.weight.shape[0]
N_CTX = 4                              # cfg.TRAINER.COCOOP.N_CTX
N_CLS = 3                              # len(classnames)
N_SUFFIX = 7
N_TKN = 1 + N_CTX + N_SUFFIX           # 12 (prefix + ctx + suffix)
HEADS = 4
HEAD_DIM = CTX_DIM // HEADS            # 8
MLP_DIM = 4 * CTX_DIM
N_TEXT_LAYERS = 2
META_HID = max(VIS_DIM // 16, 1)       # vis_dim // 16 = 2

T_VIS = B * VIS_SEQ                    # 34 flattened visual tokens
T_TXT = B * N_CLS * N_TKN              # 72 flattened text tokens
NEG_INF = -1e9
LANES = 128                            # slab lane width (lane-dense, opt 8)

_BLOCK_KEYS = ("ln1_g", "ln1_b", "qkv_w", "qkv_b", "proj_w", "proj_b",
               "ln2_g", "ln2_b", "fc1_w", "fc1_b", "fc2_w", "fc2_b")


# ---------------- operand packer: many tiny arrays -> one [rows,128] slab ----------------
class _SlabPacker:
    """Row offsets are multiples of 8 and every piece starts at lane 0, so all
    in-kernel slices are (8,128)-tile aligned static views."""

    def __init__(self):
        self.pieces = []
        self.offs = {}
        self.row = 0

    def add(self, name, arr):
        arr = jnp.asarray(arr)
        if arr.ndim == 1:
            arr = arr.reshape(1, -1)
        arr = arr.astype(jnp.float32)
        r, c = arr.shape
        assert c <= LANES, (name, arr.shape)
        rp = ((r + 7) // 8) * 8
        self.pieces.append(jnp.pad(arr, ((0, rp - r), (0, LANES - c))))
        self.offs[name] = (self.row, r, c)
        self.row += rp

    def finalize(self):
        return jnp.concatenate(self.pieces, axis=0), dict(self.offs)


# ---------------- in-kernel helpers ----------------
def _mxu(a, b):
    # bf16 MXU operands, f32 accumulation (review opt 5).
    return jnp.dot(a.astype(jnp.bfloat16), b.astype(jnp.bfloat16),
                   preferred_element_type=jnp.float32)


def _ln(x, g, b, eps=1e-5):
    mu = jnp.mean(x, axis=-1, keepdims=True)
    xc = x - mu
    var = jnp.mean(xc * xc, axis=-1, keepdims=True)
    return xc * jax.lax.rsqrt(var + eps) * g + b


def _l2norm(x):
    return x * jax.lax.rsqrt(jnp.sum(x * x, axis=-1, keepdims=True))


def _softmax_rows(s):
    s = s - jnp.max(s, axis=-1, keepdims=True)
    p = jnp.exp(s)
    return p * pl.reciprocal(jnp.sum(p, axis=-1, keepdims=True), approx=True)


def _transformer_block(x, w, attn_mask, n_heads, head_dim):
    """Pre-LN CLIP block on a flat token matrix x: [T, D].

    Batch structure / causality ride in the additive block-diagonal mask, heads
    are static lane slices of the fused QKV tile, and the output projection is
    a SINGLE [T,D]@[D,D] dot on the lane-concatenated per-head outputs.
    """
    d = x.shape[-1]
    h = _ln(x, w["ln1_g"], w["ln1_b"])
    qkv = _mxu(h, w["qkv_w"]) + w["qkv_b"]
    scale = 1.0 / math.sqrt(head_dim)
    outs = []
    for hh in range(n_heads):
        lo = hh * head_dim
        q = qkv[:, lo:lo + head_dim]
        k = qkv[:, d + lo:d + lo + head_dim]
        v = qkv[:, 2 * d + lo:2 * d + lo + head_dim]
        s = _mxu(q, k.T) * scale + attn_mask          # f32 scores + f32 mask
        p = _softmax_rows(s)
        outs.append(_mxu(p, v))                        # [T, dh]
    o = jnp.concatenate(outs, axis=-1)                 # [T, D]  (lane concat)
    x = x + _mxu(o, w["proj_w"]) + w["proj_b"]
    h = _ln(x, w["ln2_g"], w["ln2_b"])
    h = _mxu(h, w["fc1_w"]) + w["fc1_b"]
    h = h * jax.nn.sigmoid(1.702 * h)                  # CLIP QuickGELU
    x = x + _mxu(h, w["fc2_w"]) + w["fc2_b"]
    return x


# ---------------- the single fused kernel ----------------
def _fused_cocoop_kernel(slab_ref, out_ref, *, offs):
    def L(name):
        off, r, c = offs[name]
        return slab_ref[pl.ds(off, r), pl.ds(0, c)]

    def blk(prefix):
        return {k: L(f"{prefix}/{k}") for k in _BLOCK_KEYS}

    # ---- image encoder (synthetic 1-block ViT) ----
    emb = _mxu(L("patches"), L("patch_w"))             # [T_VIS, W]
    x = emb + L("vis_base")                            # cls/patch bias + pos, pre-tiled
    x = _transformer_block(x, blk("vis_blk"), L("vis_attn_mask"), HEADS, HEAD_DIM)
    # CLS readout: static row slices instead of a one-hot matmul (review opt 4)
    x_cls = jnp.concatenate([x[b * VIS_SEQ:b * VIS_SEQ + 1, :] for b in range(B)], axis=0)
    x_cls = _ln(x_cls, L("vis_ln_g"), L("vis_ln_b"))
    imf = jnp.dot(x_cls, L("vis_proj"), preferred_element_type=jnp.float32)   # [B, VIS_DIM]
    imf = _l2norm(imf)                                  # image_features / ||.||

    # ---- prompt learner: meta-net on the VPU (hidden dim is tiny) ----
    w1 = L("meta_w1t")                                  # [META_HID, VIS_DIM]
    b1 = L("meta_b1")                                   # [1, META_HID]
    w2 = L("meta_w2")                                   # [META_HID, CTX_DIM]
    ctx_bias = jnp.zeros((B, CTX_DIM), jnp.float32) + L("meta_b2")
    for j in range(META_HID):
        hj = jnp.sum(imf * w1[j:j + 1, :], axis=-1, keepdims=True) + b1[:, j:j + 1]
        ctx_bias = ctx_bias + jnp.maximum(hj, 0.0) * w2[j:j + 1, :]           # [B, CTX_DIM]

    # prompts = prefix | (ctx + bias_b) | suffix (+pos), flattened [T_TXT, D]
    tmeta = L("txt_meta")                               # [:,0]=is_ctx, [:,1]=batch id
    is_ctx = tmeta[:, 0:1]
    bid = tmeta[:, 1:2]
    bias_rows = jnp.zeros((T_TXT, CTX_DIM), jnp.float32)
    for b in range(B):                                  # broadcast select, no matmul
        bias_rows = bias_rows + jnp.where(bid == float(b), ctx_bias[b:b + 1, :], 0.0)
    xt = L("base_prompt_pos") + is_ctx * bias_rows

    # ---- text encoder (2 blocks, causal + per-prompt block-diag mask) ----
    tmask = L("text_attn_mask")
    for li in range(N_TEXT_LAYERS):
        xt = _transformer_block(xt, blk(f"txt{li}"), tmask, HEADS, HEAD_DIM)
    xt = _ln(xt, L("ln_final_g"), L("ln_final_b"))
    # EOT readout stays a (data-dependent) one-hot matmul
    x_eot = jnp.dot(L("eot_sel"), xt, preferred_element_type=jnp.float32)     # [B*N_CLS, D]
    tfeat = jnp.dot(x_eot, L("text_proj"), preferred_element_type=jnp.float32)
    tfeat = _l2norm(tfeat)                              # [B*N_CLS, VIS_DIM]

    # ---- CoCoOp logit reduction (one dot, masked row-wise reductions) ----
    logit_full = jax.lax.dot_general(imf, tfeat, (((1,), (1,)), ((), ())),
                                     preferred_element_type=jnp.float32)     # [B, B*N_CLS]
    true_sum = jnp.sum(logit_full * L("true_mask"))
    err = jnp.where(L("errsel_mask") > 0.5, logit_full, -1e30)
    error_sum = jnp.sum(jnp.max(err, axis=-1, keepdims=True))
    other_sum = jnp.sum(logit_full * L("valid_mask")) * (1.0 / N_CLS)

    slot = jax.lax.broadcasted_iota(jnp.int32, out_ref.shape, 1)
    out_ref[...] = jnp.where(slot == 0, true_sum,
                             jnp.where(slot == 1, error_sum,
                                       other_sum)).astype(out_ref.dtype)


# ---------------- glue: build the slab (plain JAX) + one pallas_call ----------------
@jax.jit
def custom_clip_forward(params, image, label):
    f32 = jnp.float32
    # logit_scale.exp(): computed but never applied to logits, exactly as in the reference.
    _ = jnp.exp(params["logit_scale"])

    # patchify NCHW image -> [B*VIS_SEQ, PATCH_DIM] with a zero row at each CLS slot
    x = image.reshape(B, C_IN, IMG // PATCH, PATCH, IMG // PATCH, PATCH)
    x = x.transpose(0, 2, 4, 1, 3, 5).reshape(B, N_PATCH, PATCH_DIM)
    patches = jnp.pad(x, ((0, 0), (1, 0), (0, 0))).reshape(T_VIS, PATCH_DIM)

    # visual additive embedding: cls rows get cls_tok+pos[0]; patch rows get patch_b+pos[1:]
    cls_row = params["cls_tok"].reshape(1, VIS_WIDTH) + params["vis_pos"][0:1, :]
    patch_rows = params["patch_b"].reshape(1, VIS_WIDTH) + params["vis_pos"][1:, :]
    vis_base = jnp.tile(jnp.concatenate([cls_row, patch_rows], axis=0), (B, 1))   # [T_VIS, W]

    # visual attention mask: block-diagonal over the batch
    vis_bid = jnp.arange(T_VIS) // VIS_SEQ
    vis_attn_mask = jnp.where(vis_bid[:, None] == vis_bid[None, :], 0.0, NEG_INF).astype(f32)

    # prompt template: prefix | ctx | suffix (+pos), tiled over batch
    ctx_b = jnp.broadcast_to(params["ctx"][None], (N_CLS, N_CTX, CTX_DIM))
    base = jnp.concatenate([params["token_prefix"], ctx_b, params["token_suffix"]], axis=1)
    base = (base + params["pos_emb"][None]).reshape(N_CLS * N_TKN, CTX_DIM)
    base_prompt_pos = jnp.tile(base, (B, 1))                                      # [T_TXT, D]

    # per-text-token metadata: is_ctx flag and batch id
    txt_tok = jnp.arange(T_TXT)
    gid = txt_tok // N_TKN
    tid = txt_tok % N_TKN
    is_ctx = ((tid >= 1) & (tid < 1 + N_CTX)).astype(f32)
    txt_bid = (txt_tok // (N_CLS * N_TKN)).astype(f32)
    txt_meta = jnp.stack([is_ctx, txt_bid], axis=1)                               # [T_TXT, 2]

    # text attention mask: causal within each (batch, class) prompt, blocked across prompts
    text_attn_mask = jnp.where(
        (gid[:, None] == gid[None, :]) & (tid[None, :] <= tid[:, None]),
        0.0, NEG_INF).astype(f32)

    # EOT readout selector (data-dependent via argmax, matches tokenized_prompts.argmax(-1))
    eot = jnp.argmax(params["tokenized_prompts"], axis=-1)                        # [N_CLS]
    eot_cols = jnp.arange(B * N_CLS) * N_TKN + jnp.tile(eot, B)
    eot_sel = jax.nn.one_hot(eot_cols, T_TXT, dtype=f32)                          # [B*N_CLS, T_TXT]

    # reduction masks over the [B, B*N_CLS] cosine-logit matrix
    colj = jnp.arange(B * N_CLS)
    col_b = colj // N_CLS
    col_c = colj % N_CLS
    valid_mask = (col_b[None, :] == jnp.arange(B)[:, None]).astype(f32)           # own-batch cols
    true_mask = valid_mask * (col_c[None, :] == label[:, None]).astype(f32)       # true class
    errsel_mask = valid_mask - true_mask                                          # other classes

    # ---- pack everything into ONE slab -> one HBM->VMEM DMA ----
    pk = _SlabPacker()
    pk.add("patches", patches)
    pk.add("patch_w", params["patch_w"])
    pk.add("vis_base", vis_base)
    pk.add("vis_attn_mask", vis_attn_mask)
    pk.add("vis_ln_g", params["vis_ln_g"]); pk.add("vis_ln_b", params["vis_ln_b"])
    pk.add("vis_proj", params["vis_proj"])
    pk.add("meta_w1t", params["meta_w1"].T)            # [META_HID, VIS_DIM]
    pk.add("meta_b1", params["meta_b1"])
    pk.add("meta_w2", params["meta_w2"])
    pk.add("meta_b2", params["meta_b2"])
    pk.add("base_prompt_pos", base_prompt_pos)
    pk.add("txt_meta", txt_meta)
    pk.add("text_attn_mask", text_attn_mask)
    pk.add("ln_final_g", params["ln_final_g"]); pk.add("ln_final_b", params["ln_final_b"])
    pk.add("eot_sel", eot_sel)
    pk.add("text_proj", params["text_proj"])
    pk.add("true_mask", true_mask)
    pk.add("valid_mask", valid_mask)
    pk.add("errsel_mask", errsel_mask)

    def add_block(prefix, bw):
        for k in _BLOCK_KEYS:
            pk.add(f"{prefix}/{k}", bw[k])

    add_block("vis_blk", params["vis_blk"])
    for li in range(N_TEXT_LAYERS):
        add_block(f"txt{li}", params["text_blocks"][li])

    slab, offs = pk.finalize()                         # [~1.4k rows, 128] f32, < 1 MiB

    out = pl.pallas_call(
        functools.partial(_fused_cocoop_kernel, offs=offs),
        out_shape=jax.ShapeDtypeStruct((1, 3), jnp.float32),
        grid=(1,),
        in_specs=[pl.BlockSpec(slab.shape, lambda i: (0, 0))],
        out_specs=pl.BlockSpec((1, 3), lambda i: (0, 0)),
        compiler_params=pltpu.CompilerParams(dimension_semantics=("arbitrary",)),
    )(slab)
    return out[0, 0], out[0, 1], out[0, 2]             # (true_sum, error_sum, other_sum)


# ---------------- deterministic parameter init ----------------
def init_params(key):
    ks = iter(jax.random.split(key, 128))

    def nrm(shape, std=0.02):
        return jax.random.normal(next(ks), shape, jnp.float32) * std

    def block_params(d, mlp):
        return {
            "ln1_g": jnp.ones((d,), jnp.float32), "ln1_b": jnp.zeros((d,), jnp.float32),
            "qkv_w": nrm((d, 3 * d)), "qkv_b": jnp.zeros((3 * d,), jnp.float32),
            "proj_w": nrm((d, d)), "proj_b": jnp.zeros((d,), jnp.float32),
            "ln2_g": jnp.ones((d,), jnp.float32), "ln2_b": jnp.zeros((d,), jnp.float32),
            "fc1_w": nrm((d, mlp)), "fc1_b": jnp.zeros((mlp,), jnp.float32),
            "fc2_w": nrm((mlp, d)), "fc2_b": jnp.zeros((d,), jnp.float32),
        }

    # synthetic tokenized prompts: SOT ... tokens ... EOT(=max id) ... padding
    # TODO(synk): no CLIP BPE tokenizer available; synthetic token ids emulate argmax->EOT.
    name_lens = [1, 2, 3]
    tok_rows = []
    for c in range(N_CLS):
        row = [49406] + [500 + t for t in range(N_CTX + name_lens[c])] + [49407]
        row = row + [0] * (N_TKN - len(row))
        tok_rows.append(row)
    tok = jnp.array(tok_rows, jnp.int32)

    return {
        # visual encoder
        "patch_w": nrm((PATCH_DIM, VIS_WIDTH)),
        "patch_b": jnp.zeros((VIS_WIDTH,), jnp.float32),
        "cls_tok": nrm((1, 1, VIS_WIDTH)),
        "vis_pos": nrm((VIS_SEQ, VIS_WIDTH)),
        "vis_blk": block_params(VIS_WIDTH, 4 * VIS_WIDTH),
        "vis_ln_g": jnp.ones((VIS_WIDTH,), jnp.float32),
        "vis_ln_b": jnp.zeros((VIS_WIDTH,), jnp.float32),
        "vis_proj": nrm((VIS_WIDTH, VIS_DIM)),
        # prompt learner
        "ctx": nrm((N_CTX, CTX_DIM)),
        "meta_w1": nrm((VIS_DIM, META_HID)), "meta_b1": jnp.zeros((META_HID,), jnp.float32),
        "meta_w2": nrm((META_HID, CTX_DIM)), "meta_b2": jnp.zeros((CTX_DIM,), jnp.float32),
        "token_prefix": nrm((N_CLS, 1, CTX_DIM)),
        "token_suffix": nrm((N_CLS, N_SUFFIX, CTX_DIM)),
        "tokenized_prompts": tok,
        # text encoder
        "pos_emb": nrm((N_TKN, CTX_DIM)),
        "text_blocks": [block_params(CTX_DIM, MLP_DIM) for _ in range(N_TEXT_LAYERS)],
        "ln_final_g": jnp.ones((CTX_DIM,), jnp.float32),
        "ln_final_b": jnp.zeros((CTX_DIM,), jnp.float32),
        "text_proj": nrm((CTX_DIM, VIS_DIM)),
        "logit_scale": jnp.array(math.log(1.0 / 0.07), jnp.float32),
    }


if __name__ == "__main__":
    key = jax.random.PRNGKey(0)
    kp, ki, kl = jax.random.split(key, 3)
    params = init_params(kp)
    image = jax.random.normal(ki, (B, C_IN, IMG, IMG), jnp.float32)   # NCHW
    label = jax.random.randint(kl, (B,), 0, N_CLS, dtype=jnp.int32)

    true_sum, error_sum, other_sum = custom_clip_forward(params, image, label)
    jax.block_until_ready((true_sum, error_sum, other_sum))
    print("KERNEL_OK")
</pallas_src>

<mosaic_0001>
module attributes {stable_mosaic.version = 11 : i64} {
  func.func @_fused_cocoop_kernel(%arg0: i32, %arg1: memref<1408x128xf32, #tpu.memory_space<vmem>>, %arg2: memref<1x3xf32, #tpu.memory_space<vmem>>) attributes {dimension_semantics = [#tpu.dimension_semantics<arbitrary>], iteration_bounds = array<i64: 1>, scalar_prefetch = 0 : i64, scratch_operands = 0 : i64, tpu.core_type = #tpu.core_type<tc>, window_params = [{pipeline_mode = #tpu.pipeline_mode<synchronous>, transform_indices = @transform_0, window_bounds = array<i64: 1408, 128>}, {pipeline_mode = #tpu.pipeline_mode<synchronous>, transform_indices = @transform_1, window_bounds = array<i64: 1, 3>}]} {
    %c0 = arith.constant 0 : index
    %c0_0 = arith.constant 0 : index
    %0 = vector.load %arg1[%c0, %c0_0] : memref<1408x128xf32, #tpu.memory_space<vmem>>, vector<34x48xf32>
    %c40 = arith.constant 40 : index
    %c0_1 = arith.constant 0 : index
    %1 = vector.load %arg1[%c40, %c0_1] : memref<1408x128xf32, #tpu.memory_space<vmem>>, vector<48x32xf32>
    %2 = arith.truncf %0 : vector<34x48xf32> to vector<34x48xbf16>
    %3 = arith.truncf %1 : vector<48x32xf32> to vector<48x32xbf16>
    %cst = arith.constant dense<0.000000e+00> : vector<34x32xf32>
    %4 = tpu.matmul %2, %3, %cst {dimension_numbers = #tpu.dot_dimension_numbers<[1], [0], [0], [1], [0, 0, 1, 1], [], []>} : vector<34x48xbf16>, vector<48x32xbf16>, vector<34x32xf32> -> vector<34x32xf32>
    %c88 = arith.constant 88 : index
    %c0_2 = arith.constant 0 : index
    %5 = vector.load %arg1[%c88, %c0_2] : memref<1408x128xf32, #tpu.memory_space<vmem>>, vector<34x32xf32>
    %6 = arith.addf %4, %5 : vector<34x32xf32>
    %c544 = arith.constant 544 : index
    %c0_3 = arith.constant 0 : index
    %7 = vector.load %arg1[%c544, %c0_3] : memref<1408x128xf32, #tpu.memory_space<vmem>>, vector<1x32xf32>
    %c552 = arith.constant 552 : index
    %c0_4 = arith.constant 0 : index
    %8 = vector.load %arg1[%c552, %c0_4] : memref<1408x128xf32, #tpu.memory_space<vmem>>, vector<1x32xf32>
    %c560 = arith.constant 560 : index
    %c0_5 = arith.constant 0 : index
    %9 = vector.load %arg1[%c560, %c0_5] : memref<1408x128xf32, #tpu.memory_space<vmem>>, vector<32x96xf32>
    %c592 = arith.constant 592 : index
    %c0_6 = arith.constant 0 : index
    %10 = vector.load %arg1[%c592, %c0_6] : memref<1408x128xf32, #tpu.memory_space<vmem>>, vector<1x96xf32>
    %c600 = arith.constant 600 : index
    %c0_7 = arith.constant 0 : index
    %11 = vector.load %arg1[%c600, %c0_7] : memref<1408x128xf32, #tpu.memory_space<vmem>>, vector<32x32xf32>
    %c632 = arith.constant 632 : index
    %c0_8 = arith.constant 0 : index
    %12 = vector.load %arg1[%c632, %c0_8] : memref<1408x128xf32, #tpu.memory_space<vmem>>, vector<1x32xf32>
    %c640 = arith.constant 640 : index
    %c0_9 = arith.constant 0 : index
    %13 = vector.load %arg1[%c640, %c0_9] : memref<1408x128xf32, #tpu.memory_space<vmem>>, vector<1x32xf32>
    %c648 = arith.constant 648 : index
    %c0_10 = arith.constant 0 : index
    %14 = vector.load %arg1[%c648, %c0_10] : memref<1408x128xf32, #tpu.memory_space<vmem>>, vector<1x32xf32>
    %c656 = arith.constant 656 : index
    %c0_11 = arith.constant 0 : index
    %15 = vector.load %arg1[%c656, %c0_11] : memref<1408x128xf32, #tpu.memory_space<vmem>>, vector<32x128xf32>
    %c688 = arith.constant 688 : index
    %c0_12 = arith.constant 0 : index
    %16 = vector.load %arg1[%c688, %c0_12] : memref<1408x128xf32, #tpu.memory_space<vmem>>, vector<1x128xf32>
    %c696 = arith.constant 696 : index
    %c0_13 = arith.constant 0 : index
    %17 = vector.load %arg1[%c696, %c0_13] : memref<1408x128xf32, #tpu.memory_space<vmem>>, vector<128x32xf32>
    %c824 = arith.constant 824 : index
    %c0_14 = arith.constant 0 : index
    %18 = vector.load %arg1[%c824, %c0_14] : memref<1408x128xf32, #tpu.memory_space<vmem>>, vector<1x32xf32>
    %c128 = arith.constant 128 : index
    %c0_15 = arith.constant 0 : index
    %19 = vector.load %arg1[%c128, %c0_15] : memref<1408x128xf32, #tpu.memory_space<vmem>>, vector<34x34xf32>
    %cst_16 = arith.constant dense<0.000000e+00> : vector<34xf32>
    %20 = vector.multi_reduction <add>, %6, %cst_16 [1] : vector<34x32xf32> to vector<34xf32>
    %21 = vector.shape_cast %20 : vector<34xf32> to vector<34x1xf32>
    %cst_17 = arith.constant 3.200000e+01 : f32
    %22 = vector.broadcast %cst_17 : f32 to vector<34x1xf32>
    %23 = arith.divf %21, %22 : vector<34x1xf32>
    %24 = vector.broadcast %23 : vector<34x1xf32> to vector<34x32xf32>
    %25 = arith.subf %6, %24 : vector<34x32xf32>
    %26 = arith.mulf %25, %25 : vector<34x32xf32>
    %cst_18 = arith.constant dense<0.000000e+00> : vector<34xf32>
    %27 = vector.multi_reduction <add>, %26, %cst_18 [1] : vector<34x32xf32> to vector<34xf32>
    %28 = vector.shape_cast %27 : vector<34xf32> to vector<34x1xf32>
    %cst_19 = arith.constant 3.200000e+01 : f32
    %29 = vector.broadcast %cst_19 : f32 to vector<34x1xf32>
    %30 = arith.divf %28, %29 : vector<34x1xf32>
    %cst_20 = arith.constant 9.99999974E-6 : f32
    %31 = vector.broadcast %cst_20 : f32 to vector<34x1xf32>
    %32 = arith.addf %30, %31 : vector<34x1xf32>
    %33 = math.rsqrt %32 : vector<34x1xf32>
    %34 = vector.broadcast %33 : vector<34x1xf32> to vector<34x32xf32>
    %35 = arith.mulf %25, %34 : vector<34x32xf32>
    %36 = vector.broadcast %7 : vector<1x32xf32> to vector<34x32xf32>
    %37 = arith.mulf %35, %36 : vector<34x32xf32>
    %38 = vector.broadcast %8 : vector<1x32xf32> to vector<34x32xf32>
    %39 = arith.addf %37, %38 : vector<34x32xf32>
    %40 = arith.truncf %39 : vector<34x32xf32> to vector<34x32xbf16>
    %41 = arith.truncf %9 : vector<32x96xf32> to vector<32x96xbf16>
    %cst_21 = arith.constant dense<0.000000e+00> : vector<34x96xf32>
    %42 = tpu.matmul %40, %41, %cst_21 {dimension_numbers = #tpu.dot_dimension_numbers<[1], [0], [0], [1], [0, 0, 1, 1], [], []>} : vector<34x32xbf16>, vector<32x96xbf16>, vector<34x96xf32> -> vector<34x96xf32>
    %43 = vector.broadcast %10 : vector<1x96xf32> to vector<34x96xf32>
    %44 = arith.addf %42, %43 : vector<34x96xf32>
    %45 = vector.extract_strided_slice %44 {offsets = [0, 0], sizes = [34, 8], strides = [1, 1]} : vector<34x96xf32> to vector<34x8xf32>
    %46 = vector.extract_strided_slice %44 {offsets = [0, 32], sizes = [34, 8], strides = [1, 1]} : vector<34x96xf32> to vector<34x8xf32>
    %47 = vector.extract_strided_slice %44 {offsets = [0, 64], sizes = [34, 8], strides = [1, 1]} : vector<34x96xf32> to vector<34x8xf32>
    %48 = tpu.transpose %46, [1, 0] : vector<34x8xf32> -> vector<8x34xf32>
    %49 = arith.truncf %45 : vector<34x8xf32> to vector<34x8xbf16>
    %50 = arith.truncf %48 : vector<8x34xf32> to vector<8x34xbf16>
    %cst_22 = arith.constant dense<0.000000e+00> : vector<34x34xf32>
    %51 = tpu.matmul %49, %50, %cst_22 {dimension_numbers = #tpu.dot_dimension_numbers<[1], [0], [0], [1], [0, 0, 1, 1], [], []>} : vector<34x8xbf16>, vector<8x34xbf16>, vector<34x34xf32> -> vector<34x34xf32>
    %cst_23 = arith.constant 0.353553385 : f32
    %52 = vector.broadcast %cst_23 : f32 to vector<34x34xf32>
    %53 = arith.mulf %51, %52 : vector<34x34xf32>
    %54 = arith.addf %53, %19 : vector<34x34xf32>
    %cst_24 = arith.constant dense<0xFF800000> : vector<34xf32>
    %55 = vector.multi_reduction <maximumf>, %54, %cst_24 [1] : vector<34x34xf32> to vector<34xf32>
    %56 = vector.shape_cast %55 : vector<34xf32> to vector<34x1xf32>
    %57 = vector.broadcast %56 : vector<34x1xf32> to vector<34x34xf32>
    %58 = arith.subf %54, %57 : vector<34x34xf32>
    %59 = math.exp %58 : vector<34x34xf32>
    %cst_25 = arith.constant dense<0.000000e+00> : vector<34xf32>
    %60 = vector.multi_reduction <add>, %59, %cst_25 [1] : vector<34x34xf32> to vector<34xf32>
    %61 = vector.shape_cast %60 : vector<34xf32> to vector<34x1xf32>
    %62 = tpu.reciprocal %61 {approx = true} : vector<34x1xf32> -> vector<34x1xf32>
    %63 = vector.broadcast %62 : vector<34x1xf32> to vector<34x34xf32>
    %64 = arith.mulf %59, %63 : vector<34x34xf32>
    %65 = arith.truncf %64 : vector<34x34xf32> to vector<34x34xbf16>
    %66 = arith.truncf %47 : vector<34x8xf32> to vector<34x8xbf16>
    %cst_26 = arith.constant dense<0.000000e+00> : vector<34x8xf32>
    %67 = tpu.matmul %65, %66, %cst_26 {dimension_numbers = #tpu.dot_dimension_numbers<[1], [0], [0], [1], [0, 0, 1, 1], [], []>} : vector<34x34xbf16>, vector<34x8xbf16>, vector<34x8xf32> -> vector<34x8xf32>
    %68 = vector.extract_strided_slice %44 {offsets = [0, 8], sizes = [34, 8], strides = [1, 1]} : vector<34x96xf32> to vector<34x8xf32>
    %69 = vector.extract_strided_slice %44 {offsets = [0, 40], sizes = [34, 8], strides = [1, 1]} : vector<34x96xf32> to vector<34x8xf32>
    %70 = vector.extract_strided_slice %44 {offsets = [0, 72], sizes = [34, 8], strides = [1, 1]} : vector<34x96xf32> to vector<34x8xf32>
    %71 = tpu.transpose %69, [1, 0] : vector<34x8xf32> -> vector<8x34xf32>
    %72 = arith.truncf %68 : vector<34x8xf32> to vector<34x8xbf16>
    %73 = arith.truncf %71 : vector<8x34xf32> to vector<8x34xbf16>
    %cst_27 = arith.constant dense<0.000000e+00> : vector<34x34xf32>
    %74 = tpu.matmul %72, %73, %cst_27 {dimension_numbers = #tpu.dot_dimension_numbers<[1], [0], [0], [1], [0, 0, 1, 1], [], []>} : vector<34x8xbf16>, vector<8x34xbf16>, vector<34x34xf32> -> vector<34x34xf32>
    %cst_28 = arith.constant 0.353553385 : f32
    %75 = vector.broadcast %cst_28 : f32 to vector<34x34xf32>
    %76 = arith.mulf %74, %75 : vector<34x34xf32>
    %77 = arith.addf %76, %19 : vector<34x34xf32>
    %cst_29 = arith.constant dense<0xFF800000> : vector<34xf32>
    %78 = vector.multi_reduction <maximumf>, %77, %cst_29 [1] : vector<34x34xf32> to vector<34xf32>
    %79 = vector.shape_cast %78 : vector<34xf32> to vector<34x1xf32>
    %80 = vector.broadcast %79 : vector<34x1xf32> to vector<34x34xf32>
    %81 = arith.subf %77, %80 : vector<34x34xf32>
    %82 = math.exp %81 : vector<34x34xf32>
    %cst_30 = arith.constant dense<0.000000e+00> : vector<34xf32>
    %83 = vector.multi_reduction <add>, %82, %cst_30 [1] : vector<34x34xf32> to vector<34xf32>
    %84 = vector.shape_cast %83 : vector<34xf32> to vector<34x1xf32>
    %85 = tpu.reciprocal %84 {approx = true} : vector<34x1xf32> -> vector<34x1xf32>
    %86 = vector.broadcast %85 : vector<34x1xf32> to vector<34x34xf32>
    %87 = arith.mulf %82, %86 : vector<34x34xf32>
    %88 = arith.truncf %87 : vector<34x34xf32> to vector<34x34xbf16>
    %89 = arith.truncf %70 : vector<34x8xf32> to vector<34x8xbf16>
    %cst_31 = arith.constant dense<0.000000e+00> : vector<34x8xf32>
    %90 = tpu.matmul %88, %89, %cst_31 {dimension_numbers = #tpu.dot_dimension_numbers<[1], [0], [0], [1], [0, 0, 1, 1], [], []>} : vector<34x34xbf16>, vector<34x8xbf16>, vector<34x8xf32> -> vector<34x8xf32>
    %91 = vector.extract_strided_slice %44 {offsets = [0, 16], sizes = [34, 8], strides = [1, 1]} : vector<34x96xf32> to vector<34x8xf32>
    %92 = vector.extract_strided_slice %44 {offsets = [0, 48], sizes = [34, 8], strides = [1, 1]} : vector<34x96xf32> to vector<34x8xf32>
    %93 = vector.extract_strided_slice %44 {offsets = [0, 80], sizes = [34, 8], strides = [1, 1]} : vector<34x96xf32> to vector<34x8xf32>
    %94 = tpu.transpose %92, [1, 0] : vector<34x8xf32> -> vector<8x34xf32>
    %95 = arith.truncf %91 : vector<34x8xf32> to vector<34x8xbf16>
    %96 = arith.truncf %94 : vector<8x34xf32> to vector<8x34xbf16>
    %cst_32 = arith.constant dense<0.000000e+00> : vector<34x34xf32>
    %97 = tpu.matmul %95, %96, %cst_32 {dimension_numbers = #tpu.dot_dimension_numbers<[1], [0], [0], [1], [0, 0, 1, 1], [], []>} : vector<34x8xbf16>, vector<8x34xbf16>, vector<34x34xf32> -> vector<34x34xf32>
    %cst_33 = arith.constant 0.353553385 : f32
    %98 = vector.broadcast %cst_33 : f32 to vector<34x34xf32>
    %99 = arith.mulf %97, %98 : vector<34x34xf32>
    %100 = arith.addf %99, %19 : vector<34x34xf32>
    %cst_34 = arith.constant dense<0xFF800000> : vector<34xf32>
    %101 = vector.multi_reduction <maximumf>, %100, %cst_34 [1] : vector<34x34xf32> to vector<34xf32>
    %102 = vector.shape_cast %101 : vector<34xf32> to vector<34x1xf32>
    %103 = vector.broadcast %102 : vector<34x1xf32> to vector<34x34xf32>
    %104 = arith.subf %100, %103 : vector<34x34xf32>
    %105 = math.exp %104 : vector<34x34xf32>
    %cst_35 = arith.constant dense<0.000000e+00> : vector<34xf32>
    %106 = vector.multi_reduction <add>, %105, %cst_35 [1] : vector<34x34xf32> to vector<34xf32>
    %107 = vector.shape_cast %106 : vector<34xf32> to vector<34x1xf32>
    %108 = tpu.reciprocal %107 {approx = true} : vector<34x1xf32> -> vector<34x1xf32>
    %109 = vector.broadcast %108 : vector<34x1xf32> to vector<34x34xf32>
    %110 = arith.mulf %105, %109 : vector<34x34xf32>
    %111 = arith.truncf %110 : vector<34x34xf32> to vector<34x34xbf16>
    %112 = arith.truncf %93 : vector<34x8xf32> to vector<34x8xbf16>
    %cst_36 = arith.constant dense<0.000000e+00> : vector<34x8xf32>
    %113 = tpu.matmul %111, %112, %cst_36 {dimension_numbers = #tpu.dot_dimension_numbers<[1], [0], [0], [1], [0, 0, 1, 1], [], []>} : vector<34x34xbf16>, vector<34x8xbf16>, vector<34x8xf32> -> vector<34x8xf32>
    %114 = vector.extract_strided_slice %44 {offsets = [0, 24], sizes = [34, 8], strides = [1, 1]} : vector<34x96xf32> to vector<34x8xf32>
    %115 = vector.extract_strided_slice %44 {offsets = [0, 56], sizes = [34, 8], strides = [1, 1]} : vector<34x96xf32> to vector<34x8xf32>
    %116 = vector.extract_strided_slice %44 {offsets = [0, 88], sizes = [34, 8], strides = [1, 1]} : vector<34x96xf32> to vector<34x8xf32>
    %117 = tpu.transpose %115, [1, 0] : vector<34x8xf32> -> vector<8x34xf32>
    %118 = arith.truncf %114 : vector<34x8xf32> to vector<34x8xbf16>
    %119 = arith.truncf %117 : vector<8x34xf32> to vector<8x34xbf16>
    %cst_37 = arith.constant dense<0.000000e+00> : vector<34x34xf32>
    %120 = tpu.matmul %118, %119, %cst_37 {dimension_numbers = #tpu.dot_dimension_numbers<[1], [0], [0], [1], [0, 0, 1, 1], [], []>} : vector<34x8xbf16>, vector<8x34xbf16>, vector<34x34xf32> -> vector<34x34xf32>
    %cst_38 = arith.constant 0.353553385 : f32
    %121 = vector.broadcast %cst_38 : f32 to vector<34x34xf32>
    %122 = arith.mulf %120, %121 : vector<34x34xf32>
    %123 = arith.addf %122, %19 : vector<34x34xf32>
    %cst_39 = arith.constant dense<0xFF800000> : vector<34xf32>
    %124 = vector.multi_reduction <maximumf>, %123, %cst_39 [1] : vector<34x34xf32> to vector<34xf32>
    %125 = vector.shape_cast %124 : vector<34xf32> to vector<34x1xf32>
    %126 = vector.broadcast %125 : vector<34x1xf32> to vector<34x34xf32>
    %127 = arith.subf %123, %126 : vector<34x34xf32>
    %128 = math.exp %127 : vector<34x34xf32>
    %cst_40 = arith.constant dense<0.000000e+00> : vector<34xf32>
    %129 = vector.multi_reduction <add>, %128, %cst_40 [1] : vector<34x34xf32> to vector<34xf32>
    %130 = vector.shape_cast %129 : vector<34xf32> to vector<34x1xf32>
    %131 = tpu.reciprocal %130 {approx = true} : vector<34x1xf32> -> vector<34x1xf32>
    %132 = vector.broadcast %131 : vector<34x1xf32> to vector<34x34xf32>
    %133 = arith.mulf %128, %132 : vector<34x34xf32>
    %134 = arith.truncf %133 : vector<34x34xf32> to vector<34x34xbf16>
    %135 = arith.truncf %116 : vector<34x8xf32> to vector<34x8xbf16>
    %cst_41 = arith.constant dense<0.000000e+00> : vector<34x8xf32>
    %136 = tpu.matmul %134, %135, %cst_41 {dimension_numbers = #tpu.dot_dimension_numbers<[1], [0], [0], [1], [0, 0, 1, 1], [], []>} : vector<34x34xbf16>, vector<34x8xbf16>, vector<34x8xf32> -> vector<34x8xf32>
    %137 = tpu.concatenate %67, %90, %113, %136 in 1 : vector<34x8xf32>, vector<34x8xf32>, vector<34x8xf32>, vector<34x8xf32> -> vector<34x32xf32>
    %138 = arith.truncf %137 : vector<34x32xf32> to vector<34x32xbf16>
    %139 = arith.truncf %11 : vector<32x32xf32> to vector<32x32xbf16>
    %cst_42 = arith.constant dense<0.000000e+00> : vector<34x32xf32>
    %140 = tpu.matmul %138, %139, %cst_42 {dimension_numbers = #tpu.dot_dimension_numbers<[1], [0], [0], [1], [0, 0, 1, 1], [], []>} : vector<34x32xbf16>, vector<32x32xbf16>, vector<34x32xf32> -> vector<34x32xf32>
    %141 = arith.addf %6, %140 : vector<34x32xf32>
    %142 = vector.broadcast %12 : vector<1x32xf32> to vector<34x32xf32>
    %143 = arith.addf %141, %142 : vector<34x32xf32>
    %cst_43 = arith.constant dense<0.000000e+00> : vector<34xf32>
    %144 = vector.multi_reduction <add>, %143, %cst_43 [1] : vector<34x32xf32> to vector<34xf32>
    %145 = vector.shape_cast %144 : vector<34xf32> to vector<34x1xf32>
    %cst_44 = arith.constant 3.200000e+01 : f32
    %146 = vector.broadcast %cst_44 : f32 to vector<34x1xf32>
    %147 = arith.divf %145, %146 : vector<34x1xf32>
    %148 = vector.broadcast %147 : vector<34x1xf32> to vector<34x32xf32>
    %149 = arith.subf %143, %148 : vector<34x32xf32>
    %150 = arith.mulf %149, %149 : vector<34x32xf32>
    %cst_45 = arith.constant dense<0.000000e+00> : vector<34xf32>
    %151 = vector.multi_reduction <add>, %150, %cst_45 [1] : vector<34x32xf32> to vector<34xf32>
    %152 = vector.shape_cast %151 : vector<34xf32> to vector<34x1xf32>
    %cst_46 = arith.constant 3.200000e+01 : f32
    %153 = vector.broadcast %cst_46 : f32 to vector<34x1xf32>
    %154 = arith.divf %152, %153 : vector<34x1xf32>
    %cst_47 = arith.constant 9.99999974E-6 : f32
    %155 = vector.broadcast %cst_47 : f32 to vector<34x1xf32>
    %156 = arith.addf %154, %155 : vector<34x1xf32>
    %157 = math.rsqrt %156 : vector<34x1xf32>
    %158 = vector.broadcast %157 : vector<34x1xf32> to vector<34x32xf32>
    %159 = arith.mulf %149, %158 : vector<34x32xf32>
    %160 = vector.broadcast %13 : vector<1x32xf32> to vector<34x32xf32>
    %161 = arith.mulf %159, %160 : vector<34x32xf32>
    %162 = vector.broadcast %14 : vector<1x32xf32> to vector<34x32xf32>
    %163 = arith.addf %161, %162 : vector<34x32xf32>
    %164 = arith.truncf %163 : vector<34x32xf32> to vector<34x32xbf16>
    %165 = arith.truncf %15 : vector<32x128xf32> to vector<32x128xbf16>
    %cst_48 = arith.constant dense<0.000000e+00> : vector<34x128xf32>
    %166 = tpu.matmul %164, %165, %cst_48 {dimension_numbers = #tpu.dot_dimension_numbers<[1], [0], [0], [1], [0, 0, 1, 1], [], []>} : vector<34x32xbf16>, vector<32x128xbf16>, vector<34x128xf32> -> vector<34x128xf32>
    %167 = vector.broadcast %16 : vector<1x128xf32> to vector<34x128xf32>
    %168 = arith.addf %166, %167 : vector<34x128xf32>
    %cst_49 = arith.constant 1.702000e+00 : f32
    %169 = vector.broadcast %cst_49 : f32 to vector<34x128xf32>
    %170 = arith.mulf %169, %168 : vector<34x128xf32>
    %171 = arith.negf %170 : vector<34x128xf32>
    %172 = math.exp %171 : vector<34x128xf32>
    %cst_50 = arith.constant 1.000000e+00 : f32
    %173 = vector.broadcast %cst_50 : f32 to vector<34x128xf32>
    %174 = arith.addf %173, %172 : vector<34x128xf32>
    %175 = arith.divf %173, %174 : vector<34x128xf32>
    %176 = arith.mulf %168, %175 : vector<34x128xf32>
    %177 = arith.truncf %176 : vector<34x128xf32> to vector<34x128xbf16>
    %178 = arith.truncf %17 : vector<128x32xf32> to vector<128x32xbf16>
    %cst_51 = arith.constant dense<0.000000e+00> : vector<34x32xf32>
    %179 = tpu.matmul %177, %178, %cst_51 {dimension_numbers = #tpu.dot_dimension_numbers<[1], [0], [0], [1], [0, 0, 1, 1], [], []>} : vector<34x128xbf16>, vector<128x32xbf16>, vector<34x32xf32> -> vector<34x32xf32>
    %180 = arith.addf %143, %179 : vector<34x32xf32>
    %181 = vector.broadcast %18 : vector<1x32xf32> to vector<34x32xf32>
    %182 = arith.addf %180, %181 : vector<34x32xf32>
    %183 = vector.extract_strided_slice %182 {offsets = [0, 0], sizes = [1, 32], strides = [1, 1]} : vector<34x32xf32> to vector<1x32xf32>
    %184 = vector.extract_strided_slice %182 {offsets = [17, 0], sizes = [1, 32], strides = [1, 1]} : vector<34x32xf32> to vector<1x32xf32>
    %185 = tpu.concatenate %183, %184 in 0 : vector<1x32xf32>, vector<1x32xf32> -> vector<2x32xf32>
    %c168 = arith.constant 168 : index
    %c0_52 = arith.constant 0 : index
    %186 = vector.load %arg1[%c168, %c0_52] : memref<1408x128xf32, #tpu.memory_space<vmem>>, vector<1x32xf32>
    %c176 = arith.constant 176 : index
    %c0_53 = arith.constant 0 : index
    %187 = vector.load %arg1[%c176, %c0_53] : memref<1408x128xf32, #tpu.memory_space<vmem>>, vector<1x32xf32>
    %cst_54 = arith.constant dense<0.000000e+00> : vector<2xf32>
    %188 = vector.multi_reduction <add>, %185, %cst_54 [1] : vector<2x32xf32> to vector<2xf32>
    %189 = vector.shape_cast %188 : vector<2xf32> to vector<2x1xf32>
    %cst_55 = arith.constant 3.200000e+01 : f32
    %190 = vector.broadcast %cst_55 : f32 to vector<2x1xf32>
    %191 = arith.divf %189, %190 : vector<2x1xf32>
    %192 = vector.broadcast %191 : vector<2x1xf32> to vector<2x32xf32>
    %193 = arith.subf %185, %192 : vector<2x32xf32>
    %194 = arith.mulf %193, %193 : vector<2x32xf32>
    %cst_56 = arith.constant dense<0.000000e+00> : vector<2xf32>
    %195 = vector.multi_reduction <add>, %194, %cst_56 [1] : vector<2x32xf32> to vector<2xf32>
    %196 = vector.shape_cast %195 : vector<2xf32> to vector<2x1xf32>
    %cst_57 = arith.constant 3.200000e+01 : f32
    %197 = vector.broadcast %cst_57 : f32 to vector<2x1xf32>
    %198 = arith.divf %196, %197 : vector<2x1xf32>
    %cst_58 = arith.constant 9.99999974E-6 : f32
    %199 = vector.broadcast %cst_58 : f32 to vector<2x1xf32>
    %200 = arith.addf %198, %199 : vector<2x1xf32>
    %201 = math.rsqrt %200 : vector<2x1xf32>
    %202 = vector.broadcast %201 : vector<2x1xf32> to vector<2x32xf32>
    %203 = arith.mulf %193, %202 : vector<2x32xf32>
    %204 = vector.broadcast %186 : vector<1x32xf32> to vector<2x32xf32>
    %205 = arith.mulf %203, %204 : vector<2x32xf32>
    %206 = vector.broadcast %187 : vector<1x32xf32> to vector<2x32xf32>
    %207 = arith.addf %205, %206 : vector<2x32xf32>
    %c184 = arith.constant 184 : index
    %c0_59 = arith.constant 0 : index
    %208 = vector.load %arg1[%c184, %c0_59] : memref<1408x128xf32, #tpu.memory_space<vmem>>, vector<32x32xf32>
    %cst_60 = arith.constant dense<0.000000e+00> : vector<2x32xf32>
    %209 = tpu.matmul %207, %208, %cst_60 {dimension_numbers = #tpu.dot_dimension_numbers<[1], [0], [0], [1], [0, 0, 1, 1], [], []>} : vector<2x32xf32>, vector<32x32xf32>, vector<2x32xf32> -> vector<2x32xf32>
    %210 = arith.mulf %209, %209 : vector<2x32xf32>
    %cst_61 = arith.constant dense<0.000000e+00> : vector<2xf32>
    %211 = vector.multi_reduction <add>, %210, %cst_61 [1] : vector<2x32xf32> to vector<2xf32>
    %212 = vector.shape_cast %211 : vector<2xf32> to vector<2x1xf32>
    %213 = math.rsqrt %212 : vector<2x1xf32>
    %214 = vector.broadcast %213 : vector<2x1xf32> to vector<2x32xf32>
    %215 = arith.mulf %209, %214 : vector<2x32xf32>
    %c216 = arith.constant 216 : index
    %c0_62 = arith.constant 0 : index
    %216 = vector.load %arg1[%c216, %c0_62] : memref<1408x128xf32, #tpu.memory_space<vmem>>, vector<2x32xf32>
    %c224 = arith.constant 224 : index
    %c0_63 = arith.constant 0 : index
    %217 = vector.load %arg1[%c224, %c0_63] : memref<1408x128xf32, #tpu.memory_space<vmem>>, vector<1x2xf32>
    %c232 = arith.constant 232 : index
    %c0_64 = arith.constant 0 : index
    %218 = vector.load %arg1[%c232, %c0_64] : memref<1408x128xf32, #tpu.memory_space<vmem>>, vector<2x32xf32>
    %cst_65 = arith.constant 0.000000e+00 : f32
    %219 = vector.broadcast %cst_65 : f32 to vector<2x32xf32>
    %c240 = arith.constant 240 : index
    %c0_66 = arith.constant 0 : index
    %220 = vector.load %arg1[%c240, %c0_66] : memref<1408x128xf32, #tpu.memory_space<vmem>>, vector<1x32xf32>
    %221 = vector.broadcast %220 : vector<1x32xf32> to vector<2x32xf32>
    %222 = arith.addf %219, %221 : vector<2x32xf32>
    %223 = vector.extract_strided_slice %216 {offsets = [0, 0], sizes = [1, 32], strides = [1, 1]} : vector<2x32xf32> to vector<1x32xf32>
    %224 = vector.broadcast %223 : vector<1x32xf32> to vector<2x32xf32>
    %225 = arith.mulf %215, %224 : vector<2x32xf32>
    %cst_67 = arith.constant dense<0.000000e+00> : vector<2xf32>
    %226 = vector.multi_reduction <add>, %225, %cst_67 [1] : vector<2x32xf32> to vector<2xf32>
    %227 = vector.shape_cast %226 : vector<2xf32> to vector<2x1xf32>
    %228 = vector.extract_strided_slice %217 {offsets = [0, 0], sizes = [1, 1], strides = [1, 1]} : vector<1x2xf32> to vector<1x1xf32>
    %229 = vector.broadcast %228 : vector<1x1xf32> to vector<2x1xf32>
    %230 = arith.addf %227, %229 : vector<2x1xf32>
    %cst_68 = arith.constant 0.000000e+00 : f32
    %231 = vector.broadcast %cst_68 : f32 to vector<2x1xf32>
    %232 = arith.maximumf %230, %231 : vector<2x1xf32>
    %233 = vector.extract_strided_slice %218 {offsets = [0, 0], sizes = [1, 32], strides = [1, 1]} : vector<2x32xf32> to vector<1x32xf32>
    %234 = vector.broadcast %232 : vector<2x1xf32> to vector<2x32xf32>
    %235 = vector.broadcast %233 : vector<1x32xf32> to vector<2x32xf32>
    %236 = arith.mulf %234, %235 : vector<2x32xf32>
    %237 = arith.addf %222, %236 : vector<2x32xf32>
    %238 = vector.extract_strided_slice %216 {offsets = [1, 0], sizes = [1, 32], strides = [1, 1]} : vector<2x32xf32> to vector<1x32xf32>
    %239 = vector.broadcast %238 : vector<1x32xf32> to vector<2x32xf32>
    %240 = arith.mulf %215, %239 : vector<2x32xf32>
    %cst_69 = arith.constant dense<0.000000e+00> : vector<2xf32>
    %241 = vector.multi_reduction <add>, %240, %cst_69 [1] : vector<2x32xf32> to vector<2xf32>
    %242 = vector.shape_cast %241 : vector<2xf32> to vector<2x1xf32>
    %243 = vector.extract_strided_slice %217 {offsets = [0, 1], sizes = [1, 1], strides = [1, 1]} : vector<1x2xf32> to vector<1x1xf32>
    %244 = vector.broadcast %243 : vector<1x1xf32> to vector<2x1xf32>
    %245 = arith.addf %242, %244 : vector<2x1xf32>
    %cst_70 = arith.constant 0.000000e+00 : f32
    %246 = vector.broadcast %cst_70 : f32 to vector<2x1xf32>
    %247 = arith.maximumf %245, %246 : vector<2x1xf32>
    %248 = vector.extract_strided_slice %218 {offsets = [1, 0], sizes = [1, 32], strides = [1, 1]} : vector<2x32xf32> to vector<1x32xf32>
    %249 = vector.broadcast %247 : vector<2x1xf32> to vector<2x32xf32>
    %250 = vector.broadcast %248 : vector<1x32xf32> to vector<2x32xf32>
    %251 = arith.mulf %249, %250 : vector<2x32xf32>
    %252 = arith.addf %237, %251 : vector<2x32xf32>
    %c320 = arith.constant 320 : index
    %c0_71 = arith.constant 0 : index
    %253 = vector.load %arg1[%c320, %c0_71] : memref<1408x128xf32, #tpu.memory_space<vmem>>, vector<72x2xf32>
    %254 = vector.extract_strided_slice %253 {offsets = [0, 0], sizes = [72, 1], strides = [1, 1]} : vector<72x2xf32> to vector<72x1xf32>
    %255 = vector.extract_strided_slice %253 {offsets = [0, 1], sizes = [72, 1], strides = [1, 1]} : vector<72x2xf32> to vector<72x1xf32>
    %cst_72 = arith.constant 0.000000e+00 : f32
    %256 = vector.broadcast %cst_72 : f32 to vector<72x32xf32>
    %cst_73 = arith.constant 0.000000e+00 : f32
    %257 = vector.broadcast %cst_73 : f32 to vector<72x1xf32>
    %258 = arith.cmpf oeq, %255, %257 : vector<72x1xf32>
    %259 = vector.extract_strided_slice %252 {offsets = [0, 0], sizes = [1, 32], strides = [1, 1]} : vector<2x32xf32> to vector<1x32xf32>
    %cst_74 = arith.constant 0.000000e+00 : f32
    %260 = vector.shape_cast %258 : vector<72x1xi1> to vector<72x1xi1>
    %261 = vector.broadcast %260 : vector<72x1xi1> to vector<72x32xi1>
    %262 = vector.shape_cast %259 : vector<1x32xf32> to vector<1x32xf32>
    %263 = vector.broadcast %262 : vector<1x32xf32> to vector<72x32xf32>
    %264 = vector.broadcast %cst_74 : f32 to vector<72x32xf32>
    %265 = arith.select %261, %263, %264 : vector<72x32xi1>, vector<72x32xf32>
    %266 = arith.addf %256, %265 : vector<72x32xf32>
    %cst_75 = arith.constant 1.000000e+00 : f32
    %267 = vector.broadcast %cst_75 : f32 to vector<72x1xf32>
    %268 = arith.cmpf oeq, %255, %267 : vector<72x1xf32>
    %269 = vector.extract_strided_slice %252 {offsets = [1, 0], sizes = [1, 32], strides = [1, 1]} : vector<2x32xf32> to vector<1x32xf32>
    %cst_76 = arith.constant 0.000000e+00 : f32
    %270 = vector.shape_cast %268 : vector<72x1xi1> to vector<72x1xi1>
    %271 = vector.broadcast %270 : vector<72x1xi1> to vector<72x32xi1>
    %272 = vector.shape_cast %269 : vector<1x32xf32> to vector<1x32xf32>
    %273 = vector.broadcast %272 : vector<1x32xf32> to vector<72x32xf32>
    %274 = vector.broadcast %cst_76 : f32 to vector<72x32xf32>
    %275 = arith.select %271, %273, %274 : vector<72x32xi1>, vector<72x32xf32>
    %276 = arith.addf %266, %275 : vector<72x32xf32>
    %c248 = arith.constant 248 : index
    %c0_77 = arith.constant 0 : index
    %277 = vector.load %arg1[%c248, %c0_77] : memref<1408x128xf32, #tpu.memory_space<vmem>>, vector<72x32xf32>
    %278 = vector.broadcast %254 : vector<72x1xf32> to vector<72x32xf32>
    %279 = arith.mulf %278, %276 : vector<72x32xf32>
    %280 = arith.addf %277, %279 : vector<72x32xf32>
    %c392 = arith.constant 392 : index
    %c0_78 = arith.constant 0 : index
    %281 = vector.load %arg1[%c392, %c0_78] : memref<1408x128xf32, #tpu.memory_space<vmem>>, vector<72x72xf32>
    %c832 = arith.constant 832 : index
    %c0_79 = arith.constant 0 : index
    %282 = vector.load %arg1[%c832, %c0_79] : memref<1408x128xf32, #tpu.memory_space<vmem>>, vector<1x32xf32>
    %c840 = arith.constant 840 : index
    %c0_80 = arith.constant 0 : index
    %283 = vector.load %arg1[%c840, %c0_80] : memref<1408x128xf32, #tpu.memory_space<vmem>>, vector<1x32xf32>
    %c848 = arith.constant 848 : index
    %c0_81 = arith.constant 0 : index
    %284 = vector.load %arg1[%c848, %c0_81] : memref<1408x128xf32, #tpu.memory_space<vmem>>, vector<32x96xf32>
    %c880 = arith.constant 880 : index
    %c0_82 = arith.constant 0 : index
    %285 = vector.load %arg1[%c880, %c0_82] : memref<1408x128xf32, #tpu.memory_space<vmem>>, vector<1x96xf32>
    %c888 = arith.constant 888 : index
    %c0_83 = arith.constant 0 : index
    %286 = vector.load %arg1[%c888, %c0_83] : memref<1408x128xf32, #tpu.memory_space<vmem>>, vector<32x32xf32>
    %c920 = arith.constant 920 : index
    %c0_84 = arith.constant 0 : index
    %287 = vector.load %arg1[%c920, %c0_84] : memref<1408x128xf32, #tpu.memory_space<vmem>>, vector<1x32xf32>
    %c928 = arith.constant 928 : index
    %c0_85 = arith.constant 0 : index
    %288 = vector.load %arg1[%c928, %c0_85] : memref<1408x128xf32, #tpu.memory_space<vmem>>, vector<1x32xf32>
    %c936 = arith.constant 936 : index
    %c0_86 = arith.constant 0 : index
    %289 = vector.load %arg1[%c936, %c0_86] : memref<1408x128xf32, #tpu.memory_space<vmem>>, vector<1x32xf32>
    %c944 = arith.constant 944 : index
    %c0_87 = arith.constant 0 : index
    %290 = vector.load %arg1[%c944, %c0_87] : memref<1408x128xf32, #tpu.memory_space<vmem>>, vector<32x128xf32>
    %c976 = arith.constant 976 : index
    %c0_88 = arith.constant 0 : index
    %291 = vector.load %arg1[%c976, %c0_88] : memref<1408x128xf32, #tpu.memory_space<vmem>>, vector<1x128xf32>
    %c984 = arith.constant 984 : index
    %c0_89 = arith.constant 0 : index
    %292 = vector.load %arg1[%c984, %c0_89] : memref<1408x128xf32, #tpu.memory_space<vmem>>, vector<128x32xf32>
    %c1112 = arith.constant 1112 : index
    %c0_90 = arith.constant 0 : index
    %293 = vector.load %arg1[%c1112, %c0_90] : memref<1408x128xf32, #tpu.memory_space<vmem>>, vector<1x32xf32>
    %cst_91 = arith.constant dense<0.000000e+00> : vector<72xf32>
    %294 = vector.multi_reduction <add>, %280, %cst_91 [1] : vector<72x32xf32> to vector<72xf32>
    %295 = vector.shape_cast %294 : vector<72xf32> to vector<72x1xf32>
    %cst_92 = arith.constant 3.200000e+01 : f32
    %296 = vector.broadcast %cst_92 : f32 to vector<72x1xf32>
    %297 = arith.divf %295, %296 : vector<72x1xf32>
    %298 = vector.broadcast %297 : vector<72x1xf32> to vector<72x32xf32>
    %299 = arith.subf %280, %298 : vector<72x32xf32>
    %300 = arith.mulf %299, %299 : vector<72x32xf32>
    %cst_93 = arith.constant dense<0.000000e+00> : vector<72xf32>
    %301 = vector.multi_reduction <add>, %300, %cst_93 [1] : vector<72x32xf32> to vector<72xf32>
    %302 = vector.shape_cast %301 : vector<72xf32> to vector<72x1xf32>
    %cst_94 = arith.constant 3.200000e+01 : f32
    %303 = vector.broadcast %cst_94 : f32 to vector<72x1xf32>
    %304 = arith.divf %302, %303 : vector<72x1xf32>
    %cst_95 = arith.constant 9.99999974E-6 : f32
    %305 = vector.broadcast %cst_95 : f32 to vector<72x1xf32>
    %306 = arith.addf %304, %305 : vector<72x1xf32>
    %307 = math.rsqrt %306 : vector<72x1xf32>
    %308 = vector.broadcast %307 : vector<72x1xf32> to vector<72x32xf32>
    %309 = arith.mulf %299, %308 : vector<72x32xf32>
    %310 = vector.broadcast %282 : vector<1x32xf32> to vector<72x32xf32>
    %311 = arith.mulf %309, %310 : vector<72x32xf32>
    %312 = vector.broadcast %283 : vector<1x32xf32> to vector<72x32xf32>
    %313 = arith.addf %311, %312 : vector<72x32xf32>
    %314 = arith.truncf %313 : vector<72x32xf32> to vector<72x32xbf16>
    %315 = arith.truncf %284 : vector<32x96xf32> to vector<32x96xbf16>
    %cst_96 = arith.constant dense<0.000000e+00> : vector<72x96xf32>
    %316 = tpu.matmul %314, %315, %cst_96 {dimension_numbers = #tpu.dot_dimension_numbers<[1], [0], [0], [1], [0, 0, 1, 1], [], []>} : vector<72x32xbf16>, vector<32x96xbf16>, vector<72x96xf32> -> vector<72x96xf32>
    %317 = vector.broadcast %285 : vector<1x96xf32> to vector<72x96xf32>
    %318 = arith.addf %316, %317 : vector<72x96xf32>
    %319 = vector.extract_strided_slice %318 {offsets = [0, 0], sizes = [72, 8], strides = [1, 1]} : vector<72x96xf32> to vector<72x8xf32>
    %320 = vector.extract_strided_slice %318 {offsets = [0, 32], sizes = [72, 8], strides = [1, 1]} : vector<72x96xf32> to vector<72x8xf32>
    %321 = vector.extract_strided_slice %318 {offsets = [0, 64], sizes = [72, 8], strides = [1, 1]} : vector<72x96xf32> to vector<72x8xf32>
    %322 = tpu.transpose %320, [1, 0] : vector<72x8xf32> -> vector<8x72xf32>
    %323 = arith.truncf %319 : vector<72x8xf32> to vector<72x8xbf16>
    %324 = arith.truncf %322 : vector<8x72xf32> to vector<8x72xbf16>
    %cst_97 = arith.constant dense<0.000000e+00> : vector<72x72xf32>
    %325 = tpu.matmul %323, %324, %cst_97 {dimension_numbers = #tpu.dot_dimension_numbers<[1], [0], [0], [1], [0, 0, 1, 1], [], []>} : vector<72x8xbf16>, vector<8x72xbf16>, vector<72x72xf32> -> vector<72x72xf32>
    %cst_98 = arith.constant 0.353553385 : f32
    %326 = vector.broadcast %cst_98 : f32 to vector<72x72xf32>
    %327 = arith.mulf %325, %326 : vector<72x72xf32>
    %328 = arith.addf %327, %281 : vector<72x72xf32>
    %cst_99 = arith.constant dense<0xFF800000> : vector<72xf32>
    %329 = vector.multi_reduction <maximumf>, %328, %cst_99 [1] : vector<72x72xf32> to vector<72xf32>
    %330 = vector.shape_cast %329 : vector<72xf32> to vector<72x1xf32>
    %331 = vector.broadcast %330 : vector<72x1xf32> to vector<72x72xf32>
    %332 = arith.subf %328, %331 : vector<72x72xf32>
    %333 = math.exp %332 : vector<72x72xf32>
    %cst_100 = arith.constant dense<0.000000e+00> : vector<72xf32>
    %334 = vector.multi_reduction <add>, %333, %cst_100 [1] : vector<72x72xf32> to vector<72xf32>
    %335 = vector.shape_cast %334 : vector<72xf32> to vector<72x1xf32>
    %336 = tpu.reciprocal %335 {approx = true} : vector<72x1xf32> -> vector<72x1xf32>
    %337 = vector.broadcast %336 : vector<72x1xf32> to vector<72x72xf32>
    %338 = arith.mulf %333, %337 : vector<72x72xf32>
    %339 = arith.truncf %338 : vector<72x72xf32> to vector<72x72xbf16>
    %340 = arith.truncf %321 : vector<72x8xf32> to vector<72x8xbf16>
    %cst_101 = arith.constant dense<0.000000e+00> : vector<72x8xf32>
    %341 = tpu.matmul %339, %340, %cst_101 {dimension_numbers = #tpu.dot_dimension_numbers<[1], [0], [0], [1], [0, 0, 1, 1], [], []>} : vector<72x72xbf16>, vector<72x8xbf16>, vector<72x8xf32> -> vector<72x8xf32>
    %342 = vector.extract_strided_slice %318 {offsets = [0, 8], sizes = [72, 8], strides = [1, 1]} : vector<72x96xf32> to vector<72x8xf32>
    %343 = vector.extract_strided_slice %318 {offsets = [0, 40], sizes = [72, 8], strides = [1, 1]} : vector<72x96xf32> to vector<72x8xf32>
    %344 = vector.extract_strided_slice %318 {offsets = [0, 72], sizes = [72, 8], strides = [1, 1]} : vector<72x96xf32> to vector<72x8xf32>
    %345 = tpu.transpose %343, [1, 0] : vector<72x8xf32> -> vector<8x72xf32>
    %346 = arith.truncf %342 : vector<72x8xf32> to vector<72x8xbf16>
    %347 = arith.truncf %345 : vector<8x72xf32> to vector<8x72xbf16>
    %cst_102 = arith.constant dense<0.000000e+00> : vector<72x72xf32>
    %348 = tpu.matmul %346, %347, %cst_102 {dimension_numbers = #tpu.dot_dimension_numbers<[1], [0], [0], [1], [0, 0, 1, 1], [], []>} : vector<72x8xbf16>, vector<8x72xbf16>, vector<72x72xf32> -> vector<72x72xf32>
    %cst_103 = arith.constant 0.353553385 : f32
    %349 = vector.broadcast %cst_103 : f32 to vector<72x72xf32>
    %350 = arith.mulf %348, %349 : vector<72x72xf32>
    %351 = arith.addf %350, %281 : vector<72x72xf32>
    %cst_104 = arith.constant dense<0xFF800000> : vector<72xf32>
    %352 = vector.multi_reduction <maximumf>, %351, %cst_104 [1] : vector<72x72xf32> to vector<72xf32>
    %353 = vector.shape_cast %352 : vector<72xf32> to vector<72x1xf32>
    %354 = vector.broadcast %353 : vector<72x1xf32> to vector<72x72xf32>
    %355 = arith.subf %351, %354 : vector<72x72xf32>
    %356 = math.exp %355 : vector<72x72xf32>
    %cst_105 = arith.constant dense<0.000000e+00> : vector<72xf32>
    %357 = vector.multi_reduction <add>, %356, %cst_105 [1] : vector<72x72xf32> to vector<72xf32>
    %358 = vector.shape_cast %357 : vector<72xf32> to vector<72x1xf32>
    %359 = tpu.reciprocal %358 {approx = true} : vector<72x1xf32> -> vector<72x1xf32>
    %360 = vector.broadcast %359 : vector<72x1xf32> to vector<72x72xf32>
    %361 = arith.mulf %356, %360 : vector<72x72xf32>
    %362 = arith.truncf %361 : vector<72x72xf32> to vector<72x72xbf16>
    %363 = arith.truncf %344 : vector<72x8xf32> to vector<72x8xbf16>
    %cst_106 = arith.constant dense<0.000000e+00> : vector<72x8xf32>
    %364 = tpu.matmul %362, %363, %cst_106 {dimension_numbers = #tpu.dot_dimension_numbers<[1], [0], [0], [1], [0, 0, 1, 1], [], []>} : vector<72x72xbf16>, vector<72x8xbf16>, vector<72x8xf32> -> vector<72x8xf32>
    %365 = vector.extract_strided_slice %318 {offsets = [0, 16], sizes = [72, 8], strides = [1, 1]} : vector<72x96xf32> to vector<72x8xf32>
    %366 = vector.extract_strided_slice %318 {offsets = [0, 48], sizes = [72, 8], strides = [1, 1]} : vector<72x96xf32> to vector<72x8xf32>
    %367 = vector.extract_strided_slice %318 {offsets = [0, 80], sizes = [72, 8], strides = [1, 1]} : vector<72x96xf32> to vector<72x8xf32>
    %368 = tpu.transpose %366, [1, 0] : vector<72x8xf32> -> vector<8x72xf32>
    %369 = arith.truncf %365 : vector<72x8xf32> to vector<72x8xbf16>
    %370 = arith.truncf %368 : vector<8x72xf32> to vector<8x72xbf16>
    %cst_107 = arith.constant dense<0.000000e+00> : vector<72x72xf32>
    %371 = tpu.matmul %369, %370, %cst_107 {dimension_numbers = #tpu.dot_dimension_numbers<[1], [0], [0], [1], [0, 0, 1, 1], [], []>} : vector<72x8xbf16>, vector<8x72xbf16>, vector<72x72xf32> -> vector<72x72xf32>
    %cst_108 = arith.constant 0.353553385 : f32
    %372 = vector.broadcast %cst_108 : f32 to vector<72x72xf32>
    %373 = arith.mulf %371, %372 : vector<72x72xf32>
    %374 = arith.addf %373, %281 : vector<72x72xf32>
    %cst_109 = arith.constant dense<0xFF800000> : vector<72xf32>
    %375 = vector.multi_reduction <maximumf>, %374, %cst_109 [1] : vector<72x72xf32> to vector<72xf32>
    %376 = vector.shape_cast %375 : vector<72xf32> to vector<72x1xf32>
    %377 = vector.broadcast %376 : vector<72x1xf32> to vector<72x72xf32>
    %378 = arith.subf %374, %377 : vector<72x72xf32>
    %379 = math.exp %378 : vector<72x72xf32>
    %cst_110 = arith.constant dense<0.000000e+00> : vector<72xf32>
    %380 = vector.multi_reduction <add>, %379, %cst_110 [1] : vector<72x72xf32> to vector<72xf32>
    %381 = vector.shape_cast %380 : vector<72xf32> to vector<72x1xf32>
    %382 = tpu.reciprocal %381 {approx = true} : vector<72x1xf32> -> vector<72x1xf32>
    %383 = vector.broadcast %382 : vector<72x1xf32> to vector<72x72xf32>
    %384 = arith.mulf %379, %383 : vector<72x72xf32>
    %385 = arith.truncf %384 : vector<72x72xf32> to vector<72x72xbf16>
    %386 = arith.truncf %367 : vector<72x8xf32> to vector<72x8xbf16>
    %cst_111 = arith.constant dense<0.000000e+00> : vector<72x8xf32>
    %387 = tpu.matmul %385, %386, %cst_111 {dimension_numbers = #tpu.dot_dimension_numbers<[1], [0], [0], [1], [0, 0, 1, 1], [], []>} : vector<72x72xbf16>, vector<72x8xbf16>, vector<72x8xf32> -> vector<72x8xf32>
    %388 = vector.extract_strided_slice %318 {offsets = [0, 24], sizes = [72, 8], strides = [1, 1]} : vector<72x96xf32> to vector<72x8xf32>
    %389 = vector.extract_strided_slice %318 {offsets = [0, 56], sizes = [72, 8], strides = [1, 1]} : vector<72x96xf32> to vector<72x8xf32>
    %390 = vector.extract_strided_slice %318 {offsets = [0, 88], sizes = [72, 8], strides = [1, 1]} : vector<72x96xf32> to vector<72x8xf32>
    %391 = tpu.transpose %389, [1, 0] : vector<72x8xf32> -> vector<8x72xf32>
    %392 = arith.truncf %388 : vector<72x8xf32> to vector<72x8xbf16>
    %393 = arith.truncf %391 : vector<8x72xf32> to vector<8x72xbf16>
    %cst_112 = arith.constant dense<0.000000e+00> : vector<72x72xf32>
    %394 = tpu.matmul %392, %393, %cst_112 {dimension_numbers = #tpu.dot_dimension_numbers<[1], [0], [0], [1], [0, 0, 1, 1], [], []>} : vector<72x8xbf16>, vector<8x72xbf16>, vector<72x72xf32> -> vector<72x72xf32>
    %cst_113 = arith.constant 0.353553385 : f32
    %395 = vector.broadcast %cst_113 : f32 to vector<72x72xf32>
    %396 = arith.mulf %394, %395 : vector<72x72xf32>
    %397 = arith.addf %396, %281 : vector<72x72xf32>
    %cst_114 = arith.constant dense<0xFF800000> : vector<72xf32>
    %398 = vector.multi_reduction <maximumf>, %397, %cst_114 [1] : vector<72x72xf32> to vector<72xf32>
    %399 = vector.shape_cast %398 : vector<72xf32> to vector<72x1xf32>
    %400 = vector.broadcast %399 : vector<72x1xf32> to vector<72x72xf32>
    %401 = arith.subf %397, %400 : vector<72x72xf32>
    %402 = math.exp %401 : vector<72x72xf32>
    %cst_115 = arith.constant dense<0.000000e+00> : vector<72xf32>
    %403 = vector.multi_reduction <add>, %402, %cst_115 [1] : vector<72x72xf32> to vector<72xf32>
    %404 = vector.shape_cast %403 : vector<72xf32> to vector<72x1xf32>
    %405 = tpu.reciprocal %404 {approx = true} : vector<72x1xf32> -> vector<72x1xf32>
    %406 = vector.broadcast %405 : vector<72x1xf32> to vector<72x72xf32>
    %407 = arith.mulf %402, %406 : vector<72x72xf32>
    %408 = arith.truncf %407 : vector<72x72xf32> to vector<72x72xbf16>
    %409 = arith.truncf %390 : vector<72x8xf32> to vector<72x8xbf16>
    %cst_116 = arith.constant dense<0.000000e+00> : vector<72x8xf32>
    %410 = tpu.matmul %408, %409, %cst_116 {dimension_numbers = #tpu.dot_dimension_numbers<[1], [0], [0], [1], [0, 0, 1, 1], [], []>} : vector<72x72xbf16>, vector<72x8xbf16>, vector<72x8xf32> -> vector<72x8xf32>
    %411 = tpu.concatenate %341, %364, %387, %410 in 1 : vector<72x8xf32>, vector<72x8xf32>, vector<72x8xf32>, vector<72x8xf32> -> vector<72x32xf32>
    %412 = arith.truncf %411 : vector<72x32xf32> to vector<72x32xbf16>
    %413 = arith.truncf %286 : vector<32x32xf32> to vector<32x32xbf16>
    %cst_117 = arith.constant dense<0.000000e+00> : vector<72x32xf32>
    %414 = tpu.matmul %412, %413, %cst_117 {dimension_numbers = #tpu.dot_dimension_numbers<[1], [0], [0], [1], [0, 0, 1, 1], [], []>} : vector<72x32xbf16>, vector<32x32xbf16>, vector<72x32xf32> -> vector<72x32xf32>
    %415 = arith.addf %280, %414 : vector<72x32xf32>
    %416 = vector.broadcast %287 : vector<1x32xf32> to vector<72x32xf32>
    %417 = arith.addf %415, %416 : vector<72x32xf32>
    %cst_118 = arith.constant dense<0.000000e+00> : vector<72xf32>
    %418 = vector.multi_reduction <add>, %417, %cst_118 [1] : vector<72x32xf32> to vector<72xf32>
    %419 = vector.shape_cast %418 : vector<72xf32> to vector<72x1xf32>
    %cst_119 = arith.constant 3.200000e+01 : f32
    %420 = vector.broadcast %cst_119 : f32 to vector<72x1xf32>
    %421 = arith.divf %419, %420 : vector<72x1xf32>
    %422 = vector.broadcast %421 : vector<72x1xf32> to vector<72x32xf32>
    %423 = arith.subf %417, %422 : vector<72x32xf32>
    %424 = arith.mulf %423, %423 : vector<72x32xf32>
    %cst_120 = arith.constant dense<0.000000e+00> : vector<72xf32>
    %425 = vector.multi_reduction <add>, %424, %cst_120 [1] : vector<72x32xf32> to vector<72xf32>
    %426 = vector.shape_cast %425 : vector<72xf32> to vector<72x1xf32>
    %cst_121 = arith.constant 3.200000e+01 : f32
    %427 = vector.broadcast %cst_121 : f32 to vector<72x1xf32>
    %428 = arith.divf %426, %427 : vector<72x1xf32>
    %cst_122 = arith.constant 9.99999974E-6 : f32
    %429 = vector.broadcast %cst_122 : f32 to vector<72x1xf32>
    %430 = arith.addf %428, %429 : vector<72x1xf32>
    %431 = math.rsqrt %430 : vector<72x1xf32>
    %432 = vector.broadcast %431 : vector<72x1xf32> to vector<72x32xf32>
    %433 = arith.mulf %423, %432 : vector<72x32xf32>
    %434 = vector.broadcast %288 : vector<1x32xf32> to vector<72x32xf32>
    %435 = arith.mulf %433, %434 : vector<72x32xf32>
    %436 = vector.broadcast %289 : vector<1x32xf32> to vector<72x32xf32>
    %437 = arith.addf %435, %436 : vector<72x32xf32>
    %438 = arith.truncf %437 : vector<72x32xf32> to vector<72x32xbf16>
    %439 = arith.truncf %290 : vector<32x128xf32> to vector<32x128xbf16>
    %cst_123 = arith.constant dense<0.000000e+00> : vector<72x128xf32>
    %440 = tpu.matmul %438, %439, %cst_123 {dimension_numbers = #tpu.dot_dimension_numbers<[1], [0], [0], [1], [0, 0, 1, 1], [], []>} : vector<72x32xbf16>, vector<32x128xbf16>, vector<72x128xf32> -> vector<72x128xf32>
    %441 = vector.broadcast %291 : vector<1x128xf32> to vector<72x128xf32>
    %442 = arith.addf %440, %441 : vector<72x128xf32>
    %cst_124 = arith.constant 1.702000e+00 : f32
    %443 = vector.broadcast %cst_124 : f32 to vector<72x128xf32>
    %444 = arith.mulf %443, %442 : vector<72x128xf32>
    %445 = arith.negf %444 : vector<72x128xf32>
    %446 = math.exp %445 : vector<72x128xf32>
    %cst_125 = arith.constant 1.000000e+00 : f32
    %447 = vector.broadcast %cst_125 : f32 to vector<72x128xf32>
    %448 = arith.addf %447, %446 : vector<72x128xf32>
    %449 = arith.divf %447, %448 : vector<72x128xf32>
    %450 = arith.mulf %442, %449 : vector<72x128xf32>
    %451 = arith.truncf %450 : vector<72x128xf32> to vector<72x128xbf16>
    %452 = arith.truncf %292 : vector<128x32xf32> to vector<128x32xbf16>
    %cst_126 = arith.constant dense<0.000000e+00> : vector<72x32xf32>
    %453 = tpu.matmul %451, %452, %cst_126 {dimension_numbers = #tpu.dot_dimension_numbers<[1], [0], [0], [1], [0, 0, 1, 1], [], []>} : vector<72x128xbf16>, vector<128x32xbf16>, vector<72x32xf32> -> vector<72x32xf32>
    %454 = arith.addf %417, %453 : vector<72x32xf32>
    %455 = vector.broadcast %293 : vector<1x32xf32> to vector<72x32xf32>
    %456 = arith.addf %454, %455 : vector<72x32xf32>
    %c1120 = arith.constant 1120 : index
    %c0_127 = arith.constant 0 : index
    %457 = vector.load %arg1[%c1120, %c0_127] : memref<1408x128xf32, #tpu.memory_space<vmem>>, vector<1x32xf32>
    %c1128 = arith.constant 1128 : index
    %c0_128 = arith.constant 0 : index
    %458 = vector.load %arg1[%c1128, %c0_128] : memref<1408x128xf32, #tpu.memory_space<vmem>>, vector<1x32xf32>
    %c1136 = arith.constant 1136 : index
    %c0_129 = arith.constant 0 : index
    %459 = vector.load %arg1[%c1136, %c0_129] : memref<1408x128xf32, #tpu.memory_space<vmem>>, vector<32x96xf32>
    %c1168 = arith.constant 1168 : index
    %c0_130 = arith.constant 0 : index
    %460 = vector.load %arg1[%c1168, %c0_130] : memref<1408x128xf32, #tpu.memory_space<vmem>>, vector<1x96xf32>
    %c1176 = arith.constant 1176 : index
    %c0_131 = arith.constant 0 : index
    %461 = vector.load %arg1[%c1176, %c0_131] : memref<1408x128xf32, #tpu.memory_space<vmem>>, vector<32x32xf32>
    %c1208 = arith.constant 1208 : index
    %c0_132 = arith.constant 0 : index
    %462 = vector.load %arg1[%c1208, %c0_132] : memref<1408x128xf32, #tpu.memory_space<vmem>>, vector<1x32xf32>
    %c1216 = arith.constant 1216 : index
    %c0_133 = arith.constant 0 : index
    %463 = vector.load %arg1[%c1216, %c0_133] : memref<1408x128xf32, #tpu.memory_space<vmem>>, vector<1x32xf32>
    %c1224 = arith.constant 1224 : index
    %c0_134 = arith.constant 0 : index
    %464 = vector.load %arg1[%c1224, %c0_134] : memref<1408x128xf32, #tpu.memory_space<vmem>>, vector<1x32xf32>
    %c1232 = arith.constant 1232 : index
    %c0_135 = arith.constant 0 : index
    %465 = vector.load %arg1[%c1232, %c0_135] : memref<1408x128xf32, #tpu.memory_space<vmem>>, vector<32x128xf32>
    %c1264 = arith.constant 1264 : index
    %c0_136 = arith.constant 0 : index
    %466 = vector.load %arg1[%c1264, %c0_136] : memref<1408x128xf32, #tpu.memory_space<vmem>>, vector<1x128xf32>
    %c1272 = arith.constant 1272 : index
    %c0_137 = arith.constant 0 : index
    %467 = vector.load %arg1[%c1272, %c0_137] : memref<1408x128xf32, #tpu.memory_space<vmem>>, vector<128x32xf32>
    %c1400 = arith.constant 1400 : index
    %c0_138 = arith.constant 0 : index
    %468 = vector.load %arg1[%c1400, %c0_138] : memref<1408x128xf32, #tpu.memory_space<vmem>>, vector<1x32xf32>
    %cst_139 = arith.constant dense<0.000000e+00> : vector<72xf32>
    %469 = vector.multi_reduction <add>, %456, %cst_139 [1] : vector<72x32xf32> to vector<72xf32>
    %470 = vector.shape_cast %469 : vector<72xf32> to vector<72x1xf32>
    %cst_140 = arith.constant 3.200000e+01 : f32
    %471 = vector.broadcast %cst_140 : f32 to vector<72x1xf32>
    %472 = arith.divf %470, %471 : vector<72x1xf32>
    %473 = vector.broadcast %472 : vector<72x1xf32> to vector<72x32xf32>
    %474 = arith.subf %456, %473 : vector<72x32xf32>
    %475 = arith.mulf %474, %474 : vector<72x32xf32>
    %cst_141 = arith.constant dense<0.000000e+00> : vector<72xf32>
    %476 = vector.multi_reduction <add>, %475, %cst_141 [1] : vector<72x32xf32> to vector<72xf32>
    %477 = vector.shape_cast %476 : vector<72xf32> to vector<72x1xf32>
    %cst_142 = arith.constant 3.200000e+01 : f32
    %478 = vector.broadcast %cst_142 : f32 to vector<72x1xf32>
    %479 = arith.divf %477, %478 : vector<72x1xf32>
    %cst_143 = arith.constant 9.99999974E-6 : f32
    %480 = vector.broadcast %cst_143 : f32 to vector<72x1xf32>
    %481 = arith.addf %479, %480 : vector<72x1xf32>
    %482 = math.rsqrt %481 : vector<72x1xf32>
    %483 = vector.broadcast %482 : vector<72x1xf32> to vector<72x32xf32>
    %484 = arith.mulf %474, %483 : vector<72x32xf32>
    %485 = vector.broadcast %457 : vector<1x32xf32> to vector<72x32xf32>
    %486 = arith.mulf %484, %485 : vector<72x32xf32>
    %487 = vector.broadcast %458 : vector<1x32xf32> to vector<72x32xf32>
    %488 = arith.addf %486, %487 : vector<72x32xf32>
    %489 = arith.truncf %488 : vector<72x32xf32> to vector<72x32xbf16>
    %490 = arith.truncf %459 : vector<32x96xf32> to vector<32x96xbf16>
    %cst_144 = arith.constant dense<0.000000e+00> : vector<72x96xf32>
    %491 = tpu.matmul %489, %490, %cst_144 {dimension_numbers = #tpu.dot_dimension_numbers<[1], [0], [0], [1], [0, 0, 1, 1], [], []>} : vector<72x32xbf16>, vector<32x96xbf16>, vector<72x96xf32> -> vector<72x96xf32>
    %492 = vector.broadcast %460 : vector<1x96xf32> to vector<72x96xf32>
    %493 = arith.addf %491, %492 : vector<72x96xf32>
    %494 = vector.extract_strided_slice %493 {offsets = [0, 0], sizes = [72, 8], strides = [1, 1]} : vector<72x96xf32> to vector<72x8xf32>
    %495 = vector.extract_strided_slice %493 {offsets = [0, 32], sizes = [72, 8], strides = [1, 1]} : vector<72x96xf32> to vector<72x8xf32>
    %496 = vector.extract_strided_slice %493 {offsets = [0, 64], sizes = [72, 8], strides = [1, 1]} : vector<72x96xf32> to vector<72x8xf32>
    %497 = tpu.transpose %495, [1, 0] : vector<72x8xf32> -> vector<8x72xf32>
    %498 = arith.truncf %494 : vector<72x8xf32> to vector<72x8xbf16>
    %499 = arith.truncf %497 : vector<8x72xf32> to vector<8x72xbf16>
    %cst_145 = arith.constant dense<0.000000e+00> : vector<72x72xf32>
    %500 = tpu.matmul %498, %499, %cst_145 {dimension_numbers = #tpu.dot_dimension_numbers<[1], [0], [0], [1], [0, 0, 1, 1], [], []>} : vector<72x8xbf16>, vector<8x72xbf16>, vector<72x72xf32> -> vector<72x72xf32>
    %cst_146 = arith.constant 0.353553385 : f32
    %501 = vector.broadcast %cst_146 : f32 to vector<72x72xf32>
    %502 = arith.mulf %500, %501 : vector<72x72xf32>
    %503 = arith.addf %502, %281 : vector<72x72xf32>
    %cst_147 = arith.constant dense<0xFF800000> : vector<72xf32>
    %504 = vector.multi_reduction <maximumf>, %503, %cst_147 [1] : vector<72x72xf32> to vector<72xf32>
    %505 = vector.shape_cast %504 : vector<72xf32> to vector<72x1xf32>
    %506 = vector.broadcast %505 : vector<72x1xf32> to vector<72x72xf32>
    %507 = arith.subf %503, %506 : vector<72x72xf32>
    %508 = math.exp %507 : vector<72x72xf32>
    %cst_148 = arith.constant dense<0.000000e+00> : vector<72xf32>
    %509 = vector.multi_reduction <add>, %508, %cst_148 [1] : vector<72x72xf32> to vector<72xf32>
    %510 = vector.shape_cast %509 : vector<72xf32> to vector<72x1xf32>
    %511 = tpu.reciprocal %510 {approx = true} : vector<72x1xf32> -> vector<72x1xf32>
    %512 = vector.broadcast %511 : vector<72x1xf32> to vector<72x72xf32>
    %513 = arith.mulf %508, %512 : vector<72x72xf32>
    %514 = arith.truncf %513 : vector<72x72xf32> to vector<72x72xbf16>
    %515 = arith.truncf %496 : vector<72x8xf32> to vector<72x8xbf16>
    %cst_149 = arith.constant dense<0.000000e+00> : vector<72x8xf32>
    %516 = tpu.matmul %514, %515, %cst_149 {dimension_numbers = #tpu.dot_dimension_numbers<[1], [0], [0], [1], [0, 0, 1, 1], [], []>} : vector<72x72xbf16>, vector<72x8xbf16>, vector<72x8xf32> -> vector<72x8xf32>
    %517 = vector.extract_strided_slice %493 {offsets = [0, 8], sizes = [72, 8], strides = [1, 1]} : vector<72x96xf32> to vector<72x8xf32>
    %518 = vector.extract_strided_slice %493 {offsets = [0, 40], sizes = [72, 8], strides = [1, 1]} : vector<72x96xf32> to vector<72x8xf32>
    %519 = vector.extract_strided_slice %493 {offsets = [0, 72], sizes = [72, 8], strides = [1, 1]} : vector<72x96xf32> to vector<72x8xf32>
    %520 = tpu.transpose %518, [1, 0] : vector<72x8xf32> -> vector<8x72xf32>
    %521 = arith.truncf %517 : vector<72x8xf32> to vector<72x8xbf16>
    %522 = arith.truncf %520 : vector<8x72xf32> to vector<8x72xbf16>
    %cst_150 = arith.constant dense<0.000000e+00> : vector<72x72xf32>
    %523 = tpu.matmul %521, %522, %cst_150 {dimension_numbers = #tpu.dot_dimension_numbers<[1], [0], [0], [1], [0, 0, 1, 1], [], []>} : vector<72x8xbf16>, vector<8x72xbf16>, vector<72x72xf32> -> vector<72x72xf32>
    %cst_151 = arith.constant 0.353553385 : f32
    %524 = vector.broadcast %cst_151 : f32 to vector<72x72xf32>
    %525 = arith.mulf %523, %524 : vector<72x72xf32>
    %526 = arith.addf %525, %281 : vector<72x72xf32>
    %cst_152 = arith.constant dense<0xFF800000> : vector<72xf32>
    %527 = vector.multi_reduction <maximumf>, %526, %cst_152 [1] : vector<72x72xf32> to vector<72xf32>
    %528 = vector.shape_cast %527 : vector<72xf32> to vector<72x1xf32>
    %529 = vector.broadcast %528 : vector<72x1xf32> to vector<72x72xf32>
    %530 = arith.subf %526, %529 : vector<72x72xf32>
    %531 = math.exp %530 : vector<72x72xf32>
    %cst_153 = arith.constant dense<0.000000e+00> : vector<72xf32>
    %532 = vector.multi_reduction <add>, %531, %cst_153 [1] : vector<72x72xf32> to vector<72xf32>
    %533 = vector.shape_cast %532 : vector<72xf32> to vector<72x1xf32>
    %534 = tpu.reciprocal %533 {approx = true} : vector<72x1xf32> -> vector<72x1xf32>
    %535 = vector.broadcast %534 : vector<72x1xf32> to vector<72x72xf32>
    %536 = arith.mulf %531, %535 : vector<72x72xf32>
    %537 = arith.truncf %536 : vector<72x72xf32> to vector<72x72xbf16>
    %538 = arith.truncf %519 : vector<72x8xf32> to vector<72x8xbf16>
    %cst_154 = arith.constant dense<0.000000e+00> : vector<72x8xf32>
    %539 = tpu.matmul %537, %538, %cst_154 {dimension_numbers = #tpu.dot_dimension_numbers<[1], [0], [0], [1], [0, 0, 1, 1], [], []>} : vector<72x72xbf16>, vector<72x8xbf16>, vector<72x8xf32> -> vector<72x8xf32>
    %540 = vector.extract_strided_slice %493 {offsets = [0, 16], sizes = [72, 8], strides = [1, 1]} : vector<72x96xf32> to vector<72x8xf32>
    %541 = vector.extract_strided_slice %493 {offsets = [0, 48], sizes = [72, 8], strides = [1, 1]} : vector<72x96xf32> to vector<72x8xf32>
    %542 = vector.extract_strided_slice %493 {offsets = [0, 80], sizes = [72, 8], strides = [1, 1]} : vector<72x96xf32> to vector<72x8xf32>
    %543 = tpu.transpose %541, [1, 0] : vector<72x8xf32> -> vector<8x72xf32>
    %544 = arith.truncf %540 : vector<72x8xf32> to vector<72x8xbf16>
    %545 = arith.truncf %543 : vector<8x72xf32> to vector<8x72xbf16>
    %cst_155 = arith.constant dense<0.000000e+00> : vector<72x72xf32>
    %546 = tpu.matmul %544, %545, %cst_155 {dimension_numbers = #tpu.dot_dimension_numbers<[1], [0], [0], [1], [0, 0, 1, 1], [], []>} : vector<72x8xbf16>, vector<8x72xbf16>, vector<72x72xf32> -> vector<72x72xf32>
    %cst_156 = arith.constant 0.353553385 : f32
    %547 = vector.broadcast %cst_156 : f32 to vector<72x72xf32>
    %548 = arith.mulf %546, %547 : vector<72x72xf32>
    %549 = arith.addf %548, %281 : vector<72x72xf32>
    %cst_157 = arith.constant dense<0xFF800000> : vector<72xf32>
    %550 = vector.multi_reduction <maximumf>, %549, %cst_157 [1] : vector<72x72xf32> to vector<72xf32>
    %551 = vector.shape_cast %550 : vector<72xf32> to vector<72x1xf32>
    %552 = vector.broadcast %551 : vector<72x1xf32> to vector<72x72xf32>
    %553 = arith.subf %549, %552 : vector<72x72xf32>
    %554 = math.exp %553 : vector<72x72xf32>
    %cst_158 = arith.constant dense<0.000000e+00> : vector<72xf32>
    %555 = vector.multi_reduction <add>, %554, %cst_158 [1] : vector<72x72xf32> to vector<72xf32>
    %556 = vector.shape_cast %555 : vector<72xf32> to vector<72x1xf32>
    %557 = tpu.reciprocal %556 {approx = true} : vector<72x1xf32> -> vector<72x1xf32>
    %558 = vector.broadcast %557 : vector<72x1xf32> to vector<72x72xf32>
    %559 = arith.mulf %554, %558 : vector<72x72xf32>
    %560 = arith.truncf %559 : vector<72x72xf32> to vector<72x72xbf16>
    %561 = arith.truncf %542 : vector<72x8xf32> to vector<72x8xbf16>
    %cst_159 = arith.constant dense<0.000000e+00> : vector<72x8xf32>
    %562 = tpu.matmul %560, %561, %cst_159 {dimension_numbers = #tpu.dot_dimension_numbers<[1], [0], [0], [1], [0, 0, 1, 1], [], []>} : vector<72x72xbf16>, vector<72x8xbf16>, vector<72x8xf32> -> vector<72x8xf32>
    %563 = vector.extract_strided_slice %493 {offsets = [0, 24], sizes = [72, 8], strides = [1, 1]} : vector<72x96xf32> to vector<72x8xf32>
    %564 = vector.extract_strided_slice %493 {offsets = [0, 56], sizes = [72, 8], strides = [1, 1]} : vector<72x96xf32> to vector<72x8xf32>
    %565 = vector.extract_strided_slice %493 {offsets = [0, 88], sizes = [72, 8], strides = [1, 1]} : vector<72x96xf32> to vector<72x8xf32>
    %566 = tpu.transpose %564, [1, 0] : vector<72x8xf32> -> vector<8x72xf32>
    %567 = arith.truncf %563 : vector<72x8xf32> to vector<72x8xbf16>
    %568 = arith.truncf %566 : vector<8x72xf32> to vector<8x72xbf16>
    %cst_160 = arith.constant dense<0.000000e+00> : vector<72x72xf32>
    %569 = tpu.matmul %567, %568, %cst_160 {dimension_numbers = #tpu.dot_dimension_numbers<[1], [0], [0], [1], [0, 0, 1, 1], [], []>} : vector<72x8xbf16>, vector<8x72xbf16>, vector<72x72xf32> -> vector<72x72xf32>
    %cst_161 = arith.constant 0.353553385 : f32
    %570 = vector.broadcast %cst_161 : f32 to vector<72x72xf32>
    %571 = arith.mulf %569, %570 : vector<72x72xf32>
    %572 = arith.addf %571, %281 : vector<72x72xf32>
    %cst_162 = arith.constant dense<0xFF800000> : vector<72xf32>
    %573 = vector.multi_reduction <maximumf>, %572, %cst_162 [1] : vector<72x72xf32> to vector<72xf32>
    %574 = vector.shape_cast %573 : vector<72xf32> to vector<72x1xf32>
    %575 = vector.broadcast %574 : vector<72x1xf32> to vector<72x72xf32>
    %576 = arith.subf %572, %575 : vector<72x72xf32>
    %577 = math.exp %576 : vector<72x72xf32>
    %cst_163 = arith.constant dense<0.000000e+00> : vector<72xf32>
    %578 = vector.multi_reduction <add>, %577, %cst_163 [1] : vector<72x72xf32> to vector<72xf32>
    %579 = vector.shape_cast %578 : vector<72xf32> to vector<72x1xf32>
    %580 = tpu.reciprocal %579 {approx = true} : vector<72x1xf32> -> vector<72x1xf32>
    %581 = vector.broadcast %580 : vector<72x1xf32> to vector<72x72xf32>
    %582 = arith.mulf %577, %581 : vector<72x72xf32>
    %583 = arith.truncf %582 : vector<72x72xf32> to vector<72x72xbf16>
    %584 = arith.truncf %565 : vector<72x8xf32> to vector<72x8xbf16>
    %cst_164 = arith.constant dense<0.000000e+00> : vector<72x8xf32>
    %585 = tpu.matmul %583, %584, %cst_164 {dimension_numbers = #tpu.dot_dimension_numbers<[1], [0], [0], [1], [0, 0, 1, 1], [], []>} : vector<72x72xbf16>, vector<72x8xbf16>, vector<72x8xf32> -> vector<72x8xf32>
    %586 = tpu.concatenate %516, %539, %562, %585 in 1 : vector<72x8xf32>, vector<72x8xf32>, vector<72x8xf32>, vector<72x8xf32> -> vector<72x32xf32>
    %587 = arith.truncf %586 : vector<72x32xf32> to vector<72x32xbf16>
    %588 = arith.truncf %461 : vector<32x32xf32> to vector<32x32xbf16>
    %cst_165 = arith.constant dense<0.000000e+00> : vector<72x32xf32>
    %589 = tpu.matmul %587, %588, %cst_165 {dimension_numbers = #tpu.dot_dimension_numbers<[1], [0], [0], [1], [0, 0, 1, 1], [], []>} : vector<72x32xbf16>, vector<32x32xbf16>, vector<72x32xf32> -> vector<72x32xf32>
    %590 = arith.addf %456, %589 : vector<72x32xf32>
    %591 = vector.broadcast %462 : vector<1x32xf32> to vector<72x32xf32>
    %592 = arith.addf %590, %591 : vector<72x32xf32>
    %cst_166 = arith.constant dense<0.000000e+00> : vector<72xf32>
    %593 = vector.multi_reduction <add>, %592, %cst_166 [1] : vector<72x32xf32> to vector<72xf32>
    %594 = vector.shape_cast %593 : vector<72xf32> to vector<72x1xf32>
    %cst_167 = arith.constant 3.200000e+01 : f32
    %595 = vector.broadcast %cst_167 : f32 to vector<72x1xf32>
    %596 = arith.divf %594, %595 : vector<72x1xf32>
    %597 = vector.broadcast %596 : vector<72x1xf32> to vector<72x32xf32>
    %598 = arith.subf %592, %597 : vector<72x32xf32>
    %599 = arith.mulf %598, %598 : vector<72x32xf32>
    %cst_168 = arith.constant dense<0.000000e+00> : vector<72xf32>
    %600 = vector.multi_reduction <add>, %599, %cst_168 [1] : vector<72x32xf32> to vector<72xf32>
    %601 = vector.shape_cast %600 : vector<72xf32> to vector<72x1xf32>
    %cst_169 = arith.constant 3.200000e+01 : f32
    %602 = vector.broadcast %cst_169 : f32 to vector<72x1xf32>
    %603 = arith.divf %601, %602 : vector<72x1xf32>
    %cst_170 = arith.constant 9.99999974E-6 : f32
    %604 = vector.broadcast %cst_170 : f32 to vector<72x1xf32>
    %605 = arith.addf %603, %604 : vector<72x1xf32>
    %606 = math.rsqrt %605 : vector<72x1xf32>
    %607 = vector.broadcast %606 : vector<72x1xf32> to vector<72x32xf32>
    %608 = arith.mulf %598, %607 : vector<72x32xf32>
    %609 = vector.broadcast %463 : vector<1x32xf32> to vector<72x32xf32>
    %610 = arith.mulf %608, %609 : vector<72x32xf32>
    %611 = vector.broadcast %464 : vector<1x32xf32> to vector<72x32xf32>
    %612 = arith.addf %610, %611 : vector<72x32xf32>
    %613 = arith.truncf %612 : vector<72x32xf32> to vector<72x32xbf16>
    %614 = arith.truncf %465 : vector<32x128xf32> to vector<32x128xbf16>
    %cst_171 = arith.constant dense<0.000000e+00> : vector<72x128xf32>
    %615 = tpu.matmul %613, %614, %cst_171 {dimension_numbers = #tpu.dot_dimension_numbers<[1], [0], [0], [1], [0, 0, 1, 1], [], []>} : vector<72x32xbf16>, vector<32x128xbf16>, vector<72x128xf32> -> vector<72x128xf32>
    %616 = vector.broadcast %466 : vector<1x128xf32> to vector<72x128xf32>
    %617 = arith.addf %615, %616 : vector<72x128xf32>
    %cst_172 = arith.constant 1.702000e+00 : f32
    %618 = vector.broadcast %cst_172 : f32 to vector<72x128xf32>
    %619 = arith.mulf %618, %617 : vector<72x128xf32>
    %620 = arith.negf %619 : vector<72x128xf32>
    %621 = math.exp %620 : vector<72x128xf32>
    %cst_173 = arith.constant 1.000000e+00 : f32
    %622 = vector.broadcast %cst_173 : f32 to vector<72x128xf32>
    %623 = arith.addf %622, %621 : vector<72x128xf32>
    %624 = arith.divf %622, %623 : vector<72x128xf32>
    %625 = arith.mulf %617, %624 : vector<72x128xf32>
    %626 = arith.truncf %625 : vector<72x128xf32> to vector<72x128xbf16>
    %627 = arith.truncf %467 : vector<128x32xf32> to vector<128x32xbf16>
    %cst_174 = arith.constant dense<0.000000e+00> : vector<72x32xf32>
    %628 = tpu.matmul %626, %627, %cst_174 {dimension_numbers = #tpu.dot_dimension_numbers<[1], [0], [0], [1], [0, 0, 1, 1], [], []>} : vector<72x128xbf16>, vector<128x32xbf16>, vector<72x32xf32> -> vector<72x32xf32>
    %629 = arith.addf %592, %628 : vector<72x32xf32>
    %630 = vector.broadcast %468 : vector<1x32xf32> to vector<72x32xf32>
    %631 = arith.addf %629, %630 : vector<72x32xf32>
    %c464 = arith.constant 464 : index
    %c0_175 = arith.constant 0 : index
    %632 = vector.load %arg1[%c464, %c0_175] : memref<1408x128xf32, #tpu.memory_space<vmem>>, vector<1x32xf32>
    %c472 = arith.constant 472 : index
    %c0_176 = arith.constant 0 : index
    %633 = vector.load %arg1[%c472, %c0_176] : memref<1408x128xf32, #tpu.memory_space<vmem>>, vector<1x32xf32>
    %cst_177 = arith.constant dense<0.000000e+00> : vector<72xf32>
    %634 = vector.multi_reduction <add>, %631, %cst_177 [1] : vector<72x32xf32> to vector<72xf32>
    %635 = vector.shape_cast %634 : vector<72xf32> to vector<72x1xf32>
    %cst_178 = arith.constant 3.200000e+01 : f32
    %636 = vector.broadcast %cst_178 : f32 to vector<72x1xf32>
    %637 = arith.divf %635, %636 : vector<72x1xf32>
    %638 = vector.broadcast %637 : vector<72x1xf32> to vector<72x32xf32>
    %639 = arith.subf %631, %638 : vector<72x32xf32>
    %640 = arith.mulf %639, %639 : vector<72x32xf32>
    %cst_179 = arith.constant dense<0.000000e+00> : vector<72xf32>
    %641 = vector.multi_reduction <add>, %640, %cst_179 [1] : vector<72x32xf32> to vector<72xf32>
    %642 = vector.shape_cast %641 : vector<72xf32> to vector<72x1xf32>
    %cst_180 = arith.constant 3.200000e+01 : f32
    %643 = vector.broadcast %cst_180 : f32 to vector<72x1xf32>
    %644 = arith.divf %642, %643 : vector<72x1xf32>
    %cst_181 = arith.constant 9.99999974E-6 : f32
    %645 = vector.broadcast %cst_181 : f32 to vector<72x1xf32>
    %646 = arith.addf %644, %645 : vector<72x1xf32>
    %647 = math.rsqrt %646 : vector<72x1xf32>
    %648 = vector.broadcast %647 : vector<72x1xf32> to vector<72x32xf32>
    %649 = arith.mulf %639, %648 : vector<72x32xf32>
    %650 = vector.broadcast %632 : vector<1x32xf32> to vector<72x32xf32>
    %651 = arith.mulf %649, %650 : vector<72x32xf32>
    %652 = vector.broadcast %633 : vector<1x32xf32> to vector<72x32xf32>
    %653 = arith.addf %651, %652 : vector<72x32xf32>
    %c480 = arith.constant 480 : index
    %c0_182 = arith.constant 0 : index
    %654 = vector.load %arg1[%c480, %c0_182] : memref<1408x128xf32, #tpu.memory_space<vmem>>, vector<6x72xf32>
    %cst_183 = arith.constant dense<0.000000e+00> : vector<6x32xf32>
    %655 = tpu.matmul %654, %653, %cst_183 {dimension_numbers = #tpu.dot_dimension_numbers<[1], [0], [0], [1], [0, 0, 1, 1], [], []>} : vector<6x72xf32>, vector<72x32xf32>, vector<6x32xf32> -> vector<6x32xf32>
    %c488 = arith.constant 488 : index
    %c0_184 = arith.constant 0 : index
    %656 = vector.load %arg1[%c488, %c0_184] : memref<1408x128xf32, #tpu.memory_space<vmem>>, vector<32x32xf32>
    %cst_185 = arith.constant dense<0.000000e+00> : vector<6x32xf32>
    %657 = tpu.matmul %655, %656, %cst_185 {dimension_numbers = #tpu.dot_dimension_numbers<[1], [0], [0], [1], [0, 0, 1, 1], [], []>} : vector<6x32xf32>, vector<32x32xf32>, vector<6x32xf32> -> vector<6x32xf32>
    %658 = arith.mulf %657, %657 : vector<6x32xf32>
    %cst_186 = arith.constant dense<0.000000e+00> : vector<6xf32>
    %659 = vector.multi_reduction <add>, %658, %cst_186 [1] : vector<6x32xf32> to vector<6xf32>
    %660 = vector.shape_cast %659 : vector<6xf32> to vector<6x1xf32>
    %661 = math.rsqrt %660 : vector<6x1xf32>
    %662 = vector.broadcast %661 : vector<6x1xf32> to vector<6x32xf32>
    %663 = arith.mulf %657, %662 : vector<6x32xf32>
    %cst_187 = arith.constant dense<0.000000e+00> : vector<2x6xf32>
    %664 = tpu.matmul %215, %663, %cst_187 {dimension_numbers = #tpu.dot_dimension_numbers<[1], [1], [0], [0], [0, 0, 1, 0], [], []>} : vector<2x32xf32>, vector<6x32xf32>, vector<2x6xf32> -> vector<2x6xf32>
    %c520 = arith.constant 520 : index
    %c0_188 = arith.constant 0 : index
    %665 = vector.load %arg1[%c520, %c0_188] : memref<1408x128xf32, #tpu.memory_space<vmem>>, vector<2x6xf32>
    %666 = arith.mulf %664, %665 : vector<2x6xf32>
    %667 = vector.shape_cast %666 : vector<2x6xf32> to vector<1x2x6xf32>
    %cst_189 = arith.constant dense<0.000000e+00> : vector<1xf32>
    %668 = vector.multi_reduction <add>, %667, %cst_189 [1, 2] : vector<1x2x6xf32> to vector<1xf32>
    %669 = vector.shape_cast %668 : vector<1xf32> to vector<1x1x1xf32>
    %670 = vector.extract %669[0, 0, 0] : f32 from vector<1x1x1xf32>
    %c536 = arith.constant 536 : index
    %c0_190 = arith.constant 0 : index
    %671 = vector.load %arg1[%c536, %c0_190] : memref<1408x128xf32, #tpu.memory_space<vmem>>, vector<2x6xf32>
    %cst_191 = arith.constant 5.000000e-01 : f32
    %672 = vector.broadcast %cst_191 : f32 to vector<2x6xf32>
    %673 = arith.cmpf ogt, %671, %672 : vector<2x6xf32>
    %cst_192 = arith.constant -1.000000e+30 : f32
    %674 = vector.broadcast %cst_192 : f32 to vector<2x6xf32>
    %675 = arith.select %673, %664, %674 : vector<2x6xi1>, vector<2x6xf32>
    %cst_193 = arith.constant dense<0xFF800000> : vector<2xf32>
    %676 = vector.multi_reduction <maximumf>, %675, %cst_193 [1] : vector<2x6xf32> to vector<2xf32>
    %677 = vector.shape_cast %676 : vector<2xf32> to vector<2x1xf32>
    %678 = vector.shape_cast %677 : vector<2x1xf32> to vector<1x2x1xf32>
    %cst_194 = arith.constant dense<0.000000e+00> : vector<1xf32>
    %679 = vector.multi_reduction <add>, %678, %cst_194 [1, 2] : vector<1x2x1xf32> to vector<1xf32>
    %680 = vector.shape_cast %679 : vector<1xf32> to vector<1x1x1xf32>
    %681 = vector.extract %680[0, 0, 0] : f32 from vector<1x1x1xf32>
    %c528 = arith.constant 528 : index
    %c0_195 = arith.constant 0 : index
    %682 = vector.load %arg1[%c528, %c0_195] : memref<1408x128xf32, #tpu.memory_space<vmem>>, vector<2x6xf32>
    %683 = arith.mulf %664, %682 : vector<2x6xf32>
    %684 = vector.shape_cast %683 : vector<2x6xf32> to vector<1x2x6xf32>
    %cst_196 = arith.constant dense<0.000000e+00> : vector<1xf32>
    %685 = vector.multi_reduction <add>, %684, %cst_196 [1, 2] : vector<1x2x6xf32> to vector<1xf32>
    %686 = vector.shape_cast %685 : vector<1xf32> to vector<1x1x1xf32>
    %687 = vector.extract %686[0, 0, 0] : f32 from vector<1x1x1xf32>
    %cst_197 = arith.constant 0.333333343 : f32
    %688 = arith.mulf %687, %cst_197 : f32
    %689 = tpu.iota {dimensions = array<i32: 1>} : vector<1x3xi32>
    %c0_i32 = arith.constant 0 : i32
    %690 = vector.broadcast %c0_i32 : i32 to vector<1x3xi32>
    %691 = arith.cmpi eq, %689, %690 : vector<1x3xi32>
    %c1_i32 = arith.constant 1 : i32
    %692 = vector.broadcast %c1_i32 : i32 to vector<1x3xi32>
    %693 = arith.cmpi eq, %689, %692 : vector<1x3xi32>
    %694 = vector.broadcast %681 : f32 to vector<1x3xf32>
    %695 = vector.broadcast %688 : f32 to vector<1x3xf32>
    %696 = arith.select %693, %694, %695 : vector<1x3xi1>, vector<1x3xf32>
    %697 = vector.broadcast %670 : f32 to vector<1x3xf32>
    %698 = arith.select %691, %697, %696 : vector<1x3xi1>, vector<1x3xf32>
    %c0_198 = arith.constant 0 : index
    %c0_199 = arith.constant 0 : index
    %699 = vector.load %arg2[%c0_198, %c0_199] : memref<1x3xf32, #tpu.memory_space<vmem>>, vector<1x3xf32>
    tpu.vector_store %arg2[%c0_198, %c0_199], %698 {strides = array<i32>} : memref<1x3xf32, #tpu.memory_space<vmem>>, vector<1x3xf32>,
    return
  }
  func.func @transform_0(%arg0: i32) -> (i32, i32) {
    %c0_i32 = arith.constant 0 : i32
    %c0_i32_0 = arith.constant 0 : i32
    %c0_i32_1 = arith.constant 0 : i32
    return %c0_i32, %c0_i32_0 : i32, i32
  }
  func.func @transform_1(%arg0: i32) -> (i32, i32) {
    %c0_i32 = arith.constant 0 : i32
    %c0_i32_0 = arith.constant 0 : i32
    %c0_i32_1 = arith.constant 0 : i32
    return %c0_i32, %c0_i32_0 : i32, i32
  }
}

</mosaic_0001>

<llo_original>
// kernel: tile.18
$region0: #{tile.18}
  %s0 = inlined_call_operand.vmem [shape: f32[2,17,32], index: 0, kind: input, shape index: {}]
  %s1 = inlined_call_operand.vmem [shape: f32[34,32], index: 1, kind: output, shape index: {}]
  %v2 = vld [vmem:[%s0] sm:$0xff]
  %vm3 = vcmask 261120
  %4 = vst.msk [vmem:[%s1] sm:$0xff] %vm3, %v2
  %s5 = scalar_lea.vmem %s0, 8
  %v6 = vld [vmem:[%s5] sm:$0xff]
  %vm7 = vcmask 261120
  %s8 = scalar_lea.vmem %s1, 8
  %9 = vst.msk [vmem:[%s8] sm:$0xff] %vm7, %v6
  %s10 = scalar_lea.vmem %s0, 16
  %s11 = smov 3
  %v12 = vld [vmem:[%s10] ss:$8 sm:%s11]
  %vm13 = vcmask 261120
  %s14 = scalar_lea.vmem %s1, 16
  %15 = vst.msk [vmem:[%s14] sm:$0x3] %vm13, %v12
  %s16 = scalar_lea.vmem %s0, 25
  %v17 = vld [vmem:[%s16] sm:$0xff]
  %vm18 = vcmask 261120
  %s19 = scalar_lea.vmem %s1, 18
  %20 = vst.msk [vmem:[%s19] sm:$0xff] %vm18, %v17
  %s21 = scalar_lea.vmem %s0, 33
  %v22 = vld [vmem:[%s21] sm:$0xff]
  %vm23 = vcmask 261120
  %s24 = scalar_lea.vmem %s1, 26
  %25 = vst.msk [vmem:[%s24] sm:$0xff] %vm23, %v22

// kernel: tile.22
$region0: #{tile.22}
  %s0 = inlined_call_operand.vmem [shape: f32[2,36,32], index: 0, kind: input, shape index: {}]
  %s1 = inlined_call_operand.vmem [shape: f32[72,32], index: 1, kind: output, shape index: {}]
  $region1: #{tile.22} parent=0
    #allocation0 [shape = 'u8[131072]{0}', space=vmem, size = 0x20000, scoped, tag = 'scoped mem for input reshape']
    %s3 = sshllo.u32 0, 2
    %s4 = smul.addr 2, 31
    %s5 = scalar_lea.vmem %s0, %s4
    %v6 = vld [vmem:[%s5] sm:%s3]
    %s7 = scalar_lea.vmem [#allocation0], 248
    %8 = vst [vmem:[%s7] sm:%s3] %v6
    %s9 = smul.addr 2, 30
    %s10 = scalar_lea.vmem %s0, %s9
    %v11 = vld [vmem:[%s10] sm:%s3]
    %s12 = scalar_lea.vmem [#allocation0], 240
    %13 = vst [vmem:[%s12] sm:%s3] %v11
    %s14 = smul.addr 2, 29
    %s15 = scalar_lea.vmem %s0, %s14
    %v16 = vld [vmem:[%s15] sm:%s3]
    %s17 = scalar_lea.vmem [#allocation0], 232
    %18 = vst [vmem:[%s17] sm:%s3] %v16
    %s19 = smul.addr 2, 28
    %s20 = scalar_lea.vmem %s0, %s19
    %v21 = vld [vmem:[%s20] sm:%s3]
    %s22 = scalar_lea.vmem [#allocation0], 224
    %23 = vst [vmem:[%s22] sm:%s3] %v21
    %s24 = smul.addr 2, 27
    %s25 = scalar_lea.vmem %s0, %s24
    %v26 = vld [vmem:[%s25] sm:%s3]
    %s27 = scalar_lea.vmem [#allocation0], 216
    %28 = vst [vmem:[%s27] sm:%s3] %v26
    %s29 = smul.addr 2, 26
    %s30 = scalar_lea.vmem %s0, %s29
    %v31 = vld [vmem:[%s30] sm:%s3]
    %s32 = scalar_lea.vmem [#allocation0], 208
    %33 = vst [vmem:[%s32] sm:%s3] %v31
    %s34 = smul.addr 2, 25
    %s35 = scalar_lea.vmem %s0, %s34
    %v36 = vld [vmem:[%s35] sm:%s3]
    %s37 = scalar_lea.vmem [#allocation0], 200
    %38 = vst [vmem:[%s37] sm:%s3] %v36
    %s39 = smul.addr 2, 24
    %s40 = scalar_lea.vmem %s0, %s39
    %v41 = vld [vmem:[%s40] sm:%s3]
    %s42 = scalar_lea.vmem [#allocation0], 192
    %43 = vst [vmem:[%s42] sm:%s3] %v41
    %s44 = smul.addr 2, 23
    %s45 = scalar_lea.vmem %s0, %s44
    %v46 = vld [vmem:[%s45] sm:%s3]
    %s47 = scalar_lea.vmem [#allocation0], 184
    %48 = vst [vmem:[%s47] sm:%s3] %v46
    %s49 = smul.addr 2, 22
    %s50 = scalar_lea.vmem %s0, %s49
    %v51 = vld [vmem:[%s50] sm:%s3]
    %s52 = scalar_lea.vmem [#allocation0], 176
    %53 = vst [vmem:[%s52] sm:%s3] %v51
    %s54 = smul.addr 2, 21
    %s55 = scalar_lea.vmem %s0, %s54
    %v56 = vld [vmem:[%s55] sm:%s3]
    %s57 = scalar_lea.vmem [#allocation0], 168
    %58 = vst [vmem:[%s57] sm:%s3] %v56
    %s59 = smul.addr 2, 20
    %s60 = scalar_lea.vmem %s0, %s59
    %v61 = vld [vmem:[%s60] sm:%s3]
    %s62 = scalar_lea.vmem [#allocation0], 160
    %63 = vst [vmem:[%s62] sm:%s3] %v61
    %s64 = smul.addr 2, 19
    %s65 = scalar_lea.vmem %s0, %s64
    %v66 = vld [vmem:[%s65] sm:%s3]
    %s67 = scalar_lea.vmem [#allocation0], 152
    %68 = vst [vmem:[%s67] sm:%s3] %v66
    %s69 = smul.addr 2, 18
    %s70 = scalar_lea.vmem %s0, %s69
    %v71 = vld [vmem:[%s70] sm:%s3]
    %s72 = scalar_lea.vmem [#allocation0], 144
    %73 = vst [vmem:[%s72] sm:%s3] %v71
    %s74 = smul.addr 2, 17
    %s75 = scalar_lea.vmem %s0, %s74
    %v76 = vld [vmem:[%s75] sm:%s3]
    %s77 = scalar_lea.vmem [#allocation0], 136
    %78 = vst [vmem:[%s77] sm:%s3] %v76
    %s79 = smul.addr 2, 16
    %s80 = scalar_lea.vmem %s0, %s79
    %v81 = vld [vmem:[%s80] sm:%s3]
    %s82 = scalar_lea.vmem [#allocation0], 128
    %83 = vst [vmem:[%s82] sm:%s3] %v81
    %s84 = smul.addr 2, 15
    %s85 = scalar_lea.vmem %s0, %s84
    %v86 = vld [vmem:[%s85] sm:%s3]
    %s87 = scalar_lea.vmem [#allocation0], 120
    %88 = vst [vmem:[%s87] sm:%s3] %v86
    %s89 = smul.addr 2, 14
    %s90 = scalar_lea.vmem %s0, %s89
    %v91 = vld [vmem:[%s90] sm:%s3]
    %s92 = scalar_lea.vmem [#allocation0], 112
    %93 = vst [vmem:[%s92] sm:%s3] %v91
    %s94 = smul.addr 2, 13
    %s95 = scalar_lea.vmem %s0, %s94
    %v96 = vld [vmem:[%s95] sm:%s3]
    %s97 = scalar_lea.vmem [#allocation0], 104
    %98 = vst [vmem:[%s97] sm:%s3] %v96
    %s99 = smul.addr 2, 12
    %s100 = scalar_lea.vmem %s0, %s99
    %v101 = vld [vmem:[%s100] sm:%s3]
    %s102 = scalar_lea.vmem [#allocation0], 96
    %103 = vst [vmem:[%s102] sm:%s3] %v101
    %s104 = smul.addr 2, 11
    %s105 = scalar_lea.vmem %s0, %s104
    %v106 = vld [vmem:[%s105] sm:%s3]
    %s107 = scalar_lea.vmem [#allocation0], 88
    %108 = vst [vmem:[%s107] sm:%s3] %v106
    %s109 = smul.addr 2, 10
    %s110 = scalar_lea.vmem %s0, %s109
    %v111 = vld [vmem:[%s110] sm:%s3]
    %s112 = scalar_lea.vmem [#allocation0], 80
    %113 = vst [vmem:[%s112] sm:%s3] %v111
    %s114 = smul.addr 2, 9
    %s115 = scalar_lea.vmem %s0, %s114
    %v116 = vld [vmem:[%s115] sm:%s3]
    %s117 = scalar_lea.vmem [#allocation0], 72
    %118 = vst [vmem:[%s117] sm:%s3] %v116
    %s119 = smul.addr 2, 8
    %s120 = scalar_lea.vmem %s0, %s119
    %v121 = vld [vmem:[%s120] sm:%s3]
    %s122 = scalar_lea.vmem [#allocation0], 64
    %123 = vst [vmem:[%s122] sm:%s3] %v121
    %s124 = smul.addr 2, 7
    %s125 = scalar_lea.vmem %s0, %s124
    %v126 = vld [vmem:[%s125] sm:%s3]
    %s127 = scalar_lea.vmem [#allocation0], 56
    %128 = vst [vmem:[%s127] sm:%s3] %v126
    %s129 = smul.addr 2, 6
    %s130 = scalar_lea.vmem %s0, %s129
    %v131 = vld [vmem:[%s130] sm:%s3]
    %s132 = scalar_lea.vmem [#allocation0], 48
    %133 = vst [vmem:[%s132] sm:%s3] %v131
    %s134 = smul.addr 2, 5
    %s135 = scalar_lea.vmem %s0, %s134
    %v136 = vld [vmem:[%s135] sm:%s3]
    %s137 = scalar_lea.vmem [#allocation0], 40
    %138 = vst [vmem:[%s137] sm:%s3] %v136
    %s139 = smul.addr 2, 4
    %s140 = scalar_lea.vmem %s0, %s139
    %v141 = vld [vmem:[%s140] sm:%s3]
    %s142 = scalar_lea.vmem [#allocation0], 32
    %143 = vst [vmem:[%s142] sm:%s3] %v141
    %s144 = smul.addr 2, 3
    %s145 = scalar_lea.vmem %s0, %s144
    %v146 = vld [vmem:[%s145] sm:%s3]
    %s147 = scalar_lea.vmem [#allocation0], 24
    %148 = vst [vmem:[%s147] sm:%s3] %v146
    %s149 = smul.addr 2, 2
    %s150 = scalar_lea.vmem %s0, %s149
    %v151 = vld [vmem:[%s150] sm:%s3]
    %s152 = scalar_lea.vmem [#allocation0], 16
    %153 = vst [vmem:[%s152] sm:%s3] %v151
    %s154 = scalar_lea.vmem %s0, 2
    %v155 = vld [vmem:[%s154] sm:%s3]
    %s156 = scalar_lea.vmem [#allocation0], 8
    %157 = vst [vmem:[%s156] sm:%s3] %v155
    %v158 = vld [vmem:[%s0] sm:%s3]
    %159 = vst [vmem:[#allocation0] sm:%s3] %v158
    %v160 = vld [vmem:[#allocation0] ss:$8 sm:$0xf]
    %v161 = vld [vmem:[#allocation0] ss:$8 sm:$0xf0]
    %vm162 = vcmask 1047556
    %v163 = vsel %vm162, %v161, %v160
    %vm164 = vcmask 293888
    %165 = vst.msk [vmem:[%s1] sm:$0xff] %vm164, %v163
    %s166 = scalar_lea.vmem [#allocation0], 64
    %v167 = vld [vmem:[%s166] ss:$8 sm:$0xf]
    %s168 = scalar_lea.vmem [#allocation0], 64
    %v169 = vld [vmem:[%s168] ss:$8 sm:$0xf0]
    %vm170 = vcmask 1047556
    %v171 = vsel %vm170, %v169, %v167
    %vm172 = vcmask 293888
    %s173 = scalar_lea.vmem %s1, 8
    %174 = vst.msk [vmem:[%s173] sm:$0xff] %vm172, %v171
    %s175 = scalar_lea.vmem [#allocation0], 128
    %v176 = vld [vmem:[%s175] ss:$8 sm:$0xf]
    %s177 = scalar_lea.vmem [#allocation0], 128
    %v178 = vld [vmem:[%s177] ss:$8 sm:$0xf0]
    %vm179 = vcmask 1047556
    %v180 = vsel %vm179, %v178, %v176
    %vm181 = vcmask 293888
    %s182 = scalar_lea.vmem %s1, 16
    %183 = vst.msk [vmem:[%s182] sm:$0xff] %vm181, %v180
    %s184 = scalar_lea.vmem [#allocation0], 192
    %v185 = vld [vmem:[%s184] ss:$8 sm:$0xf]
    %s186 = scalar_lea.vmem [#allocation0], 192
    %v187 = vld [vmem:[%s186] ss:$8 sm:$0xf0]
    %vm188 = vcmask 1047556
    %v189 = vsel %vm188, %v187, %v185
    %vm190 = vcmask 293888
    %s191 = scalar_lea.vmem %s1, 24
    %192 = vst.msk [vmem:[%s191] sm:$0xff] %vm190, %v189
    %s193 = scalar_lea.vmem [#allocation0], 1
    %v194 = vld [vmem:[%s193] ss:$8 sm:$0xf]
    %s195 = scalar_lea.vmem [#allocation0], 1
    %v196 = vld [vmem:[%s195] ss:$8 sm:$0xf0]
    %vm197 = vcmask 1047556
    %v198 = vsel %vm197, %v196, %v194
    %199 = vrot.lane.b32.xlu0 %v198, 36
    %v200 = vpop.permute.xlu0 %199
    %vm201 = vcmask 589088
    %202 = vst.msk [vmem:[%s1] sm:$0xff] %vm201, %v200
    %s203 = scalar_lea.vmem [#allocation0], 65
    %v204 = vld [vmem:[%s203] ss:$8 sm:$0xf]
    %s205 = scalar_lea.vmem [#allocation0], 65
    %v206 = vld [vmem:[%s205] ss:$8 sm:$0xf0]
    %vm207 = vcmask 1047556
    %v208 = vsel %vm207, %v206, %v204
    %209 = vrot.lane.b32.xlu0 %v208, 36
    %v210 = vpop.permute.xlu0 %209
    %vm211 = vcmask 589088
    %s212 = scalar_lea.vmem %s1, 8
    %213 = vst.msk [vmem:[%s212] sm:$0xff] %vm211, %v210
    %s214 = scalar_lea.vmem [#allocation0], 129
    %v215 = vld [vmem:[%s214] ss:$8 sm:$0xf]
    %s216 = scalar_lea.vmem [#allocation0], 129
    %v217 = vld [vmem:[%s216] ss:$8 sm:$0xf0]
    %vm218 = vcmask 1047556
    %v219 = vsel %vm218, %v217, %v215
    %220 = vrot.lane.b32.xlu0 %v219, 36
    %v221 = vpop.permute.xlu0 %220
    %vm222 = vcmask 589088
    %s223 = scalar_lea.vmem %s1, 16
    %224 = vst.msk [vmem:[%s223] sm:$0xff] %vm222, %v221
    %s225 = scalar_lea.vmem [#allocation0], 193
    %v226 = vld [vmem:[%s225] ss:$8 sm:$0xf]
    %s227 = scalar_lea.vmem [#allocation0], 193
    %v228 = vld [vmem:[%s227] ss:$8 sm:$0xf0]
    %vm229 = vcmask 1047556
    %v230 = vsel %vm229, %v228, %v226
    %231 = vrot.lane.b32.xlu0 %v230, 36
    %v232 = vpop.permute.xlu0 %231
    %vm233 = vcmask 589088
    %s234 = scalar_lea.vmem %s1, 24
    %235 = vst.msk [vmem:[%s234] sm:$0xff] %vm233, %v232

// kernel: tile.26
$region0: #{tile.26}
  #allocation0 [shape = 's32[1]{0}', space=sflag, size = 0x4, scoped, tag = 'scoped memory for tile.26']
  %s0 = inlined_call_operand.vmem [shape: s32[3], index: 0, kind: input, shape index: {}]
  %s1 = inlined_call_operand.vmem [shape: s32[2,3], index: 1, kind: output, shape index: {}]
  // Predicated region
  $region2: #{tile.26} parent=0 // pred_check
    _
  $region3: #{tile.26} parent=0 // pred_check_branch
    %3 = sbr.rel (0) target = $region5
  $region4: #{tile.26} parent=0 // pred_region
    _
  $region5: #{tile.26} parent=0 // pred_fallthru
    _
  %v4 = vld [vmem:[%s0] ss:$0 sm:$0xff]
  %5 = vst [vmem:[%s1] sm:$0x3] %v4

// kernel: custom_clip_forward.1
$region0: #{custom_clip_forward.1}
  #allocation0 [shape = 'u32[]', space=smem, size = 0x4, offset = 0x4, fixed_abs, tag = 'smem constant byte address 0x4 - core index']
  #allocation1 [shape = 'u32[144,128]{1,0:T(1,128)}', space=vmem, size = 0x12000, scoped, tag = 'internal scratch']
  %s0 = inlined_call_operand.vmem [shape: f32[1408,128], index: 0, kind: input, shape index: {}]
  %s1 = inlined_call_operand.vmem [shape: f32[1,3], index: 1, kind: output, shape index: {}]
  %s2 = sld [smem:[#allocation0]]
  $region14: #{custom_clip_forward.1} parent=0
    _
  %s4 = ssub.s32 1, %s2
  %s5 = scalar_select 0, %s4, %s2
  // Predicated region
  $region2: #{custom_clip_forward.1} parent=0 // pred_check
    _
  $region3: #{custom_clip_forward.1} parent=0 // pred_check_branch
    %7 = sbr.rel (0) target = $region5
  $region4: #{custom_clip_forward.1} parent=0 // pred_region
    _
  $region5: #{custom_clip_forward.1} parent=0 // pred_fallthru
    _
  %v9 = vld [vmem:[%s0] sm:$0xff]
  %v10 = vld [vmem:[%s0 + $0x8] sm:$0xff]
  %v11 = vld [vmem:[%s0 + $0x10] sm:$0xff]
  %v12 = vld [vmem:[%s0 + $0x18] sm:$0xff]
  %v13 = vld [vmem:[%s0 + $0x20] sm:$0x3]
  %v14 = vld [vmem:[%s0 + $0x28] sm:$0xff]
  %v15 = vld [vmem:[%s0 + $0x30] sm:$0xff]
  %v16 = vld [vmem:[%s0 + $0x38] sm:$0xff]
  %v17 = vld [vmem:[%s0 + $0x40] sm:$0xff]
  %v18 = vld [vmem:[%s0 + $0x48] sm:$0xff]
  %v19 = vld [vmem:[%s0 + $0x50] sm:$0xff]
  %v20 = vpack.c.bf16 %v10, %v9
  %v21 = vpack.c.bf16 %v12, %v11
  %v22 = vpack.c.bf16 %v13, %v13
  %v23 = vpack.c.bf16 %v15, %v14
  %v24 = vpack.c.bf16 %v17, %v16
  %v25 = vpack.c.bf16 %v19, %v18
  %v26 = vld [vmem:[%s0 + $0x58] sm:$0xff]
  %v27 = vld [vmem:[%s0 + $0x60] sm:$0xff]
  %v28 = vld [vmem:[%s0 + $0x68] sm:$0xff]
  %v29 = vld [vmem:[%s0 + $0x70] sm:$0xff]
  %v30 = vld [vmem:[%s0 + $0x78] sm:$0x3]
  %vm31 = vcmask 392192
  %v33 = vsel %vm31, %v20, 0
  %v36 = vsel %vm31, %v21, 0
  %v39 = vsel %vm31, %v22, 0
  %41 = vmatprep.subr.bf16.mxu0 0
  %42 = vmatpush1.bf16.msra.mxu0 %v23
  %43 = vmatprep.subr.bf16.mxu0 0
  %44 = vmatpush1.bf16.msra.mxu0 %v24
  %45 = vmatprep.subr.bf16.mxu0 0
  %46 = vmatpush1.bf16.msra.mxu0 %v25
  %47 = vmatprep.subr.bf16.mxu0 0
  %48 = vmatpush1.bf16.msra.mxu0 0
  %49 = vmatprep.subr.bf16.mxu0 0
  %50 = vmatpush1.bf16.msra.mxu0 0
  %51 = vmatprep.subr.bf16.mxu0 0
  %52 = vmatpush1.bf16.msra.mxu0 0
  %53 = vmatprep.subr.bf16.mxu0 0
  %54 = vmatpush1.bf16.msra.mxu0 0
  %55 = vmatprep.subr.bf16.mxu0 0
  %56 = vmatpush1.bf16.msra.mxu0 0
  %57 = vmatprep.subr.bf16.mxu0 0
  %58 = vmatpush1.bf16.msra.mxu0 0
  %59 = vmatprep.subr.bf16.mxu0 0
  %60 = vmatpush1.bf16.msra.mxu0 0
  %61 = vmatprep.subr.bf16.mxu0 0
  %62 = vmatpush1.bf16.msra.mxu0 0
  %63 = vmatprep.subr.bf16.mxu0 0
  %64 = vmatpush1.bf16.msra.mxu0 0
  %65 = vmatprep.subr.bf16.mxu0 0
  %66 = vmatpush1.bf16.msra.mxu0 0
  %67 = vmatprep.subr.bf16.mxu0 0
  %68 = vmatpush1.bf16.msra.mxu0 0
  %69 = vmatprep.subr.bf16.mxu0 0
  %70 = vmatpush1.bf16.msra.mxu0 0
  %71 = vmatprep.subr.bf16.mxu0 0
  %72 = vmatpush1.bf16.msra.mxu0 0
  %73 = vmatprep.mubr.bf16.mxu0 0
  %74 = vmatmul.mubr.bf16.gmra.mrb[0].mxu0 %v33
  %v75 = vpop.f32.mrb[0].mxu0
  %v76 = vadd.f32 %v26, %v75
  %v77 = vpop.f32.mrb[0].mxu0
  %v78 = vpop.f32.mrb[0].mxu0
  %v79 = vadd.f32 %v27, %v78
  %v80 = vpop.f32.mrb[0].mxu0
  %81 = vmatprep.mubr.bf16.mxu0 0
  %82 = vmatmul.mubr.bf16.gmra.mrb[0].mxu0 %v36
  %v83 = vpop.f32.mrb[0].mxu0
  %v84 = vadd.f32 %v28, %v83
  %v85 = vpop.f32.mrb[0].mxu0
  %v86 = vpop.f32.mrb[0].mxu0
  %v87 = vadd.f32 %v29, %v86
  %v88 = vpop.f32.mrb[0].mxu0
  %89 = vmatprep.mubr.bf16.mxu0 0
  %90 = vmatmul.mubr.bf16.gmra.mrb[0].mxu0 %v39
  %v91 = vpop.f32.mrb[0].mxu0
  %v92 = vadd.f32 %v30, %v91
  %v93 = vpop.f32.mrb[0].mxu0
  %v94 = vpop.f32.mrb[0].mxu0
  %v95 = vpop.f32.mrb[0].mxu0
  %96 = vdwg.mxu0
  %v97 = vld [vmem:[%s0 + $0x220] sm:$0x1]
  %v98 = vld [vmem:[%s0 + $0x228] sm:$0x1]
  %v99 = vld [vmem:[%s0 + $0x230] sm:$0xff]
  %v100 = vld [vmem:[%s0 + $0x238] sm:$0xff]
  %v101 = vld [vmem:[%s0 + $0x240] sm:$0xff]
  %v102 = vld [vmem:[%s0 + $0x248] sm:$0xff]
  %v103 = vld [vmem:[%s0 + $0x250] sm:$0x1]
  %v104 = vld [vmem:[%s0 + $0x258] sm:$0xff]
  %v105 = vld [vmem:[%s0 + $0x260] sm:$0xff]
  %v106 = vld [vmem:[%s0 + $0x268] sm:$0xff]
  %v107 = vld [vmem:[%s0 + $0x270] sm:$0xff]
  %v108 = vld [vmem:[%s0 + $0x278] sm:$0x1]
  %v109 = vld [vmem:[%s0 + $0x280] sm:$0x1]
  %v110 = vld [vmem:[%s0 + $0x288] sm:$0x1]
  %v111 = vld [vmem:[%s0 + $0x290] sm:$0xff]
  %v112 = vld [vmem:[%s0 + $0x298] sm:$0xff]
  %v113 = vld [vmem:[%s0 + $0x2a0] sm:$0xff]
  %v114 = vld [vmem:[%s0 + $0x2a8] sm:$0xff]
  %v115 = vld [vmem:[%s0 + $0x2b0] sm:$0x1]
  %v116 = vld [vmem:[%s0 + $0x2b8] sm:$0xff]
  %v117 = vld [vmem:[%s0 + $0x2c0] sm:$0xff]
  %v118 = vld [vmem:[%s0 + $0x2c8] sm:$0xff]
  %v119 = vld [vmem:[%s0 + $0x2d0] sm:$0xff]
  %v120 = vld [vmem:[%s0 + $0x2d8] sm:$0xff]
  %v121 = vld [vmem:[%s0 + $0x2e0] sm:$0xff]
  %v122 = vld [vmem:[%s0 + $0x2e8] sm:$0xff]
  %v123 = vld [vmem:[%s0 + $0x2f0] sm:$0xff]
  %v124 = vld [vmem:[%s0 + $0x2f8] sm:$0xff]
  %v125 = vld [vmem:[%s0 + $0x300] sm:$0xff]
  %v126 = vld [vmem:[%s0 + $0x308] sm:$0xff]
  %v127 = vld [vmem:[%s0 + $0x310] sm:$0xff]
  %v128 = vld [vmem:[%s0 + $0x318] sm:$0xff]
  %v129 = vld [vmem:[%s0 + $0x320] sm:$0xff]
  %v130 = vld [vmem:[%s0 + $0x328] sm:$0xff]
  %v131 = vld [vmem:[%s0 + $0x330] sm:$0xff]
  %v132 = vld [vmem:[%s0 + $0x338] sm:$0x1]
  %v133 = vld [vmem:[%s0 + $0x80] sm:$0xff]
  %v134 = vld [vmem:[%s0 + $0x88] sm:$0xff]
  %v135 = vld [vmem:[%s0 + $0x90] sm:$0xff]
  %v136 = vld [vmem:[%s0 + $0x98] sm:$0xff]
  %v137 = vld [vmem:[%s0 + $0xa0] sm:$0x3]
  %vm138 = vcmask 261120
  %v139 = vsel %vm138, %v76, 0.0
  %140 = vadd.xlane.f32.xlu0 %v139
  %v141 = vpop.xlane.xlu0 %140
  %v142 = vsel %vm138, %v79, 0.0
  %143 = vadd.xlane.f32.xlu0 %v142
  %v144 = vpop.xlane.xlu0 %143
  %v145 = vsel %vm138, %v84, 0.0
  %146 = vadd.xlane.f32.xlu0 %v145
  %v147 = vpop.xlane.xlu0 %146
  %v148 = vsel %vm138, %v87, 0.0
  %149 = vadd.xlane.f32.xlu0 %v148
  %v150 = vpop.xlane.xlu0 %149
  %vm151 = vcmask 254976
  %v152 = vsel %vm151, %v92, 0.0
  %153 = vadd.xlane.f32.xlu0 %v152
  %v154 = vpop.xlane.xlu0 %153
  %v155 = vrcp.pop 32.0
  %v156 = vmul.f32 %v141, %v155
  %v157 = vmul.f32 %v144, %v155
  %v158 = vmul.f32 %v147, %v155
  %v159 = vmul.f32 %v150, %v155
  %v160 = vmul.f32 %v154, %v155
  %v161 = vsub.f32 %v76, %v156
  %v162 = vsub.f32 %v79, %v157
  %v163 = vsub.f32 %v84, %v158
  %v164 = vsub.f32 %v87, %v159
  %v165 = vsub.f32 %v92, %v160
  %v166 = vmul.f32 %v161, %v161
  %v167 = vmul.f32 %v162, %v162
  %v168 = vmul.f32 %v163, %v163
  %v169 = vmul.f32 %v164, %v164
  %v170 = vmul.f32 %v165, %v165
  %v171 = vsel %vm138, %v166, 0.0
  %172 = vadd.xlane.f32.xlu0 %v171
  %v173 = vpop.xlane.xlu0 %172
  %v174 = vsel %vm138, %v167, 0.0
  %175 = vadd.xlane.f32.xlu0 %v174
  %v176 = vpop.xlane.xlu0 %175
  %v177 = vsel %vm138, %v168, 0.0
  %178 = vadd.xlane.f32.xlu0 %v177
  %v179 = vpop.xlane.xlu0 %178
  %v180 = vsel %vm138, %v169, 0.0
  %181 = vadd.xlane.f32.xlu0 %v180
  %v182 = vpop.xlane.xlu0 %181
  %v183 = vsel %vm151, %v170, 0.0
  %184 = vadd.xlane.f32.xlu0 %v183
  %v185 = vpop.xlane.xlu0 %184
  %v186 = vmul.f32 %v173, %v155
  %v187 = vmul.f32 %v176, %v155
  %v188 = vmul.f32 %v179, %v155
  %v189 = vmul.f32 %v182, %v155
  %v190 = vmul.f32 %v185, %v155
  %v191 = vadd.f32 %v186, 1e-05
  %v192 = vadd.f32 %v187, 1e-05
  %v193 = vadd.f32 %v188, 1e-05
  %v194 = vadd.f32 %v189, 1e-05
  %v195 = vadd.f32 %v190, 1e-05
  %v196 = vrsqrt.pop %v191
  %v197 = vrsqrt.pop %v192
  %v198 = vrsqrt.pop %v193
  %v199 = vrsqrt.pop %v194
  %v200 = vrsqrt.pop %v195
  %v201 = vmul.f32 %v161, %v196
  %v202 = vmul.f32 %v162, %v197
  %v203 = vmul.f32 %v163, %v198
  %v204 = vmul.f32 %v164, %v199
  %v205 = vmul.f32 %v165, %v200
  %v206 = vlaneseq
  %v207 = vshrl.u32 %v206, 7
  %v208 = vsub.s32 0, %v207
  %v209 = vrot.slane %v97, %v208
  %v210 = vmul.f32 %v201, %v209
  %v211 = vmul.f32 %v202, %v209
  %v212 = vmul.f32 %v203, %v209
  %v213 = vmul.f32 %v204, %v209
  %v214 = vmul.f32 %v205, %v209
  %v215 = vlaneseq
  %v216 = vshrl.u32 %v215, 7
  %v217 = vsub.s32 0, %v216
  %v218 = vrot.slane %v98, %v217
  %v219 = vadd.f32 %v210, %v218
  %v220 = vadd.f32 %v211, %v218
  %v221 = vadd.f32 %v212, %v218
  %v222 = vadd.f32 %v213, %v218
  %v223 = vadd.f32 %v214, %v218
  %v224 = vpack.c.bf16 %v220, %v219
  %v225 = vpack.c.bf16 %v222, %v221
  %v226 = vpack.c.bf16 %v223, %v223
  %v227 = vpack.c.bf16 %v100, %v99
  %v228 = vpack.c.bf16 %v102, %v101
  %v229 = vlaneseq
  %v230 = vshrl.u32 %v229, 7
  %v231 = vsub.s32 0, %v230
  %v232 = vrot.slane %v103, %v231
  %v234 = vsel %vm138, %v224, 0
  %v237 = vsel %vm138, %v225, 0
  %v240 = vsel %vm138, %v226, 0
  %242 = vmatprep.subr.bf16.mxu0 0
  %243 = vmatpush1.bf16.msra.mxu0 %v227
  %244 = vmatprep.subr.bf16.mxu0 0
  %245 = vmatpush1.bf16.msra.mxu0 %v228
  %246 = vmatprep.subr.bf16.mxu0 0
  %247 = vmatpush1.bf16.msra.mxu0 0
  %248 = vmatprep.subr.bf16.mxu0 0
  %249 = vmatpush1.bf16.msra.mxu0 0
  %250 = vmatprep.subr.bf16.mxu0 0
  %251 = vmatpush1.bf16.msra.mxu0 0
  %252 = vmatprep.subr.bf16.mxu0 0
  %253 = vmatpush1.bf16.msra.mxu0 0
  %254 = vmatprep.subr.bf16.mxu0 0
  %255 = vmatpush1.bf16.msra.mxu0 0
  %256 = vmatprep.subr.bf16.mxu0 0
  %257 = vmatpush1.bf16.msra.mxu0 0
  %258 = vmatprep.subr.bf16.mxu0 0
  %259 = vmatpush1.bf16.msra.mxu0 0
  %260 = vmatprep.subr.bf16.mxu0 0
  %261 = vmatpush1.bf16.msra.mxu0 0
  %262 = vmatprep.subr.bf16.mxu0 0
  %263 = vmatpush1.bf16.msra.mxu0 0
  %264 = vmatprep.subr.bf16.mxu0 0
  %265 = vmatpush1.bf16.msra.mxu0 0
  %266 = vmatprep.subr.bf16.mxu0 0
  %267 = vmatpush1.bf16.msra.mxu0 0
  %268 = vmatprep.subr.bf16.mxu0 0
  %269 = vmatpush1.bf16.msra.mxu0 0
  %270 = vmatprep.subr.bf16.mxu0 0
  %271 = vmatpush1.bf16.msra.mxu0 0
  %272 = vmatprep.subr.bf16.mxu0 0
  %273 = vmatpush1.bf16.msra.mxu0 0
  %274 = vmatprep.mubr.bf16.mxu0 0
  %275 = vmatmul.mubr.bf16.gmra.mrb[0].mxu0 %v234
  %v276 = vpop.f32.mrb[0].mxu0
  %v277 = vadd.f32 %v232, %v276
  %v278 = vpop.f32.mrb[0].mxu0
  %v279 = vpop.f32.mrb[0].mxu0
  %v280 = vadd.f32 %v232, %v279
  %v281 = vpop.f32.mrb[0].mxu0
  %282 = vmatprep.mubr.bf16.mxu0 0
  %283 = vmatmul.mubr.bf16.gmra.mrb[0].mxu0 %v237
  %v284 = vpop.f32.mrb[0].mxu0
  %v285 = vadd.f32 %v232, %v284
  %v286 = vpop.f32.mrb[0].mxu0
  %v287 = vpop.f32.mrb[0].mxu0
  %v288 = vadd.f32 %v232, %v287
  %v289 = vpop.f32.mrb[0].mxu0
  %290 = vmatprep.mubr.bf16.mxu0 0
  %291 = vmatmul.mubr.bf16.gmra.mrb[0].mxu0 %v240
  %v292 = vpop.f32.mrb[0].mxu0
  %v293 = vadd.f32 %v232, %v292
  %v294 = vpop.f32.mrb[0].mxu0
  %v295 = vpop.f32.mrb[0].mxu0
  %v296 = vpop.f32.mrb[0].mxu0
  %297 = vdwg.mxu0
  %303 = vrot.lane.b32.xlu0 %v277, 96
  %v304 = vpop.permute.xlu0 %303
  %305 = vrot.lane.b32.xlu0 %v280, 96
  %v306 = vpop.permute.xlu0 %305
  %307 = vrot.lane.b32.xlu0 %v285, 96
  %v308 = vpop.permute.xlu0 %307
  %309 = vrot.lane.b32.xlu0 %v288, 96
  %v310 = vpop.permute.xlu0 %309
  %311 = vrot.lane.b32.xlu0 %v293, 96
  %v312 = vpop.permute.xlu0 %311
  %318 = vxpose.xlu0.b32.start [1/16] %v304, 128
  %319 = vxpose.xlu0.b32.cont [2/16] %v306, 128
  %320 = vxpose.xlu0.b32.cont [3/16] %v308, 128
  %321 = vxpose.xlu0.b32.cont [4/16] %v310, 128
  %322 = vxpose.xlu0.b32.cont [5/16] %v312, 128
  %323 = vxpose.xlu0.b32.cont [6/16] 0.0, 128
  %324 = vxpose.xlu0.b32.cont [7/16] 0.0, 128
  %325 = vxpose.xlu0.b32.cont [8/16] 0.0, 128
  %326 = vxpose.xlu0.b32.cont [9/16] 0.0, 128
  %327 = vxpose.xlu0.b32.cont [10/16] 0.0, 128
  %328 = vxpose.xlu0.b32.cont [11/16] 0.0, 128
  %329 = vxpose.xlu0.b32.cont [12/16] 0.0, 128
  %330 = vxpose.xlu0.b32.cont [13/16] 0.0, 128
  %331 = vxpose.xlu0.b32.cont [14/16] 0.0, 128
  %332 = vxpose.xlu0.b32.cont [15/16] 0.0, 128
  %333 = vxpose.xlu0.b32.end [16/16] 0.0, 128
  %v334 = vpop.trf.xlu0
  %v335 = vpop.trf.xlu0
  %v336 = vpop.trf.xlu0
  %v337 = vpop.trf.xlu0
  %v338 = vpop.trf.xlu0
  %v339 = vpop.trf.xlu0
  %v340 = vpop.trf.xlu0
  %v341 = vpop.trf.xlu0
  %v342 = vpop.trf.xlu0
  %v343 = vpop.trf.xlu0
  %v344 = vpop.trf.xlu0
  %v345 = vpop.trf.xlu0
  %v346 = vpop.trf.xlu0
  %v347 = vpop.trf.xlu0
  %v348 = vpop.trf.xlu0
  %v349 = vpop.trf.xlu0
  %v350 = vpack.c.bf16 %v280, %v277
  %v351 = vpack.c.bf16 %v288, %v285
  %v352 = vpack.c.bf16 %v293, %v293
  %v353 = vpack.c.bf16 %v334, %v334
  %vm354 = vcmask 64512
  %v356 = vsel %vm354, %v350, 0
  %v359 = vsel %vm354, %v351, 0
  %v362 = vsel %vm354, %v352, 0
  %vm364 = vcmask 1043456
  %v366 = vsel %vm364, %v353, 0
  %368 = vmatprep.subr.bf16.mxu0 0
  %369 = vmatpush1.bf16.msra.mxu0 %v366
  %370 = vmatprep.subr.bf16.mxu0 0
  %371 = vmatpush1.bf16.msra.mxu0 0
  %372 = vmatprep.subr.bf16.mxu0 0
  %373 = vmatpush1.bf16.msra.mxu0 0
  %374 = vmatprep.subr.bf16.mxu0 0
  %375 = vmatpush1.bf16.msra.mxu0 0
  %376 = vmatprep.subr.bf16.mxu0 0
  %377 = vmatpush1.bf16.msra.mxu0 0
  %378 = vmatprep.subr.bf16.mxu0 0
  %379 = vmatpush1.bf16.msra.mxu0 0
  %380 = vmatprep.subr.bf16.mxu0 0
  %381 = vmatpush1.bf16.msra.mxu0 0
  %382 = vmatprep.subr.bf16.mxu0 0
  %383 = vmatpush1.bf16.msra.mxu0 0
  %384 = vmatprep.subr.bf16.mxu0 0
  %385 = vmatpush1.bf16.msra.mxu0 0
  %386 = vmatprep.subr.bf16.mxu0 0
  %387 = vmatpush1.bf16.msra.mxu0 0
  %388 = vmatprep.subr.bf16.mxu0 0
  %389 = vmatpush1.bf16.msra.mxu0 0
  %390 = vmatprep.subr.bf16.mxu0 0
  %391 = vmatpush1.bf16.msra.mxu0 0
  %392 = vmatprep.subr.bf16.mxu0 0
  %393 = vmatpush1.bf16.msra.mxu0 0
  %394 = vmatprep.subr.bf16.mxu0 0
  %395 = vmatpush1.bf16.msra.mxu0 0
  %396 = vmatprep.subr.bf16.mxu0 0
  %397 = vmatpush1.bf16.msra.mxu0 0
  %398 = vmatprep.subr.bf16.mxu0 0
  %399 = vmatpush1.bf16.msra.mxu0 0
  %400 = vmatprep.mubr.bf16.mxu0 0
  %401 = vmatmul.mubr.bf16.gmra.mrb[0].mxu0 %v356
  %v402 = vpop.f32.mrb[0].mxu0
  %v403 = vadd.f32 0.0, %v402
  %v404 = vpop.f32.mrb[0].mxu0
  %v405 = vpop.f32.mrb[0].mxu0
  %v406 = vadd.f32 0.0, %v405
  %v407 = vpop.f32.mrb[0].mxu0
  %408 = vmatprep.mubr.bf16.mxu0 0
  %409 = vmatmul.mubr.bf16.gmra.mrb[0].mxu0 %v359
  %v410 = vpop.f32.mrb[0].mxu0
  %v411 = vadd.f32 0.0, %v410
  %v412 = vpop.f32.mrb[0].mxu0
  %v413 = vpop.f32.mrb[0].mxu0
  %v414 = vadd.f32 0.0, %v413
  %v415 = vpop.f32.mrb[0].mxu0
  %416 = vmatprep.mubr.bf16.mxu0 0
  %417 = vmatmul.mubr.bf16.gmra.mrb[0].mxu0 %v362
  %v418 = vpop.f32.mrb[0].mxu0
  %v419 = vadd.f32 0.0, %v418
  %v420 = vpop.f32.mrb[0].mxu0
  %v421 = vpop.f32.mrb[0].mxu0
  %v422 = vpop.f32.mrb[0].mxu0
  %423 = vdwg.mxu0
  %v424 = vmul.f32 %v403, 0.35355338
  %v425 = vmul.f32 %v406, 0.35355338
  %v426 = vmul.f32 %v411, 0.35355338
  %v427 = vmul.f32 %v414, 0.35355338
  %v428 = vmul.f32 %v419, 0.35355338
  %v429 = vadd.f32 %v424, %v133
  %v430 = vadd.f32 %v425, %v134
  %v431 = vadd.f32 %v426, %v135
  %v432 = vadd.f32 %v427, %v136
  %v433 = vadd.f32 %v428, %v137
  %vm434 = vcmask 277504
  %v435 = vsel %vm434, %v429, -inf
  %436 = vmax.xlane.f32.xlu0 %v435
  %v437 = vpop.xlane.xlu0 %436
  %v438 = vsel %vm434, %v430, -inf
  %439 = vmax.xlane.f32.xlu0 %v438
  %v440 = vpop.xlane.xlu0 %439
  %v441 = vsel %vm434, %v431, -inf
  %442 = vmax.xlane.f32.xlu0 %v441
  %v443 = vpop.xlane.xlu0 %442
  %v444 = vsel %vm434, %v432, -inf
  %445 = vmax.xlane.f32.xlu0 %v444
  %v446 = vpop.xlane.xlu0 %445
  %vm447 = vcmask 271360
  %v448 = vsel %vm447, %v433, -inf
  %449 = vmax.xlane.f32.xlu0 %v448
  %v450 = vpop.xlane.xlu0 %449
  %v451 = vsub.f32 %v429, %v437
  %v452 = vsub.f32 %v430, %v440
  %v453 = vsub.f32 %v431, %v443
  %v454 = vsub.f32 %v432, %v446
  %v455 = vsub.f32 %v433, %v450
  %v456 = vmul.f32 %v451, 1.442695
  %v457 = vpow.pop %v456
  %v458 = vmul.f32 %v452, 1.442695
  %v459 = vpow.pop %v458
  %v460 = vmul.f32 %v453, 1.442695
  %v461 = vpow.pop %v460
  %v462 = vmul.f32 %v454, 1.442695
  %v463 = vpow.pop %v462
  %v464 = vmul.f32 %v455, 1.442695
  %v465 = vpow.pop %v464
  %v466 = vsel %vm434, %v457, 0.0
  %467 = vadd.xlane.f32.xlu0 %v466
  %v468 = vpop.xlane.xlu0 %467
  %v469 = vsel %vm434, %v459, 0.0
  %470 = vadd.xlane.f32.xlu0 %v469
  %v471 = vpop.xlane.xlu0 %470
  %v472 = vsel %vm434, %v461, 0.0
  %473 = vadd.xlane.f32.xlu0 %v472
  %v474 = vpop.xlane.xlu0 %473
  %v475 = vsel %vm434, %v463, 0.0
  %476 = vadd.xlane.f32.xlu0 %v475
  %v477 = vpop.xlane.xlu0 %476
  %v478 = vsel %vm447, %v465, 0.0
  %479 = vadd.xlane.f32.xlu0 %v478
  %v480 = vpop.xlane.xlu0 %479
  %v481 = vrcp.pop %v468
  %v482 = vrcp.pop %v471
  %v483 = vrcp.pop %v474
  %v484 = vrcp.pop %v477
  %v485 = vrcp.pop %v480
  %v486 = vmul.f32 %v457, %v481
  %v487 = vmul.f32 %v459, %v482
  %v488 = vmul.f32 %v461, %v483
  %v489 = vmul.f32 %v463, %v484
  %v490 = vmul.f32 %v465, %v485
  %v491 = vpack.c.bf16 %v487, %v486
  %v492 = vpack.c.bf16 %v489, %v488
  %v493 = vpack.c.bf16 %v490, %v490
  %497 = vrot.lane.b32.xlu0 %v350, 64
  %v498 = vpop.permute.xlu0 %497
  %499 = vrot.lane.b32.xlu0 %v351, 64
  %v500 = vpop.permute.xlu0 %499
  %501 = vrot.lane.b32.xlu0 %v352, 64
  %v502 = vpop.permute.xlu0 %501
  %v506 = vsel %vm434, %v491, 0
  %v509 = vsel %vm434, %v492, 0
  %v512 = vsel %vm434, %v493, 0
  %vm514 = vcmask 1040384
  %v516 = vsel %vm514, %v502, 0
  %518 = vmatprep.subr.bf16.mxu0 0
  %519 = vmatpush1.bf16.msra.mxu0 %v498
  %520 = vmatprep.subr.bf16.mxu0 0
  %521 = vmatpush1.bf16.msra.mxu0 %v500
  %522 = vmatprep.subr.bf16.mxu0 0
  %523 = vmatpush1.bf16.msra.mxu0 %v516
  %524 = vmatprep.subr.bf16.mxu0 0
  %525 = vmatpush1.bf16.msra.mxu0 0
  %526 = vmatprep.subr.bf16.mxu0 0
  %527 = vmatpush1.bf16.msra.mxu0 0
  %528 = vmatprep.subr.bf16.mxu0 0
  %529 = vmatpush1.bf16.msra.mxu0 0
  %530 = vmatprep.subr.bf16.mxu0 0
  %531 = vmatpush1.bf16.msra.mxu0 0
  %532 = vmatprep.subr.bf16.mxu0 0
  %533 = vmatpush1.bf16.msra.mxu0 0
  %534 = vmatprep.subr.bf16.mxu0 0
  %535 = vmatpush1.bf16.msra.mxu0 0
  %536 = vmatprep.subr.bf16.mxu0 0
  %537 = vmatpush1.bf16.msra.mxu0 0
  %538 = vmatprep.subr.bf16.mxu0 0
  %539 = vmatpush1.bf16.msra.mxu0 0
  %540 = vmatprep.subr.bf16.mxu0 0
  %541 = vmatpush1.bf16.msra.mxu0 0
  %542 = vmatprep.subr.bf16.mxu0 0
  %543 = vmatpush1.bf16.msra.mxu0 0
  %544 = vmatprep.subr.bf16.mxu0 0
  %545 = vmatpush1.bf16.msra.mxu0 0
  %546 = vmatprep.subr.bf16.mxu0 0
  %547 = vmatpush1.bf16.msra.mxu0 0
  %548 = vmatprep.subr.bf16.mxu0 0
  %549 = vmatpush1.bf16.msra.mxu0 0
  %550 = vmatprep.mubr.bf16.mxu0 0
  %551 = vmatmul.mubr.bf16.gmra.mrb[0].mxu0 %v506
  %v552 = vpop.f32.mrb[0].mxu0
  %v553 = vadd.f32 0.0, %v552
  %v554 = vpop.f32.mrb[0].mxu0
  %v555 = vpop.f32.mrb[0].mxu0
  %v556 = vadd.f32 0.0, %v555
  %v557 = vpop.f32.mrb[0].mxu0
  %558 = vmatprep.mubr.bf16.mxu0 0
  %559 = vmatmul.mubr.bf16.gmra.mrb[0].mxu0 %v509
  %v560 = vpop.f32.mrb[0].mxu0
  %v561 = vadd.f32 0.0, %v560
  %v562 = vpop.f32.mrb[0].mxu0
  %v563 = vpop.f32.mrb[0].mxu0
  %v564 = vadd.f32 0.0, %v563
  %v565 = vpop.f32.mrb[0].mxu0
  %566 = vmatprep.mubr.bf16.mxu0 0
  %567 = vmatmul.mubr.bf16.gmra.mrb[0].mxu0 %v512
  %v568 = vpop.f32.mrb[0].mxu0
  %v569 = vadd.f32 0.0, %v568
  %v570 = vpop.f32.mrb[0].mxu0
  %v571 = vpop.f32.mrb[0].mxu0
  %v572 = vpop.f32.mrb[0].mxu0
  %573 = vdwg.mxu0
  %574 = vrot.lane.b32.xlu0 %v277, 88
  %v575 = vpop.permute.xlu0 %574
  %576 = vrot.lane.b32.xlu0 %v280, 88
  %v577 = vpop.permute.xlu0 %576
  %578 = vrot.lane.b32.xlu0 %v285, 88
  %v579 = vpop.permute.xlu0 %578
  %580 = vrot.lane.b32.xlu0 %v288, 88
  %v581 = vpop.permute.xlu0 %580
  %582 = vrot.lane.b32.xlu0 %v293, 88
  %v583 = vpop.permute.xlu0 %582
  %589 = vxpose.xlu0.b32.start [1/16] %v575, 128
  %590 = vxpose.xlu0.b32.cont [2/16] %v577, 128
  %591 = vxpose.xlu0.b32.cont [3/16] %v579, 128
  %592 = vxpose.xlu0.b32.cont [4/16] %v581, 128
  %593 = vxpose.xlu0.b32.cont [5/16] %v583, 128
  %594 = vxpose.xlu0.b32.cont [6/16] 0.0, 128
  %595 = vxpose.xlu0.b32.cont [7/16] 0.0, 128
  %596 = vxpose.xlu0.b32.cont [8/16] 0.0, 128
  %597 = vxpose.xlu0.b32.cont [9/16] 0.0, 128
  %598 = vxpose.xlu0.b32.cont [10/16] 0.0, 128
  %599 = vxpose.xlu0.b32.cont [11/16] 0.0, 128
  %600 = vxpose.xlu0.b32.cont [12/16] 0.0, 128
  %601 = vxpose.xlu0.b32.cont [13/16] 0.0, 128
  %602 = vxpose.xlu0.b32.cont [14/16] 0.0, 128
  %603 = vxpose.xlu0.b32.cont [15/16] 0.0, 128
  %604 = vxpose.xlu0.b32.end [16/16] 0.0, 128
  %v605 = vpop.trf.xlu0
  %v606 = vpop.trf.xlu0
  %v607 = vpop.trf.xlu0
  %v608 = vpop.trf.xlu0
  %v609 = vpop.trf.xlu0
  %v610 = vpop.trf.xlu0
  %v611 = vpop.trf.xlu0
  %v612 = vpop.trf.xlu0
  %v613 = vpop.trf.xlu0
  %v614 = vpop.trf.xlu0
  %v615 = vpop.trf.xlu0
  %v616 = vpop.trf.xlu0
  %v617 = vpop.trf.xlu0
  %v618 = vpop.trf.xlu0
  %v619 = vpop.trf.xlu0
  %v620 = vpop.trf.xlu0
  %v621 = vpack.c.bf16 %v605, %v605
  %622 = vrot.lane.b32.xlu0 %v350, 120
  %v623 = vpop.permute.xlu0 %622
  %624 = vrot.lane.b32.xlu0 %v351, 120
  %v625 = vpop.permute.xlu0 %624
  %626 = vrot.lane.b32.xlu0 %v352, 120
  %v627 = vpop.permute.xlu0 %626
  %v629 = vsel %vm354, %v623, 0
  %v632 = vsel %vm354, %v625, 0
  %v635 = vsel %vm354, %v627, 0
  %v638 = vsel %vm364, %v621, 0
  %640 = vmatprep.subr.bf16.mxu0 0
  %641 = vmatpush1.bf16.msra.mxu0 %v638
  %642 = vmatprep.subr.bf16.mxu0 0
  %643 = vmatpush1.bf16.msra.mxu0 0
  %644 = vmatprep.subr.bf16.mxu0 0
  %645 = vmatpush1.bf16.msra.mxu0 0
  %646 = vmatprep.subr.bf16.mxu0 0
  %647 = vmatpush1.bf16.msra.mxu0 0
  %648 = vmatprep.subr.bf16.mxu0 0
  %649 = vmatpush1.bf16.msra.mxu0 0
  %650 = vmatprep.subr.bf16.mxu0 0
  %651 = vmatpush1.bf16.msra.mxu0 0
  %652 = vmatprep.subr.bf16.mxu0 0
  %653 = vmatpush1.bf16.msra.mxu0 0
  %654 = vmatprep.subr.bf16.mxu0 0
  %655 = vmatpush1.bf16.msra.mxu0 0
  %656 = vmatprep.subr.bf16.mxu0 0
  %657 = vmatpush1.bf16.msra.mxu0 0
  %658 = vmatprep.subr.bf16.mxu0 0
  %659 = vmatpush1.bf16.msra.mxu0 0
  %660 = vmatprep.subr.bf16.mxu0 0
  %661 = vmatpush1.bf16.msra.mxu0 0
  %662 = vmatprep.subr.bf16.mxu0 0
  %663 = vmatpush1.bf16.msra.mxu0 0
  %664 = vmatprep.subr.bf16.mxu0 0
  %665 = vmatpush1.bf16.msra.mxu0 0
  %666 = vmatprep.subr.bf16.mxu0 0
  %667 = vmatpush1.bf16.msra.mxu0 0
  %668 = vmatprep.subr.bf16.mxu0 0
  %669 = vmatpush1.bf16.msra.mxu0 0
  %670 = vmatprep.subr.bf16.mxu0 0
  %671 = vmatpush1.bf16.msra.mxu0 0
  %672 = vmatprep.mubr.bf16.mxu0 0
  %673 = vmatmul.mubr.bf16.gmra.mrb[0].mxu0 %v629
  %v674 = vpop.f32.mrb[0].mxu0
  %v675 = vadd.f32 0.0, %v674
  %v676 = vpop.f32.mrb[0].mxu0
  %v677 = vpop.f32.mrb[0].mxu0
  %v678 = vadd.f32 0.0, %v677
  %v679 = vpop.f32.mrb[0].mxu0
  %680 = vmatprep.mubr.bf16.mxu0 0
  %681 = vmatmul.mubr.bf16.gmra.mrb[0].mxu0 %v632
  %v682 = vpop.f32.mrb[0].mxu0
  %v683 = vadd.f32 0.0, %v682
  %v684 = vpop.f32.mrb[0].mxu0
  %v685 = vpop.f32.mrb[0].mxu0
  %v686 = vadd.f32 0.0, %v685
  %v687 = vpop.f32.mrb[0].mxu0
  %688 = vmatprep.mubr.bf16.mxu0 0
  %689 = vmatmul.mubr.bf16.gmra.mrb[0].mxu0 %v635
  %v690 = vpop.f32.mrb[0].mxu0
  %v691 = vadd.f32 0.0, %v690
  %v692 = vpop.f32.mrb[0].mxu0
  %v693 = vpop.f32.mrb[0].mxu0
  %v694 = vpop.f32.mrb[0].mxu0
  %695 = vdwg.mxu0
  %v696 = vmul.f32 %v675, 0.35355338
  %v697 = vmul.f32 %v678, 0.35355338
  %v698 = vmul.f32 %v683, 0.35355338
  %v699 = vmul.f32 %v686, 0.35355338
  %v700 = vmul.f32 %v691, 0.35355338
  %v701 = vadd.f32 %v696, %v133
  %v702 = vadd.f32 %v697, %v134
  %v703 = vadd.f32 %v698, %v135
  %v704 = vadd.f32 %v699, %v136
  %v705 = vadd.f32 %v700, %v137
  %v706 = vsel %vm434, %v701, -inf
  %707 = vmax.xlane.f32.xlu0 %v706
  %v708 = vpop.xlane.xlu0 %707
  %v709 = vsel %vm434, %v702, -inf
  %710 = vmax.xlane.f32.xlu0 %v709
  %v711 = vpop.xlane.xlu0 %710
  %v712 = vsel %vm434, %v703, -inf
  %713 = vmax.xlane.f32.xlu0 %v712
  %v714 = vpop.xlane.xlu0 %713
  %v715 = vsel %vm434, %v704, -inf
  %716 = vmax.xlane.f32.xlu0 %v715
  %v717 = vpop.xlane.xlu0 %716
  %v718 = vsel %vm447, %v705, -inf
  %719 = vmax.xlane.f32.xlu0 %v718
  %v720 = vpop.xlane.xlu0 %719
  %v721 = vsub.f32 %v701, %v708
  %v722 = vsub.f32 %v702, %v711
  %v723 = vsub.f32 %v703, %v714
  %v724 = vsub.f32 %v704, %v717
  %v725 = vsub.f32 %v705, %v720
  %v726 = vmul.f32 %v721, 1.442695
  %v727 = vpow.pop %v726
  %v728 = vmul.f32 %v722, 1.442695
  %v729 = vpow.pop %v728
  %v730 = vmul.f32 %v723, 1.442695
  %v731 = vpow.pop %v730
  %v732 = vmul.f32 %v724, 1.442695
  %v733 = vpow.pop %v732
  %v734 = vmul.f32 %v725, 1.442695
  %v735 = vpow.pop %v734
  %v736 = vsel %vm434, %v727, 0.0
  %737 = vadd.xlane.f32.xlu0 %v736
  %v738 = vpop.xlane.xlu0 %737
  %v739 = vsel %vm434, %v729, 0.0
  %740 = vadd.xlane.f32.xlu0 %v739
  %v741 = vpop.xlane.xlu0 %740
  %v742 = vsel %vm434, %v731, 0.0
  %743 = vadd.xlane.f32.xlu0 %v742
  %v744 = vpop.xlane.xlu0 %743
  %v745 = vsel %vm434, %v733, 0.0
  %746 = vadd.xlane.f32.xlu0 %v745
  %v747 = vpop.xlane.xlu0 %746
  %v748 = vsel %vm447, %v735, 0.0
  %749 = vadd.xlane.f32.xlu0 %v748
  %v750 = vpop.xlane.xlu0 %749
  %v751 = vrcp.pop %v738
  %v752 = vrcp.pop %v741
  %v753 = vrcp.pop %v744
  %v754 = vrcp.pop %v747
  %v755 = vrcp.pop %v750
  %v756 = vmul.f32 %v727, %v751
  %v757 = vmul.f32 %v729, %v752
  %v758 = vmul.f32 %v731, %v753
  %v759 = vmul.f32 %v733, %v754
  %v760 = vmul.f32 %v735, %v755
  %v761 = vpack.c.bf16 %v757, %v756
  %v762 = vpack.c.bf16 %v759, %v758
  %v763 = vpack.c.bf16 %v760, %v760
  %764 = vrot.lane.b32.xlu0 %v350, 56
  %v765 = vpop.permute.xlu0 %764
  %766 = vrot.lane.b32.xlu0 %v351, 56
  %v767 = vpop.permute.xlu0 %766
  %768 = vrot.lane.b32.xlu0 %v352, 56
  %v769 = vpop.permute.xlu0 %768
  %v773 = vsel %vm434, %v761, 0
  %v776 = vsel %vm434, %v762, 0
  %v779 = vsel %vm434, %v763, 0
  %v782 = vsel %vm514, %v769, 0
  %784 = vmatprep.subr.bf16.mxu0 0
  %785 = vmatpush1.bf16.msra.mxu0 %v765
  %786 = vmatprep.subr.bf16.mxu0 0
  %787 = vmatpush1.bf16.msra.mxu0 %v767
  %788 = vmatprep.subr.bf16.mxu0 0
  %789 = vmatpush1.bf16.msra.mxu0 %v782
  %790 = vmatprep.subr.bf16.mxu0 0
  %791 = vmatpush1.bf16.msra.mxu0 0
  %792 = vmatprep.subr.bf16.mxu0 0
  %793 = vmatpush1.bf16.msra.mxu0 0
  %794 = vmatprep.subr.bf16.mxu0 0
  %795 = vmatpush1.bf16.msra.mxu0 0
  %796 = vmatprep.subr.bf16.mxu0 0
  %797 = vmatpush1.bf16.msra.mxu0 0
  %798 = vmatprep.subr.bf16.mxu0 0
  %799 = vmatpush1.bf16.msra.mxu0 0
  %800 = vmatprep.subr.bf16.mxu0 0
  %801 = vmatpush1.bf16.msra.mxu0 0
  %802 = vmatprep.subr.bf16.mxu0 0
  %803 = vmatpush1.bf16.msra.mxu0 0
  %804 = vmatprep.subr.bf16.mxu0 0
  %805 = vmatpush1.bf16.msra.mxu0 0
  %806 = vmatprep.subr.bf16.mxu0 0
  %807 = vmatpush1.bf16.msra.mxu0 0
  %808 = vmatprep.subr.bf16.mxu0 0
  %809 = vmatpush1.bf16.msra.mxu0 0
  %810 = vmatprep.subr.bf16.mxu0 0
  %811 = vmatpush1.bf16.msra.mxu0 0
  %812 = vmatprep.subr.bf16.mxu0 0
  %813 = vmatpush1.bf16.msra.mxu0 0
  %814 = vmatprep.subr.bf16.mxu0 0
  %815 = vmatpush1.bf16.msra.mxu0 0
  %816 = vmatprep.mubr.bf16.mxu0 0
  %817 = vmatmul.mubr.bf16.gmra.mrb[0].mxu0 %v773
  %v818 = vpop.f32.mrb[0].mxu0
  %v819 = vadd.f32 0.0, %v818
  %v820 = vpop.f32.mrb[0].mxu0
  %v821 = vpop.f32.mrb[0].mxu0
  %v822 = vadd.f32 0.0, %v821
  %v823 = vpop.f32.mrb[0].mxu0
  %824 = vmatprep.mubr.bf16.mxu0 0
  %825 = vmatmul.mubr.bf16.gmra.mrb[0].mxu0 %v776
  %v826 = vpop.f32.mrb[0].mxu0
  %v827 = vadd.f32 0.0, %v826
  %v828 = vpop.f32.mrb[0].mxu0
  %v829 = vpop.f32.mrb[0].mxu0
  %v830 = vadd.f32 0.0, %v829
  %v831 = vpop.f32.mrb[0].mxu0
  %832 = vmatprep.mubr.bf16.mxu0 0
  %833 = vmatmul.mubr.bf16.gmra.mrb[0].mxu0 %v779
  %v834 = vpop.f32.mrb[0].mxu0
  %v835 = vadd.f32 0.0, %v834
  %v836 = vpop.f32.mrb[0].mxu0
  %v837 = vpop.f32.mrb[0].mxu0
  %v838 = vpop.f32.mrb[0].mxu0
  %839 = vdwg.mxu0
  %840 = vrot.lane.b32.xlu0 %v277, 80
  %v841 = vpop.permute.xlu0 %840
  %842 = vrot.lane.b32.xlu0 %v280, 80
  %v843 = vpop.permute.xlu0 %842
  %844 = vrot.lane.b32.xlu0 %v285, 80
  %v845 = vpop.permute.xlu0 %844
  %846 = vrot.lane.b32.xlu0 %v288, 80
  %v847 = vpop.permute.xlu0 %846
  %848 = vrot.lane.b32.xlu0 %v293, 80
  %v849 = vpop.permute.xlu0 %848
  %855 = vxpose.xlu0.b32.start [1/16] %v841, 128
  %856 = vxpose.xlu0.b32.cont [2/16] %v843, 128
  %857 = vxpose.xlu0.b32.cont [3/16] %v845, 128
  %858 = vxpose.xlu0.b32.cont [4/16] %v847, 128
  %859 = vxpose.xlu0.b32.cont [5/16] %v849, 128
  %860 = vxpose.xlu0.b32.cont [6/16] 0.0, 128
  %861 = vxpose.xlu0.b32.cont [7/16] 0.0, 128
  %862 = vxpose.xlu0.b32.cont [8/16] 0.0, 128
  %863 = vxpose.xlu0.b32.cont [9/16] 0.0, 128
  %864 = vxpose.xlu0.b32.cont [10/16] 0.0, 128
  %865 = vxpose.xlu0.b32.cont [11/16] 0.0, 128
  %866 = vxpose.xlu0.b32.cont [12/16] 0.0, 128
  %867 = vxpose.xlu0.b32.cont [13/16] 0.0, 128
  %868 = vxpose.xlu0.b32.cont [14/16] 0.0, 128
  %869 = vxpose.xlu0.b32.cont [15/16] 0.0, 128
  %870 = vxpose.xlu0.b32.end [16/16] 0.0, 128
  %v871 = vpop.trf.xlu0
  %v872 = vpop.trf.xlu0
  %v873 = vpop.trf.xlu0
  %v874 = vpop.trf.xlu0
  %v875 = vpop.trf.xlu0
  %v876 = vpop.trf.xlu0
  %v877 = vpop.trf.xlu0
  %v878 = vpop.trf.xlu0
  %v879 = vpop.trf.xlu0
  %v880 = vpop.trf.xlu0
  %v881 = vpop.trf.xlu0
  %v882 = vpop.trf.xlu0
  %v883 = vpop.trf.xlu0
  %v884 = vpop.trf.xlu0
  %v885 = vpop.trf.xlu0
  %v886 = vpop.trf.xlu0
  %v887 = vpack.c.bf16 %v871, %v871
  %888 = vrot.lane.b32.xlu0 %v350, 112
  %v889 = vpop.permute.xlu0 %888
  %890 = vrot.lane.b32.xlu0 %v351, 112
  %v891 = vpop.permute.xlu0 %890
  %892 = vrot.lane.b32.xlu0 %v352, 112
  %v893 = vpop.permute.xlu0 %892
  %v895 = vsel %vm354, %v889, 0
  %v898 = vsel %vm354, %v891, 0
  %v901 = vsel %vm354, %v893, 0
  %v904 = vsel %vm364, %v887, 0
  %906 = vmatprep.subr.bf16.mxu0 0
  %907 = vmatpush1.bf16.msra.mxu0 %v904
  %908 = vmatprep.subr.bf16.mxu0 0
  %909 = vmatpush1.bf16.msra.mxu0 0
  %910 = vmatprep.subr.bf16.mxu0 0
  %911 = vmatpush1.bf16.msra.mxu0 0
  %912 = vmatprep.subr.bf16.mxu0 0
  %913 = vmatpush1.bf16.msra.mxu0 0
  %914 = vmatprep.subr.bf16.mxu0 0
  %915 = vmatpush1.bf16.msra.mxu0 0
  %916 = vmatprep.subr.bf16.mxu0 0
  %917 = vmatpush1.bf16.msra.mxu0 0
  %918 = vmatprep.subr.bf16.mxu0 0
  %919 = vmatpush1.bf16.msra.mxu0 0
  %920 = vmatprep.subr.bf16.mxu0 0
  %921 = vmatpush1.bf16.msra.mxu0 0
  %922 = vmatprep.subr.bf16.mxu0 0
  %923 = vmatpush1.bf16.msra.mxu0 0
  %924 = vmatprep.subr.bf16.mxu0 0
  %925 = vmatpush1.bf16.msra.mxu0 0
  %926 = vmatprep.subr.bf16.mxu0 0
  %927 = vmatpush1.bf16.msra.mxu0 0
  %928 = vmatprep.subr.bf16.mxu0 0
  %929 = vmatpush1.bf16.msra.mxu0 0
  %930 = vmatprep.subr.bf16.mxu0 0
  %931 = vmatpush1.bf16.msra.mxu0 0
  %932 = vmatprep.subr.bf16.mxu0 0
  %933 = vmatpush1.bf16.msra.mxu0 0
  %934 = vmatprep.subr.bf16.mxu0 0
  %935 = vmatpush1.bf16.msra.mxu0 0
  %936 = vmatprep.subr.bf16.mxu0 0
  %937 = vmatpush1.bf16.msra.mxu0 0
  %938 = vmatprep.mubr.bf16.mxu0 0
  %939 = vmatmul.mubr.bf16.gmra.mrb[0].mxu0 %v895
  %v940 = vpop.f32.mrb[0].mxu0
  %v941 = vadd.f32 0.0, %v940
  %v942 = vpop.f32.mrb[0].mxu0
  %v943 = vpop.f32.mrb[0].mxu0
  %v944 = vadd.f32 0.0, %v943
  %v945 = vpop.f32.mrb[0].mxu0
  %946 = vmatprep.mubr.bf16.mxu0 0
  %947 = vmatmul.mubr.bf16.gmra.mrb[0].mxu0 %v898
  %v948 = vpop.f32.mrb[0].mxu0
  %v949 = vadd.f32 0.0, %v948
  %v950 = vpop.f32.mrb[0].mxu0
  %v951 = vpop.f32.mrb[0].mxu0
  %v952 = vadd.f32 0.0, %v951
  %v953 = vpop.f32.mrb[0].mxu0
  %954 = vmatprep.mubr.bf16.mxu0 0
  %955 = vmatmul.mubr.bf16.gmra.mrb[0].mxu0 %v901
  %v956 = vpop.f32.mrb[0].mxu0
  %v957 = vadd.f32 0.0, %v956
  %v958 = vpop.f32.mrb[0].mxu0
  %v959 = vpop.f32.mrb[0].mxu0
  %v960 = vpop.f32.mrb[0].mxu0
  %961 = vdwg.mxu0
  %v962 = vmul.f32 %v941, 0.35355338
  %v963 = vmul.f32 %v944, 0.35355338
  %v964 = vmul.f32 %v949, 0.35355338
  %v965 = vmul.f32 %v952, 0.35355338
  %v966 = vmul.f32 %v957, 0.35355338
  %v967 = vadd.f32 %v962, %v133
  %v968 = vadd.f32 %v963, %v134
  %v969 = vadd.f32 %v964, %v135
  %v970 = vadd.f32 %v965, %v136
  %v971 = vadd.f32 %v966, %v137
  %v972 = vsel %vm434, %v967, -inf
  %973 = vmax.xlane.f32.xlu0 %v972
  %v974 = vpop.xlane.xlu0 %973
  %v975 = vsel %vm434, %v968, -inf
  %976 = vmax.xlane.f32.xlu0 %v975
  %v977 = vpop.xlane.xlu0 %976
  %v978 = vsel %vm434, %v969, -inf
  %979 = vmax.xlane.f32.xlu0 %v978
  %v980 = vpop.xlane.xlu0 %979
  %v981 = vsel %vm434, %v970, -inf
  %982 = vmax.xlane.f32.xlu0 %v981
  %v983 = vpop.xlane.xlu0 %982
  %v984 = vsel %vm447, %v971, -inf
  %985 = vmax.xlane.f32.xlu0 %v984
  %v986 = vpop.xlane.xlu0 %985
  %v987 = vsub.f32 %v967, %v974
  %v988 = vsub.f32 %v968, %v977
  %v989 = vsub.f32 %v969, %v980
  %v990 = vsub.f32 %v970, %v983
  %v991 = vsub.f32 %v971, %v986
  %v992 = vmul.f32 %v987, 1.442695
  %v993 = vpow.pop %v992
  %v994 = vmul.f32 %v988, 1.442695
  %v995 = vpow.pop %v994
  %v996 = vmul.f32 %v989, 1.442695
  %v997 = vpow.pop %v996
  %v998 = vmul.f32 %v990, 1.442695
  %v999 = vpow.pop %v998
  %v1000 = vmul.f32 %v991, 1.442695
  %v1001 = vpow.pop %v1000
  %v1002 = vsel %vm434, %v993, 0.0
  %1003 = vadd.xlane.f32.xlu0 %v1002
  %v1004 = vpop.xlane.xlu0 %1003
  %v1005 = vsel %vm434, %v995, 0.0
  %1006 = vadd.xlane.f32.xlu0 %v1005
  %v1007 = vpop.xlane.xlu0 %1006
  %v1008 = vsel %vm434, %v997, 0.0
  %1009 = vadd.xlane.f32.xlu0 %v1008
  %v1010 = vpop.xlane.xlu0 %1009
  %v1011 = vsel %vm434, %v999, 0.0
  %1012 = vadd.xlane.f32.xlu0 %v1011
  %v1013 = vpop.xlane.xlu0 %1012
  %v1014 = vsel %vm447, %v1001, 0.0
  %1015 = vadd.xlane.f32.xlu0 %v1014
  %v1016 = vpop.xlane.xlu0 %1015
  %v1017 = vrcp.pop %v1004
  %v1018 = vrcp.pop %v1007
  %v1019 = vrcp.pop %v1010
  %v1020 = vrcp.pop %v1013
  %v1021 = vrcp.pop %v1016
  %v1022 = vmul.f32 %v993, %v1017
  %v1023 = vmul.f32 %v995, %v1018
  %v1024 = vmul.f32 %v997, %v1019
  %v1025 = vmul.f32 %v999, %v1020
  %v1026 = vmul.f32 %v1001, %v1021
  %v1027 = vpack.c.bf16 %v1023, %v1022
  %v1028 = vpack.c.bf16 %v1025, %v1024
  %v1029 = vpack.c.bf16 %v1026, %v1026
  %1030 = vrot.lane.b32.xlu0 %v350, 48
  %v1031 = vpop.permute.xlu0 %1030
  %1032 = vrot.lane.b32.xlu0 %v351, 48
  %v1033 = vpop.permute.xlu0 %1032
  %1034 = vrot.lane.b32.xlu0 %v352, 48
  %v1035 = vpop.permute.xlu0 %1034
  %v1039 = vsel %vm434, %v1027, 0
  %v1042 = vsel %vm434, %v1028, 0
  %v1045 = vsel %vm434, %v1029, 0
  %v1048 = vsel %vm514, %v1035, 0
  %1050 = vmatprep.subr.bf16.mxu0 0
  %1051 = vmatpush1.bf16.msra.mxu0 %v1031
  %1052 = vmatprep.subr.bf16.mxu0 0
  %1053 = vmatpush1.bf16.msra.mxu0 %v1033
  %1054 = vmatprep.subr.bf16.mxu0 0
  %1055 = vmatpush1.bf16.msra.mxu0 %v1048
  %1056 = vmatprep.subr.bf16.mxu0 0
  %1057 = vmatpush1.bf16.msra.mxu0 0
  %1058 = vmatprep.subr.bf16.mxu0 0
  %1059 = vmatpush1.bf16.msra.mxu0 0
  %1060 = vmatprep.subr.bf16.mxu0 0
  %1061 = vmatpush1.bf16.msra.mxu0 0
  %1062 = vmatprep.subr.bf16.mxu0 0
  %1063 = vmatpush1.bf16.msra.mxu0 0
  %1064 = vmatprep.subr.bf16.mxu0 0
  %1065 = vmatpush1.bf16.msra.mxu0 0
  %1066 = vmatprep.subr.bf16.mxu0 0
  %1067 = vmatpush1.bf16.msra.mxu0 0
  %1068 = vmatprep.subr.bf16.mxu0 0
  %1069 = vmatpush1.bf16.msra.mxu0 0
  %1070 = vmatprep.subr.bf16.mxu0 0
  %1071 = vmatpush1.bf16.msra.mxu0 0
  %1072 = vmatprep.subr.bf16.mxu0 0
  %1073 = vmatpush1.bf16.msra.mxu0 0
  %1074 = vmatprep.subr.bf16.mxu0 0
  %1075 = vmatpush1.bf16.msra.mxu0 0
  %1076 = vmatprep.subr.bf16.mxu0 0
  %1077 = vmatpush1.bf16.msra.mxu0 0
  %1078 = vmatprep.subr.bf16.mxu0 0
  %1079 = vmatpush1.bf16.msra.mxu0 0
  %1080 = vmatprep.subr.bf16.mxu0 0
  %1081 = vmatpush1.bf16.msra.mxu0 0
  %1082 = vmatprep.mubr.bf16.mxu0 0
  %1083 = vmatmul.mubr.bf16.gmra.mrb[0].mxu0 %v1039
  %v1084 = vpop.f32.mrb[0].mxu0
  %v1085 = vadd.f32 0.0, %v1084
  %v1086 = vpop.f32.mrb[0].mxu0
  %v1087 = vpop.f32.mrb[0].mxu0
  %v1088 = vadd.f32 0.0, %v1087
  %v1089 = vpop.f32.mrb[0].mxu0
  %1090 = vmatprep.mubr.bf16.mxu0 0
  %1091 = vmatmul.mubr.bf16.gmra.mrb[0].mxu0 %v1042
  %v1092 = vpop.f32.mrb[0].mxu0
  %v1093 = vadd.f32 0.0, %v1092
  %v1094 = vpop.f32.mrb[0].mxu0
  %v1095 = vpop.f32.mrb[0].mxu0
  %v1096 = vadd.f32 0.0, %v1095
  %v1097 = vpop.f32.mrb[0].mxu0
  %1098 = vmatprep.mubr.bf16.mxu0 0
  %1099 = vmatmul.mubr.bf16.gmra.mrb[0].mxu0 %v1045
  %v1100 = vpop.f32.mrb[0].mxu0
  %v1101 = vadd.f32 0.0, %v1100
  %v1102 = vpop.f32.mrb[0].mxu0
  %v1103 = vpop.f32.mrb[0].mxu0
  %v1104 = vpop.f32.mrb[0].mxu0
  %1105 = vdwg.mxu0
  %1106 = vrot.lane.b32.xlu0 %v277, 72
  %v1107 = vpop.permute.xlu0 %1106
  %1108 = vrot.lane.b32.xlu0 %v280, 72
  %v1109 = vpop.permute.xlu0 %1108
  %1110 = vrot.lane.b32.xlu0 %v285, 72
  %v1111 = vpop.permute.xlu0 %1110
  %1112 = vrot.lane.b32.xlu0 %v288, 72
  %v1113 = vpop.permute.xlu0 %1112
  %1114 = vrot.lane.b32.xlu0 %v293, 72
  %v1115 = vpop.permute.xlu0 %1114
  %1121 = vxpose.xlu0.b32.start [1/16] %v1107, 128
  %1122 = vxpose.xlu0.b32.cont [2/16] %v1109, 128
  %1123 = vxpose.xlu0.b32.cont [3/16] %v1111, 128
  %1124 = vxpose.xlu0.b32.cont [4/16] %v1113, 128
  %1125 = vxpose.xlu0.b32.cont [5/16] %v1115, 128
  %1126 = vxpose.xlu0.b32.cont [6/16] 0.0, 128
  %1127 = vxpose.xlu0.b32.cont [7/16] 0.0, 128
  %1128 = vxpose.xlu0.b32.cont [8/16] 0.0, 128
  %1129 = vxpose.xlu0.b32.cont [9/16] 0.0, 128
  %1130 = vxpose.xlu0.b32.cont [10/16] 0.0, 128
  %1131 = vxpose.xlu0.b32.cont [11/16] 0.0, 128
  %1132 = vxpose.xlu0.b32.cont [12/16] 0.0, 128
  %1133 = vxpose.xlu0.b32.cont [13/16] 0.0, 128
  %1134 = vxpose.xlu0.b32.cont [14/16] 0.0, 128
  %1135 = vxpose.xlu0.b32.cont [15/16] 0.0, 128
  %1136 = vxpose.xlu0.b32.end [16/16] 0.0, 128
  %v1137 = vpop.trf.xlu0
  %v1138 = vpop.trf.xlu0
  %v1139 = vpop.trf.xlu0
  %v1140 = vpop.trf.xlu0
  %v1141 = vpop.trf.xlu0
  %v1142 = vpop.trf.xlu0
  %v1143 = vpop.trf.xlu0
  %v1144 = vpop.trf.xlu0
  %v1145 = vpop.trf.xlu0
  %v1146 = vpop.trf.xlu0
  %v1147 = vpop.trf.xlu0
  %v1148 = vpop.trf.xlu0
  %v1149 = vpop.trf.xlu0
  %v1150 = vpop.trf.xlu0
  %v1151 = vpop.trf.xlu0
  %v1152 = vpop.trf.xlu0
  %v1153 = vpack.c.bf16 %v1137, %v1137
  %1154 = vrot.lane.b32.xlu0 %v350, 104
  %v1155 = vpop.permute.xlu0 %1154
  %1156 = vrot.lane.b32.xlu0 %v351, 104
  %v1157 = vpop.permute.xlu0 %1156
  %1158 = vrot.lane.b32.xlu0 %v352, 104
  %v1159 = vpop.permute.xlu0 %1158
  %v1161 = vsel %vm354, %v1155, 0
  %v1164 = vsel %vm354, %v1157, 0
  %v1167 = vsel %vm354, %v1159, 0
  %v1170 = vsel %vm364, %v1153, 0
  %1172 = vmatprep.subr.bf16.mxu0 0
  %1173 = vmatpush1.bf16.msra.mxu0 %v1170
  %1174 = vmatprep.subr.bf16.mxu0 0
  %1175 = vmatpush1.bf16.msra.mxu0 0
  %1176 = vmatprep.subr.bf16.mxu0 0
  %1177 = vmatpush1.bf16.msra.mxu0 0
  %1178 = vmatprep.subr.bf16.mxu0 0
  %1179 = vmatpush1.bf16.msra.mxu0 0
  %1180 = vmatprep.subr.bf16.mxu0 0
  %1181 = vmatpush1.bf16.msra.mxu0 0
  %1182 = vmatprep.subr.bf16.mxu0 0
  %1183 = vmatpush1.bf16.msra.mxu0 0
  %1184 = vmatprep.subr.bf16.mxu0 0
  %1185 = vmatpush1.bf16.msra.mxu0 0
  %1186 = vmatprep.subr.bf16.mxu0 0
  %1187 = vmatpush1.bf16.msra.mxu0 0
  %1188 = vmatprep.subr.bf16.mxu0 0
  %1189 = vmatpush1.bf16.msra.mxu0 0
  %1190 = vmatprep.subr.bf16.mxu0 0
  %1191 = vmatpush1.bf16.msra.mxu0 0
  %1192 = vmatprep.subr.bf16.mxu0 0
  %1193 = vmatpush1.bf16.msra.mxu0 0
  %1194 = vmatprep.subr.bf16.mxu0 0
  %1195 = vmatpush1.bf16.msra.mxu0 0
  %1196 = vmatprep.subr.bf16.mxu0 0
  %1197 = vmatpush1.bf16.msra.mxu0 0
  %1198 = vmatprep.subr.bf16.mxu0 0
  %1199 = vmatpush1.bf16.msra.mxu0 0
  %1200 = vmatprep.subr.bf16.mxu0 0
  %1201 = vmatpush1.bf16.msra.mxu0 0
  %1202 = vmatprep.subr.bf16.mxu0 0
  %1203 = vmatpush1.bf16.msra.mxu0 0
  %1204 = vmatprep.mubr.bf16.mxu0 0
  %1205 = vmatmul.mubr.bf16.gmra.mrb[0].mxu0 %v1161
  %v1206 = vpop.f32.mrb[0].mxu0
  %v1207 = vadd.f32 0.0, %v1206
  %v1208 = vpop.f32.mrb[0].mxu0
  %v1209 = vpop.f32.mrb[0].mxu0
  %v1210 = vadd.f32 0.0, %v1209
  %v1211 = vpop.f32.mrb[0].mxu0
  %1212 = vmatprep.mubr.bf16.mxu0 0
  %1213 = vmatmul.mubr.bf16.gmra.mrb[0].mxu0 %v1164
  %v1214 = vpop.f32.mrb[0].mxu0
  %v1215 = vadd.f32 0.0, %v1214
  %v1216 = vpop.f32.mrb[0].mxu0
  %v1217 = vpop.f32.mrb[0].mxu0
  %v1218 = vadd.f32 0.0, %v1217
  %v1219 = vpop.f32.mrb[0].mxu0
  %1220 = vmatprep.mubr.bf16.mxu0 0
  %1221 = vmatmul.mubr.bf16.gmra.mrb[0].mxu0 %v1167
  %v1222 = vpop.f32.mrb[0].mxu0
  %v1223 = vadd.f32 0.0, %v1222
  %v1224 = vpop.f32.mrb[0].mxu0
  %v1225 = vpop.f32.mrb[0].mxu0
  %v1226 = vpop.f32.mrb[0].mxu0
  %1227 = vdwg.mxu0
  %v1228 = vmul.f32 %v1207, 0.35355338
  %v1229 = vmul.f32 %v1210, 0.35355338
  %v1230 = vmul.f32 %v1215, 0.35355338
  %v1231 = vmul.f32 %v1218, 0.35355338
  %v1232 = vmul.f32 %v1223, 0.35355338
  %v1233 = vadd.f32 %v1228, %v133
  %v1234 = vadd.f32 %v1229, %v134
  %v1235 = vadd.f32 %v1230, %v135
  %v1236 = vadd.f32 %v1231, %v136
  %v1237 = vadd.f32 %v1232, %v137
  %v1238 = vsel %vm434, %v1233, -inf
  %1239 = vmax.xlane.f32.xlu0 %v1238
  %v1240 = vpop.xlane.xlu0 %1239
  %v1241 = vsel %vm434, %v1234, -inf
  %1242 = vmax.xlane.f32.xlu0 %v1241
  %v1243 = vpop.xlane.xlu0 %1242
  %v1244 = vsel %vm434, %v1235, -inf
  %1245 = vmax.xlane.f32.xlu0 %v1244
  %v1246 = vpop.xlane.xlu0 %1245
  %v1247 = vsel %vm434, %v1236, -inf
  %1248 = vmax.xlane.f32.xlu0 %v1247
  %v1249 = vpop.xlane.xlu0 %1248
  %v1250 = vsel %vm447, %v1237, -inf
  %1251 = vmax.xlane.f32.xlu0 %v1250
  %v1252 = vpop.xlane.xlu0 %1251
  %v1253 = vsub.f32 %v1233, %v1240
  %v1254 = vsub.f32 %v1234, %v1243
  %v1255 = vsub.f32 %v1235, %v1246
  %v1256 = vsub.f32 %v1236, %v1249
  %v1257 = vsub.f32 %v1237, %v1252
  %v1258 = vmul.f32 %v1253, 1.442695
  %v1259 = vpow.pop %v1258
  %v1260 = vmul.f32 %v1254, 1.442695
  %v1261 = vpow.pop %v1260
  %v1262 = vmul.f32 %v1255, 1.442695
  %v1263 = vpow.pop %v1262
  %v1264 = vmul.f32 %v1256, 1.442695
  %v1265 = vpow.pop %v1264
  %v1266 = vmul.f32 %v1257, 1.442695
  %v1267 = vpow.pop %v1266
  %v1268 = vsel %vm434, %v1259, 0.0
  %1269 = vadd.xlane.f32.xlu0 %v1268
  %v1270 = vpop.xlane.xlu0 %1269
  %v1271 = vsel %vm434, %v1261, 0.0
  %1272 = vadd.xlane.f32.xlu0 %v1271
  %v1273 = vpop.xlane.xlu0 %1272
  %v1274 = vsel %vm434, %v1263, 0.0
  %1275 = vadd.xlane.f32.xlu0 %v1274
  %v1276 = vpop.xlane.xlu0 %1275
  %v1277 = vsel %vm434, %v1265, 0.0
  %1278 = vadd.xlane.f32.xlu0 %v1277
  %v1279 = vpop.xlane.xlu0 %1278
  %v1280 = vsel %vm447, %v1267, 0.0
  %1281 = vadd.xlane.f32.xlu0 %v1280
  %v1282 = vpop.xlane.xlu0 %1281
  %v1283 = vrcp.pop %v1270
  %v1284 = vrcp.pop %v1273
  %v1285 = vrcp.pop %v1276
  %v1286 = vrcp.pop %v1279
  %v1287 = vrcp.pop %v1282
  %v1288 = vmul.f32 %v1259, %v1283
  %v1289 = vmul.f32 %v1261, %v1284
  %v1290 = vmul.f32 %v1263, %v1285
  %v1291 = vmul.f32 %v1265, %v1286
  %v1292 = vmul.f32 %v1267, %v1287
  %v1293 = vpack.c.bf16 %v1289, %v1288
  %v1294 = vpack.c.bf16 %v1291, %v1290
  %v1295 = vpack.c.bf16 %v1292, %v1292
  %1296 = vrot.lane.b32.xlu0 %v350, 40
  %v1297 = vpop.permute.xlu0 %1296
  %1298 = vrot.lane.b32.xlu0 %v351, 40
  %v1299 = vpop.permute.xlu0 %1298
  %1300 = vrot.lane.b32.xlu0 %v352, 40
  %v1301 = vpop.permute.xlu0 %1300
  %v1305 = vsel %vm434, %v1293, 0
  %v1308 = vsel %vm434, %v1294, 0
  %v1311 = vsel %vm434, %v1295, 0
  %v1314 = vsel %vm514, %v1301, 0
  %1316 = vmatprep.subr.bf16.mxu0 0
  %1317 = vmatpush1.bf16.msra.mxu0 %v1297
  %1318 = vmatprep.subr.bf16.mxu0 0
  %1319 = vmatpush1.bf16.msra.mxu0 %v1299
  %1320 = vmatprep.subr.bf16.mxu0 0
  %1321 = vmatpush1.bf16.msra.mxu0 %v1314
  %1322 = vmatprep.subr.bf16.mxu0 0
  %1323 = vmatpush1.bf16.msra.mxu0 0
  %1324 = vmatprep.subr.bf16.mxu0 0
  %1325 = vmatpush1.bf16.msra.mxu0 0
  %1326 = vmatprep.subr.bf16.mxu0 0
  %1327 = vmatpush1.bf16.msra.mxu0 0
  %1328 = vmatprep.subr.bf16.mxu0 0
  %1329 = vmatpush1.bf16.msra.mxu0 0
  %1330 = vmatprep.subr.bf16.mxu0 0
  %1331 = vmatpush1.bf16.msra.mxu0 0
  %1332 = vmatprep.subr.bf16.mxu0 0
  %1333 = vmatpush1.bf16.msra.mxu0 0
  %1334 = vmatprep.subr.bf16.mxu0 0
  %1335 = vmatpush1.bf16.msra.mxu0 0
  %1336 = vmatprep.subr.bf16.mxu0 0
  %1337 = vmatpush1.bf16.msra.mxu0 0
  %1338 = vmatprep.subr.bf16.mxu0 0
  %1339 = vmatpush1.bf16.msra.mxu0 0
  %1340 = vmatprep.subr.bf16.mxu0 0
  %1341 = vmatpush1.bf16.msra.mxu0 0
  %1342 = vmatprep.subr.bf16.mxu0 0
  %1343 = vmatpush1.bf16.msra.mxu0 0
  %1344 = vmatprep.subr.bf16.mxu0 0
  %1345 = vmatpush1.bf16.msra.mxu0 0
  %1346 = vmatprep.subr.bf16.mxu0 0
  %1347 = vmatpush1.bf16.msra.mxu0 0
  %1348 = vmatprep.mubr.bf16.mxu0 0
  %1349 = vmatmul.mubr.bf16.gmra.mrb[0].mxu0 %v1305
  %v1350 = vpop.f32.mrb[0].mxu0
  %v1351 = vadd.f32 0.0, %v1350
  %v1352 = vpop.f32.mrb[0].mxu0
  %v1353 = vpop.f32.mrb[0].mxu0
  %v1354 = vadd.f32 0.0, %v1353
  %v1355 = vpop.f32.mrb[0].mxu0
  %1356 = vmatprep.mubr.bf16.mxu0 0
  %1357 = vmatmul.mubr.bf16.gmra.mrb[0].mxu0 %v1308
  %v1358 = vpop.f32.mrb[0].mxu0
  %v1359 = vadd.f32 0.0, %v1358
  %v1360 = vpop.f32.mrb[0].mxu0
  %v1361 = vpop.f32.mrb[0].mxu0
  %v1362 = vadd.f32 0.0, %v1361
  %v1363 = vpop.f32.mrb[0].mxu0
  %1364 = vmatprep.mubr.bf16.mxu0 0
  %1365 = vmatmul.mubr.bf16.gmra.mrb[0].mxu0 %v1311
  %v1366 = vpop.f32.mrb[0].mxu0
  %v1367 = vadd.f32 0.0, %v1366
  %v1368 = vpop.f32.mrb[0].mxu0
  %v1369 = vpop.f32.mrb[0].mxu0
  %v1370 = vpop.f32.mrb[0].mxu0
  %1371 = vdwg.mxu0
  %1377 = vrot.lane.b32.xlu0 %v819, 8
  %v1378 = vpop.permute.xlu0 %1377
  %1379 = vrot.lane.b32.xlu0 %v822, 8
  %v1380 = vpop.permute.xlu0 %1379
  %1381 = vrot.lane.b32.xlu0 %v827, 8
  %v1382 = vpop.permute.xlu0 %1381
  %1383 = vrot.lane.b32.xlu0 %v830, 8
  %v1384 = vpop.permute.xlu0 %1383
  %1385 = vrot.lane.b32.xlu0 %v835, 8
  %v1386 = vpop.permute.xlu0 %1385
  %1397 = vrot.lane.b32.xlu0 %v1085, 16
  %v1398 = vpop.permute.xlu0 %1397
  %1399 = vrot.lane.b32.xlu0 %v1088, 16
  %v1400 = vpop.permute.xlu0 %1399
  %1401 = vrot.lane.b32.xlu0 %v1093, 16
  %v1402 = vpop.permute.xlu0 %1401
  %1403 = vrot.lane.b32.xlu0 %v1096, 16
  %v1404 = vpop.permute.xlu0 %1403
  %1405 = vrot.lane.b32.xlu0 %v1101, 16
  %v1406 = vpop.permute.xlu0 %1405
  %1417 = vrot.lane.b32.xlu0 %v1351, 24
  %v1418 = vpop.permute.xlu0 %1417
  %1419 = vrot.lane.b32.xlu0 %v1354, 24
  %v1420 = vpop.permute.xlu0 %1419
  %1421 = vrot.lane.b32.xlu0 %v1359, 24
  %v1422 = vpop.permute.xlu0 %1421
  %1423 = vrot.lane.b32.xlu0 %v1362, 24
  %v1424 = vpop.permute.xlu0 %1423
  %1425 = vrot.lane.b32.xlu0 %v1367, 24
  %v1426 = vpop.permute.xlu0 %1425
  %v1432 = vsel %vm354, %v553, %v1378
  %v1433 = vsel %vm354, %v556, %v1380
  %v1434 = vsel %vm354, %v561, %v1382
  %v1435 = vsel %vm354, %v564, %v1384
  %v1436 = vsel %vm354, %v569, %v1386
  %vm1437 = vcmask 130048
  %v1438 = vsel %vm1437, %v1432, %v1398
  %v1439 = vsel %vm1437, %v1433, %v1400
  %v1440 = vsel %vm1437, %v1434, %v1402
  %v1441 = vsel %vm1437, %v1435, %v1404
  %v1442 = vsel %vm1437, %v1436, %v1406
  %vm1443 = vcmask 195584
  %v1444 = vsel %vm1443, %v1438, %v1418
  %v1445 = vsel %vm1443, %v1439, %v1420
  %v1446 = vsel %vm1443, %v1440, %v1422
  %v1447 = vsel %vm1443, %v1441, %v1424
  %v1448 = vsel %vm1443, %v1442, %v1426
  %v1449 = vpack.c.bf16 %v1445, %v1444
  %v1450 = vpack.c.bf16 %v1447, %v1446
  %v1451 = vpack.c.bf16 %v1448, %v1448
  %v1452 = vpack.c.bf16 %v105, %v104
  %v1453 = vpack.c.bf16 %v107, %v106
  %v1455 = vsel %vm138, %v1449, 0
  %v1458 = vsel %vm138, %v1450, 0
  %v1461 = vsel %vm138, %v1451, 0
  %1463 = vmatprep.subr.bf16.mxu0 0
  %1464 = vmatpush1.bf16.msra.mxu0 %v1452
  %1465 = vmatprep.subr.bf16.mxu0 0
  %1466 = vmatpush1.bf16.msra.mxu0 %v1453
  %1467 = vmatprep.subr.bf16.mxu0 0
  %1468 = vmatpush1.bf16.msra.mxu0 0
  %1469 = vmatprep.subr.bf16.mxu0 0
  %1470 = vmatpush1.bf16.msra.mxu0 0
  %1471 = vmatprep.subr.bf16.mxu0 0
  %1472 = vmatpush1.bf16.msra.mxu0 0
  %1473 = vmatprep.subr.bf16.mxu0 0
  %1474 = vmatpush1.bf16.msra.mxu0 0
  %1475 = vmatprep.subr.bf16.mxu0 0
  %1476 = vmatpush1.bf16.msra.mxu0 0
  %1477 = vmatprep.subr.bf16.mxu0 0
  %1478 = vmatpush1.bf16.msra.mxu0 0
  %1479 = vmatprep.subr.bf16.mxu0 0
  %1480 = vmatpush1.bf16.msra.mxu0 0
  %1481 = vmatprep.subr.bf16.mxu0 0
  %1482 = vmatpush1.bf16.msra.mxu0 0
  %1483 = vmatprep.subr.bf16.mxu0 0
  %1484 = vmatpush1.bf16.msra.mxu0 0
  %1485 = vmatprep.subr.bf16.mxu0 0
  %1486 = vmatpush1.bf16.msra.mxu0 0
  %1487 = vmatprep.subr.bf16.mxu0 0
  %1488 = vmatpush1.bf16.msra.mxu0 0
  %1489 = vmatprep.subr.bf16.mxu0 0
  %1490 = vmatpush1.bf16.msra.mxu0 0
  %1491 = vmatprep.subr.bf16.mxu0 0
  %1492 = vmatpush1.bf16.msra.mxu0 0
  %1493 = vmatprep.subr.bf16.mxu0 0
  %1494 = vmatpush1.bf16.msra.mxu0 0
  %1495 = vmatprep.mubr.bf16.mxu0 0
  %1496 = vmatmul.mubr.bf16.gmra.mrb[0].mxu0 %v1455
  %v1497 = vpop.f32.mrb[0].mxu0
  %v1498 = vadd.f32 0.0, %v1497
  %v1499 = vpop.f32.mrb[0].mxu0
  %v1500 = vpop.f32.mrb[0].mxu0
  %v1501 = vadd.f32 0.0, %v1500
  %v1502 = vpop.f32.mrb[0].mxu0
  %1503 = vmatprep.mubr.bf16.mxu0 0
  %1504 = vmatmul.mubr.bf16.gmra.mrb[0].mxu0 %v1458
  %v1505 = vpop.f32.mrb[0].mxu0
  %v1506 = vadd.f32 0.0, %v1505
  %v1507 = vpop.f32.mrb[0].mxu0
  %v1508 = vpop.f32.mrb[0].mxu0
  %v1509 = vadd.f32 0.0, %v1508
  %v1510 = vpop.f32.mrb[0].mxu0
  %1511 = vmatprep.mubr.bf16.mxu0 0
  %1512 = vmatmul.mubr.bf16.gmra.mrb[0].mxu0 %v1461
  %v1513 = vpop.f32.mrb[0].mxu0
  %v1514 = vadd.f32 0.0, %v1513
  %v1515 = vpop.f32.mrb[0].mxu0
  %v1516 = vpop.f32.mrb[0].mxu0
  %v1517 = vpop.f32.mrb[0].mxu0
  %1518 = vdwg.mxu0
  %v1519 = vadd.f32 %v76, %v1498
  %v1520 = vadd.f32 %v79, %v1501
  %v1521 = vadd.f32 %v84, %v1506
  %v1522 = vadd.f32 %v87, %v1509
  %v1523 = vadd.f32 %v92, %v1514
  %v1524 = vlaneseq
  %v1525 = vshrl.u32 %v1524, 7
  %v1526 = vsub.s32 0, %v1525
  %v1527 = vrot.slane %v108, %v1526
  %v1528 = vadd.f32 %v1519, %v1527
  %v1529 = vadd.f32 %v1520, %v1527
  %v1530 = vadd.f32 %v1521, %v1527
  %v1531 = vadd.f32 %v1522, %v1527
  %v1532 = vadd.f32 %v1523, %v1527
  %v1533 = vsel %vm138, %v1528, 0.0
  %1534 = vadd.xlane.f32.xlu0 %v1533
  %v1535 = vpop.xlane.xlu0 %1534
  %v1536 = vsel %vm138, %v1529, 0.0
  %1537 = vadd.xlane.f32.xlu0 %v1536
  %v1538 = vpop.xlane.xlu0 %1537
  %v1539 = vsel %vm138, %v1530, 0.0
  %1540 = vadd.xlane.f32.xlu0 %v1539
  %v1541 = vpop.xlane.xlu0 %1540
  %v1542 = vsel %vm138, %v1531, 0.0
  %1543 = vadd.xlane.f32.xlu0 %v1542
  %v1544 = vpop.xlane.xlu0 %1543
  %v1545 = vsel %vm151, %v1532, 0.0
  %1546 = vadd.xlane.f32.xlu0 %v1545
  %v1547 = vpop.xlane.xlu0 %1546
  %v1548 = vmul.f32 %v1535, %v155
  %v1549 = vmul.f32 %v1538, %v155
  %v1550 = vmul.f32 %v1541, %v155
  %v1551 = vmul.f32 %v1544, %v155
  %v1552 = vmul.f32 %v1547, %v155
  %v1553 = vsub.f32 %v1528, %v1548
  %v1554 = vsub.f32 %v1529, %v1549
  %v1555 = vsub.f32 %v1530, %v1550
  %v1556 = vsub.f32 %v1531, %v1551
  %v1557 = vsub.f32 %v1532, %v1552
  %v1558 = vmul.f32 %v1553, %v1553
  %v1559 = vmul.f32 %v1554, %v1554
  %v1560 = vmul.f32 %v1555, %v1555
  %v1561 = vmul.f32 %v1556, %v1556
  %v1562 = vmul.f32 %v1557, %v1557
  %v1563 = vsel %vm138, %v1558, 0.0
  %1564 = vadd.xlane.f32.xlu0 %v1563
  %v1565 = vpop.xlane.xlu0 %1564
  %v1566 = vsel %vm138, %v1559, 0.0
  %1567 = vadd.xlane.f32.xlu0 %v1566
  %v1568 = vpop.xlane.xlu0 %1567
  %v1569 = vsel %vm138, %v1560, 0.0
  %1570 = vadd.xlane.f32.xlu0 %v1569
  %v1571 = vpop.xlane.xlu0 %1570
  %v1572 = vsel %vm138, %v1561, 0.0
  %1573 = vadd.xlane.f32.xlu0 %v1572
  %v1574 = vpop.xlane.xlu0 %1573
  %v1575 = vsel %vm151, %v1562, 0.0
  %1576 = vadd.xlane.f32.xlu0 %v1575
  %v1577 = vpop.xlane.xlu0 %1576
  %v1578 = vmul.f32 %v1565, %v155
  %v1579 = vmul.f32 %v1568, %v155
  %v1580 = vmul.f32 %v1571, %v155
  %v1581 = vmul.f32 %v1574, %v155
  %v1582 = vmul.f32 %v1577, %v155
  %v1583 = vadd.f32 %v1578, 1e-05
  %v1584 = vadd.f32 %v1579, 1e-05
  %v1585 = vadd.f32 %v1580, 1e-05
  %v1586 = vadd.f32 %v1581, 1e-05
  %v1587 = vadd.f32 %v1582, 1e-05
  %v1588 = vrsqrt.pop %v1583
  %v1589 = vrsqrt.pop %v1584
  %v1590 = vrsqrt.pop %v1585
  %v1591 = vrsqrt.pop %v1586
  %v1592 = vrsqrt.pop %v1587
  %v1593 = vmul.f32 %v1553, %v1588
  %v1594 = vmul.f32 %v1554, %v1589
  %v1595 = vmul.f32 %v1555, %v1590
  %v1596 = vmul.f32 %v1556, %v1591
  %v1597 = vmul.f32 %v1557, %v1592
  %v1598 = vlaneseq
  %v1599 = vshrl.u32 %v1598, 7
  %v1600 = vsub.s32 0, %v1599
  %v1601 = vrot.slane %v109, %v1600
  %v1602 = vmul.f32 %v1593, %v1601
  %v1603 = vmul.f32 %v1594, %v1601
  %v1604 = vmul.f32 %v1595, %v1601
  %v1605 = vmul.f32 %v1596, %v1601
  %v1606 = vmul.f32 %v1597, %v1601
  %v1607 = vlaneseq
  %v1608 = vshrl.u32 %v1607, 7
  %v1609 = vsub.s32 0, %v1608
  %v1610 = vrot.slane %v110, %v1609
  %v1611 = vadd.f32 %v1602, %v1610
  %v1612 = vadd.f32 %v1603, %v1610
  %v1613 = vadd.f32 %v1604, %v1610
  %v1614 = vadd.f32 %v1605, %v1610
  %v1615 = vadd.f32 %v1606, %v1610
  %v1616 = vpack.c.bf16 %v1612, %v1611
  %v1617 = vpack.c.bf16 %v1614, %v1613
  %v1618 = vpack.c.bf16 %v1615, %v1615
  %v1619 = vpack.c.bf16 %v112, %v111
  %v1620 = vpack.c.bf16 %v114, %v113
  %v1621 = vlaneseq
  %v1622 = vshrl.u32 %v1621, 7
  %v1623 = vsub.s32 0, %v1622
  %v1624 = vrot.slane %v115, %v1623
  %v1626 = vsel %vm138, %v1616, 0
  %v1629 = vsel %vm138, %v1617, 0
  %v1632 = vsel %vm138, %v1618, 0
  %1634 = vmatprep.subr.bf16.mxu0 0
  %1635 = vmatpush1.bf16.msra.mxu0 %v1619
  %1636 = vmatprep.subr.bf16.mxu0 0
  %1637 = vmatpush1.bf16.msra.mxu0 %v1620
  %1638 = vmatprep.subr.bf16.mxu0 0
  %1639 = vmatpush1.bf16.msra.mxu0 0
  %1640 = vmatprep.subr.bf16.mxu0 0
  %1641 = vmatpush1.bf16.msra.mxu0 0
  %1642 = vmatprep.subr.bf16.mxu0 0
  %1643 = vmatpush1.bf16.msra.mxu0 0
  %1644 = vmatprep.subr.bf16.mxu0 0
  %1645 = vmatpush1.bf16.msra.mxu0 0
  %1646 = vmatprep.subr.bf16.mxu0 0
  %1647 = vmatpush1.bf16.msra.mxu0 0
  %1648 = vmatprep.subr.bf16.mxu0 0
  %1649 = vmatpush1.bf16.msra.mxu0 0
  %1650 = vmatprep.subr.bf16.mxu0 0
  %1651 = vmatpush1.bf16.msra.mxu0 0
  %1652 = vmatprep.subr.bf16.mxu0 0
  %1653 = vmatpush1.bf16.msra.mxu0 0
  %1654 = vmatprep.subr.bf16.mxu0 0
  %1655 = vmatpush1.bf16.msra.mxu0 0
  %1656 = vmatprep.subr.bf16.mxu0 0
  %1657 = vmatpush1.bf16.msra.mxu0 0
  %1658 = vmatprep.subr.bf16.mxu0 0
  %1659 = vmatpush1.bf16.msra.mxu0 0
  %1660 = vmatprep.subr.bf16.mxu0 0
  %1661 = vmatpush1.bf16.msra.mxu0 0
  %1662 = vmatprep.subr.bf16.mxu0 0
  %1663 = vmatpush1.bf16.msra.mxu0 0
  %1664 = vmatprep.subr.bf16.mxu0 0
  %1665 = vmatpush1.bf16.msra.mxu0 0
  %1666 = vmatprep.mubr.bf16.mxu0 0
  %1667 = vmatmul.mubr.bf16.gmra.mrb[0].mxu0 %v1626
  %v1668 = vpop.f32.mrb[0].mxu0
  %v1669 = vadd.f32 %v1624, %v1668
  %v1670 = vpop.f32.mrb[0].mxu0
  %v1671 = vpop.f32.mrb[0].mxu0
  %v1672 = vadd.f32 %v1624, %v1671
  %v1673 = vpop.f32.mrb[0].mxu0
  %1674 = vmatprep.mubr.bf16.mxu0 0
  %1675 = vmatmul.mubr.bf16.gmra.mrb[0].mxu0 %v1629
  %v1676 = vpop.f32.mrb[0].mxu0
  %v1677 = vadd.f32 %v1624, %v1676
  %v1678 = vpop.f32.mrb[0].mxu0
  %v1679 = vpop.f32.mrb[0].mxu0
  %v1680 = vadd.f32 %v1624, %v1679
  %v1681 = vpop.f32.mrb[0].mxu0
  %1682 = vmatprep.mubr.bf16.mxu0 0
  %1683 = vmatmul.mubr.bf16.gmra.mrb[0].mxu0 %v1632
  %v1684 = vpop.f32.mrb[0].mxu0
  %v1685 = vadd.f32 %v1624, %v1684
  %v1686 = vpop.f32.mrb[0].mxu0
  %v1687 = vpop.f32.mrb[0].mxu0
  %v1688 = vpop.f32.mrb[0].mxu0
  %1689 = vdwg.mxu0
  %v1690 = vmul.f32 %v1669, 1.702
  %v1691 = vmul.f32 %v1672, 1.702
  %v1692 = vmul.f32 %v1677, 1.702
  %v1693 = vmul.f32 %v1680, 1.702
  %v1694 = vmul.f32 %v1685, 1.702
  %v1695 = vxor.u32 %v1690, 2147483648
  %v1696 = vxor.u32 %v1691, 2147483648
  %v1697 = vxor.u32 %v1692, 2147483648
  %v1698 = vxor.u32 %v1693, 2147483648
  %v1699 = vxor.u32 %v1694, 2147483648
  %v1700 = vmul.f32 %v1695, 1.442695
  %v1701 = vpow.pop %v1700
  %v1702 = vmul.f32 %v1696, 1.442695
  %v1703 = vpow.pop %v1702
  %v1704 = vmul.f32 %v1697, 1.442695
  %v1705 = vpow.pop %v1704
  %v1706 = vmul.f32 %v1698, 1.442695
  %v1707 = vpow.pop %v1706
  %v1708 = vmul.f32 %v1699, 1.442695
  %v1709 = vpow.pop %v1708
  %v1710 = vadd.f32 %v1701, 1.0
  %v1711 = vadd.f32 %v1703, 1.0
  %v1712 = vadd.f32 %v1705, 1.0
  %v1713 = vadd.f32 %v1707, 1.0
  %v1714 = vadd.f32 %v1709, 1.0
  %v1715 = vrcp.pop %v1710
  %v1716 = vmul.f32 1.0, %v1715
  %v1717 = vrcp.pop %v1711
  %v1718 = vmul.f32 1.0, %v1717
  %v1719 = vrcp.pop %v1712
  %v1720 = vmul.f32 1.0, %v1719
  %v1721 = vrcp.pop %v1713
  %v1722 = vmul.f32 1.0, %v1721
  %v1723 = vrcp.pop %v1714
  %v1724 = vmul.f32 1.0, %v1723
  %v1725 = vmul.f32 %v1669, %v1716
  %v1726 = vmul.f32 %v1672, %v1718
  %v1727 = vmul.f32 %v1677, %v1720
  %v1728 = vmul.f32 %v1680, %v1722
  %v1729 = vmul.f32 %v1685, %v1724
  %v1730 = vpack.c.bf16 %v1726, %v1725
  %v1731 = vpack.c.bf16 %v1728, %v1727
  %v1732 = vpack.c.bf16 %v1729, %v1729
  %v1733 = vpack.c.bf16 %v117, %v116
  %v1734 = vpack.c.bf16 %v119, %v118
  %v1735 = vpack.c.bf16 %v121, %v120
  %v1736 = vpack.c.bf16 %v123, %v122
  %v1737 = vpack.c.bf16 %v125, %v124
  %v1738 = vpack.c.bf16 %v127, %v126
  %v1739 = vpack.c.bf16 %v129, %v128
  %v1740 = vpack.c.bf16 %v131, %v130
  %1741 = vmatprep.subr.bf16.mxu0 0
  %1742 = vmatpush1.bf16.msra.mxu0 %v1733
  %1743 = vmatprep.subr.bf16.mxu0 0
  %1744 = vmatpush1.bf16.msra.mxu0 %v1734
  %1745 = vmatprep.subr.bf16.mxu0 0
  %1746 = vmatpush1.bf16.msra.mxu0 %v1735
  %1747 = vmatprep.subr.bf16.mxu0 0
  %1748 = vmatpush1.bf16.msra.mxu0 %v1736
  %1749 = vmatprep.subr.bf16.mxu0 0
  %1750 = vmatpush1.bf16.msra.mxu0 %v1737
  %1751 = vmatprep.subr.bf16.mxu0 0
  %1752 = vmatpush1.bf16.msra.mxu0 %v1738
  %1753 = vmatprep.subr.bf16.mxu0 0
  %1754 = vmatpush1.bf16.msra.mxu0 %v1739
  %1755 = vmatprep.subr.bf16.mxu0 0
  %1756 = vmatpush1.bf16.msra.mxu0 %v1740
  %1757 = vmatprep.subr.bf16.mxu0 0
  %1758 = vmatpush1.bf16.msra.mxu0 0
  %1759 = vmatprep.subr.bf16.mxu0 0
  %1760 = vmatpush1.bf16.msra.mxu0 0
  %1761 = vmatprep.subr.bf16.mxu0 0
  %1762 = vmatpush1.bf16.msra.mxu0 0
  %1763 = vmatprep.subr.bf16.mxu0 0
  %1764 = vmatpush1.bf16.msra.mxu0 0
  %1765 = vmatprep.subr.bf16.mxu0 0
  %1766 = vmatpush1.bf16.msra.mxu0 0
  %1767 = vmatprep.subr.bf16.mxu0 0
  %1768 = vmatpush1.bf16.msra.mxu0 0
  %1769 = vmatprep.subr.bf16.mxu0 0
  %1770 = vmatpush1.bf16.msra.mxu0 0
  %1771 = vmatprep.subr.bf16.mxu0 0
  %1772 = vmatpush1.bf16.msra.mxu0 0
  %1773 = vmatprep.mubr.bf16.mxu0 0
  %1774 = vmatmul.mubr.bf16.gmra.mrb[0].mxu0 %v1730
  %v1775 = vpop.f32.mrb[0].mxu0
  %v1776 = vadd.f32 0.0, %v1775
  %v1777 = vpop.f32.mrb[0].mxu0
  %v1778 = vpop.f32.mrb[0].mxu0
  %v1779 = vpop.f32.mrb[0].mxu0
  %1780 = vmatprep.mubr.bf16.mxu0 0
  %1781 = vmatmul.mubr.bf16.gmra.mrb[0].mxu0 %v1731
  %v1782 = vpop.f32.mrb[0].mxu0
  %v1783 = vadd.f32 0.0, %v1782
  %v1784 = vpop.f32.mrb[0].mxu0
  %v1785 = vpop.f32.mrb[0].mxu0
  %v1786 = vpop.f32.mrb[0].mxu0
  %1787 = vmatprep.mubr.bf16.mxu0 0
  %1788 = vmatmul.mubr.bf16.gmra.mrb[0].mxu0 %v1732
  %v1789 = vpop.f32.mrb[0].mxu0
  %v1790 = vpop.f32.mrb[0].mxu0
  %v1791 = vpop.f32.mrb[0].mxu0
  %v1792 = vpop.f32.mrb[0].mxu0
  %1793 = vdwg.mxu0
  %v1794 = vadd.f32 %v1528, %v1776
  %v1795 = vadd.f32 %v1530, %v1783
  %v1796 = vlaneseq
  %v1797 = vshrl.u32 %v1796, 7
  %v1798 = vsub.s32 0, %v1797
  %v1799 = vrot.slane %v132, %v1798
  %v1800 = vadd.f32 %v1794, %v1799
  %v1801 = vadd.f32 %v1795, %v1799
  %v1802 = vsel %vm514, %v1800, %v1801
  %v1803 = vld [vmem:[%s0 + $0xa8] sm:$0x1]
  %v1804 = vld [vmem:[%s0 + $0xb0] sm:$0x1]
  %v1805 = vsel %vm151, %v1802, 0.0
  %1806 = vadd.xlane.f32.xlu0 %v1805
  %v1807 = vpop.xlane.xlu0 %1806
  %v1808 = vmul.f32 %v1807, %v155
  %v1809 = vsub.f32 %v1802, %v1808
  %v1810 = vmul.f32 %v1809, %v1809
  %v1811 = vsel %vm151, %v1810, 0.0
  %1812 = vadd.xlane.f32.xlu0 %v1811
  %v1813 = vpop.xlane.xlu0 %1812
  %v1814 = vmul.f32 %v1813, %v155
  %v1815 = vadd.f32 %v1814, 1e-05
  %v1816 = vrsqrt.pop %v1815
  %v1817 = vmul.f32 %v1809, %v1816
  %v1818 = vlaneseq
  %v1819 = vshrl.u32 %v1818, 7
  %v1820 = vsub.s32 0, %v1819
  %v1821 = vrot.slane %v1803, %v1820
  %v1822 = vmul.f32 %v1817, %v1821
  %v1823 = vlaneseq
  %v1824 = vshrl.u32 %v1823, 7
  %v1825 = vsub.s32 0, %v1824
  %v1826 = vrot.slane %v1804, %v1825
  %v1827 = vadd.f32 %v1822, %v1826
  %v1828 = vld [vmem:[%s0 + $0xb8] sm:$0xff]
  %v1829 = vld [vmem:[%s0 + $0xc0] sm:$0xff]
  %v1830 = vld [vmem:[%s0 + $0xc8] sm:$0xff]
  %v1831 = vld [vmem:[%s0 + $0xd0] sm:$0xff]
  %v1833 = vsel %vm138, %v1827, 0
  %1835 = vmatprep.subr.mxu0 0.0
  %1836 = vmatpush1.msra.mxu0 %v1828
  %1837 = vmatprep.subr.mxu0 0.0
  %1838 = vmatpush1.msra.mxu0 %v1829
  %1839 = vmatprep.subr.mxu0 0.0
  %1840 = vmatpush1.msra.mxu0 %v1830
  %1841 = vmatprep.subr.mxu0 0.0
  %1842 = vmatpush1.msra.mxu0 %v1831
  %1843 = vmatprep.subr.mxu0 0.0
  %1844 = vmatpush1.msra.mxu0 0.0
  %1845 = vmatprep.subr.mxu0 0.0
  %1846 = vmatpush1.msra.mxu0 0.0
  %1847 = vmatprep.subr.mxu0 0.0
  %1848 = vmatpush1.msra.mxu0 0.0
  %1849 = vmatprep.subr.mxu0 0.0
  %1850 = vmatpush1.msra.mxu0 0.0
  %1851 = vmatprep.subr.mxu0 0.0
  %1852 = vmatpush1.msra.mxu0 0.0
  %1853 = vmatprep.subr.mxu0 0.0
  %1854 = vmatpush1.msra.mxu0 0.0
  %1855 = vmatprep.subr.mxu0 0.0
  %1856 = vmatpush1.msra.mxu0 0.0
  %1857 = vmatprep.subr.mxu0 0.0
  %1858 = vmatpush1.msra.mxu0 0.0
  %1859 = vmatprep.subr.mxu0 0.0
  %1860 = vmatpush1.msra.mxu0 0.0
  %1861 = vmatprep.subr.mxu0 0.0
  %1862 = vmatpush1.msra.mxu0 0.0
  %1863 = vmatprep.subr.mxu0 0.0
  %1864 = vmatpush1.msra.mxu0 0.0
  %1865 = vmatprep.subr.mxu0 0.0
  %1866 = vmatpush1.msra.mxu0 0.0
  %1867 = vmatprep.subr.mxu0 0.0
  %1868 = vmatpush1.msra.mxu0 0.0
  %1869 = vmatprep.subr.mxu0 0.0
  %1870 = vmatpush1.msra.mxu0 0.0
  %1871 = vmatprep.subr.mxu0 0.0
  %1872 = vmatpush1.msra.mxu0 0.0
  %1873 = vmatprep.subr.mxu0 0.0
  %1874 = vmatpush1.msra.mxu0 0.0
  %1875 = vmatprep.subr.mxu0 0.0
  %1876 = vmatpush1.msra.mxu0 0.0
  %1877 = vmatprep.subr.mxu0 0.0
  %1878 = vmatpush1.msra.mxu0 0.0
  %1879 = vmatprep.subr.mxu0 0.0
  %1880 = vmatpush1.msra.mxu0 0.0
  %1881 = vmatprep.subr.mxu0 0.0
  %1882 = vmatpush1.msra.mxu0 0.0
  %1883 = vmatprep.subr.mxu0 0.0
  %1884 = vmatpush1.msra.mxu0 0.0
  %1885 = vmatprep.subr.mxu0 0.0
  %1886 = vmatpush1.msra.mxu0 0.0
  %1887 = vmatprep.subr.mxu0 0.0
  %1888 = vmatpush1.msra.mxu0 0.0
  %1889 = vmatprep.subr.mxu0 0.0
  %1890 = vmatpush1.msra.mxu0 0.0
  %1891 = vmatprep.subr.mxu0 0.0
  %1892 = vmatpush1.msra.mxu0 0.0
  %1893 = vmatprep.subr.mxu0 0.0
  %1894 = vmatpush1.msra.mxu0 0.0
  %1895 = vmatprep.subr.mxu0 0.0
  %1896 = vmatpush1.msra.mxu0 0.0
  %1897 = vmatprep.subr.mxu0 0.0
  %1898 = vmatpush1.msra.mxu0 0.0
  %1899 = vmatprep.mubr.f32.mxu0 0.0
  %1900 = vmatmul.mubr.f32.gmra.mrb[0].mxu0 %v1833
  %v1901 = vpop.f32.mrb[0].mxu0
  %v1902 = vadd.f32 0.0, %v1901
  %v1903 = vpop.f32.mrb[0].mxu0
  %1904 = vdwg.mxu0
  %v1905 = vmul.f32 %v1902, %v1902
  %v1906 = vsel %vm151, %v1905, 0.0
  %1907 = vadd.xlane.f32.xlu0 %v1906
  %v1908 = vpop.xlane.xlu0 %1907
  %v1909 = vrsqrt.pop %v1908
  %v1910 = vmul.f32 %v1902, %v1909
  %v1911 = vld [vmem:[%s0 + $0xd8] sm:$0x3]
  %v1912 = vld [vmem:[%s0 + $0xe0] sm:$0x1]
  %v1913 = vld [vmem:[%s0 + $0xe8] sm:$0x3]
  %v1914 = vld [vmem:[%s0 + $0xf0] sm:$0x1]
  %v1915 = vlaneseq
  %v1916 = vshrl.u32 %v1915, 7
  %v1917 = vsub.s32 0, %v1916
  %v1918 = vrot.slane %v1914, %v1917
  %v1919 = vadd.f32 %v1918, 0.0
  %v1920 = vlaneseq
  %v1921 = vshrl.u32 %v1920, 7
  %v1922 = vsub.s32 0, %v1921
  %v1923 = vrot.slane %v1911, %v1922
  %v1924 = vmul.f32 %v1910, %v1923
  %v1925 = vsel %vm151, %v1924, 0.0
  %1926 = vadd.xlane.f32.xlu0 %v1925
  %v1927 = vpop.xlane.xlu0 %1926
  %v1928 = vlaneseq
  %v1929 = vshrl.u32 %v1928, 7
  %v1930 = vsub.s32 0, %v1929
  %v1931 = vrot.slane %v1912, %v1930
  %v1932 = vadd.f32 %v1927, %v1931
  %v1933 = vmax.f32 %v1932, 0.0
  %1935 = vset.pattern.permute.xlu0 0
  %1936 = vperm.xlu0 %1935, %v1933
  %v1937 = vpop.permute.xlu0 %1936
  %v1939 = vlaneseq
  %v1940 = vshrl.u32 %v1939, 7
  %v1941 = vsub.s32 0, %v1940
  %v1942 = vrot.slane %v1913, %v1941
  %v1943 = vmul.f32 %v1937, %v1942
  %v1944 = vadd.f32 %v1919, %v1943
  %v1945 = vlaneseq
  %v1946 = vshrl.u32 %v1945, 7
  %v1947 = vsub.s32 1, %v1946
  %v1948 = vrot.slane %v1911, %v1947
  %v1949 = vmul.f32 %v1910, %v1948
  %v1950 = vsel %vm151, %v1949, 0.0
  %1951 = vadd.xlane.f32.xlu0 %v1950
  %v1952 = vpop.xlane.xlu0 %1951
  %v1953 = vadd.f32 %v1952, %v1931
  %v1954 = vmax.f32 %v1953, 0.0
  %1956 = vset.pattern.permute.xlu0 1
  %1957 = vperm.xlu0 %1956, %v1954
  %v1958 = vpop.permute.xlu0 %1957
  %v1960 = vlaneseq
  %v1961 = vshrl.u32 %v1960, 7
  %v1962 = vsub.s32 1, %v1961
  %v1963 = vrot.slane %v1913, %v1962
  %v1964 = vmul.f32 %v1958, %v1963
  %v1965 = vadd.f32 %v1944, %v1964
  %v1966 = vld [vmem:[%s0 + $0x140] sm:$0xff]
  %v1967 = vld [vmem:[%s0 + $0x148] sm:$0xff]
  %v1968 = vld [vmem:[%s0 + $0x150] sm:$0xff]
  %v1969 = vld [vmem:[%s0 + $0x158] sm:$0xff]
  %v1970 = vld [vmem:[%s0 + $0x160] sm:$0xff]
  %v1971 = vld [vmem:[%s0 + $0x168] sm:$0xff]
  %v1972 = vld [vmem:[%s0 + $0x170] sm:$0xff]
  %v1973 = vld [vmem:[%s0 + $0x178] sm:$0xff]
  %v1974 = vld [vmem:[%s0 + $0x180] sm:$0xff]
  %vm1975 = vcmp.eq.f32.partialorder %v1966, 0.0
  %vm1976 = vcmp.eq.f32.partialorder %v1967, 0.0
  %vm1977 = vcmp.eq.f32.partialorder %v1968, 0.0
  %vm1978 = vcmp.eq.f32.partialorder %v1969, 0.0
  %vm1979 = vcmp.eq.f32.partialorder %v1970, 0.0
  %vm1980 = vcmp.eq.f32.partialorder %v1971, 0.0
  %vm1981 = vcmp.eq.f32.partialorder %v1972, 0.0
  %vm1982 = vcmp.eq.f32.partialorder %v1973, 0.0
  %vm1983 = vcmp.eq.f32.partialorder %v1974, 0.0
  %v1984 = vsel %vm1975, 1, 0
  %v1985 = vsel %vm1976, 1, 0
  %v1986 = vsel %vm1977, 1, 0
  %v1987 = vsel %vm1978, 1, 0
  %v1988 = vsel %vm1979, 1, 0
  %v1989 = vsel %vm1980, 1, 0
  %v1990 = vsel %vm1981, 1, 0
  %v1991 = vsel %vm1982, 1, 0
  %v1992 = vsel %vm1983, 1, 0
  %1993 = vset.pattern.permute.xlu0 1
  %1994 = vperm.xlu0 %1993, %v1984
  %v1995 = vpop.permute.xlu0 %1994
  %1996 = vset.pattern.permute.xlu0 1
  %1997 = vperm.xlu0 %1996, %v1985
  %v1998 = vpop.permute.xlu0 %1997
  %1999 = vset.pattern.permute.xlu0 1
  %2000 = vperm.xlu0 %1999, %v1986
  %v2001 = vpop.permute.xlu0 %2000
  %2002 = vset.pattern.permute.xlu0 1
  %2003 = vperm.xlu0 %2002, %v1987
  %v2004 = vpop.permute.xlu0 %2003
  %2005 = vset.pattern.permute.xlu0 1
  %2006 = vperm.xlu0 %2005, %v1988
  %v2007 = vpop.permute.xlu0 %2006
  %2008 = vset.pattern.permute.xlu0 1
  %2009 = vperm.xlu0 %2008, %v1989
  %v2010 = vpop.permute.xlu0 %2009
  %2011 = vset.pattern.permute.xlu0 1
  %2012 = vperm.xlu0 %2011, %v1990
  %v2013 = vpop.permute.xlu0 %2012
  %2014 = vset.pattern.permute.xlu0 1
  %2015 = vperm.xlu0 %2014, %v1991
  %v2016 = vpop.permute.xlu0 %2015
  %2017 = vset.pattern.permute.xlu0 1
  %2018 = vperm.xlu0 %2017, %v1992
  %v2019 = vpop.permute.xlu0 %2018
  %vm2020 = vcmp.eq.s32.totalorder %v1995, 1
  %vm2021 = vcmp.eq.s32.totalorder %v1998, 1
  %vm2022 = vcmp.eq.s32.totalorder %v2001, 1
  %vm2023 = vcmp.eq.s32.totalorder %v2004, 1
  %vm2024 = vcmp.eq.s32.totalorder %v2007, 1
  %vm2025 = vcmp.eq.s32.totalorder %v2010, 1
  %vm2026 = vcmp.eq.s32.totalorder %v2013, 1
  %vm2027 = vcmp.eq.s32.totalorder %v2016, 1
  %vm2028 = vcmp.eq.s32.totalorder %v2019, 1
  %v2029 = vlaneseq
  %v2030 = vshrl.u32 %v2029, 7
  %v2031 = vsub.s32 0, %v2030
  %v2032 = vrot.slane %v1965, %v2031
  %v2033 = vsel %vm2020, %v2032, 0.0
  %v2034 = vsel %vm2021, %v2032, 0.0
  %v2035 = vsel %vm2022, %v2032, 0.0
  %v2036 = vsel %vm2023, %v2032, 0.0
  %v2037 = vsel %vm2024, %v2032, 0.0
  %v2038 = vsel %vm2025, %v2032, 0.0
  %v2039 = vsel %vm2026, %v2032, 0.0
  %v2040 = vsel %vm2027, %v2032, 0.0
  %v2041 = vsel %vm2028, %v2032, 0.0
  %v2042 = vadd.f32 %v2033, 0.0
  %v2043 = vadd.f32 %v2034, 0.0
  %v2044 = vadd.f32 %v2035, 0.0
  %v2045 = vadd.f32 %v2036, 0.0
  %v2046 = vadd.f32 %v2037, 0.0
  %v2047 = vadd.f32 %v2038, 0.0
  %v2048 = vadd.f32 %v2039, 0.0
  %v2049 = vadd.f32 %v2040, 0.0
  %v2050 = vadd.f32 %v2041, 0.0
  %vm2051 = vcmp.eq.f32.partialorder %v1966, 1.0
  %vm2052 = vcmp.eq.f32.partialorder %v1967, 1.0
  %vm2053 = vcmp.eq.f32.partialorder %v1968, 1.0
  %vm2054 = vcmp.eq.f32.partialorder %v1969, 1.0
  %vm2055 = vcmp.eq.f32.partialorder %v1970, 1.0
  %vm2056 = vcmp.eq.f32.partialorder %v1971, 1.0
  %vm2057 = vcmp.eq.f32.partialorder %v1972, 1.0
  %vm2058 = vcmp.eq.f32.partialorder %v1973, 1.0
  %vm2059 = vcmp.eq.f32.partialorder %v1974, 1.0
  %v2060 = vsel %vm2051, 1, 0
  %v2061 = vsel %vm2052, 1, 0
  %v2062 = vsel %vm2053, 1, 0
  %v2063 = vsel %vm2054, 1, 0
  %v2064 = vsel %vm2055, 1, 0
  %v2065 = vsel %vm2056, 1, 0
  %v2066 = vsel %vm2057, 1, 0
  %v2067 = vsel %vm2058, 1, 0
  %v2068 = vsel %vm2059, 1, 0
  %2069 = vset.pattern.permute.xlu0 1
  %2070 = vperm.xlu0 %2069, %v2060
  %v2071 = vpop.permute.xlu0 %2070
  %2072 = vset.pattern.permute.xlu0 1
  %2073 = vperm.xlu0 %2072, %v2061
  %v2074 = vpop.permute.xlu0 %2073
  %2075 = vset.pattern.permute.xlu0 1
  %2076 = vperm.xlu0 %2075, %v2062
  %v2077 = vpop.permute.xlu0 %2076
  %2078 = vset.pattern.permute.xlu0 1
  %2079 = vperm.xlu0 %2078, %v2063
  %v2080 = vpop.permute.xlu0 %2079
  %2081 = vset.pattern.permute.xlu0 1
  %2082 = vperm.xlu0 %2081, %v2064
  %v2083 = vpop.permute.xlu0 %2082
  %2084 = vset.pattern.permute.xlu0 1
  %2085 = vperm.xlu0 %2084, %v2065
  %v2086 = vpop.permute.xlu0 %2085
  %2087 = vset.pattern.permute.xlu0 1
  %2088 = vperm.xlu0 %2087, %v2066
  %v2089 = vpop.permute.xlu0 %2088
  %2090 = vset.pattern.permute.xlu0 1
  %2091 = vperm.xlu0 %2090, %v2067
  %v2092 = vpop.permute.xlu0 %2091
  %2093 = vset.pattern.permute.xlu0 1
  %2094 = vperm.xlu0 %2093, %v2068
  %v2095 = vpop.permute.xlu0 %2094
  %vm2096 = vcmp.eq.s32.totalorder %v2071, 1
  %vm2097 = vcmp.eq.s32.totalorder %v2074, 1
  %vm2098 = vcmp.eq.s32.totalorder %v2077, 1
  %vm2099 = vcmp.eq.s32.totalorder %v2080, 1
  %vm2100 = vcmp.eq.s32.totalorder %v2083, 1
  %vm2101 = vcmp.eq.s32.totalorder %v2086, 1
  %vm2102 = vcmp.eq.s32.totalorder %v2089, 1
  %vm2103 = vcmp.eq.s32.totalorder %v2092, 1
  %vm2104 = vcmp.eq.s32.totalorder %v2095, 1
  %v2105 = vlaneseq
  %v2106 = vshrl.u32 %v2105, 7
  %v2107 = vsub.s32 1, %v2106
  %v2108 = vrot.slane %v1965, %v2107
  %v2109 = vsel %vm2096, %v2108, 0.0
  %v2110 = vsel %vm2097, %v2108, 0.0
  %v2111 = vsel %vm2098, %v2108, 0.0
  %v2112 = vsel %vm2099, %v2108, 0.0
  %v2113 = vsel %vm2100, %v2108, 0.0
  %v2114 = vsel %vm2101, %v2108, 0.0
  %v2115 = vsel %vm2102, %v2108, 0.0
  %v2116 = vsel %vm2103, %v2108, 0.0
  %v2117 = vsel %vm2104, %v2108, 0.0
  %v2118 = vadd.f32 %v2042, %v2109
  %v2119 = vadd.f32 %v2043, %v2110
  %v2120 = vadd.f32 %v2044, %v2111
  %v2121 = vadd.f32 %v2045, %v2112
  %v2122 = vadd.f32 %v2046, %v2113
  %v2123 = vadd.f32 %v2047, %v2114
  %v2124 = vadd.f32 %v2048, %v2115
  %v2125 = vadd.f32 %v2049, %v2116
  %v2126 = vadd.f32 %v2050, %v2117
  %v2127 = vld [vmem:[%s0 + $0xf8] sm:$0xff]
  %v2128 = vld [vmem:[%s0 + $0x100] sm:$0xff]
  %v2129 = vld [vmem:[%s0 + $0x108] sm:$0xff]
  %v2130 = vld [vmem:[%s0 + $0x110] sm:$0xff]
  %v2131 = vld [vmem:[%s0 + $0x118] sm:$0xff]
  %v2132 = vld [vmem:[%s0 + $0x120] sm:$0xff]
  %v2133 = vld [vmem:[%s0 + $0x128] sm:$0xff]
  %v2134 = vld [vmem:[%s0 + $0x130] sm:$0xff]
  %v2135 = vld [vmem:[%s0 + $0x138] sm:$0xff]
  %2137 = vset.pattern.permute.xlu0 0
  %2138 = vperm.xlu0 %2137, %v1966
  %v2139 = vpop.permute.xlu0 %2138
  %2142 = vset.pattern.permute.xlu0 0
  %2143 = vperm.xlu0 %2142, %v1967
  %v2144 = vpop.permute.xlu0 %2143
  %2147 = vset.pattern.permute.xlu0 0
  %2148 = vperm.xlu0 %2147, %v1968
  %v2149 = vpop.permute.xlu0 %2148
  %2152 = vset.pattern.permute.xlu0 0
  %2153 = vperm.xlu0 %2152, %v1969
  %v2154 = vpop.permute.xlu0 %2153
  %2157 = vset.pattern.permute.xlu0 0
  %2158 = vperm.xlu0 %2157, %v1970
  %v2159 = vpop.permute.xlu0 %2158
  %2162 = vset.pattern.permute.xlu0 0
  %2163 = vperm.xlu0 %2162, %v1971
  %v2164 = vpop.permute.xlu0 %2163
  %2167 = vset.pattern.permute.xlu0 0
  %2168 = vperm.xlu0 %2167, %v1972
  %v2169 = vpop.permute.xlu0 %2168
  %2172 = vset.pattern.permute.xlu0 0
  %2173 = vperm.xlu0 %2172, %v1973
  %v2174 = vpop.permute.xlu0 %2173
  %2177 = vset.pattern.permute.xlu0 0
  %2178 = vperm.xlu0 %2177, %v1974
  %v2179 = vpop.permute.xlu0 %2178
  %v2181 = vmul.f32 %v2139, %v2118
  %v2182 = vmul.f32 %v2144, %v2119
  %v2183 = vmul.f32 %v2149, %v2120
  %v2184 = vmul.f32 %v2154, %v2121
  %v2185 = vmul.f32 %v2159, %v2122
  %v2186 = vmul.f32 %v2164, %v2123
  %v2187 = vmul.f32 %v2169, %v2124
  %v2188 = vmul.f32 %v2174, %v2125
  %v2189 = vmul.f32 %v2179, %v2126
  %v2190 = vadd.f32 %v2127, %v2181
  %v2191 = vadd.f32 %v2128, %v2182
  %v2192 = vadd.f32 %v2129, %v2183
  %v2193 = vadd.f32 %v2130, %v2184
  %v2194 = vadd.f32 %v2131, %v2185
  %v2195 = vadd.f32 %v2132, %v2186
  %v2196 = vadd.f32 %v2133, %v2187
  %v2197 = vadd.f32 %v2134, %v2188
  %v2198 = vadd.f32 %v2135, %v2189
  %v2199 = vld [vmem:[%s0 + $0x188] sm:$0xff]
  %v2200 = vld [vmem:[%s0 + $0x190] sm:$0xff]
  %v2201 = vld [vmem:[%s0 + $0x198] sm:$0xff]
  %v2202 = vld [vmem:[%s0 + $0x1a0] sm:$0xff]
  %v2203 = vld [vmem:[%s0 + $0x1a8] sm:$0xff]
  %v2204 = vld [vmem:[%s0 + $0x1b0] sm:$0xff]
  %v2205 = vld [vmem:[%s0 + $0x1b8] sm:$0xff]
  %v2206 = vld [vmem:[%s0 + $0x1c0] sm:$0xff]
  %v2207 = vld [vmem:[%s0 + $0x1c8] sm:$0xff]
  %v2208 = vld [vmem:[%s0 + $0x340] sm:$0x1]
  %v2209 = vld [vmem:[%s0 + $0x348] sm:$0x1]
  %v2210 = vld [vmem:[%s0 + $0x350] sm:$0xff]
  %v2211 = vld [vmem:[%s0 + $0x358] sm:$0xff]
  %v2212 = vld [vmem:[%s0 + $0x360] sm:$0xff]
  %v2213 = vld [vmem:[%s0 + $0x368] sm:$0xff]
  %v2214 = vld [vmem:[%s0 + $0x370] sm:$0x1]
  %v2215 = vld [vmem:[%s0 + $0x378] sm:$0xff]
  %v2216 = vld [vmem:[%s0 + $0x380] sm:$0xff]
  %v2217 = vld [vmem:[%s0 + $0x388] sm:$0xff]
  %v2218 = vld [vmem:[%s0 + $0x390] sm:$0xff]
  %v2219 = vld [vmem:[%s0 + $0x398] sm:$0x1]
  %v2220 = vld [vmem:[%s0 + $0x3a0] sm:$0x1]
  %v2221 = vld [vmem:[%s0 + $0x3a8] sm:$0x1]
  %v2222 = vld [vmem:[%s0 + $0x3b0] sm:$0xff]
  %v2223 = vld [vmem:[%s0 + $0x3b8] sm:$0xff]
  %v2224 = vld [vmem:[%s0 + $0x3c0] sm:$0xff]
  %v2225 = vld [vmem:[%s0 + $0x3c8] sm:$0xff]
  %v2226 = vld [vmem:[%s0 + $0x3d0] sm:$0x1]
  %v2227 = vld [vmem:[%s0 + $0x3d8] sm:$0xff]
  %v2228 = vld [vmem:[%s0 + $0x3e0] sm:$0xff]
  %v2229 = vld [vmem:[%s0 + $0x3e8] sm:$0xff]
  %v2230 = vld [vmem:[%s0 + $0x3f0] sm:$0xff]
  %v2231 = vld [vmem:[%s0 + $0x3f8] sm:$0xff]
  %v2232 = vld [vmem:[%s0 + $0x400] sm:$0xff]
  %v2233 = vld [vmem:[%s0 + $0x408] sm:$0xff]
  %v2234 = vld [vmem:[%s0 + $0x410] sm:$0xff]
  %v2235 = vld [vmem:[%s0 + $0x418] sm:$0xff]
  %v2236 = vld [vmem:[%s0 + $0x420] sm:$0xff]
  %v2237 = vld [vmem:[%s0 + $0x428] sm:$0xff]
  %v2238 = vld [vmem:[%s0 + $0x430] sm:$0xff]
  %v2239 = vld [vmem:[%s0 + $0x438] sm:$0xff]
  %v2240 = vld [vmem:[%s0 + $0x440] sm:$0xff]
  %v2241 = vld [vmem:[%s0 + $0x448] sm:$0xff]
  %v2242 = vld [vmem:[%s0 + $0x450] sm:$0xff]
  %v2243 = vld [vmem:[%s0 + $0x458] sm:$0x1]
  %v2244 = vsel %vm138, %v2190, 0.0
  %2245 = vadd.xlane.f32.xlu0 %v2244
  %v2246 = vpop.xlane.xlu0 %2245
  %v2247 = vsel %vm138, %v2191, 0.0
  %2248 = vadd.xlane.f32.xlu0 %v2247
  %v2249 = vpop.xlane.xlu0 %2248
  %v2250 = vsel %vm138, %v2192, 0.0
  %2251 = vadd.xlane.f32.xlu0 %v2250
  %v2252 = vpop.xlane.xlu0 %2251
  %v2253 = vsel %vm138, %v2193, 0.0
  %2254 = vadd.xlane.f32.xlu0 %v2253
  %v2255 = vpop.xlane.xlu0 %2254
  %v2256 = vsel %vm138, %v2194, 0.0
  %2257 = vadd.xlane.f32.xlu0 %v2256
  %v2258 = vpop.xlane.xlu0 %2257
  %v2259 = vsel %vm138, %v2195, 0.0
  %2260 = vadd.xlane.f32.xlu0 %v2259
  %v2261 = vpop.xlane.xlu0 %2260
  %v2262 = vsel %vm138, %v2196, 0.0
  %2263 = vadd.xlane.f32.xlu0 %v2262
  %v2264 = vpop.xlane.xlu0 %2263
  %v2265 = vsel %vm138, %v2197, 0.0
  %2266 = vadd.xlane.f32.xlu0 %v2265
  %v2267 = vpop.xlane.xlu0 %2266
  %v2268 = vsel %vm138, %v2198, 0.0
  %2269 = vadd.xlane.f32.xlu0 %v2268
  %v2270 = vpop.xlane.xlu0 %2269
  %v2271 = vmul.f32 %v2246, %v155
  %v2272 = vmul.f32 %v2249, %v155
  %v2273 = vmul.f32 %v2252, %v155
  %v2274 = vmul.f32 %v2255, %v155
  %v2275 = vmul.f32 %v2258, %v155
  %v2276 = vmul.f32 %v2261, %v155
  %v2277 = vmul.f32 %v2264, %v155
  %v2278 = vmul.f32 %v2267, %v155
  %v2279 = vmul.f32 %v2270, %v155
  %v2280 = vsub.f32 %v2190, %v2271
  %v2281 = vsub.f32 %v2191, %v2272
  %v2282 = vsub.f32 %v2192, %v2273
  %v2283 = vsub.f32 %v2193, %v2274
  %v2284 = vsub.f32 %v2194, %v2275
  %v2285 = vsub.f32 %v2195, %v2276
  %v2286 = vsub.f32 %v2196, %v2277
  %v2287 = vsub.f32 %v2197, %v2278
  %v2288 = vsub.f32 %v2198, %v2279
  %v2289 = vmul.f32 %v2280, %v2280
  %v2290 = vmul.f32 %v2281, %v2281
  %v2291 = vmul.f32 %v2282, %v2282
  %v2292 = vmul.f32 %v2283, %v2283
  %v2293 = vmul.f32 %v2284, %v2284
  %v2294 = vmul.f32 %v2285, %v2285
  %v2295 = vmul.f32 %v2286, %v2286
  %v2296 = vmul.f32 %v2287, %v2287
  %v2297 = vmul.f32 %v2288, %v2288
  %v2298 = vsel %vm138, %v2289, 0.0
  %2299 = vadd.xlane.f32.xlu0 %v2298
  %v2300 = vpop.xlane.xlu0 %2299
  %v2301 = vsel %vm138, %v2290, 0.0
  %2302 = vadd.xlane.f32.xlu0 %v2301
  %v2303 = vpop.xlane.xlu0 %2302
  %v2304 = vsel %vm138, %v2291, 0.0
  %2305 = vadd.xlane.f32.xlu0 %v2304
  %v2306 = vpop.xlane.xlu0 %2305
  %v2307 = vsel %vm138, %v2292, 0.0
  %2308 = vadd.xlane.f32.xlu0 %v2307
  %v2309 = vpop.xlane.xlu0 %2308
  %v2310 = vsel %vm138, %v2293, 0.0
  %2311 = vadd.xlane.f32.xlu0 %v2310
  %v2312 = vpop.xlane.xlu0 %2311
  %v2313 = vsel %vm138, %v2294, 0.0
  %2314 = vadd.xlane.f32.xlu0 %v2313
  %v2315 = vpop.xlane.xlu0 %2314
  %v2316 = vsel %vm138, %v2295, 0.0
  %2317 = vadd.xlane.f32.xlu0 %v2316
  %v2318 = vpop.xlane.xlu0 %2317
  %v2319 = vsel %vm138, %v2296, 0.0
  %2320 = vadd.xlane.f32.xlu0 %v2319
  %v2321 = vpop.xlane.xlu0 %2320
  %v2322 = vsel %vm138, %v2297, 0.0
  %2323 = vadd.xlane.f32.xlu0 %v2322
  %v2324 = vpop.xlane.xlu0 %2323
  %v2325 = vmul.f32 %v2300, %v155
  %v2326 = vmul.f32 %v2303, %v155
  %v2327 = vmul.f32 %v2306, %v155
  %v2328 = vmul.f32 %v2309, %v155
  %v2329 = vmul.f32 %v2312, %v155
  %v2330 = vmul.f32 %v2315, %v155
  %v2331 = vmul.f32 %v2318, %v155
  %v2332 = vmul.f32 %v2321, %v155
  %v2333 = vmul.f32 %v2324, %v155
  %v2334 = vadd.f32 %v2325, 1e-05
  %v2335 = vadd.f32 %v2326, 1e-05
  %v2336 = vadd.f32 %v2327, 1e-05
  %v2337 = vadd.f32 %v2328, 1e-05
  %v2338 = vadd.f32 %v2329, 1e-05
  %v2339 = vadd.f32 %v2330, 1e-05
  %v2340 = vadd.f32 %v2331, 1e-05
  %v2341 = vadd.f32 %v2332, 1e-05
  %v2342 = vadd.f32 %v2333, 1e-05
  %v2343 = vrsqrt.pop %v2334
  %v2344 = vrsqrt.pop %v2335
  %v2345 = vrsqrt.pop %v2336
  %v2346 = vrsqrt.pop %v2337
  %v2347 = vrsqrt.pop %v2338
  %v2348 = vrsqrt.pop %v2339
  %v2349 = vrsqrt.pop %v2340
  %v2350 = vrsqrt.pop %v2341
  %v2351 = vrsqrt.pop %v2342
  %v2352 = vmul.f32 %v2280, %v2343
  %v2353 = vmul.f32 %v2281, %v2344
  %v2354 = vmul.f32 %v2282, %v2345
  %v2355 = vmul.f32 %v2283, %v2346
  %v2356 = vmul.f32 %v2284, %v2347
  %v2357 = vmul.f32 %v2285, %v2348
  %v2358 = vmul.f32 %v2286, %v2349
  %v2359 = vmul.f32 %v2287, %v2350
  %v2360 = vmul.f32 %v2288, %v2351
  %v2361 = vlaneseq
  %v2362 = vshrl.u32 %v2361, 7
  %v2363 = vsub.s32 0, %v2362
  %v2364 = vrot.slane %v2208, %v2363
  %v2365 = vmul.f32 %v2352, %v2364
  %v2366 = vmul.f32 %v2353, %v2364
  %v2367 = vmul.f32 %v2354, %v2364
  %v2368 = vmul.f32 %v2355, %v2364
  %v2369 = vmul.f32 %v2356, %v2364
  %v2370 = vmul.f32 %v2357, %v2364
  %v2371 = vmul.f32 %v2358, %v2364
  %v2372 = vmul.f32 %v2359, %v2364
  %v2373 = vmul.f32 %v2360, %v2364
  %v2374 = vlaneseq
  %v2375 = vshrl.u32 %v2374, 7
  %v2376 = vsub.s32 0, %v2375
  %v2377 = vrot.slane %v2209, %v2376
  %v2378 = vadd.f32 %v2365, %v2377
  %v2379 = vadd.f32 %v2366, %v2377
  %v2380 = vadd.f32 %v2367, %v2377
  %v2381 = vadd.f32 %v2368, %v2377
  %v2382 = vadd.f32 %v2369, %v2377
  %v2383 = vadd.f32 %v2370, %v2377
  %v2384 = vadd.f32 %v2371, %v2377
  %v2385 = vadd.f32 %v2372, %v2377
  %v2386 = vadd.f32 %v2373, %v2377
  %v2387 = vpack.c.bf16 %v2379, %v2378
  %v2388 = vpack.c.bf16 %v2381, %v2380
  %v2389 = vpack.c.bf16 %v2383, %v2382
  %v2390 = vpack.c.bf16 %v2385, %v2384
  %v2391 = vpack.c.bf16 %v2386, %v2386
  %v2392 = vpack.c.bf16 %v2211, %v2210
  %v2393 = vpack.c.bf16 %v2213, %v2212
  %v2394 = vlaneseq
  %v2395 = vshrl.u32 %v2394, 7
  %v2396 = vsub.s32 0, %v2395
  %v2397 = vrot.slane %v2214, %v2396
  %v2399 = vsel %vm138, %v2387, 0
  %v2402 = vsel %vm138, %v2388, 0
  %v2405 = vsel %vm138, %v2389, 0
  %v2408 = vsel %vm138, %v2390, 0
  %v2411 = vsel %vm138, %v2391, 0
  %2413 = vmatprep.subr.bf16.mxu0 0
  %2414 = vmatpush1.bf16.msra.mxu0 %v2392
  %2415 = vmatprep.subr.bf16.mxu0 0
  %2416 = vmatpush1.bf16.msra.mxu0 %v2393
  %2417 = vmatprep.subr.bf16.mxu0 0
  %2418 = vmatpush1.bf16.msra.mxu0 0
  %2419 = vmatprep.subr.bf16.mxu0 0
  %2420 = vmatpush1.bf16.msra.mxu0 0
  %2421 = vmatprep.subr.bf16.mxu0 0
  %2422 = vmatpush1.bf16.msra.mxu0 0
  %2423 = vmatprep.subr.bf16.mxu0 0
  %2424 = vmatpush1.bf16.msra.mxu0 0
  %2425 = vmatprep.subr.bf16.mxu0 0
  %2426 = vmatpush1.bf16.msra.mxu0 0
  %2427 = vmatprep.subr.bf16.mxu0 0
  %2428 = vmatpush1.bf16.msra.mxu0 0
  %2429 = vmatprep.subr.bf16.mxu0 0
  %2430 = vmatpush1.bf16.msra.mxu0 0
  %2431 = vmatprep.subr.bf16.mxu0 0
  %2432 = vmatpush1.bf16.msra.mxu0 0
  %2433 = vmatprep.subr.bf16.mxu0 0
  %2434 = vmatpush1.bf16.msra.mxu0 0
  %2435 = vmatprep.subr.bf16.mxu0 0
  %2436 = vmatpush1.bf16.msra.mxu0 0
  %2437 = vmatprep.subr.bf16.mxu0 0
  %2438 = vmatpush1.bf16.msra.mxu0 0
  %2439 = vmatprep.subr.bf16.mxu0 0
  %2440 = vmatpush1.bf16.msra.mxu0 0
  %2441 = vmatprep.subr.bf16.mxu0 0
  %2442 = vmatpush1.bf16.msra.mxu0 0
  %2443 = vmatprep.subr.bf16.mxu0 0
  %2444 = vmatpush1.bf16.msra.mxu0 0
  %2445 = vmatprep.mubr.bf16.mxu0 0
  %2446 = vmatmul.mubr.bf16.gmra.mrb[0].mxu0 %v2399
  %v2447 = vpop.f32.mrb[0].mxu0
  %v2448 = vadd.f32 %v2397, %v2447
  %v2449 = vpop.f32.mrb[0].mxu0
  %v2450 = vpop.f32.mrb[0].mxu0
  %v2451 = vadd.f32 %v2397, %v2450
  %v2452 = vpop.f32.mrb[0].mxu0
  %2453 = vmatprep.mubr.bf16.mxu0 0
  %2454 = vmatmul.mubr.bf16.gmra.mrb[0].mxu0 %v2402
  %v2455 = vpop.f32.mrb[0].mxu0
  %v2456 = vadd.f32 %v2397, %v2455
  %v2457 = vpop.f32.mrb[0].mxu0
  %v2458 = vpop.f32.mrb[0].mxu0
  %v2459 = vadd.f32 %v2397, %v2458
  %v2460 = vpop.f32.mrb[0].mxu0
  %2461 = vmatprep.mubr.bf16.mxu0 0
  %2462 = vmatmul.mubr.bf16.gmra.mrb[0].mxu0 %v2405
  %v2463 = vpop.f32.mrb[0].mxu0
  %v2464 = vadd.f32 %v2397, %v2463
  %v2465 = vpop.f32.mrb[0].mxu0
  %v2466 = vpop.f32.mrb[0].mxu0
  %v2467 = vadd.f32 %v2397, %v2466
  %v2468 = vpop.f32.mrb[0].mxu0
  %2469 = vmatprep.mubr.bf16.mxu0 0
  %2470 = vmatmul.mubr.bf16.gmra.mrb[0].mxu0 %v2408
  %v2471 = vpop.f32.mrb[0].mxu0
  %v2472 = vadd.f32 %v2397, %v2471
  %v2473 = vpop.f32.mrb[0].mxu0
  %v2474 = vpop.f32.mrb[0].mxu0
  %v2475 = vadd.f32 %v2397, %v2474
  %v2476 = vpop.f32.mrb[0].mxu0
  %2477 = vmatprep.mubr.bf16.mxu0 0
  %2478 = vmatmul.mubr.bf16.gmra.mrb[0].mxu0 %v2411
  %v2479 = vpop.f32.mrb[0].mxu0
  %v2480 = vadd.f32 %v2397, %v2479
  %v2481 = vpop.f32.mrb[0].mxu0
  %v2482 = vpop.f32.mrb[0].mxu0
  %v2483 = vpop.f32.mrb[0].mxu0
  %2484 = vdwg.mxu0
  %2494 = vrot.lane.b32.xlu0 %v2448, 96
  %v2495 = vpop.permute.xlu0 %2494
  %2496 = vrot.lane.b32.xlu0 %v2451, 96
  %v2497 = vpop.permute.xlu0 %2496
  %2498 = vrot.lane.b32.xlu0 %v2456, 96
  %v2499 = vpop.permute.xlu0 %2498
  %2500 = vrot.lane.b32.xlu0 %v2459, 96
  %v2501 = vpop.permute.xlu0 %2500
  %2502 = vrot.lane.b32.xlu0 %v2464, 96
  %v2503 = vpop.permute.xlu0 %2502
  %2504 = vrot.lane.b32.xlu0 %v2467, 96
  %v2505 = vpop.permute.xlu0 %2504
  %2506 = vrot.lane.b32.xlu0 %v2472, 96
  %v2507 = vpop.permute.xlu0 %2506
  %2508 = vrot.lane.b32.xlu0 %v2475, 96
  %v2509 = vpop.permute.xlu0 %2508
  %2510 = vrot.lane.b32.xlu0 %v2480, 96
  %v2511 = vpop.permute.xlu0 %2510
  %2521 = vxpose.xlu0.b32.start [1/16] %v2495, 128
  %2522 = vxpose.xlu0.b32.cont [2/16] %v2497, 128
  %2523 = vxpose.xlu0.b32.cont [3/16] %v2499, 128
  %2524 = vxpose.xlu0.b32.cont [4/16] %v2501, 128
  %2525 = vxpose.xlu0.b32.cont [5/16] %v2503, 128
  %2526 = vxpose.xlu0.b32.cont [6/16] %v2505, 128
  %2527 = vxpose.xlu0.b32.cont [7/16] %v2507, 128
  %2528 = vxpose.xlu0.b32.cont [8/16] %v2509, 128
  %2529 = vxpose.xlu0.b32.cont [9/16] %v2511, 128
  %2530 = vxpose.xlu0.b32.cont [10/16] 0.0, 128
  %2531 = vxpose.xlu0.b32.cont [11/16] 0.0, 128
  %2532 = vxpose.xlu0.b32.cont [12/16] 0.0, 128
  %2533 = vxpose.xlu0.b32.cont [13/16] 0.0, 128
  %2534 = vxpose.xlu0.b32.cont [14/16] 0.0, 128
  %2535 = vxpose.xlu0.b32.cont [15/16] 0.0, 128
  %2536 = vxpose.xlu0.b32.end [16/16] 0.0, 128
  %v2537 = vpop.trf.xlu0
  %v2538 = vpop.trf.xlu0
  %v2539 = vpop.trf.xlu0
  %v2540 = vpop.trf.xlu0
  %v2541 = vpop.trf.xlu0
  %v2542 = vpop.trf.xlu0
  %v2543 = vpop.trf.xlu0
  %v2544 = vpop.trf.xlu0
  %v2545 = vpop.trf.xlu0
  %v2546 = vpop.trf.xlu0
  %v2547 = vpop.trf.xlu0
  %v2548 = vpop.trf.xlu0
  %v2549 = vpop.trf.xlu0
  %v2550 = vpop.trf.xlu0
  %v2551 = vpop.trf.xlu0
  %v2552 = vpop.trf.xlu0
  %v2553 = vpack.c.bf16 %v2451, %v2448
  %v2554 = vpack.c.bf16 %v2459, %v2456
  %v2555 = vpack.c.bf16 %v2467, %v2464
  %v2556 = vpack.c.bf16 %v2475, %v2472
  %v2557 = vpack.c.bf16 %v2480, %v2480
  %v2558 = vpack.c.bf16 %v2537, %v2537
  %v2560 = vsel %vm354, %v2553, 0
  %v2563 = vsel %vm354, %v2554, 0
  %v2566 = vsel %vm354, %v2555, 0
  %v2569 = vsel %vm354, %v2556, 0
  %v2572 = vsel %vm354, %v2557, 0
  %v2575 = vsel %vm364, %v2558, 0
  %2577 = vmatprep.subr.bf16.mxu0 0
  %2578 = vmatpush1.bf16.msra.mxu0 %v2575
  %2579 = vmatprep.subr.bf16.mxu0 0
  %2580 = vmatpush1.bf16.msra.mxu0 0
  %2581 = vmatprep.subr.bf16.mxu0 0
  %2582 = vmatpush1.bf16.msra.mxu0 0
  %2583 = vmatprep.subr.bf16.mxu0 0
  %2584 = vmatpush1.bf16.msra.mxu0 0
  %2585 = vmatprep.subr.bf16.mxu0 0
  %2586 = vmatpush1.bf16.msra.mxu0 0
  %2587 = vmatprep.subr.bf16.mxu0 0
  %2588 = vmatpush1.bf16.msra.mxu0 0
  %2589 = vmatprep.subr.bf16.mxu0 0
  %2590 = vmatpush1.bf16.msra.mxu0 0
  %2591 = vmatprep.subr.bf16.mxu0 0
  %2592 = vmatpush1.bf16.msra.mxu0 0
  %2593 = vmatprep.subr.bf16.mxu0 0
  %2594 = vmatpush1.bf16.msra.mxu0 0
  %2595 = vmatprep.subr.bf16.mxu0 0
  %2596 = vmatpush1.bf16.msra.mxu0 0
  %2597 = vmatprep.subr.bf16.mxu0 0
  %2598 = vmatpush1.bf16.msra.mxu0 0
  %2599 = vmatprep.subr.bf16.mxu0 0
  %2600 = vmatpush1.bf16.msra.mxu0 0
  %2601 = vmatprep.subr.bf16.mxu0 0
  %2602 = vmatpush1.bf16.msra.mxu0 0
  %2603 = vmatprep.subr.bf16.mxu0 0
  %2604 = vmatpush1.bf16.msra.mxu0 0
  %2605 = vmatprep.subr.bf16.mxu0 0
  %2606 = vmatpush1.bf16.msra.mxu0 0
  %2607 = vmatprep.subr.bf16.mxu0 0
  %2608 = vmatpush1.bf16.msra.mxu0 0
  %2609 = vmatprep.mubr.bf16.mxu0 0
  %2610 = vmatmul.mubr.bf16.gmra.mrb[0].mxu0 %v2560
  %v2611 = vpop.f32.mrb[0].mxu0
  %v2612 = vadd.f32 0.0, %v2611
  %v2613 = vpop.f32.mrb[0].mxu0
  %v2614 = vpop.f32.mrb[0].mxu0
  %v2615 = vadd.f32 0.0, %v2614
  %v2616 = vpop.f32.mrb[0].mxu0
  %2617 = vmatprep.mubr.bf16.mxu0 0
  %2618 = vmatmul.mubr.bf16.gmra.mrb[0].mxu0 %v2563
  %v2619 = vpop.f32.mrb[0].mxu0
  %v2620 = vadd.f32 0.0, %v2619
  %v2621 = vpop.f32.mrb[0].mxu0
  %v2622 = vpop.f32.mrb[0].mxu0
  %v2623 = vadd.f32 0.0, %v2622
  %v2624 = vpop.f32.mrb[0].mxu0
  %2625 = vmatprep.mubr.bf16.mxu0 0
  %2626 = vmatmul.mubr.bf16.gmra.mrb[0].mxu0 %v2566
  %v2627 = vpop.f32.mrb[0].mxu0
  %v2628 = vadd.f32 0.0, %v2627
  %v2629 = vpop.f32.mrb[0].mxu0
  %v2630 = vpop.f32.mrb[0].mxu0
  %v2631 = vadd.f32 0.0, %v2630
  %v2632 = vpop.f32.mrb[0].mxu0
  %2633 = vmatprep.mubr.bf16.mxu0 0
  %2634 = vmatmul.mubr.bf16.gmra.mrb[0].mxu0 %v2569
  %v2635 = vpop.f32.mrb[0].mxu0
  %v2636 = vadd.f32 0.0, %v2635
  %v2637 = vpop.f32.mrb[0].mxu0
  %v2638 = vpop.f32.mrb[0].mxu0
  %v2639 = vadd.f32 0.0, %v2638
  %v2640 = vpop.f32.mrb[0].mxu0
  %2641 = vmatprep.mubr.bf16.mxu0 0
  %2642 = vmatmul.mubr.bf16.gmra.mrb[0].mxu0 %v2572
  %v2643 = vpop.f32.mrb[0].mxu0
  %v2644 = vadd.f32 0.0, %v2643
  %v2645 = vpop.f32.mrb[0].mxu0
  %v2646 = vpop.f32.mrb[0].mxu0
  %v2647 = vpop.f32.mrb[0].mxu0
  %2648 = vdwg.mxu0
  %v2649 = vmul.f32 %v2612, 0.35355338
  %v2650 = vmul.f32 %v2615, 0.35355338
  %v2651 = vmul.f32 %v2620, 0.35355338
  %v2652 = vmul.f32 %v2623, 0.35355338
  %v2653 = vmul.f32 %v2628, 0.35355338
  %v2654 = vmul.f32 %v2631, 0.35355338
  %v2655 = vmul.f32 %v2636, 0.35355338
  %v2656 = vmul.f32 %v2639, 0.35355338
  %v2657 = vmul.f32 %v2644, 0.35355338
  %v2658 = vadd.f32 %v2649, %v2199
  %v2659 = vadd.f32 %v2650, %v2200
  %v2660 = vadd.f32 %v2651, %v2201
  %v2661 = vadd.f32 %v2652, %v2202
  %v2662 = vadd.f32 %v2653, %v2203
  %v2663 = vadd.f32 %v2654, %v2204
  %v2664 = vadd.f32 %v2655, %v2205
  %v2665 = vadd.f32 %v2656, %v2206
  %v2666 = vadd.f32 %v2657, %v2207
  %vm2667 = vcmask 588800
  %v2668 = vsel %vm2667, %v2658, -inf
  %2669 = vmax.xlane.f32.xlu0 %v2668
  %v2670 = vpop.xlane.xlu0 %2669
  %v2671 = vsel %vm2667, %v2659, -inf
  %2672 = vmax.xlane.f32.xlu0 %v2671
  %v2673 = vpop.xlane.xlu0 %2672
  %v2674 = vsel %vm2667, %v2660, -inf
  %2675 = vmax.xlane.f32.xlu0 %v2674
  %v2676 = vpop.xlane.xlu0 %2675
  %v2677 = vsel %vm2667, %v2661, -inf
  %2678 = vmax.xlane.f32.xlu0 %v2677
  %v2679 = vpop.xlane.xlu0 %2678
  %v2680 = vsel %vm2667, %v2662, -inf
  %2681 = vmax.xlane.f32.xlu0 %v2680
  %v2682 = vpop.xlane.xlu0 %2681
  %v2683 = vsel %vm2667, %v2663, -inf
  %2684 = vmax.xlane.f32.xlu0 %v2683
  %v2685 = vpop.xlane.xlu0 %2684
  %v2686 = vsel %vm2667, %v2664, -inf
  %2687 = vmax.xlane.f32.xlu0 %v2686
  %v2688 = vpop.xlane.xlu0 %2687
  %v2689 = vsel %vm2667, %v2665, -inf
  %2690 = vmax.xlane.f32.xlu0 %v2689
  %v2691 = vpop.xlane.xlu0 %2690
  %v2692 = vsel %vm2667, %v2666, -inf
  %2693 = vmax.xlane.f32.xlu0 %v2692
  %v2694 = vpop.xlane.xlu0 %2693
  %v2695 = vsub.f32 %v2658, %v2670
  %v2696 = vsub.f32 %v2659, %v2673
  %v2697 = vsub.f32 %v2660, %v2676
  %v2698 = vsub.f32 %v2661, %v2679
  %v2699 = vsub.f32 %v2662, %v2682
  %v2700 = vsub.f32 %v2663, %v2685
  %v2701 = vsub.f32 %v2664, %v2688
  %v2702 = vsub.f32 %v2665, %v2691
  %v2703 = vsub.f32 %v2666, %v2694
  %v2704 = vmul.f32 %v2695, 1.442695
  %v2705 = vpow.pop %v2704
  %v2706 = vmul.f32 %v2696, 1.442695
  %v2707 = vpow.pop %v2706
  %v2708 = vmul.f32 %v2697, 1.442695
  %v2709 = vpow.pop %v2708
  %v2710 = vmul.f32 %v2698, 1.442695
  %v2711 = vpow.pop %v2710
  %v2712 = vmul.f32 %v2699, 1.442695
  %v2713 = vpow.pop %v2712
  %v2714 = vmul.f32 %v2700, 1.442695
  %v2715 = vpow.pop %v2714
  %v2716 = vmul.f32 %v2701, 1.442695
  %v2717 = vpow.pop %v2716
  %v2718 = vmul.f32 %v2702, 1.442695
  %v2719 = vpow.pop %v2718
  %v2720 = vmul.f32 %v2703, 1.442695
  %v2721 = vpow.pop %v2720
  %v2722 = vsel %vm2667, %v2705, 0.0
  %2723 = vadd.xlane.f32.xlu0 %v2722
  %v2724 = vpop.xlane.xlu0 %2723
  %v2725 = vsel %vm2667, %v2707, 0.0
  %2726 = vadd.xlane.f32.xlu0 %v2725
  %v2727 = vpop.xlane.xlu0 %2726
  %v2728 = vsel %vm2667, %v2709, 0.0
  %2729 = vadd.xlane.f32.xlu0 %v2728
  %v2730 = vpop.xlane.xlu0 %2729
  %v2731 = vsel %vm2667, %v2711, 0.0
  %2732 = vadd.xlane.f32.xlu0 %v2731
  %v2733 = vpop.xlane.xlu0 %2732
  %v2734 = vsel %vm2667, %v2713, 0.0
  %2735 = vadd.xlane.f32.xlu0 %v2734
  %v2736 = vpop.xlane.xlu0 %2735
  %v2737 = vsel %vm2667, %v2715, 0.0
  %2738 = vadd.xlane.f32.xlu0 %v2737
  %v2739 = vpop.xlane.xlu0 %2738
  %v2740 = vsel %vm2667, %v2717, 0.0
  %2741 = vadd.xlane.f32.xlu0 %v2740
  %v2742 = vpop.xlane.xlu0 %2741
  %v2743 = vsel %vm2667, %v2719, 0.0
  %2744 = vadd.xlane.f32.xlu0 %v2743
  %v2745 = vpop.xlane.xlu0 %2744
  %v2746 = vsel %vm2667, %v2721, 0.0
  %2747 = vadd.xlane.f32.xlu0 %v2746
  %v2748 = vpop.xlane.xlu0 %2747
  %v2749 = vrcp.pop %v2724
  %v2750 = vrcp.pop %v2727
  %v2751 = vrcp.pop %v2730
  %v2752 = vrcp.pop %v2733
  %v2753 = vrcp.pop %v2736
  %v2754 = vrcp.pop %v2739
  %v2755 = vrcp.pop %v2742
  %v2756 = vrcp.pop %v2745
  %v2757 = vrcp.pop %v2748
  %v2758 = vmul.f32 %v2705, %v2749
  %v2759 = vmul.f32 %v2707, %v2750
  %v2760 = vmul.f32 %v2709, %v2751
  %v2761 = vmul.f32 %v2711, %v2752
  %v2762 = vmul.f32 %v2713, %v2753
  %v2763 = vmul.f32 %v2715, %v2754
  %v2764 = vmul.f32 %v2717, %v2755
  %v2765 = vmul.f32 %v2719, %v2756
  %v2766 = vmul.f32 %v2721, %v2757
  %v2767 = vpack.c.bf16 %v2759, %v2758
  %v2768 = vpack.c.bf16 %v2761, %v2760
  %v2769 = vpack.c.bf16 %v2763, %v2762
  %v2770 = vpack.c.bf16 %v2765, %v2764
  %v2771 = vpack.c.bf16 %v2766, %v2766
  %2777 = vrot.lane.b32.xlu0 %v2553, 64
  %v2778 = vpop.permute.xlu0 %2777
  %2779 = vrot.lane.b32.xlu0 %v2554, 64
  %v2780 = vpop.permute.xlu0 %2779
  %2781 = vrot.lane.b32.xlu0 %v2555, 64
  %v2782 = vpop.permute.xlu0 %2781
  %2783 = vrot.lane.b32.xlu0 %v2556, 64
  %v2784 = vpop.permute.xlu0 %2783
  %2785 = vrot.lane.b32.xlu0 %v2557, 64
  %v2786 = vpop.permute.xlu0 %2785
  %v2792 = vsel %vm2667, %v2767, 0
  %v2795 = vsel %vm2667, %v2768, 0
  %v2798 = vsel %vm2667, %v2769, 0
  %v2801 = vsel %vm2667, %v2770, 0
  %v2804 = vsel %vm2667, %v2771, 0
  %v2807 = vsel %vm364, %v2786, 0
  %2809 = vmatprep.subr.bf16.mxu0 0
  %2810 = vmatpush1.bf16.msra.mxu0 %v2778
  %2811 = vmatprep.subr.bf16.mxu0 0
  %2812 = vmatpush1.bf16.msra.mxu0 %v2780
  %2813 = vmatprep.subr.bf16.mxu0 0
  %2814 = vmatpush1.bf16.msra.mxu0 %v2782
  %2815 = vmatprep.subr.bf16.mxu0 0
  %2816 = vmatpush1.bf16.msra.mxu0 %v2784
  %2817 = vmatprep.subr.bf16.mxu0 0
  %2818 = vmatpush1.bf16.msra.mxu0 %v2807
  %2819 = vmatprep.subr.bf16.mxu0 0
  %2820 = vmatpush1.bf16.msra.mxu0 0
  %2821 = vmatprep.subr.bf16.mxu0 0
  %2822 = vmatpush1.bf16.msra.mxu0 0
  %2823 = vmatprep.subr.bf16.mxu0 0
  %2824 = vmatpush1.bf16.msra.mxu0 0
  %2825 = vmatprep.subr.bf16.mxu0 0
  %2826 = vmatpush1.bf16.msra.mxu0 0
  %2827 = vmatprep.subr.bf16.mxu0 0
  %2828 = vmatpush1.bf16.msra.mxu0 0
  %2829 = vmatprep.subr.bf16.mxu0 0
  %2830 = vmatpush1.bf16.msra.mxu0 0
  %2831 = vmatprep.subr.bf16.mxu0 0
  %2832 = vmatpush1.bf16.msra.mxu0 0
  %2833 = vmatprep.subr.bf16.mxu0 0
  %2834 = vmatpush1.bf16.msra.mxu0 0
  %2835 = vmatprep.subr.bf16.mxu0 0
  %2836 = vmatpush1.bf16.msra.mxu0 0
  %2837 = vmatprep.subr.bf16.mxu0 0
  %2838 = vmatpush1.bf16.msra.mxu0 0
  %2839 = vmatprep.subr.bf16.mxu0 0
  %2840 = vmatpush1.bf16.msra.mxu0 0
  %2841 = vmatprep.mubr.bf16.mxu0 0
  %2842 = vmatmul.mubr.bf16.gmra.mrb[0].mxu0 %v2792
  %v2843 = vpop.f32.mrb[0].mxu0
  %v2844 = vadd.f32 0.0, %v2843
  %v2845 = vpop.f32.mrb[0].mxu0
  %v2846 = vpop.f32.mrb[0].mxu0
  %v2847 = vadd.f32 0.0, %v2846
  %v2848 = vpop.f32.mrb[0].mxu0
  %2849 = vmatprep.mubr.bf16.mxu0 0
  %2850 = vmatmul.mubr.bf16.gmra.mrb[0].mxu0 %v2795
  %v2851 = vpop.f32.mrb[0].mxu0
  %v2852 = vadd.f32 0.0, %v2851
  %v2853 = vpop.f32.mrb[0].mxu0
  %v2854 = vpop.f32.mrb[0].mxu0
  %v2855 = vadd.f32 0.0, %v2854
  %v2856 = vpop.f32.mrb[0].mxu0
  %2857 = vmatprep.mubr.bf16.mxu0 0
  %2858 = vmatmul.mubr.bf16.gmra.mrb[0].mxu0 %v2798
  %v2859 = vpop.f32.mrb[0].mxu0
  %v2860 = vadd.f32 0.0, %v2859
  %v2861 = vpop.f32.mrb[0].mxu0
  %v2862 = vpop.f32.mrb[0].mxu0
  %v2863 = vadd.f32 0.0, %v2862
  %v2864 = vpop.f32.mrb[0].mxu0
  %2865 = vmatprep.mubr.bf16.mxu0 0
  %2866 = vmatmul.mubr.bf16.gmra.mrb[0].mxu0 %v2801
  %v2867 = vpop.f32.mrb[0].mxu0
  %v2868 = vadd.f32 0.0, %v2867
  %v2869 = vpop.f32.mrb[0].mxu0
  %v2870 = vpop.f32.mrb[0].mxu0
  %v2871 = vadd.f32 0.0, %v2870
  %v2872 = vpop.f32.mrb[0].mxu0
  %2873 = vmatprep.mubr.bf16.mxu0 0
  %2874 = vmatmul.mubr.bf16.gmra.mrb[0].mxu0 %v2804
  %v2875 = vpop.f32.mrb[0].mxu0
  %v2876 = vadd.f32 0.0, %v2875
  %v2877 = vpop.f32.mrb[0].mxu0
  %v2878 = vpop.f32.mrb[0].mxu0
  %v2879 = vpop.f32.mrb[0].mxu0
  %2880 = vdwg.mxu0
  %2881 = vrot.lane.b32.xlu0 %v2448, 88
  %v2882 = vpop.permute.xlu0 %2881
  %2883 = vrot.lane.b32.xlu0 %v2451, 88
  %v2884 = vpop.permute.xlu0 %2883
  %2885 = vrot.lane.b32.xlu0 %v2456, 88
  %v2886 = vpop.permute.xlu0 %2885
  %2887 = vrot.lane.b32.xlu0 %v2459, 88
  %v2888 = vpop.permute.xlu0 %2887
  %2889 = vrot.lane.b32.xlu0 %v2464, 88
  %v2890 = vpop.permute.xlu0 %2889
  %2891 = vrot.lane.b32.xlu0 %v2467, 88
  %v2892 = vpop.permute.xlu0 %2891
  %2893 = vrot.lane.b32.xlu0 %v2472, 88
  %v2894 = vpop.permute.xlu0 %2893
  %2895 = vrot.lane.b32.xlu0 %v2475, 88
  %v2896 = vpop.permute.xlu0 %2895
  %2897 = vrot.lane.b32.xlu0 %v2480, 88
  %v2898 = vpop.permute.xlu0 %2897
  %2908 = vxpose.xlu0.b32.start [1/16] %v2882, 128
  %2909 = vxpose.xlu0.b32.cont [2/16] %v2884, 128
  %2910 = vxpose.xlu0.b32.cont [3/16] %v2886, 128
  %2911 = vxpose.xlu0.b32.cont [4/16] %v2888, 128
  %2912 = vxpose.xlu0.b32.cont [5/16] %v2890, 128
  %2913 = vxpose.xlu0.b32.cont [6/16] %v2892, 128
  %2914 = vxpose.xlu0.b32.cont [7/16] %v2894, 128
  %2915 = vxpose.xlu0.b32.cont [8/16] %v2896, 128
  %2916 = vxpose.xlu0.b32.cont [9/16] %v2898, 128
  %2917 = vxpose.xlu0.b32.cont [10/16] 0.0, 128
  %2918 = vxpose.xlu0.b32.cont [11/16] 0.0, 128
  %2919 = vxpose.xlu0.b32.cont [12/16] 0.0, 128
  %2920 = vxpose.xlu0.b32.cont [13/16] 0.0, 128
  %2921 = vxpose.xlu0.b32.cont [14/16] 0.0, 128
  %2922 = vxpose.xlu0.b32.cont [15/16] 0.0, 128
  %2923 = vxpose.xlu0.b32.end [16/16] 0.0, 128
  %v2924 = vpop.trf.xlu0
  %v2925 = vpop.trf.xlu0
  %v2926 = vpop.trf.xlu0
  %v2927 = vpop.trf.xlu0
  %v2928 = vpop.trf.xlu0
  %v2929 = vpop.trf.xlu0
  %v2930 = vpop.trf.xlu0
  %v2931 = vpop.trf.xlu0
  %v2932 = vpop.trf.xlu0
  %v2933 = vpop.trf.xlu0
  %v2934 = vpop.trf.xlu0
  %v2935 = vpop.trf.xlu0
  %v2936 = vpop.trf.xlu0
  %v2937 = vpop.trf.xlu0
  %v2938 = vpop.trf.xlu0
  %v2939 = vpop.trf.xlu0
  %v2940 = vpack.c.bf16 %v2924, %v2924
  %2941 = vrot.lane.b32.xlu0 %v2553, 120
  %v2942 = vpop.permute.xlu0 %2941
  %2943 = vrot.lane.b32.xlu0 %v2554, 120
  %v2944 = vpop.permute.xlu0 %2943
  %2945 = vrot.lane.b32.xlu0 %v2555, 120
  %v2946 = vpop.permute.xlu0 %2945
  %2947 = vrot.lane.b32.xlu0 %v2556, 120
  %v2948 = vpop.permute.xlu0 %2947
  %2949 = vrot.lane.b32.xlu0 %v2557, 120
  %v2950 = vpop.permute.xlu0 %2949
  %v2952 = vsel %vm354, %v2942, 0
  %v2955 = vsel %vm354, %v2944, 0
  %v2958 = vsel %vm354, %v2946, 0
  %v2961 = vsel %vm354, %v2948, 0
  %v2964 = vsel %vm354, %v2950, 0
  %v2967 = vsel %vm364, %v2940, 0
  %2969 = vmatprep.subr.bf16.mxu0 0
  %2970 = vmatpush1.bf16.msra.mxu0 %v2967
  %2971 = vmatprep.subr.bf16.mxu0 0
  %2972 = vmatpush1.bf16.msra.mxu0 0
  %2973 = vmatprep.subr.bf16.mxu0 0
  %2974 = vmatpush1.bf16.msra.mxu0 0
  %2975 = vmatprep.subr.bf16.mxu0 0
  %2976 = vmatpush1.bf16.msra.mxu0 0
  %2977 = vmatprep.subr.bf16.mxu0 0
  %2978 = vmatpush1.bf16.msra.mxu0 0
  %2979 = vmatprep.subr.bf16.mxu0 0
  %2980 = vmatpush1.bf16.msra.mxu0 0
  %2981 = vmatprep.subr.bf16.mxu0 0
  %2982 = vmatpush1.bf16.msra.mxu0 0
  %2983 = vmatprep.subr.bf16.mxu0 0
  %2984 = vmatpush1.bf16.msra.mxu0 0
  %2985 = vmatprep.subr.bf16.mxu0 0
  %2986 = vmatpush1.bf16.msra.mxu0 0
  %2987 = vmatprep.subr.bf16.mxu0 0
  %2988 = vmatpush1.bf16.msra.mxu0 0
  %2989 = vmatprep.subr.bf16.mxu0 0
  %2990 = vmatpush1.bf16.msra.mxu0 0
  %2991 = vmatprep.subr.bf16.mxu0 0
  %2992 = vmatpush1.bf16.msra.mxu0 0
  %2993 = vmatprep.subr.bf16.mxu0 0
  %2994 = vmatpush1.bf16.msra.mxu0 0
  %2995 = vmatprep.subr.bf16.mxu0 0
  %2996 = vmatpush1.bf16.msra.mxu0 0
  %2997 = vmatprep.subr.bf16.mxu0 0
  %2998 = vmatpush1.bf16.msra.mxu0 0
  %2999 = vmatprep.subr.bf16.mxu0 0
  %3000 = vmatpush1.bf16.msra.mxu0 0
  %3001 = vmatprep.mubr.bf16.mxu0 0
  %3002 = vmatmul.mubr.bf16.gmra.mrb[0].mxu0 %v2952
  %v3003 = vpop.f32.mrb[0].mxu0
  %v3004 = vadd.f32 0.0, %v3003
  %v3005 = vpop.f32.mrb[0].mxu0
  %v3006 = vpop.f32.mrb[0].mxu0
  %v3007 = vadd.f32 0.0, %v3006
  %v3008 = vpop.f32.mrb[0].mxu0
  %3009 = vmatprep.mubr.bf16.mxu0 0
  %3010 = vmatmul.mubr.bf16.gmra.mrb[0].mxu0 %v2955
  %v3011 = vpop.f32.mrb[0].mxu0
  %v3012 = vadd.f32 0.0, %v3011
  %v3013 = vpop.f32.mrb[0].mxu0
  %v3014 = vpop.f32.mrb[0].mxu0
  %v3015 = vadd.f32 0.0, %v3014
  %v3016 = vpop.f32.mrb[0].mxu0
  %3017 = vmatprep.mubr.bf16.mxu0 0
  %3018 = vmatmul.mubr.bf16.gmra.mrb[0].mxu0 %v2958
  %v3019 = vpop.f32.mrb[0].mxu0
  %v3020 = vadd.f32 0.0, %v3019
  %v3021 = vpop.f32.mrb[0].mxu0
  %v3022 = vpop.f32.mrb[0].mxu0
  %v3023 = vadd.f32 0.0, %v3022
  %v3024 = vpop.f32.mrb[0].mxu0
  %3025 = vmatprep.mubr.bf16.mxu0 0
  %3026 = vmatmul.mubr.bf16.gmra.mrb[0].mxu0 %v2961
  %v3027 = vpop.f32.mrb[0].mxu0
  %v3028 = vadd.f32 0.0, %v3027
  %v3029 = vpop.f32.mrb[0].mxu0
  %v3030 = vpop.f32.mrb[0].mxu0
  %v3031 = vadd.f32 0.0, %v3030
  %v3032 = vpop.f32.mrb[0].mxu0
  %3033 = vmatprep.mubr.bf16.mxu0 0
  %3034 = vmatmul.mubr.bf16.gmra.mrb[0].mxu0 %v2964
  %v3035 = vpop.f32.mrb[0].mxu0
  %v3036 = vadd.f32 0.0, %v3035
  %v3037 = vpop.f32.mrb[0].mxu0
  %v3038 = vpop.f32.mrb[0].mxu0
  %v3039 = vpop.f32.mrb[0].mxu0
  %3040 = vdwg.mxu0
  %v3041 = vmul.f32 %v3004, 0.35355338
  %v3042 = vmul.f32 %v3007, 0.35355338
  %v3043 = vmul.f32 %v3012, 0.35355338
  %v3044 = vmul.f32 %v3015, 0.35355338
  %v3045 = vmul.f32 %v3020, 0.35355338
  %v3046 = vmul.f32 %v3023, 0.35355338
  %v3047 = vmul.f32 %v3028, 0.35355338
  %v3048 = vmul.f32 %v3031, 0.35355338
  %v3049 = vmul.f32 %v3036, 0.35355338
  %v3050 = vadd.f32 %v3041, %v2199
  %v3051 = vadd.f32 %v3042, %v2200
  %v3052 = vadd.f32 %v3043, %v2201
  %v3053 = vadd.f32 %v3044, %v2202
  %v3054 = vadd.f32 %v3045, %v2203
  %v3055 = vadd.f32 %v3046, %v2204
  %v3056 = vadd.f32 %v3047, %v2205
  %v3057 = vadd.f32 %v3048, %v2206
  %v3058 = vadd.f32 %v3049, %v2207
  %v3059 = vsel %vm2667, %v3050, -inf
  %3060 = vmax.xlane.f32.xlu0 %v3059
  %v3061 = vpop.xlane.xlu0 %3060
  %v3062 = vsel %vm2667, %v3051, -inf
  %3063 = vmax.xlane.f32.xlu0 %v3062
  %v3064 = vpop.xlane.xlu0 %3063
  %v3065 = vsel %vm2667, %v3052, -inf
  %3066 = vmax.xlane.f32.xlu0 %v3065
  %v3067 = vpop.xlane.xlu0 %3066
  %v3068 = vsel %vm2667, %v3053, -inf
  %3069 = vmax.xlane.f32.xlu0 %v3068
  %v3070 = vpop.xlane.xlu0 %3069
  %v3071 = vsel %vm2667, %v3054, -inf
  %3072 = vmax.xlane.f32.xlu0 %v3071
  %v3073 = vpop.xlane.xlu0 %3072
  %v3074 = vsel %vm2667, %v3055, -inf
  %3075 = vmax.xlane.f32.xlu0 %v3074
  %v3076 = vpop.xlane.xlu0 %3075
  %v3077 = vsel %vm2667, %v3056, -inf
  %3078 = vmax.xlane.f32.xlu0 %v3077
  %v3079 = vpop.xlane.xlu0 %3078
  %v3080 = vsel %vm2667, %v3057, -inf
  %3081 = vmax.xlane.f32.xlu0 %v3080
  %v3082 = vpop.xlane.xlu0 %3081
  %v3083 = vsel %vm2667, %v3058, -inf
  %3084 = vmax.xlane.f32.xlu0 %v3083
  %v3085 = vpop.xlane.xlu0 %3084
  %v3086 = vsub.f32 %v3050, %v3061
  %v3087 = vsub.f32 %v3051, %v3064
  %v3088 = vsub.f32 %v3052, %v3067
  %v3089 = vsub.f32 %v3053, %v3070
  %v3090 = vsub.f32 %v3054, %v3073
  %v3091 = vsub.f32 %v3055, %v3076
  %v3092 = vsub.f32 %v3056, %v3079
  %v3093 = vsub.f32 %v3057, %v3082
  %v3094 = vsub.f32 %v3058, %v3085
  %v3095 = vmul.f32 %v3086, 1.442695
  %v3096 = vpow.pop %v3095
  %v3097 = vmul.f32 %v3087, 1.442695
  %v3098 = vpow.pop %v3097
  %v3099 = vmul.f32 %v3088, 1.442695
  %v3100 = vpow.pop %v3099
  %v3101 = vmul.f32 %v3089, 1.442695
  %v3102 = vpow.pop %v3101
  %v3103 = vmul.f32 %v3090, 1.442695
  %v3104 = vpow.pop %v3103
  %v3105 = vmul.f32 %v3091, 1.442695
  %v3106 = vpow.pop %v3105
  %v3107 = vmul.f32 %v3092, 1.442695
  %v3108 = vpow.pop %v3107
  %v3109 = vmul.f32 %v3093, 1.442695
  %v3110 = vpow.pop %v3109
  %v3111 = vmul.f32 %v3094, 1.442695
  %v3112 = vpow.pop %v3111
  %v3113 = vsel %vm2667, %v3096, 0.0
  %3114 = vadd.xlane.f32.xlu0 %v3113
  %v3115 = vpop.xlane.xlu0 %3114
  %v3116 = vsel %vm2667, %v3098, 0.0
  %3117 = vadd.xlane.f32.xlu0 %v3116
  %v3118 = vpop.xlane.xlu0 %3117
  %v3119 = vsel %vm2667, %v3100, 0.0
  %3120 = vadd.xlane.f32.xlu0 %v3119
  %v3121 = vpop.xlane.xlu0 %3120
  %v3122 = vsel %vm2667, %v3102, 0.0
  %3123 = vadd.xlane.f32.xlu0 %v3122
  %v3124 = vpop.xlane.xlu0 %3123
  %v3125 = vsel %vm2667, %v3104, 0.0
  %3126 = vadd.xlane.f32.xlu0 %v3125
  %v3127 = vpop.xlane.xlu0 %3126
  %v3128 = vsel %vm2667, %v3106, 0.0
  %3129 = vadd.xlane.f32.xlu0 %v3128
  %v3130 = vpop.xlane.xlu0 %3129
  %v3131 = vsel %vm2667, %v3108, 0.0
  %3132 = vadd.xlane.f32.xlu0 %v3131
  %v3133 = vpop.xlane.xlu0 %3132
  %v3134 = vsel %vm2667, %v3110, 0.0
  %3135 = vadd.xlane.f32.xlu0 %v3134
  %v3136 = vpop.xlane.xlu0 %3135
  %v3137 = vsel %vm2667, %v3112, 0.0
  %3138 = vadd.xlane.f32.xlu0 %v3137
  %v3139 = vpop.xlane.xlu0 %3138
  %v3140 = vrcp.pop %v3115
  %v3141 = vrcp.pop %v3118
  %v3142 = vrcp.pop %v3121
  %v3143 = vrcp.pop %v3124
  %v3144 = vrcp.pop %v3127
  %v3145 = vrcp.pop %v3130
  %v3146 = vrcp.pop %v3133
  %v3147 = vrcp.pop %v3136
  %v3148 = vrcp.pop %v3139
  %v3149 = vmul.f32 %v3096, %v3140
  %v3150 = vmul.f32 %v3098, %v3141
  %v3151 = vmul.f32 %v3100, %v3142
  %v3152 = vmul.f32 %v3102, %v3143
  %v3153 = vmul.f32 %v3104, %v3144
  %v3154 = vmul.f32 %v3106, %v3145
  %v3155 = vmul.f32 %v3108, %v3146
  %v3156 = vmul.f32 %v3110, %v3147
  %v3157 = vmul.f32 %v3112, %v3148
  %v3158 = vpack.c.bf16 %v3150, %v3149
  %v3159 = vpack.c.bf16 %v3152, %v3151
  %v3160 = vpack.c.bf16 %v3154, %v3153
  %v3161 = vpack.c.bf16 %v3156, %v3155
  %v3162 = vpack.c.bf16 %v3157, %v3157
  %3163 = vrot.lane.b32.xlu0 %v2553, 56
  %v3164 = vpop.permute.xlu0 %3163
  %3165 = vrot.lane.b32.xlu0 %v2554, 56
  %v3166 = vpop.permute.xlu0 %3165
  %3167 = vrot.lane.b32.xlu0 %v2555, 56
  %v3168 = vpop.permute.xlu0 %3167
  %3169 = vrot.lane.b32.xlu0 %v2556, 56
  %v3170 = vpop.permute.xlu0 %3169
  %3171 = vrot.lane.b32.xlu0 %v2557, 56
  %v3172 = vpop.permute.xlu0 %3171
  %v3178 = vsel %vm2667, %v3158, 0
  %v3181 = vsel %vm2667, %v3159, 0
  %v3184 = vsel %vm2667, %v3160, 0
  %v3187 = vsel %vm2667, %v3161, 0
  %v3190 = vsel %vm2667, %v3162, 0
  %v3193 = vsel %vm364, %v3172, 0
  %3195 = vmatprep.subr.bf16.mxu0 0
  %3196 = vmatpush1.bf16.msra.mxu0 %v3164
  %3197 = vmatprep.subr.bf16.mxu0 0
  %3198 = vmatpush1.bf16.msra.mxu0 %v3166
  %3199 = vmatprep.subr.bf16.mxu0 0
  %3200 = vmatpush1.bf16.msra.mxu0 %v3168
  %3201 = vmatprep.subr.bf16.mxu0 0
  %3202 = vmatpush1.bf16.msra.mxu0 %v3170
  %3203 = vmatprep.subr.bf16.mxu0 0
  %3204 = vmatpush1.bf16.msra.mxu0 %v3193
  %3205 = vmatprep.subr.bf16.mxu0 0
  %3206 = vmatpush1.bf16.msra.mxu0 0
  %3207 = vmatprep.subr.bf16.mxu0 0
  %3208 = vmatpush1.bf16.msra.mxu0 0
  %3209 = vmatprep.subr.bf16.mxu0 0
  %3210 = vmatpush1.bf16.msra.mxu0 0
  %3211 = vmatprep.subr.bf16.mxu0 0
  %3212 = vmatpush1.bf16.msra.mxu0 0
  %3213 = vmatprep.subr.bf16.mxu0 0
  %3214 = vmatpush1.bf16.msra.mxu0 0
  %3215 = vmatprep.subr.bf16.mxu0 0
  %3216 = vmatpush1.bf16.msra.mxu0 0
  %3217 = vmatprep.subr.bf16.mxu0 0
  %3218 = vmatpush1.bf16.msra.mxu0 0
  %3219 = vmatprep.subr.bf16.mxu0 0
  %3220 = vmatpush1.bf16.msra.mxu0 0
  %3221 = vmatprep.subr.bf16.mxu0 0
  %3222 = vmatpush1.bf16.msra.mxu0 0
  %3223 = vmatprep.subr.bf16.mxu0 0
  %3224 = vmatpush1.bf16.msra.mxu0 0
  %3225 = vmatprep.subr.bf16.mxu0 0
  %3226 = vmatpush1.bf16.msra.mxu0 0
  %3227 = vmatprep.mubr.bf16.mxu0 0
  %3228 = vmatmul.mubr.bf16.gmra.mrb[0].mxu0 %v3178
  %v3229 = vpop.f32.mrb[0].mxu0
  %v3230 = vadd.f32 0.0, %v3229
  %v3231 = vpop.f32.mrb[0].mxu0
  %v3232 = vpop.f32.mrb[0].mxu0
  %v3233 = vadd.f32 0.0, %v3232
  %v3234 = vpop.f32.mrb[0].mxu0
  %3235 = vmatprep.mubr.bf16.mxu0 0
  %3236 = vmatmul.mubr.bf16.gmra.mrb[0].mxu0 %v3181
  %v3237 = vpop.f32.mrb[0].mxu0
  %v3238 = vadd.f32 0.0, %v3237
  %v3239 = vpop.f32.mrb[0].mxu0
  %v3240 = vpop.f32.mrb[0].mxu0
  %v3241 = vadd.f32 0.0, %v3240
  %v3242 = vpop.f32.mrb[0].mxu0
  %3243 = vmatprep.mubr.bf16.mxu0 0
  %3244 = vmatmul.mubr.bf16.gmra.mrb[0].mxu0 %v3184
  %v3245 = vpop.f32.mrb[0].mxu0
  %v3246 = vadd.f32 0.0, %v3245
  %v3247 = vpop.f32.mrb[0].mxu0
  %v3248 = vpop.f32.mrb[0].mxu0
  %v3249 = vadd.f32 0.0, %v3248
  %v3250 = vpop.f32.mrb[0].mxu0
  %3251 = vmatprep.mubr.bf16.mxu0 0
  %3252 = vmatmul.mubr.bf16.gmra.mrb[0].mxu0 %v3187
  %v3253 = vpop.f32.mrb[0].mxu0
  %v3254 = vadd.f32 0.0, %v3253
  %v3255 = vpop.f32.mrb[0].mxu0
  %v3256 = vpop.f32.mrb[0].mxu0
  %v3257 = vadd.f32 0.0, %v3256
  %v3258 = vpop.f32.mrb[0].mxu0
  %3259 = vmatprep.mubr.bf16.mxu0 0
  %3260 = vmatmul.mubr.bf16.gmra.mrb[0].mxu0 %v3190
  %v3261 = vpop.f32.mrb[0].mxu0
  %v3262 = vadd.f32 0.0, %v3261
  %v3263 = vpop.f32.mrb[0].mxu0
  %v3264 = vpop.f32.mrb[0].mxu0
  %v3265 = vpop.f32.mrb[0].mxu0
  %3266 = vdwg.mxu0
  %3267 = vrot.lane.b32.xlu0 %v2448, 80
  %v3268 = vpop.permute.xlu0 %3267
  %3269 = vrot.lane.b32.xlu0 %v2451, 80
  %v3270 = vpop.permute.xlu0 %3269
  %3271 = vrot.lane.b32.xlu0 %v2456, 80
  %v3272 = vpop.permute.xlu0 %3271
  %3273 = vrot.lane.b32.xlu0 %v2459, 80
  %v3274 = vpop.permute.xlu0 %3273
  %3275 = vrot.lane.b32.xlu0 %v2464, 80
  %v3276 = vpop.permute.xlu0 %3275
  %3277 = vrot.lane.b32.xlu0 %v2467, 80
  %v3278 = vpop.permute.xlu0 %3277
  %3279 = vrot.lane.b32.xlu0 %v2472, 80
  %v3280 = vpop.permute.xlu0 %3279
  %3281 = vrot.lane.b32.xlu0 %v2475, 80
  %v3282 = vpop.permute.xlu0 %3281
  %3283 = vrot.lane.b32.xlu0 %v2480, 80
  %v3284 = vpop.permute.xlu0 %3283
  %3294 = vxpose.xlu0.b32.start [1/16] %v3268, 128
  %3295 = vxpose.xlu0.b32.cont [2/16] %v3270, 128
  %3296 = vxpose.xlu0.b32.cont [3/16] %v3272, 128
  %3297 = vxpose.xlu0.b32.cont [4/16] %v3274, 128
  %3298 = vxpose.xlu0.b32.cont [5/16] %v3276, 128
  %3299 = vxpose.xlu0.b32.cont [6/16] %v3278, 128
  %3300 = vxpose.xlu0.b32.cont [7/16] %v3280, 128
  %3301 = vxpose.xlu0.b32.cont [8/16] %v3282, 128
  %3302 = vxpose.xlu0.b32.cont [9/16] %v3284, 128
  %3303 = vxpose.xlu0.b32.cont [10/16] 0.0, 128
  %3304 = vxpose.xlu0.b32.cont [11/16] 0.0, 128
  %3305 = vxpose.xlu0.b32.cont [12/16] 0.0, 128
  %3306 = vxpose.xlu0.b32.cont [13/16] 0.0, 128
  %3307 = vxpose.xlu0.b32.cont [14/16] 0.0, 128
  %3308 = vxpose.xlu0.b32.cont [15/16] 0.0, 128
  %3309 = vxpose.xlu0.b32.end [16/16] 0.0, 128
  %v3310 = vpop.trf.xlu0
  %v3311 = vpop.trf.xlu0
  %v3312 = vpop.trf.xlu0
  %v3313 = vpop.trf.xlu0
  %v3314 = vpop.trf.xlu0
  %v3315 = vpop.trf.xlu0
  %v3316 = vpop.trf.xlu0
  %v3317 = vpop.trf.xlu0
  %v3318 = vpop.trf.xlu0
  %v3319 = vpop.trf.xlu0
  %v3320 = vpop.trf.xlu0
  %v3321 = vpop.trf.xlu0
  %v3322 = vpop.trf.xlu0
  %v3323 = vpop.trf.xlu0
  %v3324 = vpop.trf.xlu0
  %v3325 = vpop.trf.xlu0
  %v3326 = vpack.c.bf16 %v3310, %v3310
  %3327 = vrot.lane.b32.xlu0 %v2553, 112
  %v3328 = vpop.permute.xlu0 %3327
  %3329 = vrot.lane.b32.xlu0 %v2554, 112
  %v3330 = vpop.permute.xlu0 %3329
  %3331 = vrot.lane.b32.xlu0 %v2555, 112
  %v3332 = vpop.permute.xlu0 %3331
  %3333 = vrot.lane.b32.xlu0 %v2556, 112
  %v3334 = vpop.permute.xlu0 %3333
  %3335 = vrot.lane.b32.xlu0 %v2557, 112
  %v3336 = vpop.permute.xlu0 %3335
  %v3338 = vsel %vm354, %v3328, 0
  %v3341 = vsel %vm354, %v3330, 0
  %v3344 = vsel %vm354, %v3332, 0
  %v3347 = vsel %vm354, %v3334, 0
  %v3350 = vsel %vm354, %v3336, 0
  %v3353 = vsel %vm364, %v3326, 0
  %3355 = vmatprep.subr.bf16.mxu0 0
  %3356 = vmatpush1.bf16.msra.mxu0 %v3353
  %3357 = vmatprep.subr.bf16.mxu0 0
  %3358 = vmatpush1.bf16.msra.mxu0 0
  %3359 = vmatprep.subr.bf16.mxu0 0
  %3360 = vmatpush1.bf16.msra.mxu0 0
  %3361 = vmatprep.subr.bf16.mxu0 0
  %3362 = vmatpush1.bf16.msra.mxu0 0
  %3363 = vmatprep.subr.bf16.mxu0 0
  %3364 = vmatpush1.bf16.msra.mxu0 0
  %3365 = vmatprep.subr.bf16.mxu0 0
  %3366 = vmatpush1.bf16.msra.mxu0 0
  %3367 = vmatprep.subr.bf16.mxu0 0
  %3368 = vmatpush1.bf16.msra.mxu0 0
  %3369 = vmatprep.subr.bf16.mxu0 0
  %3370 = vmatpush1.bf16.msra.mxu0 0
  %3371 = vmatprep.subr.bf16.mxu0 0
  %3372 = vmatpush1.bf16.msra.mxu0 0
  %3373 = vmatprep.subr.bf16.mxu0 0
  %3374 = vmatpush1.bf16.msra.mxu0 0
  %3375 = vmatprep.subr.bf16.mxu0 0
  %3376 = vmatpush1.bf16.msra.mxu0 0
  %3377 = vmatprep.subr.bf16.mxu0 0
  %3378 = vmatpush1.bf16.msra.mxu0 0
  %3379 = vmatprep.subr.bf16.mxu0 0
  %3380 = vmatpush1.bf16.msra.mxu0 0
  %3381 = vmatprep.subr.bf16.mxu0 0
  %3382 = vmatpush1.bf16.msra.mxu0 0
  %3383 = vmatprep.subr.bf16.mxu0 0
  %3384 = vmatpush1.bf16.msra.mxu0 0
  %3385 = vmatprep.subr.bf16.mxu0 0
  %3386 = vmatpush1.bf16.msra.mxu0 0
  %3387 = vmatprep.mubr.bf16.mxu0 0
  %3388 = vmatmul.mubr.bf16.gmra.mrb[0].mxu0 %v3338
  %v3389 = vpop.f32.mrb[0].mxu0
  %v3390 = vadd.f32 0.0, %v3389
  %v3391 = vpop.f32.mrb[0].mxu0
  %v3392 = vpop.f32.mrb[0].mxu0
  %v3393 = vadd.f32 0.0, %v3392
  %v3394 = vpop.f32.mrb[0].mxu0
  %3395 = vmatprep.mubr.bf16.mxu0 0
  %3396 = vmatmul.mubr.bf16.gmra.mrb[0].mxu0 %v3341
  %v3397 = vpop.f32.mrb[0].mxu0
  %v3398 = vadd.f32 0.0, %v3397
  %v3399 = vpop.f32.mrb[0].mxu0
  %v3400 = vpop.f32.mrb[0].mxu0
  %v3401 = vadd.f32 0.0, %v3400
  %v3402 = vpop.f32.mrb[0].mxu0
  %3403 = vmatprep.mubr.bf16.mxu0 0
  %3404 = vmatmul.mubr.bf16.gmra.mrb[0].mxu0 %v3344
  %v3405 = vpop.f32.mrb[0].mxu0
  %v3406 = vadd.f32 0.0, %v3405
  %v3407 = vpop.f32.mrb[0].mxu0
  %v3408 = vpop.f32.mrb[0].mxu0
  %v3409 = vadd.f32 0.0, %v3408
  %v3410 = vpop.f32.mrb[0].mxu0
  %3411 = vmatprep.mubr.bf16.mxu0 0
  %3412 = vmatmul.mubr.bf16.gmra.mrb[0].mxu0 %v3347
  %v3413 = vpop.f32.mrb[0].mxu0
  %v3414 = vadd.f32 0.0, %v3413
  %v3415 = vpop.f32.mrb[0].mxu0
  %v3416 = vpop.f32.mrb[0].mxu0
  %v3417 = vadd.f32 0.0, %v3416
  %v3418 = vpop.f32.mrb[0].mxu0
  %3419 = vmatprep.mubr.bf16.mxu0 0
  %3420 = vmatmul.mubr.bf16.gmra.mrb[0].mxu0 %v3350
  %v3421 = vpop.f32.mrb[0].mxu0
  %v3422 = vadd.f32 0.0, %v3421
  %v3423 = vpop.f32.mrb[0].mxu0
  %v3424 = vpop.f32.mrb[0].mxu0
  %v3425 = vpop.f32.mrb[0].mxu0
  %3426 = vdwg.mxu0
  %v3427 = vmul.f32 %v3390, 0.35355338
  %v3428 = vmul.f32 %v3393, 0.35355338
  %v3429 = vmul.f32 %v3398, 0.35355338
  %v3430 = vmul.f32 %v3401, 0.35355338
  %v3431 = vmul.f32 %v3406, 0.35355338
  %v3432 = vmul.f32 %v3409, 0.35355338
  %v3433 = vmul.f32 %v3414, 0.35355338
  %v3434 = vmul.f32 %v3417, 0.35355338
  %v3435 = vmul.f32 %v3422, 0.35355338
  %v3436 = vadd.f32 %v3427, %v2199
  %v3437 = vadd.f32 %v3428, %v2200
  %v3438 = vadd.f32 %v3429, %v2201
  %v3439 = vadd.f32 %v3430, %v2202
  %v3440 = vadd.f32 %v3431, %v2203
  %v3441 = vadd.f32 %v3432, %v2204
  %v3442 = vadd.f32 %v3433, %v2205
  %v3443 = vadd.f32 %v3434, %v2206
  %v3444 = vadd.f32 %v3435, %v2207
  %v3445 = vsel %vm2667, %v3436, -inf
  %3446 = vmax.xlane.f32.xlu0 %v3445
  %v3447 = vpop.xlane.xlu0 %3446
  %v3448 = vsel %vm2667, %v3437, -inf
  %3449 = vmax.xlane.f32.xlu0 %v3448
  %v3450 = vpop.xlane.xlu0 %3449
  %v3451 = vsel %vm2667, %v3438, -inf
  %3452 = vmax.xlane.f32.xlu0 %v3451
  %v3453 = vpop.xlane.xlu0 %3452
  %v3454 = vsel %vm2667, %v3439, -inf
  %3455 = vmax.xlane.f32.xlu0 %v3454
  %v3456 = vpop.xlane.xlu0 %3455
  %v3457 = vsel %vm2667, %v3440, -inf
  %3458 = vmax.xlane.f32.xlu0 %v3457
  %v3459 = vpop.xlane.xlu0 %3458
  %v3460 = vsel %vm2667, %v3441, -inf
  %3461 = vmax.xlane.f32.xlu0 %v3460
  %v3462 = vpop.xlane.xlu0 %3461
  %v3463 = vsel %vm2667, %v3442, -inf
  %3464 = vmax.xlane.f32.xlu0 %v3463
  %v3465 = vpop.xlane.xlu0 %3464
  %v3466 = vsel %vm2667, %v3443, -inf
  %3467 = vmax.xlane.f32.xlu0 %v3466
  %v3468 = vpop.xlane.xlu0 %3467
  %v3469 = vsel %vm2667, %v3444, -inf
  %3470 = vmax.xlane.f32.xlu0 %v3469
  %v3471 = vpop.xlane.xlu0 %3470
  %v3472 = vsub.f32 %v3436, %v3447
  %v3473 = vsub.f32 %v3437, %v3450
  %v3474 = vsub.f32 %v3438, %v3453
  %v3475 = vsub.f32 %v3439, %v3456
  %v3476 = vsub.f32 %v3440, %v3459
  %v3477 = vsub.f32 %v3441, %v3462
  %v3478 = vsub.f32 %v3442, %v3465
  %v3479 = vsub.f32 %v3443, %v3468
  %v3480 = vsub.f32 %v3444, %v3471
  %v3481 = vmul.f32 %v3472, 1.442695
  %v3482 = vpow.pop %v3481
  %v3483 = vmul.f32 %v3473, 1.442695
  %v3484 = vpow.pop %v3483
  %v3485 = vmul.f32 %v3474, 1.442695
  %v3486 = vpow.pop %v3485
  %v3487 = vmul.f32 %v3475, 1.442695
  %v3488 = vpow.pop %v3487
  %v3489 = vmul.f32 %v3476, 1.442695
  %v3490 = vpow.pop %v3489
  %v3491 = vmul.f32 %v3477, 1.442695
  %v3492 = vpow.pop %v3491
  %v3493 = vmul.f32 %v3478, 1.442695
  %v3494 = vpow.pop %v3493
  %v3495 = vmul.f32 %v3479, 1.442695
  %v3496 = vpow.pop %v3495
  %v3497 = vmul.f32 %v3480, 1.442695
  %v3498 = vpow.pop %v3497
  %v3499 = vsel %vm2667, %v3482, 0.0
  %3500 = vadd.xlane.f32.xlu0 %v3499
  %v3501 = vpop.xlane.xlu0 %3500
  %v3502 = vsel %vm2667, %v3484, 0.0
  %3503 = vadd.xlane.f32.xlu0 %v3502
  %v3504 = vpop.xlane.xlu0 %3503
  %v3505 = vsel %vm2667, %v3486, 0.0
  %3506 = vadd.xlane.f32.xlu0 %v3505
  %v3507 = vpop.xlane.xlu0 %3506
  %v3508 = vsel %vm2667, %v3488, 0.0
  %3509 = vadd.xlane.f32.xlu0 %v3508
  %v3510 = vpop.xlane.xlu0 %3509
  %v3511 = vsel %vm2667, %v3490, 0.0
  %3512 = vadd.xlane.f32.xlu0 %v3511
  %v3513 = vpop.xlane.xlu0 %3512
  %v3514 = vsel %vm2667, %v3492, 0.0
  %3515 = vadd.xlane.f32.xlu0 %v3514
  %v3516 = vpop.xlane.xlu0 %3515
  %v3517 = vsel %vm2667, %v3494, 0.0
  %3518 = vadd.xlane.f32.xlu0 %v3517
  %v3519 = vpop.xlane.xlu0 %3518
  %v3520 = vsel %vm2667, %v3496, 0.0
  %3521 = vadd.xlane.f32.xlu0 %v3520
  %v3522 = vpop.xlane.xlu0 %3521
  %v3523 = vsel %vm2667, %v3498, 0.0
  %3524 = vadd.xlane.f32.xlu0 %v3523
  %v3525 = vpop.xlane.xlu0 %3524
  %v3526 = vrcp.pop %v3501
  %v3527 = vrcp.pop %v3504
  %v3528 = vrcp.pop %v3507
  %v3529 = vrcp.pop %v3510
  %v3530 = vrcp.pop %v3513
  %v3531 = vrcp.pop %v3516
  %v3532 = vrcp.pop %v3519
  %v3533 = vrcp.pop %v3522
  %v3534 = vrcp.pop %v3525
  %v3535 = vmul.f32 %v3482, %v3526
  %v3536 = vmul.f32 %v3484, %v3527
  %v3537 = vmul.f32 %v3486, %v3528
  %v3538 = vmul.f32 %v3488, %v3529
  %v3539 = vmul.f32 %v3490, %v3530
  %v3540 = vmul.f32 %v3492, %v3531
  %v3541 = vmul.f32 %v3494, %v3532
  %v3542 = vmul.f32 %v3496, %v3533
  %v3543 = vmul.f32 %v3498, %v3534
  %v3544 = vpack.c.bf16 %v3536, %v3535
  %v3545 = vpack.c.bf16 %v3538, %v3537
  %v3546 = vpack.c.bf16 %v3540, %v3539
  %v3547 = vpack.c.bf16 %v3542, %v3541
  %v3548 = vpack.c.bf16 %v3543, %v3543
  %3549 = vrot.lane.b32.xlu0 %v2553, 48
  %v3550 = vpop.permute.xlu0 %3549
  %3551 = vrot.lane.b32.xlu0 %v2554, 48
  %v3552 = vpop.permute.xlu0 %3551
  %3553 = vrot.lane.b32.xlu0 %v2555, 48
  %v3554 = vpop.permute.xlu0 %3553
  %3555 = vrot.lane.b32.xlu0 %v2556, 48
  %v3556 = vpop.permute.xlu0 %3555
  %3557 = vrot.lane.b32.xlu0 %v2557, 48
  %v3558 = vpop.permute.xlu0 %3557
  %v3564 = vsel %vm2667, %v3544, 0
  %v3567 = vsel %vm2667, %v3545, 0
  %v3570 = vsel %vm2667, %v3546, 0
  %v3573 = vsel %vm2667, %v3547, 0
  %v3576 = vsel %vm2667, %v3548, 0
  %v3579 = vsel %vm364, %v3558, 0
  %3581 = vmatprep.subr.bf16.mxu0 0
  %3582 = vmatpush1.bf16.msra.mxu0 %v3550
  %3583 = vmatprep.subr.bf16.mxu0 0
  %3584 = vmatpush1.bf16.msra.mxu0 %v3552
  %3585 = vmatprep.subr.bf16.mxu0 0
  %3586 = vmatpush1.bf16.msra.mxu0 %v3554
  %3587 = vmatprep.subr.bf16.mxu0 0
  %3588 = vmatpush1.bf16.msra.mxu0 %v3556
  %3589 = vmatprep.subr.bf16.mxu0 0
  %3590 = vmatpush1.bf16.msra.mxu0 %v3579
  %3591 = vmatprep.subr.bf16.mxu0 0
  %3592 = vmatpush1.bf16.msra.mxu0 0
  %3593 = vmatprep.subr.bf16.mxu0 0
  %3594 = vmatpush1.bf16.msra.mxu0 0
  %3595 = vmatprep.subr.bf16.mxu0 0
  %3596 = vmatpush1.bf16.msra.mxu0 0
  %3597 = vmatprep.subr.bf16.mxu0 0
  %3598 = vmatpush1.bf16.msra.mxu0 0
  %3599 = vmatprep.subr.bf16.mxu0 0
  %3600 = vmatpush1.bf16.msra.mxu0 0
  %3601 = vmatprep.subr.bf16.mxu0 0
  %3602 = vmatpush1.bf16.msra.mxu0 0
  %3603 = vmatprep.subr.bf16.mxu0 0
  %3604 = vmatpush1.bf16.msra.mxu0 0
  %3605 = vmatprep.subr.bf16.mxu0 0
  %3606 = vmatpush1.bf16.msra.mxu0 0
  %3607 = vmatprep.subr.bf16.mxu0 0
  %3608 = vmatpush1.bf16.msra.mxu0 0
  %3609 = vmatprep.subr.bf16.mxu0 0
  %3610 = vmatpush1.bf16.msra.mxu0 0
  %3611 = vmatprep.subr.bf16.mxu0 0
  %3612 = vmatpush1.bf16.msra.mxu0 0
  %3613 = vmatprep.mubr.bf16.mxu0 0
  %3614 = vmatmul.mubr.bf16.gmra.mrb[0].mxu0 %v3564
  %v3615 = vpop.f32.mrb[0].mxu0
  %v3616 = vadd.f32 0.0, %v3615
  %v3617 = vpop.f32.mrb[0].mxu0
  %v3618 = vpop.f32.mrb[0].mxu0
  %v3619 = vadd.f32 0.0, %v3618
  %v3620 = vpop.f32.mrb[0].mxu0
  %3621 = vmatprep.mubr.bf16.mxu0 0
  %3622 = vmatmul.mubr.bf16.gmra.mrb[0].mxu0 %v3567
  %v3623 = vpop.f32.mrb[0].mxu0
  %v3624 = vadd.f32 0.0, %v3623
  %v3625 = vpop.f32.mrb[0].mxu0
  %v3626 = vpop.f32.mrb[0].mxu0
  %v3627 = vadd.f32 0.0, %v3626
  %v3628 = vpop.f32.mrb[0].mxu0
  %3629 = vmatprep.mubr.bf16.mxu0 0
  %3630 = vmatmul.mubr.bf16.gmra.mrb[0].mxu0 %v3570
  %v3631 = vpop.f32.mrb[0].mxu0
  %v3632 = vadd.f32 0.0, %v3631
  %v3633 = vpop.f32.mrb[0].mxu0
  %v3634 = vpop.f32.mrb[0].mxu0
  %v3635 = vadd.f32 0.0, %v3634
  %v3636 = vpop.f32.mrb[0].mxu0
  %3637 = vmatprep.mubr.bf16.mxu0 0
  %3638 = vmatmul.mubr.bf16.gmra.mrb[0].mxu0 %v3573
  %v3639 = vpop.f32.mrb[0].mxu0
  %v3640 = vadd.f32 0.0, %v3639
  %v3641 = vpop.f32.mrb[0].mxu0
  %v3642 = vpop.f32.mrb[0].mxu0
  %v3643 = vadd.f32 0.0, %v3642
  %v3644 = vpop.f32.mrb[0].mxu0
  %3645 = vmatprep.mubr.bf16.mxu0 0
  %3646 = vmatmul.mubr.bf16.gmra.mrb[0].mxu0 %v3576
  %v3647 = vpop.f32.mrb[0].mxu0
  %v3648 = vadd.f32 0.0, %v3647
  %v3649 = vpop.f32.mrb[0].mxu0
  %v3650 = vpop.f32.mrb[0].mxu0
  %v3651 = vpop.f32.mrb[0].mxu0
  %3652 = vdwg.mxu0
  %3653 = vrot.lane.b32.xlu0 %v2448, 72
  %v3654 = vpop.permute.xlu0 %3653
  %3655 = vrot.lane.b32.xlu0 %v2451, 72
  %v3656 = vpop.permute.xlu0 %3655
  %3657 = vrot.lane.b32.xlu0 %v2456, 72
  %v3658 = vpop.permute.xlu0 %3657
  %3659 = vrot.lane.b32.xlu0 %v2459, 72
  %v3660 = vpop.permute.xlu0 %3659
  %3661 = vrot.lane.b32.xlu0 %v2464, 72
  %v3662 = vpop.permute.xlu0 %3661
  %3663 = vrot.lane.b32.xlu0 %v2467, 72
  %v3664 = vpop.permute.xlu0 %3663
  %3665 = vrot.lane.b32.xlu0 %v2472, 72
  %v3666 = vpop.permute.xlu0 %3665
  %3667 = vrot.lane.b32.xlu0 %v2475, 72
  %v3668 = vpop.permute.xlu0 %3667
  %3669 = vrot.lane.b32.xlu0 %v2480, 72
  %v3670 = vpop.permute.xlu0 %3669
  %3680 = vxpose.xlu0.b32.start [1/16] %v3654, 128
  %3681 = vxpose.xlu0.b32.cont [2/16] %v3656, 128
  %3682 = vxpose.xlu0.b32.cont [3/16] %v3658, 128
  %3683 = vxpose.xlu0.b32.cont [4/16] %v3660, 128
  %3684 = vxpose.xlu0.b32.cont [5/16] %v3662, 128
  %3685 = vxpose.xlu0.b32.cont [6/16] %v3664, 128
  %3686 = vxpose.xlu0.b32.cont [7/16] %v3666, 128
  %3687 = vxpose.xlu0.b32.cont [8/16] %v3668, 128
  %3688 = vxpose.xlu0.b32.cont [9/16] %v3670, 128
  %3689 = vxpose.xlu0.b32.cont [10/16] 0.0, 128
  %3690 = vxpose.xlu0.b32.cont [11/16] 0.0, 128
  %3691 = vxpose.xlu0.b32.cont [12/16] 0.0, 128
  %3692 = vxpose.xlu0.b32.cont [13/16] 0.0, 128
  %3693 = vxpose.xlu0.b32.cont [14/16] 0.0, 128
  %3694 = vxpose.xlu0.b32.cont [15/16] 0.0, 128
  %3695 = vxpose.xlu0.b32.end [16/16] 0.0, 128
  %v3696 = vpop.trf.xlu0
  %v3697 = vpop.trf.xlu0
  %v3698 = vpop.trf.xlu0
  %v3699 = vpop.trf.xlu0
  %v3700 = vpop.trf.xlu0
  %v3701 = vpop.trf.xlu0
  %v3702 = vpop.trf.xlu0
  %v3703 = vpop.trf.xlu0
  %v3704 = vpop.trf.xlu0
  %v3705 = vpop.trf.xlu0
  %v3706 = vpop.trf.xlu0
  %v3707 = vpop.trf.xlu0
  %v3708 = vpop.trf.xlu0
  %v3709 = vpop.trf.xlu0
  %v3710 = vpop.trf.xlu0
  %v3711 = vpop.trf.xlu0
  %v3712 = vpack.c.bf16 %v3696, %v3696
  %3713 = vrot.lane.b32.xlu0 %v2553, 104
  %v3714 = vpop.permute.xlu0 %3713
  %3715 = vrot.lane.b32.xlu0 %v2554, 104
  %v3716 = vpop.permute.xlu0 %3715
  %3717 = vrot.lane.b32.xlu0 %v2555, 104
  %v3718 = vpop.permute.xlu0 %3717
  %3719 = vrot.lane.b32.xlu0 %v2556, 104
  %v3720 = vpop.permute.xlu0 %3719
  %3721 = vrot.lane.b32.xlu0 %v2557, 104
  %v3722 = vpop.permute.xlu0 %3721
  %v3724 = vsel %vm354, %v3714, 0
  %v3727 = vsel %vm354, %v3716, 0
  %v3730 = vsel %vm354, %v3718, 0
  %v3733 = vsel %vm354, %v3720, 0
  %v3736 = vsel %vm354, %v3722, 0
  %v3739 = vsel %vm364, %v3712, 0
  %3741 = vmatprep.subr.bf16.mxu0 0
  %3742 = vmatpush1.bf16.msra.mxu0 %v3739
  %3743 = vmatprep.subr.bf16.mxu0 0
  %3744 = vmatpush1.bf16.msra.mxu0 0
  %3745 = vmatprep.subr.bf16.mxu0 0
  %3746 = vmatpush1.bf16.msra.mxu0 0
  %3747 = vmatprep.subr.bf16.mxu0 0
  %3748 = vmatpush1.bf16.msra.mxu0 0
  %3749 = vmatprep.subr.bf16.mxu0 0
  %3750 = vmatpush1.bf16.msra.mxu0 0
  %3751 = vmatprep.subr.bf16.mxu0 0
  %3752 = vmatpush1.bf16.msra.mxu0 0
  %3753 = vmatprep.subr.bf16.mxu0 0
  %3754 = vmatpush1.bf16.msra.mxu0 0
  %3755 = vmatprep.subr.bf16.mxu0 0
  %3756 = vmatpush1.bf16.msra.mxu0 0
  %3757 = vmatprep.subr.bf16.mxu0 0
  %3758 = vmatpush1.bf16.msra.mxu0 0
  %3759 = vmatprep.subr.bf16.mxu0 0
  %3760 = vmatpush1.bf16.msra.mxu0 0
  %3761 = vmatprep.subr.bf16.mxu0 0
  %3762 = vmatpush1.bf16.msra.mxu0 0
  %3763 = vmatprep.subr.bf16.mxu0 0
  %3764 = vmatpush1.bf16.msra.mxu0 0
  %3765 = vmatprep.subr.bf16.mxu0 0
  %3766 = vmatpush1.bf16.msra.mxu0 0
  %3767 = vmatprep.subr.bf16.mxu0 0
  %3768 = vmatpush1.bf16.msra.mxu0 0
  %3769 = vmatprep.subr.bf16.mxu0 0
  %3770 = vmatpush1.bf16.msra.mxu0 0
  %3771 = vmatprep.subr.bf16.mxu0 0
  %3772 = vmatpush1.bf16.msra.mxu0 0
  %3773 = vmatprep.mubr.bf16.mxu0 0
  %3774 = vmatmul.mubr.bf16.gmra.mrb[0].mxu0 %v3724
  %v3775 = vpop.f32.mrb[0].mxu0
  %v3776 = vadd.f32 0.0, %v3775
  %v3777 = vpop.f32.mrb[0].mxu0
  %v3778 = vpop.f32.mrb[0].mxu0
  %v3779 = vadd.f32 0.0, %v3778
  %v3780 = vpop.f32.mrb[0].mxu0
  %3781 = vmatprep.mubr.bf16.mxu0 0
  %3782 = vmatmul.mubr.bf16.gmra.mrb[0].mxu0 %v3727
  %v3783 = vpop.f32.mrb[0].mxu0
  %v3784 = vadd.f32 0.0, %v3783
  %v3785 = vpop.f32.mrb[0].mxu0
  %v3786 = vpop.f32.mrb[0].mxu0
  %v3787 = vadd.f32 0.0, %v3786
  %v3788 = vpop.f32.mrb[0].mxu0
  %3789 = vmatprep.mubr.bf16.mxu0 0
  %3790 = vmatmul.mubr.bf16.gmra.mrb[0].mxu0 %v3730
  %v3791 = vpop.f32.mrb[0].mxu0
  %v3792 = vadd.f32 0.0, %v3791
  %v3793 = vpop.f32.mrb[0].mxu0
  %v3794 = vpop.f32.mrb[0].mxu0
  %v3795 = vadd.f32 0.0, %v3794
  %v3796 = vpop.f32.mrb[0].mxu0
  %3797 = vmatprep.mubr.bf16.mxu0 0
  %3798 = vmatmul.mubr.bf16.gmra.mrb[0].mxu0 %v3733
  %v3799 = vpop.f32.mrb[0].mxu0
  %v3800 = vadd.f32 0.0, %v3799
  %v3801 = vpop.f32.mrb[0].mxu0
  %v3802 = vpop.f32.mrb[0].mxu0
  %v3803 = vadd.f32 0.0, %v3802
  %v3804 = vpop.f32.mrb[0].mxu0
  %3805 = vmatprep.mubr.bf16.mxu0 0
  %3806 = vmatmul.mubr.bf16.gmra.mrb[0].mxu0 %v3736
  %v3807 = vpop.f32.mrb[0].mxu0
  %v3808 = vadd.f32 0.0, %v3807
  %v3809 = vpop.f32.mrb[0].mxu0
  %v3810 = vpop.f32.mrb[0].mxu0
  %v3811 = vpop.f32.mrb[0].mxu0
  %3812 = vdwg.mxu0
  %v3813 = vmul.f32 %v3776, 0.35355338
  %v3814 = vmul.f32 %v3779, 0.35355338
  %v3815 = vmul.f32 %v3784, 0.35355338
  %v3816 = vmul.f32 %v3787, 0.35355338
  %v3817 = vmul.f32 %v3792, 0.35355338
  %v3818 = vmul.f32 %v3795, 0.35355338
  %v3819 = vmul.f32 %v3800, 0.35355338
  %v3820 = vmul.f32 %v3803, 0.35355338
  %v3821 = vmul.f32 %v3808, 0.35355338
  %v3822 = vadd.f32 %v3813, %v2199
  %v3823 = vadd.f32 %v3814, %v2200
  %v3824 = vadd.f32 %v3815, %v2201
  %v3825 = vadd.f32 %v3816, %v2202
  %v3826 = vadd.f32 %v3817, %v2203
  %v3827 = vadd.f32 %v3818, %v2204
  %v3828 = vadd.f32 %v3819, %v2205
  %v3829 = vadd.f32 %v3820, %v2206
  %v3830 = vadd.f32 %v3821, %v2207
  %v3831 = vsel %vm2667, %v3822, -inf
  %3832 = vmax.xlane.f32.xlu0 %v3831
  %v3833 = vpop.xlane.xlu0 %3832
  %v3834 = vsel %vm2667, %v3823, -inf
  %3835 = vmax.xlane.f32.xlu0 %v3834
  %v3836 = vpop.xlane.xlu0 %3835
  %v3837 = vsel %vm2667, %v3824, -inf
  %3838 = vmax.xlane.f32.xlu0 %v3837
  %v3839 = vpop.xlane.xlu0 %3838
  %v3840 = vsel %vm2667, %v3825, -inf
  %3841 = vmax.xlane.f32.xlu0 %v3840
  %v3842 = vpop.xlane.xlu0 %3841
  %v3843 = vsel %vm2667, %v3826, -inf
  %3844 = vmax.xlane.f32.xlu0 %v3843
  %v3845 = vpop.xlane.xlu0 %3844
  %v3846 = vsel %vm2667, %v3827, -inf
  %3847 = vmax.xlane.f32.xlu0 %v3846
  %v3848 = vpop.xlane.xlu0 %3847
  %v3849 = vsel %vm2667, %v3828, -inf
  %3850 = vmax.xlane.f32.xlu0 %v3849
  %v3851 = vpop.xlane.xlu0 %3850
  %v3852 = vsel %vm2667, %v3829, -inf
  %3853 = vmax.xlane.f32.xlu0 %v3852
  %v3854 = vpop.xlane.xlu0 %3853
  %v3855 = vsel %vm2667, %v3830, -inf
  %3856 = vmax.xlane.f32.xlu0 %v3855
  %v3857 = vpop.xlane.xlu0 %3856
  %v3858 = vsub.f32 %v3822, %v3833
  %v3859 = vsub.f32 %v3823, %v3836
  %v3860 = vsub.f32 %v3824, %v3839
  %v3861 = vsub.f32 %v3825, %v3842
  %v3862 = vsub.f32 %v3826, %v3845
  %v3863 = vsub.f32 %v3827, %v3848
  %v3864 = vsub.f32 %v3828, %v3851
  %v3865 = vsub.f32 %v3829, %v3854
  %v3866 = vsub.f32 %v3830, %v3857
  %v3867 = vmul.f32 %v3858, 1.442695
  %v3868 = vpow.pop %v3867
  %v3869 = vmul.f32 %v3859, 1.442695
  %v3870 = vpow.pop %v3869
  %v3871 = vmul.f32 %v3860, 1.442695
  %v3872 = vpow.pop %v3871
  %v3873 = vmul.f32 %v3861, 1.442695
  %v3874 = vpow.pop %v3873
  %v3875 = vmul.f32 %v3862, 1.442695
  %v3876 = vpow.pop %v3875
  %v3877 = vmul.f32 %v3863, 1.442695
  %v3878 = vpow.pop %v3877
  %v3879 = vmul.f32 %v3864, 1.442695
  %v3880 = vpow.pop %v3879
  %v3881 = vmul.f32 %v3865, 1.442695
  %v3882 = vpow.pop %v3881
  %v3883 = vmul.f32 %v3866, 1.442695
  %v3884 = vpow.pop %v3883
  %v3885 = vsel %vm2667, %v3868, 0.0
  %3886 = vadd.xlane.f32.xlu0 %v3885
  %v3887 = vpop.xlane.xlu0 %3886
  %v3888 = vsel %vm2667, %v3870, 0.0
  %3889 = vadd.xlane.f32.xlu0 %v3888
  %v3890 = vpop.xlane.xlu0 %3889
  %v3891 = vsel %vm2667, %v3872, 0.0
  %3892 = vadd.xlane.f32.xlu0 %v3891
  %v3893 = vpop.xlane.xlu0 %3892
  %v3894 = vsel %vm2667, %v3874, 0.0
  %3895 = vadd.xlane.f32.xlu0 %v3894
  %v3896 = vpop.xlane.xlu0 %3895
  %v3897 = vsel %vm2667, %v3876, 0.0
  %3898 = vadd.xlane.f32.xlu0 %v3897
  %v3899 = vpop.xlane.xlu0 %3898
  %v3900 = vsel %vm2667, %v3878, 0.0
  %3901 = vadd.xlane.f32.xlu0 %v3900
  %v3902 = vpop.xlane.xlu0 %3901
  %v3903 = vsel %vm2667, %v3880, 0.0
  %3904 = vadd.xlane.f32.xlu0 %v3903
  %v3905 = vpop.xlane.xlu0 %3904
  %v3906 = vsel %vm2667, %v3882, 0.0
  %3907 = vadd.xlane.f32.xlu0 %v3906
  %v3908 = vpop.xlane.xlu0 %3907
  %v3909 = vsel %vm2667, %v3884, 0.0
  %3910 = vadd.xlane.f32.xlu0 %v3909
  %v3911 = vpop.xlane.xlu0 %3910
  %v3912 = vrcp.pop %v3887
  %v3913 = vrcp.pop %v3890
  %v3914 = vrcp.pop %v3893
  %v3915 = vrcp.pop %v3896
  %v3916 = vrcp.pop %v3899
  %v3917 = vrcp.pop %v3902
  %v3918 = vrcp.pop %v3905
  %v3919 = vrcp.pop %v3908
  %v3920 = vrcp.pop %v3911
  %v3921 = vmul.f32 %v3868, %v3912
  %v3922 = vmul.f32 %v3870, %v3913
  %v3923 = vmul.f32 %v3872, %v3914
  %v3924 = vmul.f32 %v3874, %v3915
  %v3925 = vmul.f32 %v3876, %v3916
  %v3926 = vmul.f32 %v3878, %v3917
  %v3927 = vmul.f32 %v3880, %v3918
  %v3928 = vmul.f32 %v3882, %v3919
  %v3929 = vmul.f32 %v3884, %v3920
  %v3930 = vpack.c.bf16 %v3922, %v3921
  %v3931 = vpack.c.bf16 %v3924, %v3923
  %v3932 = vpack.c.bf16 %v3926, %v3925
  %v3933 = vpack.c.bf16 %v3928, %v3927
  %v3934 = vpack.c.bf16 %v3929, %v3929
  %3935 = vrot.lane.b32.xlu0 %v2553, 40
  %v3936 = vpop.permute.xlu0 %3935
  %3937 = vrot.lane.b32.xlu0 %v2554, 40
  %v3938 = vpop.permute.xlu0 %3937
  %3939 = vrot.lane.b32.xlu0 %v2555, 40
  %v3940 = vpop.permute.xlu0 %3939
  %3941 = vrot.lane.b32.xlu0 %v2556, 40
  %v3942 = vpop.permute.xlu0 %3941
  %3943 = vrot.lane.b32.xlu0 %v2557, 40
  %v3944 = vpop.permute.xlu0 %3943
  %v3950 = vsel %vm2667, %v3930, 0
  %v3953 = vsel %vm2667, %v3931, 0
  %v3956 = vsel %vm2667, %v3932, 0
  %v3959 = vsel %vm2667, %v3933, 0
  %v3962 = vsel %vm2667, %v3934, 0
  %v3965 = vsel %vm364, %v3944, 0
  %3967 = vmatprep.subr.bf16.mxu0 0
  %3968 = vmatpush1.bf16.msra.mxu0 %v3936
  %3969 = vmatprep.subr.bf16.mxu0 0
  %3970 = vmatpush1.bf16.msra.mxu0 %v3938
  %3971 = vmatprep.subr.bf16.mxu0 0
  %3972 = vmatpush1.bf16.msra.mxu0 %v3940
  %3973 = vmatprep.subr.bf16.mxu0 0
  %3974 = vmatpush1.bf16.msra.mxu0 %v3942
  %3975 = vmatprep.subr.bf16.mxu0 0
  %3976 = vmatpush1.bf16.msra.mxu0 %v3965
  %3977 = vmatprep.subr.bf16.mxu0 0
  %3978 = vmatpush1.bf16.msra.mxu0 0
  %3979 = vmatprep.subr.bf16.mxu0 0
  %3980 = vmatpush1.bf16.msra.mxu0 0
  %3981 = vmatprep.subr.bf16.mxu0 0
  %3982 = vmatpush1.bf16.msra.mxu0 0
  %3983 = vmatprep.subr.bf16.mxu0 0
  %3984 = vmatpush1.bf16.msra.mxu0 0
  %3985 = vmatprep.subr.bf16.mxu0 0
  %3986 = vmatpush1.bf16.msra.mxu0 0
  %3987 = vmatprep.subr.bf16.mxu0 0
  %3988 = vmatpush1.bf16.msra.mxu0 0
  %3989 = vmatprep.subr.bf16.mxu0 0
  %3990 = vmatpush1.bf16.msra.mxu0 0
  %3991 = vmatprep.subr.bf16.mxu0 0
  %3992 = vmatpush1.bf16.msra.mxu0 0
  %3993 = vmatprep.subr.bf16.mxu0 0
  %3994 = vmatpush1.bf16.msra.mxu0 0
  %3995 = vmatprep.subr.bf16.mxu0 0
  %3996 = vmatpush1.bf16.msra.mxu0 0
  %3997 = vmatprep.subr.bf16.mxu0 0
  %3998 = vmatpush1.bf16.msra.mxu0 0
  %3999 = vmatprep.mubr.bf16.mxu0 0
  %4000 = vmatmul.mubr.bf16.gmra.mrb[0].mxu0 %v3950
  %v4001 = vpop.f32.mrb[0].mxu0
  %v4002 = vadd.f32 0.0, %v4001
  %v4003 = vpop.f32.mrb[0].mxu0
  %v4004 = vpop.f32.mrb[0].mxu0
  %v4005 = vadd.f32 0.0, %v4004
  %v4006 = vpop.f32.mrb[0].mxu0
  %4007 = vmatprep.mubr.bf16.mxu0 0
  %4008 = vmatmul.mubr.bf16.gmra.mrb[0].mxu0 %v3953
  %v4009 = vpop.f32.mrb[0].mxu0
  %v4010 = vadd.f32 0.0, %v4009
  %v4011 = vpop.f32.mrb[0].mxu0
  %v4012 = vpop.f32.mrb[0].mxu0
  %v4013 = vadd.f32 0.0, %v4012
  %v4014 = vpop.f32.mrb[0].mxu0
  %4015 = vmatprep.mubr.bf16.mxu0 0
  %4016 = vmatmul.mubr.bf16.gmra.mrb[0].mxu0 %v3956
  %v4017 = vpop.f32.mrb[0].mxu0
  %v4018 = vadd.f32 0.0, %v4017
  %v4019 = vpop.f32.mrb[0].mxu0
  %v4020 = vpop.f32.mrb[0].mxu0
  %v4021 = vadd.f32 0.0, %v4020
  %v4022 = vpop.f32.mrb[0].mxu0
  %4023 = vmatprep.mubr.bf16.mxu0 0
  %4024 = vmatmul.mubr.bf16.gmra.mrb[0].mxu0 %v3959
  %v4025 = vpop.f32.mrb[0].mxu0
  %v4026 = vadd.f32 0.0, %v4025
  %v4027 = vpop.f32.mrb[0].mxu0
  %v4028 = vpop.f32.mrb[0].mxu0
  %v4029 = vadd.f32 0.0, %v4028
  %v4030 = vpop.f32.mrb[0].mxu0
  %4031 = vmatprep.mubr.bf16.mxu0 0
  %4032 = vmatmul.mubr.bf16.gmra.mrb[0].mxu0 %v3962
  %v4033 = vpop.f32.mrb[0].mxu0
  %v4034 = vadd.f32 0.0, %v4033
  %v4035 = vpop.f32.mrb[0].mxu0
  %v4036 = vpop.f32.mrb[0].mxu0
  %v4037 = vpop.f32.mrb[0].mxu0
  %4038 = vdwg.mxu0
  %4048 = vrot.lane.b32.xlu0 %v3230, 8
  %v4049 = vpop.permute.xlu0 %4048
  %4050 = vrot.lane.b32.xlu0 %v3233, 8
  %v4051 = vpop.permute.xlu0 %4050
  %4052 = vrot.lane.b32.xlu0 %v3238, 8
  %v4053 = vpop.permute.xlu0 %4052
  %4054 = vrot.lane.b32.xlu0 %v3241, 8
  %v4055 = vpop.permute.xlu0 %4054
  %4056 = vrot.lane.b32.xlu0 %v3246, 8
  %v4057 = vpop.permute.xlu0 %4056
  %4058 = vrot.lane.b32.xlu0 %v3249, 8
  %v4059 = vpop.permute.xlu0 %4058
  %4060 = vrot.lane.b32.xlu0 %v3254, 8
  %v4061 = vpop.permute.xlu0 %4060
  %4062 = vrot.lane.b32.xlu0 %v3257, 8
  %v4063 = vpop.permute.xlu0 %4062
  %4064 = vrot.lane.b32.xlu0 %v3262, 8
  %v4065 = vpop.permute.xlu0 %4064
  %4084 = vrot.lane.b32.xlu0 %v3616, 16
  %v4085 = vpop.permute.xlu0 %4084
  %4086 = vrot.lane.b32.xlu0 %v3619, 16
  %v4087 = vpop.permute.xlu0 %4086
  %4088 = vrot.lane.b32.xlu0 %v3624, 16
  %v4089 = vpop.permute.xlu0 %4088
  %4090 = vrot.lane.b32.xlu0 %v3627, 16
  %v4091 = vpop.permute.xlu0 %4090
  %4092 = vrot.lane.b32.xlu0 %v3632, 16
  %v4093 = vpop.permute.xlu0 %4092
  %4094 = vrot.lane.b32.xlu0 %v3635, 16
  %v4095 = vpop.permute.xlu0 %4094
  %4096 = vrot.lane.b32.xlu0 %v3640, 16
  %v4097 = vpop.permute.xlu0 %4096
  %4098 = vrot.lane.b32.xlu0 %v3643, 16
  %v4099 = vpop.permute.xlu0 %4098
  %4100 = vrot.lane.b32.xlu0 %v3648, 16
  %v4101 = vpop.permute.xlu0 %4100
  %4120 = vrot.lane.b32.xlu0 %v4002, 24
  %v4121 = vpop.permute.xlu0 %4120
  %4122 = vrot.lane.b32.xlu0 %v4005, 24
  %v4123 = vpop.permute.xlu0 %4122
  %4124 = vrot.lane.b32.xlu0 %v4010, 24
  %v4125 = vpop.permute.xlu0 %4124
  %4126 = vrot.lane.b32.xlu0 %v4013, 24
  %v4127 = vpop.permute.xlu0 %4126
  %4128 = vrot.lane.b32.xlu0 %v4018, 24
  %v4129 = vpop.permute.xlu0 %4128
  %4130 = vrot.lane.b32.xlu0 %v4021, 24
  %v4131 = vpop.permute.xlu0 %4130
  %4132 = vrot.lane.b32.xlu0 %v4026, 24
  %v4133 = vpop.permute.xlu0 %4132
  %4134 = vrot.lane.b32.xlu0 %v4029, 24
  %v4135 = vpop.permute.xlu0 %4134
  %4136 = vrot.lane.b32.xlu0 %v4034, 24
  %v4137 = vpop.permute.xlu0 %4136
  %v4147 = vsel %vm354, %v2844, %v4049
  %v4148 = vsel %vm354, %v2847, %v4051
  %v4149 = vsel %vm354, %v2852, %v4053
  %v4150 = vsel %vm354, %v2855, %v4055
  %v4151 = vsel %vm354, %v2860, %v4057
  %v4152 = vsel %vm354, %v2863, %v4059
  %v4153 = vsel %vm354, %v2868, %v4061
  %v4154 = vsel %vm354, %v2871, %v4063
  %v4155 = vsel %vm354, %v2876, %v4065
  %v4156 = vsel %vm1437, %v4147, %v4085
  %v4157 = vsel %vm1437, %v4148, %v4087
  %v4158 = vsel %vm1437, %v4149, %v4089
  %v4159 = vsel %vm1437, %v4150, %v4091
  %v4160 = vsel %vm1437, %v4151, %v4093
  %v4161 = vsel %vm1437, %v4152, %v4095
  %v4162 = vsel %vm1437, %v4153, %v4097
  %v4163 = vsel %vm1437, %v4154, %v4099
  %v4164 = vsel %vm1437, %v4155, %v4101
  %v4165 = vsel %vm1443, %v4156, %v4121
  %v4166 = vsel %vm1443, %v4157, %v4123
  %v4167 = vsel %vm1443, %v4158, %v4125
  %v4168 = vsel %vm1443, %v4159, %v4127
  %v4169 = vsel %vm1443, %v4160, %v4129
  %v4170 = vsel %vm1443, %v4161, %v4131
  %v4171 = vsel %vm1443, %v4162, %v4133
  %v4172 = vsel %vm1443, %v4163, %v4135
  %v4173 = vsel %vm1443, %v4164, %v4137
  %v4174 = vpack.c.bf16 %v4166, %v4165
  %v4175 = vpack.c.bf16 %v4168, %v4167
  %v4176 = vpack.c.bf16 %v4170, %v4169
  %v4177 = vpack.c.bf16 %v4172, %v4171
  %v4178 = vpack.c.bf16 %v4173, %v4173
  %v4179 = vpack.c.bf16 %v2216, %v2215
  %v4180 = vpack.c.bf16 %v2218, %v2217
  %v4182 = vsel %vm138, %v4174, 0
  %v4185 = vsel %vm138, %v4175, 0
  %v4188 = vsel %vm138, %v4176, 0
  %v4191 = vsel %vm138, %v4177, 0
  %v4194 = vsel %vm138, %v4178, 0
  %4196 = vmatprep.subr.bf16.mxu0 0
  %4197 = vmatpush1.bf16.msra.mxu0 %v4179
  %4198 = vmatprep.subr.bf16.mxu0 0
  %4199 = vmatpush1.bf16.msra.mxu0 %v4180
  %4200 = vmatprep.subr.bf16.mxu0 0
  %4201 = vmatpush1.bf16.msra.mxu0 0
  %4202 = vmatprep.subr.bf16.mxu0 0
  %4203 = vmatpush1.bf16.msra.mxu0 0
  %4204 = vmatprep.subr.bf16.mxu0 0
  %4205 = vmatpush1.bf16.msra.mxu0 0
  %4206 = vmatprep.subr.bf16.mxu0 0
  %4207 = vmatpush1.bf16.msra.mxu0 0
  %4208 = vmatprep.subr.bf16.mxu0 0
  %4209 = vmatpush1.bf16.msra.mxu0 0
  %4210 = vmatprep.subr.bf16.mxu0 0
  %4211 = vmatpush1.bf16.msra.mxu0 0
  %4212 = vmatprep.subr.bf16.mxu0 0
  %4213 = vmatpush1.bf16.msra.mxu0 0
  %4214 = vmatprep.subr.bf16.mxu0 0
  %4215 = vmatpush1.bf16.msra.mxu0 0
  %4216 = vmatprep.subr.bf16.mxu0 0
  %4217 = vmatpush1.bf16.msra.mxu0 0
  %4218 = vmatprep.subr.bf16.mxu0 0
  %4219 = vmatpush1.bf16.msra.mxu0 0
  %4220 = vmatprep.subr.bf16.mxu0 0
  %4221 = vmatpush1.bf16.msra.mxu0 0
  %4222 = vmatprep.subr.bf16.mxu0 0
  %4223 = vmatpush1.bf16.msra.mxu0 0
  %4224 = vmatprep.subr.bf16.mxu0 0
  %4225 = vmatpush1.bf16.msra.mxu0 0
  %4226 = vmatprep.subr.bf16.mxu0 0
  %4227 = vmatpush1.bf16.msra.mxu0 0
  %4228 = vmatprep.mubr.bf16.mxu0 0
  %4229 = vmatmul.mubr.bf16.gmra.mrb[0].mxu0 %v4182
  %v4230 = vpop.f32.mrb[0].mxu0
  %v4231 = vadd.f32 0.0, %v4230
  %v4232 = vpop.f32.mrb[0].mxu0
  %v4233 = vpop.f32.mrb[0].mxu0
  %v4234 = vadd.f32 0.0, %v4233
  %v4235 = vpop.f32.mrb[0].mxu0
  %4236 = vmatprep.mubr.bf16.mxu0 0
  %4237 = vmatmul.mubr.bf16.gmra.mrb[0].mxu0 %v4185
  %v4238 = vpop.f32.mrb[0].mxu0
  %v4239 = vadd.f32 0.0, %v4238
  %v4240 = vpop.f32.mrb[0].mxu0
  %v4241 = vpop.f32.mrb[0].mxu0
  %v4242 = vadd.f32 0.0, %v4241
  %v4243 = vpop.f32.mrb[0].mxu0
  %4244 = vmatprep.mubr.bf16.mxu0 0
  %4245 = vmatmul.mubr.bf16.gmra.mrb[0].mxu0 %v4188
  %v4246 = vpop.f32.mrb[0].mxu0
  %v4247 = vadd.f32 0.0, %v4246
  %v4248 = vpop.f32.mrb[0].mxu0
  %v4249 = vpop.f32.mrb[0].mxu0
  %v4250 = vadd.f32 0.0, %v4249
  %v4251 = vpop.f32.mrb[0].mxu0
  %4252 = vmatprep.mubr.bf16.mxu0 0
  %4253 = vmatmul.mubr.bf16.gmra.mrb[0].mxu0 %v4191
  %v4254 = vpop.f32.mrb[0].mxu0
  %v4255 = vadd.f32 0.0, %v4254
  %v4256 = vpop.f32.mrb[0].mxu0
  %v4257 = vpop.f32.mrb[0].mxu0
  %v4258 = vadd.f32 0.0, %v4257
  %v4259 = vpop.f32.mrb[0].mxu0
  %4260 = vmatprep.mubr.bf16.mxu0 0
  %4261 = vmatmul.mubr.bf16.gmra.mrb[0].mxu0 %v4194
  %v4262 = vpop.f32.mrb[0].mxu0
  %v4263 = vadd.f32 0.0, %v4262
  %v4264 = vpop.f32.mrb[0].mxu0
  %v4265 = vpop.f32.mrb[0].mxu0
  %v4266 = vpop.f32.mrb[0].mxu0
  %4267 = vdwg.mxu0
  %v4268 = vadd.f32 %v2190, %v4231
  %v4269 = vadd.f32 %v2191, %v4234
  %v4270 = vadd.f32 %v2192, %v4239
  %v4271 = vadd.f32 %v2193, %v4242
  %v4272 = vadd.f32 %v2194, %v4247
  %v4273 = vadd.f32 %v2195, %v4250
  %v4274 = vadd.f32 %v2196, %v4255
  %v4275 = vadd.f32 %v2197, %v4258
  %v4276 = vadd.f32 %v2198, %v4263
  %v4277 = vlaneseq
  %v4278 = vshrl.u32 %v4277, 7
  %v4279 = vsub.s32 0, %v4278
  %v4280 = vrot.slane %v2219, %v4279
  %v4281 = vadd.f32 %v4268, %v4280
  %v4282 = vadd.f32 %v4269, %v4280
  %v4283 = vadd.f32 %v4270, %v4280
  %v4284 = vadd.f32 %v4271, %v4280
  %v4285 = vadd.f32 %v4272, %v4280
  %v4286 = vadd.f32 %v4273, %v4280
  %v4287 = vadd.f32 %v4274, %v4280
  %v4288 = vadd.f32 %v4275, %v4280
  %v4289 = vadd.f32 %v4276, %v4280
  %v4290 = vsel %vm138, %v4281, 0.0
  %4291 = vadd.xlane.f32.xlu0 %v4290
  %v4292 = vpop.xlane.xlu0 %4291
  %v4293 = vsel %vm138, %v4282, 0.0
  %4294 = vadd.xlane.f32.xlu0 %v4293
  %v4295 = vpop.xlane.xlu0 %4294
  %v4296 = vsel %vm138, %v4283, 0.0
  %4297 = vadd.xlane.f32.xlu0 %v4296
  %v4298 = vpop.xlane.xlu0 %4297
  %v4299 = vsel %vm138, %v4284, 0.0
  %4300 = vadd.xlane.f32.xlu0 %v4299
  %v4301 = vpop.xlane.xlu0 %4300
  %v4302 = vsel %vm138, %v4285, 0.0
  %4303 = vadd.xlane.f32.xlu0 %v4302
  %v4304 = vpop.xlane.xlu0 %4303
  %v4305 = vsel %vm138, %v4286, 0.0
  %4306 = vadd.xlane.f32.xlu0 %v4305
  %v4307 = vpop.xlane.xlu0 %4306
  %v4308 = vsel %vm138, %v4287, 0.0
  %4309 = vadd.xlane.f32.xlu0 %v4308
  %v4310 = vpop.xlane.xlu0 %4309
  %v4311 = vsel %vm138, %v4288, 0.0
  %4312 = vadd.xlane.f32.xlu0 %v4311
  %v4313 = vpop.xlane.xlu0 %4312
  %v4314 = vsel %vm138, %v4289, 0.0
  %4315 = vadd.xlane.f32.xlu0 %v4314
  %v4316 = vpop.xlane.xlu0 %4315
  %v4317 = vmul.f32 %v4292, %v155
  %v4318 = vmul.f32 %v4295, %v155
  %v4319 = vmul.f32 %v4298, %v155
  %v4320 = vmul.f32 %v4301, %v155
  %v4321 = vmul.f32 %v4304, %v155
  %v4322 = vmul.f32 %v4307, %v155
  %v4323 = vmul.f32 %v4310, %v155
  %v4324 = vmul.f32 %v4313, %v155
  %v4325 = vmul.f32 %v4316, %v155
  %v4326 = vsub.f32 %v4281, %v4317
  %v4327 = vsub.f32 %v4282, %v4318
  %v4328 = vsub.f32 %v4283, %v4319
  %v4329 = vsub.f32 %v4284, %v4320
  %v4330 = vsub.f32 %v4285, %v4321
  %v4331 = vsub.f32 %v4286, %v4322
  %v4332 = vsub.f32 %v4287, %v4323
  %v4333 = vsub.f32 %v4288, %v4324
  %v4334 = vsub.f32 %v4289, %v4325
  %v4335 = vmul.f32 %v4326, %v4326
  %v4336 = vmul.f32 %v4327, %v4327
  %v4337 = vmul.f32 %v4328, %v4328
  %v4338 = vmul.f32 %v4329, %v4329
  %v4339 = vmul.f32 %v4330, %v4330
  %v4340 = vmul.f32 %v4331, %v4331
  %v4341 = vmul.f32 %v4332, %v4332
  %v4342 = vmul.f32 %v4333, %v4333
  %v4343 = vmul.f32 %v4334, %v4334
  %v4344 = vsel %vm138, %v4335, 0.0
  %4345 = vadd.xlane.f32.xlu0 %v4344
  %v4346 = vpop.xlane.xlu0 %4345
  %v4347 = vsel %vm138, %v4336, 0.0
  %4348 = vadd.xlane.f32.xlu0 %v4347
  %v4349 = vpop.xlane.xlu0 %4348
  %v4350 = vsel %vm138, %v4337, 0.0
  %4351 = vadd.xlane.f32.xlu0 %v4350
  %v4352 = vpop.xlane.xlu0 %4351
  %v4353 = vsel %vm138, %v4338, 0.0
  %4354 = vadd.xlane.f32.xlu0 %v4353
  %v4355 = vpop.xlane.xlu0 %4354
  %v4356 = vsel %vm138, %v4339, 0.0
  %4357 = vadd.xlane.f32.xlu0 %v4356
  %v4358 = vpop.xlane.xlu0 %4357
  %v4359 = vsel %vm138, %v4340, 0.0
  %4360 = vadd.xlane.f32.xlu0 %v4359
  %v4361 = vpop.xlane.xlu0 %4360
  %v4362 = vsel %vm138, %v4341, 0.0
  %4363 = vadd.xlane.f32.xlu0 %v4362
  %v4364 = vpop.xlane.xlu0 %4363
  %v4365 = vsel %vm138, %v4342, 0.0
  %4366 = vadd.xlane.f32.xlu0 %v4365
  %v4367 = vpop.xlane.xlu0 %4366
  %v4368 = vsel %vm138, %v4343, 0.0
  %4369 = vadd.xlane.f32.xlu0 %v4368
  %v4370 = vpop.xlane.xlu0 %4369
  %v4371 = vmul.f32 %v4346, %v155
  %v4372 = vmul.f32 %v4349, %v155
  %v4373 = vmul.f32 %v4352, %v155
  %v4374 = vmul.f32 %v4355, %v155
  %v4375 = vmul.f32 %v4358, %v155
  %v4376 = vmul.f32 %v4361, %v155
  %v4377 = vmul.f32 %v4364, %v155
  %v4378 = vmul.f32 %v4367, %v155
  %v4379 = vmul.f32 %v4370, %v155
  %v4380 = vadd.f32 %v4371, 1e-05
  %v4381 = vadd.f32 %v4372, 1e-05
  %v4382 = vadd.f32 %v4373, 1e-05
  %v4383 = vadd.f32 %v4374, 1e-05
  %v4384 = vadd.f32 %v4375, 1e-05
  %v4385 = vadd.f32 %v4376, 1e-05
  %v4386 = vadd.f32 %v4377, 1e-05
  %v4387 = vadd.f32 %v4378, 1e-05
  %v4388 = vadd.f32 %v4379, 1e-05
  %v4389 = vrsqrt.pop %v4380
  %v4390 = vrsqrt.pop %v4381
  %v4391 = vrsqrt.pop %v4382
  %v4392 = vrsqrt.pop %v4383
  %v4393 = vrsqrt.pop %v4384
  %v4394 = vrsqrt.pop %v4385
  %v4395 = vrsqrt.pop %v4386
  %v4396 = vrsqrt.pop %v4387
  %v4397 = vrsqrt.pop %v4388
  %v4398 = vmul.f32 %v4326, %v4389
  %v4399 = vmul.f32 %v4327, %v4390
  %v4400 = vmul.f32 %v4328, %v4391
  %v4401 = vmul.f32 %v4329, %v4392
  %v4402 = vmul.f32 %v4330, %v4393
  %v4403 = vmul.f32 %v4331, %v4394
  %v4404 = vmul.f32 %v4332, %v4395
  %v4405 = vmul.f32 %v4333, %v4396
  %v4406 = vmul.f32 %v4334, %v4397
  %v4407 = vlaneseq
  %v4408 = vshrl.u32 %v4407, 7
  %v4409 = vsub.s32 0, %v4408
  %v4410 = vrot.slane %v2220, %v4409
  %v4411 = vmul.f32 %v4398, %v4410
  %v4412 = vmul.f32 %v4399, %v4410
  %v4413 = vmul.f32 %v4400, %v4410
  %v4414 = vmul.f32 %v4401, %v4410
  %v4415 = vmul.f32 %v4402, %v4410
  %v4416 = vmul.f32 %v4403, %v4410
  %v4417 = vmul.f32 %v4404, %v4410
  %v4418 = vmul.f32 %v4405, %v4410
  %v4419 = vmul.f32 %v4406, %v4410
  %v4420 = vlaneseq
  %v4421 = vshrl.u32 %v4420, 7
  %v4422 = vsub.s32 0, %v4421
  %v4423 = vrot.slane %v2221, %v4422
  %v4424 = vadd.f32 %v4411, %v4423
  %v4425 = vadd.f32 %v4412, %v4423
  %v4426 = vadd.f32 %v4413, %v4423
  %v4427 = vadd.f32 %v4414, %v4423
  %v4428 = vadd.f32 %v4415, %v4423
  %v4429 = vadd.f32 %v4416, %v4423
  %v4430 = vadd.f32 %v4417, %v4423
  %v4431 = vadd.f32 %v4418, %v4423
  %v4432 = vadd.f32 %v4419, %v4423
  %v4433 = vpack.c.bf16 %v4425, %v4424
  %v4434 = vpack.c.bf16 %v4427, %v4426
  %v4435 = vpack.c.bf16 %v4429, %v4428
  %v4436 = vpack.c.bf16 %v4431, %v4430
  %v4437 = vpack.c.bf16 %v4432, %v4432
  %v4438 = vpack.c.bf16 %v2223, %v2222
  %v4439 = vpack.c.bf16 %v2225, %v2224
  %v4440 = vlaneseq
  %v4441 = vshrl.u32 %v4440, 7
  %v4442 = vsub.s32 0, %v4441
  %v4443 = vrot.slane %v2226, %v4442
  %v4445 = vsel %vm138, %v4433, 0
  %v4448 = vsel %vm138, %v4434, 0
  %v4451 = vsel %vm138, %v4435, 0
  %v4454 = vsel %vm138, %v4436, 0
  %v4457 = vsel %vm138, %v4437, 0
  %4459 = vmatprep.subr.bf16.mxu0 0
  %4460 = vmatpush1.bf16.msra.mxu0 %v4438
  %4461 = vmatprep.subr.bf16.mxu0 0
  %4462 = vmatpush1.bf16.msra.mxu0 %v4439
  %4463 = vmatprep.subr.bf16.mxu0 0
  %4464 = vmatpush1.bf16.msra.mxu0 0
  %4465 = vmatprep.subr.bf16.mxu0 0
  %4466 = vmatpush1.bf16.msra.mxu0 0
  %4467 = vmatprep.subr.bf16.mxu0 0
  %4468 = vmatpush1.bf16.msra.mxu0 0
  %4469 = vmatprep.subr.bf16.mxu0 0
  %4470 = vmatpush1.bf16.msra.mxu0 0
  %4471 = vmatprep.subr.bf16.mxu0 0
  %4472 = vmatpush1.bf16.msra.mxu0 0
  %4473 = vmatprep.subr.bf16.mxu0 0
  %4474 = vmatpush1.bf16.msra.mxu0 0
  %4475 = vmatprep.subr.bf16.mxu0 0
  %4476 = vmatpush1.bf16.msra.mxu0 0
  %4477 = vmatprep.subr.bf16.mxu0 0
  %4478 = vmatpush1.bf16.msra.mxu0 0
  %4479 = vmatprep.subr.bf16.mxu0 0
  %4480 = vmatpush1.bf16.msra.mxu0 0
  %4481 = vmatprep.subr.bf16.mxu0 0
  %4482 = vmatpush1.bf16.msra.mxu0 0
  %4483 = vmatprep.subr.bf16.mxu0 0
  %4484 = vmatpush1.bf16.msra.mxu0 0
  %4485 = vmatprep.subr.bf16.mxu0 0
  %4486 = vmatpush1.bf16.msra.mxu0 0
  %4487 = vmatprep.subr.bf16.mxu0 0
  %4488 = vmatpush1.bf16.msra.mxu0 0
  %4489 = vmatprep.subr.bf16.mxu0 0
  %4490 = vmatpush1.bf16.msra.mxu0 0
  %4491 = vmatprep.mubr.bf16.mxu0 0
  %4492 = vmatmul.mubr.bf16.gmra.mrb[0].mxu0 %v4445
  %v4493 = vpop.f32.mrb[0].mxu0
  %v4494 = vadd.f32 %v4443, %v4493
  %v4495 = vpop.f32.mrb[0].mxu0
  %v4496 = vpop.f32.mrb[0].mxu0
  %v4497 = vadd.f32 %v4443, %v4496
  %v4498 = vpop.f32.mrb[0].mxu0
  %4499 = vmatprep.mubr.bf16.mxu0 0
  %4500 = vmatmul.mubr.bf16.gmra.mrb[0].mxu0 %v4448
  %v4501 = vpop.f32.mrb[0].mxu0
  %v4502 = vadd.f32 %v4443, %v4501
  %v4503 = vpop.f32.mrb[0].mxu0
  %v4504 = vpop.f32.mrb[0].mxu0
  %v4505 = vadd.f32 %v4443, %v4504
  %v4506 = vpop.f32.mrb[0].mxu0
  %4507 = vmatprep.mubr.bf16.mxu0 0
  %4508 = vmatmul.mubr.bf16.gmra.mrb[0].mxu0 %v4451
  %v4509 = vpop.f32.mrb[0].mxu0
  %v4510 = vadd.f32 %v4443, %v4509
  %v4511 = vpop.f32.mrb[0].mxu0
  %v4512 = vpop.f32.mrb[0].mxu0
  %v4513 = vadd.f32 %v4443, %v4512
  %v4514 = vpop.f32.mrb[0].mxu0
  %4515 = vmatprep.mubr.bf16.mxu0 0
  %4516 = vmatmul.mubr.bf16.gmra.mrb[0].mxu0 %v4454
  %v4517 = vpop.f32.mrb[0].mxu0
  %v4518 = vadd.f32 %v4443, %v4517
  %v4519 = vpop.f32.mrb[0].mxu0
  %v4520 = vpop.f32.mrb[0].mxu0
  %v4521 = vadd.f32 %v4443, %v4520
  %v4522 = vpop.f32.mrb[0].mxu0
  %4523 = vmatprep.mubr.bf16.mxu0 0
  %4524 = vmatmul.mubr.bf16.gmra.mrb[0].mxu0 %v4457
  %v4525 = vpop.f32.mrb[0].mxu0
  %v4526 = vadd.f32 %v4443, %v4525
  %v4527 = vpop.f32.mrb[0].mxu0
  %v4528 = vpop.f32.mrb[0].mxu0
  %v4529 = vpop.f32.mrb[0].mxu0
  %4530 = vdwg.mxu0
  %v4531 = vmul.f32 %v4494, 1.702
  %v4532 = vmul.f32 %v4497, 1.702
  %v4533 = vmul.f32 %v4502, 1.702
  %v4534 = vmul.f32 %v4505, 1.702
  %v4535 = vmul.f32 %v4510, 1.702
  %v4536 = vmul.f32 %v4513, 1.702
  %v4537 = vmul.f32 %v4518, 1.702
  %v4538 = vmul.f32 %v4521, 1.702
  %v4539 = vmul.f32 %v4526, 1.702
  %v4540 = vxor.u32 %v4531, 2147483648
  %v4541 = vxor.u32 %v4532, 2147483648
  %v4542 = vxor.u32 %v4533, 2147483648
  %v4543 = vxor.u32 %v4534, 2147483648
  %v4544 = vxor.u32 %v4535, 2147483648
  %v4545 = vxor.u32 %v4536, 2147483648
  %v4546 = vxor.u32 %v4537, 2147483648
  %v4547 = vxor.u32 %v4538, 2147483648
  %v4548 = vxor.u32 %v4539, 2147483648
  %v4549 = vmul.f32 %v4540, 1.442695
  %v4550 = vpow.pop %v4549
  %v4551 = vmul.f32 %v4541, 1.442695
  %v4552 = vpow.pop %v4551
  %v4553 = vmul.f32 %v4542, 1.442695
  %v4554 = vpow.pop %v4553
  %v4555 = vmul.f32 %v4543, 1.442695
  %v4556 = vpow.pop %v4555
  %v4557 = vmul.f32 %v4544, 1.442695
  %v4558 = vpow.pop %v4557
  %v4559 = vmul.f32 %v4545, 1.442695
  %v4560 = vpow.pop %v4559
  %v4561 = vmul.f32 %v4546, 1.442695
  %v4562 = vpow.pop %v4561
  %v4563 = vmul.f32 %v4547, 1.442695
  %v4564 = vpow.pop %v4563
  %v4565 = vmul.f32 %v4548, 1.442695
  %v4566 = vpow.pop %v4565
  %v4567 = vadd.f32 %v4550, 1.0
  %v4568 = vadd.f32 %v4552, 1.0
  %v4569 = vadd.f32 %v4554, 1.0
  %v4570 = vadd.f32 %v4556, 1.0
  %v4571 = vadd.f32 %v4558, 1.0
  %v4572 = vadd.f32 %v4560, 1.0
  %v4573 = vadd.f32 %v4562, 1.0
  %v4574 = vadd.f32 %v4564, 1.0
  %v4575 = vadd.f32 %v4566, 1.0
  %v4576 = vrcp.pop %v4567
  %v4577 = vmul.f32 1.0, %v4576
  %v4578 = vrcp.pop %v4568
  %v4579 = vmul.f32 1.0, %v4578
  %v4580 = vrcp.pop %v4569
  %v4581 = vmul.f32 1.0, %v4580
  %v4582 = vrcp.pop %v4570
  %v4583 = vmul.f32 1.0, %v4582
  %v4584 = vrcp.pop %v4571
  %v4585 = vmul.f32 1.0, %v4584
  %v4586 = vrcp.pop %v4572
  %v4587 = vmul.f32 1.0, %v4586
  %v4588 = vrcp.pop %v4573
  %v4589 = vmul.f32 1.0, %v4588
  %v4590 = vrcp.pop %v4574
  %v4591 = vmul.f32 1.0, %v4590
  %v4592 = vrcp.pop %v4575
  %v4593 = vmul.f32 1.0, %v4592
  %v4594 = vmul.f32 %v4494, %v4577
  %v4595 = vmul.f32 %v4497, %v4579
  %v4596 = vmul.f32 %v4502, %v4581
  %v4597 = vmul.f32 %v4505, %v4583
  %v4598 = vmul.f32 %v4510, %v4585
  %v4599 = vmul.f32 %v4513, %v4587
  %v4600 = vmul.f32 %v4518, %v4589
  %v4601 = vmul.f32 %v4521, %v4591
  %v4602 = vmul.f32 %v4526, %v4593
  %v4603 = vpack.c.bf16 %v4595, %v4594
  %v4604 = vpack.c.bf16 %v4597, %v4596
  %v4605 = vpack.c.bf16 %v4599, %v4598
  %v4606 = vpack.c.bf16 %v4601, %v4600
  %v4607 = vpack.c.bf16 %v4602, %v4602
  %v4608 = vpack.c.bf16 %v2228, %v2227
  %v4609 = vpack.c.bf16 %v2230, %v2229
  %v4610 = vpack.c.bf16 %v2232, %v2231
  %v4611 = vpack.c.bf16 %v2234, %v2233
  %v4612 = vpack.c.bf16 %v2236, %v2235
  %v4613 = vpack.c.bf16 %v2238, %v2237
  %v4614 = vpack.c.bf16 %v2240, %v2239
  %v4615 = vpack.c.bf16 %v2242, %v2241
  %4616 = vmatprep.subr.bf16.mxu0 0
  %4617 = vmatpush1.bf16.msra.mxu0 %v4608
  %4618 = vmatprep.subr.bf16.mxu0 0
  %4619 = vmatpush1.bf16.msra.mxu0 %v4609
  %4620 = vmatprep.subr.bf16.mxu0 0
  %4621 = vmatpush1.bf16.msra.mxu0 %v4610
  %4622 = vmatprep.subr.bf16.mxu0 0
  %4623 = vmatpush1.bf16.msra.mxu0 %v4611
  %4624 = vmatprep.subr.bf16.mxu0 0
  %4625 = vmatpush1.bf16.msra.mxu0 %v4612
  %4626 = vmatprep.subr.bf16.mxu0 0
  %4627 = vmatpush1.bf16.msra.mxu0 %v4613
  %4628 = vmatprep.subr.bf16.mxu0 0
  %4629 = vmatpush1.bf16.msra.mxu0 %v4614
  %4630 = vmatprep.subr.bf16.mxu0 0
  %4631 = vmatpush1.bf16.msra.mxu0 %v4615
  %4632 = vmatprep.subr.bf16.mxu0 0
  %4633 = vmatpush1.bf16.msra.mxu0 0
  %4634 = vmatprep.subr.bf16.mxu0 0
  %4635 = vmatpush1.bf16.msra.mxu0 0
  %4636 = vmatprep.subr.bf16.mxu0 0
  %4637 = vmatpush1.bf16.msra.mxu0 0
  %4638 = vmatprep.subr.bf16.mxu0 0
  %4639 = vmatpush1.bf16.msra.mxu0 0
  %4640 = vmatprep.subr.bf16.mxu0 0
  %4641 = vmatpush1.bf16.msra.mxu0 0
  %4642 = vmatprep.subr.bf16.mxu0 0
  %4643 = vmatpush1.bf16.msra.mxu0 0
  %4644 = vmatprep.subr.bf16.mxu0 0
  %4645 = vmatpush1.bf16.msra.mxu0 0
  %4646 = vmatprep.subr.bf16.mxu0 0
  %4647 = vmatpush1.bf16.msra.mxu0 0
  %4648 = vmatprep.mubr.bf16.mxu0 0
  %4649 = vmatmul.mubr.bf16.gmra.mrb[0].mxu0 %v4603
  %v4650 = vpop.f32.mrb[0].mxu0
  %v4651 = vadd.f32 0.0, %v4650
  %v4652 = vpop.f32.mrb[0].mxu0
  %v4653 = vpop.f32.mrb[0].mxu0
  %v4654 = vadd.f32 0.0, %v4653
  %v4655 = vpop.f32.mrb[0].mxu0
  %4656 = vmatprep.mubr.bf16.mxu0 0
  %4657 = vmatmul.mubr.bf16.gmra.mrb[0].mxu0 %v4604
  %v4658 = vpop.f32.mrb[0].mxu0
  %v4659 = vadd.f32 0.0, %v4658
  %v4660 = vpop.f32.mrb[0].mxu0
  %v4661 = vpop.f32.mrb[0].mxu0
  %v4662 = vadd.f32 0.0, %v4661
  %v4663 = vpop.f32.mrb[0].mxu0
  %4664 = vmatprep.mubr.bf16.mxu0 0
  %4665 = vmatmul.mubr.bf16.gmra.mrb[0].mxu0 %v4605
  %v4666 = vpop.f32.mrb[0].mxu0
  %v4667 = vadd.f32 0.0, %v4666
  %v4668 = vpop.f32.mrb[0].mxu0
  %v4669 = vpop.f32.mrb[0].mxu0
  %v4670 = vadd.f32 0.0, %v4669
  %v4671 = vpop.f32.mrb[0].mxu0
  %4672 = vmatprep.mubr.bf16.mxu0 0
  %4673 = vmatmul.mubr.bf16.gmra.mrb[0].mxu0 %v4606
  %v4674 = vpop.f32.mrb[0].mxu0
  %v4675 = vadd.f32 0.0, %v4674
  %v4676 = vpop.f32.mrb[0].mxu0
  %v4677 = vpop.f32.mrb[0].mxu0
  %v4678 = vadd.f32 0.0, %v4677
  %v4679 = vpop.f32.mrb[0].mxu0
  %4680 = vmatprep.mubr.bf16.mxu0 0
  %4681 = vmatmul.mubr.bf16.gmra.mrb[0].mxu0 %v4607
  %v4682 = vpop.f32.mrb[0].mxu0
  %v4683 = vadd.f32 0.0, %v4682
  %v4684 = vpop.f32.mrb[0].mxu0
  %v4685 = vpop.f32.mrb[0].mxu0
  %v4686 = vpop.f32.mrb[0].mxu0
  %4687 = vdwg.mxu0
  %v4688 = vadd.f32 %v4281, %v4651
  %v4689 = vadd.f32 %v4282, %v4654
  %v4690 = vadd.f32 %v4283, %v4659
  %v4691 = vadd.f32 %v4284, %v4662
  %v4692 = vadd.f32 %v4285, %v4667
  %v4693 = vadd.f32 %v4286, %v4670
  %v4694 = vadd.f32 %v4287, %v4675
  %v4695 = vadd.f32 %v4288, %v4678
  %v4696 = vadd.f32 %v4289, %v4683
  %v4697 = vlaneseq
  %v4698 = vshrl.u32 %v4697, 7
  %v4699 = vsub.s32 0, %v4698
  %v4700 = vrot.slane %v2243, %v4699
  %v4701 = vadd.f32 %v4688, %v4700
  %v4702 = vadd.f32 %v4689, %v4700
  %v4703 = vadd.f32 %v4690, %v4700
  %v4704 = vadd.f32 %v4691, %v4700
  %v4705 = vadd.f32 %v4692, %v4700
  %v4706 = vadd.f32 %v4693, %v4700
  %v4707 = vadd.f32 %v4694, %v4700
  %v4708 = vadd.f32 %v4695, %v4700
  %v4709 = vadd.f32 %v4696, %v4700
  %v4710 = vld [vmem:[%s0 + $0x460] sm:$0x1]
  %v4711 = vld [vmem:[%s0 + $0x468] sm:$0x1]
  %v4712 = vld [vmem:[%s0 + $0x470] sm:$0xff]
  %v4713 = vld [vmem:[%s0 + $0x478] sm:$0xff]
  %v4714 = vld [vmem:[%s0 + $0x480] sm:$0xff]
  %v4715 = vld [vmem:[%s0 + $0x488] sm:$0xff]
  %v4716 = vld [vmem:[%s0 + $0x490] sm:$0x1]
  %v4717 = vld [vmem:[%s0 + $0x498] sm:$0xff]
  %v4718 = vld [vmem:[%s0 + $0x4a0] sm:$0xff]
  %v4719 = vld [vmem:[%s0 + $0x4a8] sm:$0xff]
  %v4720 = vld [vmem:[%s0 + $0x4b0] sm:$0xff]
  %v4721 = vld [vmem:[%s0 + $0x4b8] sm:$0x1]
  %v4722 = vld [vmem:[%s0 + $0x4c0] sm:$0x1]
  %v4723 = vld [vmem:[%s0 + $0x4c8] sm:$0x1]
  %v4724 = vld [vmem:[%s0 + $0x4d0] sm:$0xff]
  %v4725 = vld [vmem:[%s0 + $0x4d8] sm:$0xff]
  %v4726 = vld [vmem:[%s0 + $0x4e0] sm:$0xff]
  %v4727 = vld [vmem:[%s0 + $0x4e8] sm:$0xff]
  %v4728 = vld [vmem:[%s0 + $0x4f0] sm:$0x1]
  %v4729 = vld [vmem:[%s0 + $0x4f8] sm:$0xff]
  %v4730 = vld [vmem:[%s0 + $0x500] sm:$0xff]
  %v4731 = vld [vmem:[%s0 + $0x508] sm:$0xff]
  %v4732 = vld [vmem:[%s0 + $0x510] sm:$0xff]
  %v4733 = vld [vmem:[%s0 + $0x518] sm:$0xff]
  %v4734 = vld [vmem:[%s0 + $0x520] sm:$0xff]
  %v4735 = vld [vmem:[%s0 + $0x528] sm:$0xff]
  %v4736 = vld [vmem:[%s0 + $0x530] sm:$0xff]
  %v4737 = vld [vmem:[%s0 + $0x538] sm:$0xff]
  %v4738 = vld [vmem:[%s0 + $0x540] sm:$0xff]
  %v4739 = vld [vmem:[%s0 + $0x548] sm:$0xff]
  %v4740 = vld [vmem:[%s0 + $0x550] sm:$0xff]
  %v4741 = vld [vmem:[%s0 + $0x558] sm:$0xff]
  %v4742 = vld [vmem:[%s0 + $0x560] sm:$0xff]
  %v4743 = vld [vmem:[%s0 + $0x568] sm:$0xff]
  %v4744 = vld [vmem:[%s0 + $0x570] sm:$0xff]
  %v4745 = vld [vmem:[%s0 + $0x578] sm:$0x1]
  %v4746 = vsel %vm138, %v4701, 0.0
  %4747 = vadd.xlane.f32.xlu0 %v4746
  %v4748 = vpop.xlane.xlu0 %4747
  %v4749 = vsel %vm138, %v4702, 0.0
  %4750 = vadd.xlane.f32.xlu0 %v4749
  %v4751 = vpop.xlane.xlu0 %4750
  %v4752 = vsel %vm138, %v4703, 0.0
  %4753 = vadd.xlane.f32.xlu0 %v4752
  %v4754 = vpop.xlane.xlu0 %4753
  %v4755 = vsel %vm138, %v4704, 0.0
  %4756 = vadd.xlane.f32.xlu0 %v4755
  %v4757 = vpop.xlane.xlu0 %4756
  %v4758 = vsel %vm138, %v4705, 0.0
  %4759 = vadd.xlane.f32.xlu0 %v4758
  %v4760 = vpop.xlane.xlu0 %4759
  %v4761 = vsel %vm138, %v4706, 0.0
  %4762 = vadd.xlane.f32.xlu0 %v4761
  %v4763 = vpop.xlane.xlu0 %4762
  %v4764 = vsel %vm138, %v4707, 0.0
  %4765 = vadd.xlane.f32.xlu0 %v4764
  %v4766 = vpop.xlane.xlu0 %4765
  %v4767 = vsel %vm138, %v4708, 0.0
  %4768 = vadd.xlane.f32.xlu0 %v4767
  %v4769 = vpop.xlane.xlu0 %4768
  %v4770 = vsel %vm138, %v4709, 0.0
  %4771 = vadd.xlane.f32.xlu0 %v4770
  %v4772 = vpop.xlane.xlu0 %4771
  %v4773 = vmul.f32 %v4748, %v155
  %v4774 = vmul.f32 %v4751, %v155
  %v4775 = vmul.f32 %v4754, %v155
  %v4776 = vmul.f32 %v4757, %v155
  %v4777 = vmul.f32 %v4760, %v155
  %v4778 = vmul.f32 %v4763, %v155
  %v4779 = vmul.f32 %v4766, %v155
  %v4780 = vmul.f32 %v4769, %v155
  %v4781 = vmul.f32 %v4772, %v155
  %v4782 = vsub.f32 %v4701, %v4773
  %v4783 = vsub.f32 %v4702, %v4774
  %v4784 = vsub.f32 %v4703, %v4775
  %v4785 = vsub.f32 %v4704, %v4776
  %v4786 = vsub.f32 %v4705, %v4777
  %v4787 = vsub.f32 %v4706, %v4778
  %v4788 = vsub.f32 %v4707, %v4779
  %v4789 = vsub.f32 %v4708, %v4780
  %v4790 = vsub.f32 %v4709, %v4781
  %v4791 = vmul.f32 %v4782, %v4782
  %v4792 = vmul.f32 %v4783, %v4783
  %v4793 = vmul.f32 %v4784, %v4784
  %v4794 = vmul.f32 %v4785, %v4785
  %v4795 = vmul.f32 %v4786, %v4786
  %v4796 = vmul.f32 %v4787, %v4787
  %v4797 = vmul.f32 %v4788, %v4788
  %v4798 = vmul.f32 %v4789, %v4789
  %v4799 = vmul.f32 %v4790, %v4790
  %v4800 = vsel %vm138, %v4791, 0.0
  %4801 = vadd.xlane.f32.xlu0 %v4800
  %v4802 = vpop.xlane.xlu0 %4801
  %v4803 = vsel %vm138, %v4792, 0.0
  %4804 = vadd.xlane.f32.xlu0 %v4803
  %v4805 = vpop.xlane.xlu0 %4804
  %v4806 = vsel %vm138, %v4793, 0.0
  %4807 = vadd.xlane.f32.xlu0 %v4806
  %v4808 = vpop.xlane.xlu0 %4807
  %v4809 = vsel %vm138, %v4794, 0.0
  %4810 = vadd.xlane.f32.xlu0 %v4809
  %v4811 = vpop.xlane.xlu0 %4810
  %v4812 = vsel %vm138, %v4795, 0.0
  %4813 = vadd.xlane.f32.xlu0 %v4812
  %v4814 = vpop.xlane.xlu0 %4813
  %v4815 = vsel %vm138, %v4796, 0.0
  %4816 = vadd.xlane.f32.xlu0 %v4815
  %v4817 = vpop.xlane.xlu0 %4816
  %v4818 = vsel %vm138, %v4797, 0.0
  %4819 = vadd.xlane.f32.xlu0 %v4818
  %v4820 = vpop.xlane.xlu0 %4819
  %v4821 = vsel %vm138, %v4798, 0.0
  %4822 = vadd.xlane.f32.xlu0 %v4821
  %v4823 = vpop.xlane.xlu0 %4822
  %v4824 = vsel %vm138, %v4799, 0.0
  %4825 = vadd.xlane.f32.xlu0 %v4824
  %v4826 = vpop.xlane.xlu0 %4825
  %v4827 = vmul.f32 %v4802, %v155
  %v4828 = vmul.f32 %v4805, %v155
  %v4829 = vmul.f32 %v4808, %v155
  %v4830 = vmul.f32 %v4811, %v155
  %v4831 = vmul.f32 %v4814, %v155
  %v4832 = vmul.f32 %v4817, %v155
  %v4833 = vmul.f32 %v4820, %v155
  %v4834 = vmul.f32 %v4823, %v155
  %v4835 = vmul.f32 %v4826, %v155
  %v4836 = vadd.f32 %v4827, 1e-05
  %v4837 = vadd.f32 %v4828, 1e-05
  %v4838 = vadd.f32 %v4829, 1e-05
  %v4839 = vadd.f32 %v4830, 1e-05
  %v4840 = vadd.f32 %v4831, 1e-05
  %v4841 = vadd.f32 %v4832, 1e-05
  %v4842 = vadd.f32 %v4833, 1e-05
  %v4843 = vadd.f32 %v4834, 1e-05
  %v4844 = vadd.f32 %v4835, 1e-05
  %v4845 = vrsqrt.pop %v4836
  %v4846 = vrsqrt.pop %v4837
  %v4847 = vrsqrt.pop %v4838
  %v4848 = vrsqrt.pop %v4839
  %v4849 = vrsqrt.pop %v4840
  %v4850 = vrsqrt.pop %v4841
  %v4851 = vrsqrt.pop %v4842
  %v4852 = vrsqrt.pop %v4843
  %v4853 = vrsqrt.pop %v4844
  %v4854 = vmul.f32 %v4782, %v4845
  %v4855 = vmul.f32 %v4783, %v4846
  %v4856 = vmul.f32 %v4784, %v4847
  %v4857 = vmul.f32 %v4785, %v4848
  %v4858 = vmul.f32 %v4786, %v4849
  %v4859 = vmul.f32 %v4787, %v4850
  %v4860 = vmul.f32 %v4788, %v4851
  %v4861 = vmul.f32 %v4789, %v4852
  %v4862 = vmul.f32 %v4790, %v4853
  %v4863 = vlaneseq
  %v4864 = vshrl.u32 %v4863, 7
  %v4865 = vsub.s32 0, %v4864
  %v4866 = vrot.slane %v4710, %v4865
  %v4867 = vmul.f32 %v4854, %v4866
  %v4868 = vmul.f32 %v4855, %v4866
  %v4869 = vmul.f32 %v4856, %v4866
  %v4870 = vmul.f32 %v4857, %v4866
  %v4871 = vmul.f32 %v4858, %v4866
  %v4872 = vmul.f32 %v4859, %v4866
  %v4873 = vmul.f32 %v4860, %v4866
  %v4874 = vmul.f32 %v4861, %v4866
  %v4875 = vmul.f32 %v4862, %v4866
  %v4876 = vlaneseq
  %v4877 = vshrl.u32 %v4876, 7
  %v4878 = vsub.s32 0, %v4877
  %v4879 = vrot.slane %v4711, %v4878
  %v4880 = vadd.f32 %v4867, %v4879
  %v4881 = vadd.f32 %v4868, %v4879
  %v4882 = vadd.f32 %v4869, %v4879
  %v4883 = vadd.f32 %v4870, %v4879
  %v4884 = vadd.f32 %v4871, %v4879
  %v4885 = vadd.f32 %v4872, %v4879
  %v4886 = vadd.f32 %v4873, %v4879
  %v4887 = vadd.f32 %v4874, %v4879
  %v4888 = vadd.f32 %v4875, %v4879
  %v4889 = vpack.c.bf16 %v4881, %v4880
  %v4890 = vpack.c.bf16 %v4883, %v4882
  %v4891 = vpack.c.bf16 %v4885, %v4884
  %v4892 = vpack.c.bf16 %v4887, %v4886
  %v4893 = vpack.c.bf16 %v4888, %v4888
  %v4894 = vpack.c.bf16 %v4713, %v4712
  %v4895 = vpack.c.bf16 %v4715, %v4714
  %v4896 = vlaneseq
  %v4897 = vshrl.u32 %v4896, 7
  %v4898 = vsub.s32 0, %v4897
  %v4899 = vrot.slane %v4716, %v4898
  %v4901 = vsel %vm138, %v4889, 0
  %v4904 = vsel %vm138, %v4890, 0
  %v4907 = vsel %vm138, %v4891, 0
  %v4910 = vsel %vm138, %v4892, 0
  %v4913 = vsel %vm138, %v4893, 0
  %4915 = vmatprep.subr.bf16.mxu0 0
  %4916 = vmatpush1.bf16.msra.mxu0 %v4894
  %4917 = vmatprep.subr.bf16.mxu0 0
  %4918 = vmatpush1.bf16.msra.mxu0 %v4895
  %4919 = vmatprep.subr.bf16.mxu0 0
  %4920 = vmatpush1.bf16.msra.mxu0 0
  %4921 = vmatprep.subr.bf16.mxu0 0
  %4922 = vmatpush1.bf16.msra.mxu0 0
  %4923 = vmatprep.subr.bf16.mxu0 0
  %4924 = vmatpush1.bf16.msra.mxu0 0
  %4925 = vmatprep.subr.bf16.mxu0 0
  %4926 = vmatpush1.bf16.msra.mxu0 0
  %4927 = vmatprep.subr.bf16.mxu0 0
  %4928 = vmatpush1.bf16.msra.mxu0 0
  %4929 = vmatprep.subr.bf16.mxu0 0
  %4930 = vmatpush1.bf16.msra.mxu0 0
  %4931 = vmatprep.subr.bf16.mxu0 0
  %4932 = vmatpush1.bf16.msra.mxu0 0
  %4933 = vmatprep.subr.bf16.mxu0 0
  %4934 = vmatpush1.bf16.msra.mxu0 0
  %4935 = vmatprep.subr.bf16.mxu0 0
  %4936 = vmatpush1.bf16.msra.mxu0 0
  %4937 = vmatprep.subr.bf16.mxu0 0
  %4938 = vmatpush1.bf16.msra.mxu0 0
  %4939 = vmatprep.subr.bf16.mxu0 0
  %4940 = vmatpush1.bf16.msra.mxu0 0
  %4941 = vmatprep.subr.bf16.mxu0 0
  %4942 = vmatpush1.bf16.msra.mxu0 0
  %4943 = vmatprep.subr.bf16.mxu0 0
  %4944 = vmatpush1.bf16.msra.mxu0 0
  %4945 = vmatprep.subr.bf16.mxu0 0
  %4946 = vmatpush1.bf16.msra.mxu0 0
  %4947 = vmatprep.mubr.bf16.mxu0 0
  %4948 = vmatmul.mubr.bf16.gmra.mrb[0].mxu0 %v4901
  %v4949 = vpop.f32.mrb[0].mxu0
  %v4950 = vadd.f32 %v4899, %v4949
  %v4951 = vpop.f32.mrb[0].mxu0
  %v4952 = vpop.f32.mrb[0].mxu0
  %v4953 = vadd.f32 %v4899, %v4952
  %v4954 = vpop.f32.mrb[0].mxu0
  %4955 = vmatprep.mubr.bf16.mxu0 0
  %4956 = vmatmul.mubr.bf16.gmra.mrb[0].mxu0 %v4904
  %v4957 = vpop.f32.mrb[0].mxu0
  %v4958 = vadd.f32 %v4899, %v4957
  %v4959 = vpop.f32.mrb[0].mxu0
  %v4960 = vpop.f32.mrb[0].mxu0
  %v4961 = vadd.f32 %v4899, %v4960
  %v4962 = vpop.f32.mrb[0].mxu0
  %4963 = vmatprep.mubr.bf16.mxu0 0
  %4964 = vmatmul.mubr.bf16.gmra.mrb[0].mxu0 %v4907
  %v4965 = vpop.f32.mrb[0].mxu0
  %v4966 = vadd.f32 %v4899, %v4965
  %v4967 = vpop.f32.mrb[0].mxu0
  %v4968 = vpop.f32.mrb[0].mxu0
  %v4969 = vadd.f32 %v4899, %v4968
  %v4970 = vpop.f32.mrb[0].mxu0
  %4971 = vmatprep.mubr.bf16.mxu0 0
  %4972 = vmatmul.mubr.bf16.gmra.mrb[0].mxu0 %v4910
  %v4973 = vpop.f32.mrb[0].mxu0
  %v4974 = vadd.f32 %v4899, %v4973
  %v4975 = vpop.f32.mrb[0].mxu0
  %v4976 = vpop.f32.mrb[0].mxu0
  %v4977 = vadd.f32 %v4899, %v4976
  %v4978 = vpop.f32.mrb[0].mxu0
  %4979 = vmatprep.mubr.bf16.mxu0 0
  %4980 = vmatmul.mubr.bf16.gmra.mrb[0].mxu0 %v4913
  %v4981 = vpop.f32.mrb[0].mxu0
  %v4982 = vadd.f32 %v4899, %v4981
  %v4983 = vpop.f32.mrb[0].mxu0
  %v4984 = vpop.f32.mrb[0].mxu0
  %v4985 = vpop.f32.mrb[0].mxu0
  %4986 = vdwg.mxu0
  %4996 = vrot.lane.b32.xlu0 %v4950, 96
  %v4997 = vpop.permute.xlu0 %4996
  %4998 = vrot.lane.b32.xlu0 %v4953, 96
  %v4999 = vpop.permute.xlu0 %4998
  %5000 = vrot.lane.b32.xlu0 %v4958, 96
  %v5001 = vpop.permute.xlu0 %5000
  %5002 = vrot.lane.b32.xlu0 %v4961, 96
  %v5003 = vpop.permute.xlu0 %5002
  %5004 = vrot.lane.b32.xlu0 %v4966, 96
  %v5005 = vpop.permute.xlu0 %5004
  %5006 = vrot.lane.b32.xlu0 %v4969, 96
  %v5007 = vpop.permute.xlu0 %5006
  %5008 = vrot.lane.b32.xlu0 %v4974, 96
  %v5009 = vpop.permute.xlu0 %5008
  %5010 = vrot.lane.b32.xlu0 %v4977, 96
  %v5011 = vpop.permute.xlu0 %5010
  %5012 = vrot.lane.b32.xlu0 %v4982, 96
  %v5013 = vpop.permute.xlu0 %5012
  %5023 = vxpose.xlu0.b32.start [1/16] %v4997, 128
  %5024 = vxpose.xlu0.b32.cont [2/16] %v4999, 128
  %5025 = vxpose.xlu0.b32.cont [3/16] %v5001, 128
  %5026 = vxpose.xlu0.b32.cont [4/16] %v5003, 128
  %5027 = vxpose.xlu0.b32.cont [5/16] %v5005, 128
  %5028 = vxpose.xlu0.b32.cont [6/16] %v5007, 128
  %5029 = vxpose.xlu0.b32.cont [7/16] %v5009, 128
  %5030 = vxpose.xlu0.b32.cont [8/16] %v5011, 128
  %5031 = vxpose.xlu0.b32.cont [9/16] %v5013, 128
  %5032 = vxpose.xlu0.b32.cont [10/16] 0.0, 128
  %5033 = vxpose.xlu0.b32.cont [11/16] 0.0, 128
  %5034 = vxpose.xlu0.b32.cont [12/16] 0.0, 128
  %5035 = vxpose.xlu0.b32.cont [13/16] 0.0, 128
  %5036 = vxpose.xlu0.b32.cont [14/16] 0.0, 128
  %5037 = vxpose.xlu0.b32.cont [15/16] 0.0, 128
  %5038 = vxpose.xlu0.b32.end [16/16] 0.0, 128
  %v5039 = vpop.trf.xlu0
  %v5040 = vpop.trf.xlu0
  %v5041 = vpop.trf.xlu0
  %v5042 = vpop.trf.xlu0
  %v5043 = vpop.trf.xlu0
  %v5044 = vpop.trf.xlu0
  %v5045 = vpop.trf.xlu0
  %v5046 = vpop.trf.xlu0
  %v5047 = vpop.trf.xlu0
  %v5048 = vpop.trf.xlu0
  %v5049 = vpop.trf.xlu0
  %v5050 = vpop.trf.xlu0
  %v5051 = vpop.trf.xlu0
  %v5052 = vpop.trf.xlu0
  %v5053 = vpop.trf.xlu0
  %v5054 = vpop.trf.xlu0
  %v5055 = vpack.c.bf16 %v4953, %v4950
  %v5056 = vpack.c.bf16 %v4961, %v4958
  %v5057 = vpack.c.bf16 %v4969, %v4966
  %v5058 = vpack.c.bf16 %v4977, %v4974
  %v5059 = vpack.c.bf16 %v4982, %v4982
  %v5060 = vpack.c.bf16 %v5039, %v5039
  %v5062 = vsel %vm354, %v5055, 0
  %v5065 = vsel %vm354, %v5056, 0
  %v5068 = vsel %vm354, %v5057, 0
  %v5071 = vsel %vm354, %v5058, 0
  %v5074 = vsel %vm354, %v5059, 0
  %v5077 = vsel %vm364, %v5060, 0
  %5079 = vmatprep.subr.bf16.mxu0 0
  %5080 = vmatpush1.bf16.msra.mxu0 %v5077
  %5081 = vmatprep.subr.bf16.mxu0 0
  %5082 = vmatpush1.bf16.msra.mxu0 0
  %5083 = vmatprep.subr.bf16.mxu0 0
  %5084 = vmatpush1.bf16.msra.mxu0 0
  %5085 = vmatprep.subr.bf16.mxu0 0
  %5086 = vmatpush1.bf16.msra.mxu0 0
  %5087 = vmatprep.subr.bf16.mxu0 0
  %5088 = vmatpush1.bf16.msra.mxu0 0
  %5089 = vmatprep.subr.bf16.mxu0 0
  %5090 = vmatpush1.bf16.msra.mxu0 0
  %5091 = vmatprep.subr.bf16.mxu0 0
  %5092 = vmatpush1.bf16.msra.mxu0 0
  %5093 = vmatprep.subr.bf16.mxu0 0
  %5094 = vmatpush1.bf16.msra.mxu0 0
  %5095 = vmatprep.subr.bf16.mxu0 0
  %5096 = vmatpush1.bf16.msra.mxu0 0
  %5097 = vmatprep.subr.bf16.mxu0 0
  %5098 = vmatpush1.bf16.msra.mxu0 0
  %5099 = vmatprep.subr.bf16.mxu0 0
  %5100 = vmatpush1.bf16.msra.mxu0 0
  %5101 = vmatprep.subr.bf16.mxu0 0
  %5102 = vmatpush1.bf16.msra.mxu0 0
  %5103 = vmatprep.subr.bf16.mxu0 0
  %5104 = vmatpush1.bf16.msra.mxu0 0
  %5105 = vmatprep.subr.bf16.mxu0 0
  %5106 = vmatpush1.bf16.msra.mxu0 0
  %5107 = vmatprep.subr.bf16.mxu0 0
  %5108 = vmatpush1.bf16.msra.mxu0 0
  %5109 = vmatprep.subr.bf16.mxu0 0
  %5110 = vmatpush1.bf16.msra.mxu0 0
  %5111 = vmatprep.mubr.bf16.mxu0 0
  %5112 = vmatmul.mubr.bf16.gmra.mrb[0].mxu0 %v5062
  %v5113 = vpop.f32.mrb[0].mxu0
  %v5114 = vadd.f32 0.0, %v5113
  %v5115 = vpop.f32.mrb[0].mxu0
  %v5116 = vpop.f32.mrb[0].mxu0
  %v5117 = vadd.f32 0.0, %v5116
  %v5118 = vpop.f32.mrb[0].mxu0
  %5119 = vmatprep.mubr.bf16.mxu0 0
  %5120 = vmatmul.mubr.bf16.gmra.mrb[0].mxu0 %v5065
  %v5121 = vpop.f32.mrb[0].mxu0
  %v5122 = vadd.f32 0.0, %v5121
  %v5123 = vpop.f32.mrb[0].mxu0
  %v5124 = vpop.f32.mrb[0].mxu0
  %v5125 = vadd.f32 0.0, %v5124
  %v5126 = vpop.f32.mrb[0].mxu0
  %5127 = vmatprep.mubr.bf16.mxu0 0
  %5128 = vmatmul.mubr.bf16.gmra.mrb[0].mxu0 %v5068
  %v5129 = vpop.f32.mrb[0].mxu0
  %v5130 = vadd.f32 0.0, %v5129
  %v5131 = vpop.f32.mrb[0].mxu0
  %v5132 = vpop.f32.mrb[0].mxu0
  %v5133 = vadd.f32 0.0, %v5132
  %v5134 = vpop.f32.mrb[0].mxu0
  %5135 = vmatprep.mubr.bf16.mxu0 0
  %5136 = vmatmul.mubr.bf16.gmra.mrb[0].mxu0 %v5071
  %v5137 = vpop.f32.mrb[0].mxu0
  %v5138 = vadd.f32 0.0, %v5137
  %v5139 = vpop.f32.mrb[0].mxu0
  %v5140 = vpop.f32.mrb[0].mxu0
  %v5141 = vadd.f32 0.0, %v5140
  %v5142 = vpop.f32.mrb[0].mxu0
  %5143 = vmatprep.mubr.bf16.mxu0 0
  %5144 = vmatmul.mubr.bf16.gmra.mrb[0].mxu0 %v5074
  %v5145 = vpop.f32.mrb[0].mxu0
  %v5146 = vadd.f32 0.0, %v5145
  %v5147 = vpop.f32.mrb[0].mxu0
  %v5148 = vpop.f32.mrb[0].mxu0
  %v5149 = vpop.f32.mrb[0].mxu0
  %5150 = vdwg.mxu0
  %v5151 = vmul.f32 %v5114, 0.35355338
  %v5152 = vmul.f32 %v5117, 0.35355338
  %v5153 = vmul.f32 %v5122, 0.35355338
  %v5154 = vmul.f32 %v5125, 0.35355338
  %v5155 = vmul.f32 %v5130, 0.35355338
  %v5156 = vmul.f32 %v5133, 0.35355338
  %v5157 = vmul.f32 %v5138, 0.35355338
  %v5158 = vmul.f32 %v5141, 0.35355338
  %v5159 = vmul.f32 %v5146, 0.35355338
  %v5160 = vadd.f32 %v5151, %v2199
  %v5161 = vadd.f32 %v5152, %v2200
  %v5162 = vadd.f32 %v5153, %v2201
  %v5163 = vadd.f32 %v5154, %v2202
  %v5164 = vadd.f32 %v5155, %v2203
  %v5165 = vadd.f32 %v5156, %v2204
  %v5166 = vadd.f32 %v5157, %v2205
  %v5167 = vadd.f32 %v5158, %v2206
  %v5168 = vadd.f32 %v5159, %v2207
  %v5169 = vsel %vm2667, %v5160, -inf
  %5170 = vmax.xlane.f32.xlu0 %v5169
  %v5171 = vpop.xlane.xlu0 %5170
  %v5172 = vsel %vm2667, %v5161, -inf
  %5173 = vmax.xlane.f32.xlu0 %v5172
  %v5174 = vpop.xlane.xlu0 %5173
  %v5175 = vsel %vm2667, %v5162, -inf
  %5176 = vmax.xlane.f32.xlu0 %v5175
  %v5177 = vpop.xlane.xlu0 %5176
  %v5178 = vsel %vm2667, %v5163, -inf
  %5179 = vmax.xlane.f32.xlu0 %v5178
  %v5180 = vpop.xlane.xlu0 %5179
  %v5181 = vsel %vm2667, %v5164, -inf
  %5182 = vmax.xlane.f32.xlu0 %v5181
  %v5183 = vpop.xlane.xlu0 %5182
  %v5184 = vsel %vm2667, %v5165, -inf
  %5185 = vmax.xlane.f32.xlu0 %v5184
  %v5186 = vpop.xlane.xlu0 %5185
  %v5187 = vsel %vm2667, %v5166, -inf
  %5188 = vmax.xlane.f32.xlu0 %v5187
  %v5189 = vpop.xlane.xlu0 %5188
  %v5190 = vsel %vm2667, %v5167, -inf
  %5191 = vmax.xlane.f32.xlu0 %v5190
  %v5192 = vpop.xlane.xlu0 %5191
  %v5193 = vsel %vm2667, %v5168, -inf
  %5194 = vmax.xlane.f32.xlu0 %v5193
  %v5195 = vpop.xlane.xlu0 %5194
  %v5196 = vsub.f32 %v5160, %v5171
  %v5197 = vsub.f32 %v5161, %v5174
  %v5198 = vsub.f32 %v5162, %v5177
  %v5199 = vsub.f32 %v5163, %v5180
  %v5200 = vsub.f32 %v5164, %v5183
  %v5201 = vsub.f32 %v5165, %v5186
  %v5202 = vsub.f32 %v5166, %v5189
  %v5203 = vsub.f32 %v5167, %v5192
  %v5204 = vsub.f32 %v5168, %v5195
  %v5205 = vmul.f32 %v5196, 1.442695
  %v5206 = vpow.pop %v5205
  %v5207 = vmul.f32 %v5197, 1.442695
  %v5208 = vpow.pop %v5207
  %v5209 = vmul.f32 %v5198, 1.442695
  %v5210 = vpow.pop %v5209
  %v5211 = vmul.f32 %v5199, 1.442695
  %v5212 = vpow.pop %v5211
  %v5213 = vmul.f32 %v5200, 1.442695
  %v5214 = vpow.pop %v5213
  %v5215 = vmul.f32 %v5201, 1.442695
  %v5216 = vpow.pop %v5215
  %v5217 = vmul.f32 %v5202, 1.442695
  %v5218 = vpow.pop %v5217
  %v5219 = vmul.f32 %v5203, 1.442695
  %v5220 = vpow.pop %v5219
  %v5221 = vmul.f32 %v5204, 1.442695
  %v5222 = vpow.pop %v5221
  %v5223 = vsel %vm2667, %v5206, 0.0
  %5224 = vadd.xlane.f32.xlu0 %v5223
  %v5225 = vpop.xlane.xlu0 %5224
  %v5226 = vsel %vm2667, %v5208, 0.0
  %5227 = vadd.xlane.f32.xlu0 %v5226
  %v5228 = vpop.xlane.xlu0 %5227
  %v5229 = vsel %vm2667, %v5210, 0.0
  %5230 = vadd.xlane.f32.xlu0 %v5229
  %v5231 = vpop.xlane.xlu0 %5230
  %v5232 = vsel %vm2667, %v5212, 0.0
  %5233 = vadd.xlane.f32.xlu0 %v5232
  %v5234 = vpop.xlane.xlu0 %5233
  %v5235 = vsel %vm2667, %v5214, 0.0
  %5236 = vadd.xlane.f32.xlu0 %v5235
  %v5237 = vpop.xlane.xlu0 %5236
  %v5238 = vsel %vm2667, %v5216, 0.0
  %5239 = vadd.xlane.f32.xlu0 %v5238
  %v5240 = vpop.xlane.xlu0 %5239
  %v5241 = vsel %vm2667, %v5218, 0.0
  %5242 = vadd.xlane.f32.xlu0 %v5241
  %v5243 = vpop.xlane.xlu0 %5242
  %v5244 = vsel %vm2667, %v5220, 0.0
  %5245 = vadd.xlane.f32.xlu0 %v5244
  %v5246 = vpop.xlane.xlu0 %5245
  %v5247 = vsel %vm2667, %v5222, 0.0
  %5248 = vadd.xlane.f32.xlu0 %v5247
  %v5249 = vpop.xlane.xlu0 %5248
  %v5250 = vrcp.pop %v5225
  %v5251 = vrcp.pop %v5228
  %v5252 = vrcp.pop %v5231
  %v5253 = vrcp.pop %v5234
  %v5254 = vrcp.pop %v5237
  %v5255 = vrcp.pop %v5240
  %v5256 = vrcp.pop %v5243
  %v5257 = vrcp.pop %v5246
  %v5258 = vrcp.pop %v5249
  %v5259 = vmul.f32 %v5206, %v5250
  %v5260 = vmul.f32 %v5208, %v5251
  %v5261 = vmul.f32 %v5210, %v5252
  %v5262 = vmul.f32 %v5212, %v5253
  %v5263 = vmul.f32 %v5214, %v5254
  %v5264 = vmul.f32 %v5216, %v5255
  %v5265 = vmul.f32 %v5218, %v5256
  %v5266 = vmul.f32 %v5220, %v5257
  %v5267 = vmul.f32 %v5222, %v5258
  %v5268 = vpack.c.bf16 %v5260, %v5259
  %v5269 = vpack.c.bf16 %v5262, %v5261
  %v5270 = vpack.c.bf16 %v5264, %v5263
  %v5271 = vpack.c.bf16 %v5266, %v5265
  %v5272 = vpack.c.bf16 %v5267, %v5267
  %5278 = vrot.lane.b32.xlu0 %v5055, 64
  %v5279 = vpop.permute.xlu0 %5278
  %5280 = vrot.lane.b32.xlu0 %v5056, 64
  %v5281 = vpop.permute.xlu0 %5280
  %5282 = vrot.lane.b32.xlu0 %v5057, 64
  %v5283 = vpop.permute.xlu0 %5282
  %5284 = vrot.lane.b32.xlu0 %v5058, 64
  %v5285 = vpop.permute.xlu0 %5284
  %5286 = vrot.lane.b32.xlu0 %v5059, 64
  %v5287 = vpop.permute.xlu0 %5286
  %v5293 = vsel %vm2667, %v5268, 0
  %v5296 = vsel %vm2667, %v5269, 0
  %v5299 = vsel %vm2667, %v5270, 0
  %v5302 = vsel %vm2667, %v5271, 0
  %v5305 = vsel %vm2667, %v5272, 0
  %v5308 = vsel %vm364, %v5287, 0
  %5310 = vmatprep.subr.bf16.mxu0 0
  %5311 = vmatpush1.bf16.msra.mxu0 %v5279
  %5312 = vmatprep.subr.bf16.mxu0 0
  %5313 = vmatpush1.bf16.msra.mxu0 %v5281
  %5314 = vmatprep.subr.bf16.mxu0 0
  %5315 = vmatpush1.bf16.msra.mxu0 %v5283
  %5316 = vmatprep.subr.bf16.mxu0 0
  %5317 = vmatpush1.bf16.msra.mxu0 %v5285
  %5318 = vmatprep.subr.bf16.mxu0 0
  %5319 = vmatpush1.bf16.msra.mxu0 %v5308
  %5320 = vmatprep.subr.bf16.mxu0 0
  %5321 = vmatpush1.bf16.msra.mxu0 0
  %5322 = vmatprep.subr.bf16.mxu0 0
  %5323 = vmatpush1.bf16.msra.mxu0 0
  %5324 = vmatprep.subr.bf16.mxu0 0
  %5325 = vmatpush1.bf16.msra.mxu0 0
  %5326 = vmatprep.subr.bf16.mxu0 0
  %5327 = vmatpush1.bf16.msra.mxu0 0
  %5328 = vmatprep.subr.bf16.mxu0 0
  %5329 = vmatpush1.bf16.msra.mxu0 0
  %5330 = vmatprep.subr.bf16.mxu0 0
  %5331 = vmatpush1.bf16.msra.mxu0 0
  %5332 = vmatprep.subr.bf16.mxu0 0
  %5333 = vmatpush1.bf16.msra.mxu0 0
  %5334 = vmatprep.subr.bf16.mxu0 0
  %5335 = vmatpush1.bf16.msra.mxu0 0
  %5336 = vmatprep.subr.bf16.mxu0 0
  %5337 = vmatpush1.bf16.msra.mxu0 0
  %5338 = vmatprep.subr.bf16.mxu0 0
  %5339 = vmatpush1.bf16.msra.mxu0 0
  %5340 = vmatprep.subr.bf16.mxu0 0
  %5341 = vmatpush1.bf16.msra.mxu0 0
  %5342 = vmatprep.mubr.bf16.mxu0 0
  %5343 = vmatmul.mubr.bf16.gmra.mrb[0].mxu0 %v5293
  %v5344 = vpop.f32.mrb[0].mxu0
  %v5345 = vadd.f32 0.0, %v5344
  %v5346 = vpop.f32.mrb[0].mxu0
  %v5347 = vpop.f32.mrb[0].mxu0
  %v5348 = vadd.f32 0.0, %v5347
  %v5349 = vpop.f32.mrb[0].mxu0
  %5350 = vmatprep.mubr.bf16.mxu0 0
  %5351 = vmatmul.mubr.bf16.gmra.mrb[0].mxu0 %v5296
  %v5352 = vpop.f32.mrb[0].mxu0
  %v5353 = vadd.f32 0.0, %v5352
  %v5354 = vpop.f32.mrb[0].mxu0
  %v5355 = vpop.f32.mrb[0].mxu0
  %v5356 = vadd.f32 0.0, %v5355
  %v5357 = vpop.f32.mrb[0].mxu0
  %5358 = vmatprep.mubr.bf16.mxu0 0
  %5359 = vmatmul.mubr.bf16.gmra.mrb[0].mxu0 %v5299
  %v5360 = vpop.f32.mrb[0].mxu0
  %v5361 = vadd.f32 0.0, %v5360
  %v5362 = vpop.f32.mrb[0].mxu0
  %v5363 = vpop.f32.mrb[0].mxu0
  %v5364 = vadd.f32 0.0, %v5363
  %v5365 = vpop.f32.mrb[0].mxu0
  %5366 = vmatprep.mubr.bf16.mxu0 0
  %5367 = vmatmul.mubr.bf16.gmra.mrb[0].mxu0 %v5302
  %v5368 = vpop.f32.mrb[0].mxu0
  %v5369 = vadd.f32 0.0, %v5368
  %v5370 = vpop.f32.mrb[0].mxu0
  %v5371 = vpop.f32.mrb[0].mxu0
  %v5372 = vadd.f32 0.0, %v5371
  %v5373 = vpop.f32.mrb[0].mxu0
  %5374 = vmatprep.mubr.bf16.mxu0 0
  %5375 = vmatmul.mubr.bf16.gmra.mrb[0].mxu0 %v5305
  %v5376 = vpop.f32.mrb[0].mxu0
  %v5377 = vadd.f32 0.0, %v5376
  %v5378 = vpop.f32.mrb[0].mxu0
  %v5379 = vpop.f32.mrb[0].mxu0
  %v5380 = vpop.f32.mrb[0].mxu0
  %5381 = vdwg.mxu0
  %5382 = vrot.lane.b32.xlu0 %v4950, 88
  %v5383 = vpop.permute.xlu0 %5382
  %5384 = vrot.lane.b32.xlu0 %v4953, 88
  %v5385 = vpop.permute.xlu0 %5384
  %5386 = vrot.lane.b32.xlu0 %v4958, 88
  %v5387 = vpop.permute.xlu0 %5386
  %5388 = vrot.lane.b32.xlu0 %v4961, 88
  %v5389 = vpop.permute.xlu0 %5388
  %5390 = vrot.lane.b32.xlu0 %v4966, 88
  %v5391 = vpop.permute.xlu0 %5390
  %5392 = vrot.lane.b32.xlu0 %v4969, 88
  %v5393 = vpop.permute.xlu0 %5392
  %5394 = vrot.lane.b32.xlu0 %v4974, 88
  %v5395 = vpop.permute.xlu0 %5394
  %5396 = vrot.lane.b32.xlu0 %v4977, 88
  %v5397 = vpop.permute.xlu0 %5396
  %5398 = vrot.lane.b32.xlu0 %v4982, 88
  %v5399 = vpop.permute.xlu0 %5398
  %5409 = vxpose.xlu0.b32.start [1/16] %v5383, 128
  %5410 = vxpose.xlu0.b32.cont [2/16] %v5385, 128
  %5411 = vxpose.xlu0.b32.cont [3/16] %v5387, 128
  %5412 = vxpose.xlu0.b32.cont [4/16] %v5389, 128
  %5413 = vxpose.xlu0.b32.cont [5/16] %v5391, 128
  %5414 = vxpose.xlu0.b32.cont [6/16] %v5393, 128
  %5415 = vxpose.xlu0.b32.cont [7/16] %v5395, 128
  %5416 = vxpose.xlu0.b32.cont [8/16] %v5397, 128
  %5417 = vxpose.xlu0.b32.cont [9/16] %v5399, 128
  %5418 = vxpose.xlu0.b32.cont [10/16] 0.0, 128
  %5419 = vxpose.xlu0.b32.cont [11/16] 0.0, 128
  %5420 = vxpose.xlu0.b32.cont [12/16] 0.0, 128
  %5421 = vxpose.xlu0.b32.cont [13/16] 0.0, 128
  %5422 = vxpose.xlu0.b32.cont [14/16] 0.0, 128
  %5423 = vxpose.xlu0.b32.cont [15/16] 0.0, 128
  %5424 = vxpose.xlu0.b32.end [16/16] 0.0, 128
  %v5425 = vpop.trf.xlu0
  %v5426 = vpop.trf.xlu0
  %v5427 = vpop.trf.xlu0
  %v5428 = vpop.trf.xlu0
  %v5429 = vpop.trf.xlu0
  %v5430 = vpop.trf.xlu0
  %v5431 = vpop.trf.xlu0
  %v5432 = vpop.trf.xlu0
  %v5433 = vpop.trf.xlu0
  %v5434 = vpop.trf.xlu0
  %v5435 = vpop.trf.xlu0
  %v5436 = vpop.trf.xlu0
  %v5437 = vpop.trf.xlu0
  %v5438 = vpop.trf.xlu0
  %v5439 = vpop.trf.xlu0
  %v5440 = vpop.trf.xlu0
  %v5441 = vpack.c.bf16 %v5425, %v5425
  %5442 = vrot.lane.b32.xlu0 %v5055, 120
  %v5443 = vpop.permute.xlu0 %5442
  %5444 = vrot.lane.b32.xlu0 %v5056, 120
  %v5445 = vpop.permute.xlu0 %5444
  %5446 = vrot.lane.b32.xlu0 %v5057, 120
  %v5447 = vpop.permute.xlu0 %5446
  %5448 = vrot.lane.b32.xlu0 %v5058, 120
  %v5449 = vpop.permute.xlu0 %5448
  %5450 = vrot.lane.b32.xlu0 %v5059, 120
  %v5451 = vpop.permute.xlu0 %5450
  %v5453 = vsel %vm354, %v5443, 0
  %v5456 = vsel %vm354, %v5445, 0
  %v5459 = vsel %vm354, %v5447, 0
  %v5462 = vsel %vm354, %v5449, 0
  %v5465 = vsel %vm354, %v5451, 0
  %v5468 = vsel %vm364, %v5441, 0
  %5470 = vmatprep.subr.bf16.mxu0 0
  %5471 = vmatpush1.bf16.msra.mxu0 %v5468
  %5472 = vmatprep.subr.bf16.mxu0 0
  %5473 = vmatpush1.bf16.msra.mxu0 0
  %5474 = vmatprep.subr.bf16.mxu0 0
  %5475 = vmatpush1.bf16.msra.mxu0 0
  %5476 = vmatprep.subr.bf16.mxu0 0
  %5477 = vmatpush1.bf16.msra.mxu0 0
  %5478 = vmatprep.subr.bf16.mxu0 0
  %5479 = vmatpush1.bf16.msra.mxu0 0
  %5480 = vmatprep.subr.bf16.mxu0 0
  %5481 = vmatpush1.bf16.msra.mxu0 0
  %5482 = vmatprep.subr.bf16.mxu0 0
  %5483 = vmatpush1.bf16.msra.mxu0 0
  %5484 = vmatprep.subr.bf16.mxu0 0
  %5485 = vmatpush1.bf16.msra.mxu0 0
  %5486 = vmatprep.subr.bf16.mxu0 0
  %5487 = vmatpush1.bf16.msra.mxu0 0
  %5488 = vmatprep.subr.bf16.mxu0 0
  %5489 = vmatpush1.bf16.msra.mxu0 0
  %5490 = vmatprep.subr.bf16.mxu0 0
  %5491 = vmatpush1.bf16.msra.mxu0 0
  %5492 = vmatprep.subr.bf16.mxu0 0
  %5493 = vmatpush1.bf16.msra.mxu0 0
  %5494 = vmatprep.subr.bf16.mxu0 0
  %5495 = vmatpush1.bf16.msra.mxu0 0
  %5496 = vmatprep.subr.bf16.mxu0 0
  %5497 = vmatpush1.bf16.msra.mxu0 0
  %5498 = vmatprep.subr.bf16.mxu0 0
  %5499 = vmatpush1.bf16.msra.mxu0 0
  %5500 = vmatprep.subr.bf16.mxu0 0
  %5501 = vmatpush1.bf16.msra.mxu0 0
  %5502 = vmatprep.mubr.bf16.mxu0 0
  %5503 = vmatmul.mubr.bf16.gmra.mrb[0].mxu0 %v5453
  %v5504 = vpop.f32.mrb[0].mxu0
  %v5505 = vadd.f32 0.0, %v5504
  %v5506 = vpop.f32.mrb[0].mxu0
  %v5507 = vpop.f32.mrb[0].mxu0
  %v5508 = vadd.f32 0.0, %v5507
  %v5509 = vpop.f32.mrb[0].mxu0
  %5510 = vmatprep.mubr.bf16.mxu0 0
  %5511 = vmatmul.mubr.bf16.gmra.mrb[0].mxu0 %v5456
  %v5512 = vpop.f32.mrb[0].mxu0
  %v5513 = vadd.f32 0.0, %v5512
  %v5514 = vpop.f32.mrb[0].mxu0
  %v5515 = vpop.f32.mrb[0].mxu0
  %v5516 = vadd.f32 0.0, %v5515
  %v5517 = vpop.f32.mrb[0].mxu0
  %5518 = vmatprep.mubr.bf16.mxu0 0
  %5519 = vmatmul.mubr.bf16.gmra.mrb[0].mxu0 %v5459
  %v5520 = vpop.f32.mrb[0].mxu0
  %v5521 = vadd.f32 0.0, %v5520
  %v5522 = vpop.f32.mrb[0].mxu0
  %v5523 = vpop.f32.mrb[0].mxu0
  %v5524 = vadd.f32 0.0, %v5523
  %v5525 = vpop.f32.mrb[0].mxu0
  %5526 = vmatprep.mubr.bf16.mxu0 0
  %5527 = vmatmul.mubr.bf16.gmra.mrb[0].mxu0 %v5462
  %v5528 = vpop.f32.mrb[0].mxu0
  %v5529 = vadd.f32 0.0, %v5528
  %v5530 = vpop.f32.mrb[0].mxu0
  %v5531 = vpop.f32.mrb[0].mxu0
  %v5532 = vadd.f32 0.0, %v5531
  %v5533 = vpop.f32.mrb[0].mxu0
  %5534 = vmatprep.mubr.bf16.mxu0 0
  %5535 = vmatmul.mubr.bf16.gmra.mrb[0].mxu0 %v5465
  %v5536 = vpop.f32.mrb[0].mxu0
  %v5537 = vadd.f32 0.0, %v5536
  %v5538 = vpop.f32.mrb[0].mxu0
  %v5539 = vpop.f32.mrb[0].mxu0
  %v5540 = vpop.f32.mrb[0].mxu0
  %5541 = vdwg.mxu0
  %v5542 = vmul.f32 %v5505, 0.35355338
  %v5543 = vmul.f32 %v5508, 0.35355338
  %v5544 = vmul.f32 %v5513, 0.35355338
  %v5545 = vmul.f32 %v5516, 0.35355338
  %v5546 = vmul.f32 %v5521, 0.35355338
  %v5547 = vmul.f32 %v5524, 0.35355338
  %v5548 = vmul.f32 %v5529, 0.35355338
  %v5549 = vmul.f32 %v5532, 0.35355338
  %v5550 = vmul.f32 %v5537, 0.35355338
  %v5551 = vadd.f32 %v5542, %v2199
  %v5552 = vadd.f32 %v5543, %v2200
  %v5553 = vadd.f32 %v5544, %v2201
  %v5554 = vadd.f32 %v5545, %v2202
  %v5555 = vadd.f32 %v5546, %v2203
  %v5556 = vadd.f32 %v5547, %v2204
  %v5557 = vadd.f32 %v5548, %v2205
  %v5558 = vadd.f32 %v5549, %v2206
  %v5559 = vadd.f32 %v5550, %v2207
  %v5560 = vsel %vm2667, %v5551, -inf
  %5561 = vmax.xlane.f32.xlu0 %v5560
  %v5562 = vpop.xlane.xlu0 %5561
  %v5563 = vsel %vm2667, %v5552, -inf
  %5564 = vmax.xlane.f32.xlu0 %v5563
  %v5565 = vpop.xlane.xlu0 %5564
  %v5566 = vsel %vm2667, %v5553, -inf
  %5567 = vmax.xlane.f32.xlu0 %v5566
  %v5568 = vpop.xlane.xlu0 %5567
  %v5569 = vsel %vm2667, %v5554, -inf
  %5570 = vmax.xlane.f32.xlu0 %v5569
  %v5571 = vpop.xlane.xlu0 %5570
  %v5572 = vsel %vm2667, %v5555, -inf
  %5573 = vmax.xlane.f32.xlu0 %v5572
  %v5574 = vpop.xlane.xlu0 %5573
  %v5575 = vsel %vm2667, %v5556, -inf
  %5576 = vmax.xlane.f32.xlu0 %v5575
  %v5577 = vpop.xlane.xlu0 %5576
  %v5578 = vsel %vm2667, %v5557, -inf
  %5579 = vmax.xlane.f32.xlu0 %v5578
  %v5580 = vpop.xlane.xlu0 %5579
  %v5581 = vsel %vm2667, %v5558, -inf
  %5582 = vmax.xlane.f32.xlu0 %v5581
  %v5583 = vpop.xlane.xlu0 %5582
  %v5584 = vsel %vm2667, %v5559, -inf
  %5585 = vmax.xlane.f32.xlu0 %v5584
  %v5586 = vpop.xlane.xlu0 %5585
  %v5587 = vsub.f32 %v5551, %v5562
  %v5588 = vsub.f32 %v5552, %v5565
  %v5589 = vsub.f32 %v5553, %v5568
  %v5590 = vsub.f32 %v5554, %v5571
  %v5591 = vsub.f32 %v5555, %v5574
  %v5592 = vsub.f32 %v5556, %v5577
  %v5593 = vsub.f32 %v5557, %v5580
  %v5594 = vsub.f32 %v5558, %v5583
  %v5595 = vsub.f32 %v5559, %v5586
  %v5596 = vmul.f32 %v5587, 1.442695
  %v5597 = vpow.pop %v5596
  %v5598 = vmul.f32 %v5588, 1.442695
  %v5599 = vpow.pop %v5598
  %v5600 = vmul.f32 %v5589, 1.442695
  %v5601 = vpow.pop %v5600
  %v5602 = vmul.f32 %v5590, 1.442695
  %v5603 = vpow.pop %v5602
  %v5604 = vmul.f32 %v5591, 1.442695
  %v5605 = vpow.pop %v5604
  %v5606 = vmul.f32 %v5592, 1.442695
  %v5607 = vpow.pop %v5606
  %v5608 = vmul.f32 %v5593, 1.442695
  %v5609 = vpow.pop %v5608
  %v5610 = vmul.f32 %v5594, 1.442695
  %v5611 = vpow.pop %v5610
  %v5612 = vmul.f32 %v5595, 1.442695
  %v5613 = vpow.pop %v5612
  %v5614 = vsel %vm2667, %v5597, 0.0
  %5615 = vadd.xlane.f32.xlu0 %v5614
  %v5616 = vpop.xlane.xlu0 %5615
  %v5617 = vsel %vm2667, %v5599, 0.0
  %5618 = vadd.xlane.f32.xlu0 %v5617
  %v5619 = vpop.xlane.xlu0 %5618
  %v5620 = vsel %vm2667, %v5601, 0.0
  %5621 = vadd.xlane.f32.xlu0 %v5620
  %v5622 = vpop.xlane.xlu0 %5621
  %v5623 = vsel %vm2667, %v5603, 0.0
  %5624 = vadd.xlane.f32.xlu0 %v5623
  %v5625 = vpop.xlane.xlu0 %5624
  %v5626 = vsel %vm2667, %v5605, 0.0
  %5627 = vadd.xlane.f32.xlu0 %v5626
  %v5628 = vpop.xlane.xlu0 %5627
  %v5629 = vsel %vm2667, %v5607, 0.0
  %5630 = vadd.xlane.f32.xlu0 %v5629
  %v5631 = vpop.xlane.xlu0 %5630
  %v5632 = vsel %vm2667, %v5609, 0.0
  %5633 = vadd.xlane.f32.xlu0 %v5632
  %v5634 = vpop.xlane.xlu0 %5633
  %v5635 = vsel %vm2667, %v5611, 0.0
  %5636 = vadd.xlane.f32.xlu0 %v5635
  %v5637 = vpop.xlane.xlu0 %5636
  %v5638 = vsel %vm2667, %v5613, 0.0
  %5639 = vadd.xlane.f32.xlu0 %v5638
  %v5640 = vpop.xlane.xlu0 %5639
  %v5641 = vrcp.pop %v5616
  %v5642 = vrcp.pop %v5619
  %v5643 = vrcp.pop %v5622
  %v5644 = vrcp.pop %v5625
  %v5645 = vrcp.pop %v5628
  %v5646 = vrcp.pop %v5631
  %v5647 = vrcp.pop %v5634
  %v5648 = vrcp.pop %v5637
  %v5649 = vrcp.pop %v5640
  %v5650 = vmul.f32 %v5597, %v5641
  %v5651 = vmul.f32 %v5599, %v5642
  %v5652 = vmul.f32 %v5601, %v5643
  %v5653 = vmul.f32 %v5603, %v5644
  %v5654 = vmul.f32 %v5605, %v5645
  %v5655 = vmul.f32 %v5607, %v5646
  %v5656 = vmul.f32 %v5609, %v5647
  %v5657 = vmul.f32 %v5611, %v5648
  %v5658 = vmul.f32 %v5613, %v5649
  %v5659 = vpack.c.bf16 %v5651, %v5650
  %v5660 = vpack.c.bf16 %v5653, %v5652
  %v5661 = vpack.c.bf16 %v5655, %v5654
  %v5662 = vpack.c.bf16 %v5657, %v5656
  %v5663 = vpack.c.bf16 %v5658, %v5658
  %5664 = vrot.lane.b32.xlu0 %v5055, 56
  %v5665 = vpop.permute.xlu0 %5664
  %5666 = vrot.lane.b32.xlu0 %v5056, 56
  %v5667 = vpop.permute.xlu0 %5666
  %5668 = vrot.lane.b32.xlu0 %v5057, 56
  %v5669 = vpop.permute.xlu0 %5668
  %5670 = vrot.lane.b32.xlu0 %v5058, 56
  %v5671 = vpop.permute.xlu0 %5670
  %5672 = vrot.lane.b32.xlu0 %v5059, 56
  %v5673 = vpop.permute.xlu0 %5672
  %v5679 = vsel %vm2667, %v5659, 0
  %v5682 = vsel %vm2667, %v5660, 0
  %v5685 = vsel %vm2667, %v5661, 0
  %v5688 = vsel %vm2667, %v5662, 0
  %v5691 = vsel %vm2667, %v5663, 0
  %v5694 = vsel %vm364, %v5673, 0
  %5696 = vmatprep.subr.bf16.mxu0 0
  %5697 = vmatpush1.bf16.msra.mxu0 %v5665
  %5698 = vmatprep.subr.bf16.mxu0 0
  %5699 = vmatpush1.bf16.msra.mxu0 %v5667
  %5700 = vmatprep.subr.bf16.mxu0 0
  %5701 = vmatpush1.bf16.msra.mxu0 %v5669
  %5702 = vmatprep.subr.bf16.mxu0 0
  %5703 = vmatpush1.bf16.msra.mxu0 %v5671
  %5704 = vmatprep.subr.bf16.mxu0 0
  %5705 = vmatpush1.bf16.msra.mxu0 %v5694
  %5706 = vmatprep.subr.bf16.mxu0 0
  %5707 = vmatpush1.bf16.msra.mxu0 0
  %5708 = vmatprep.subr.bf16.mxu0 0
  %5709 = vmatpush1.bf16.msra.mxu0 0
  %5710 = vmatprep.subr.bf16.mxu0 0
  %5711 = vmatpush1.bf16.msra.mxu0 0
  %5712 = vmatprep.subr.bf16.mxu0 0
  %5713 = vmatpush1.bf16.msra.mxu0 0
  %5714 = vmatprep.subr.bf16.mxu0 0
  %5715 = vmatpush1.bf16.msra.mxu0 0
  %5716 = vmatprep.subr.bf16.mxu0 0
  %5717 = vmatpush1.bf16.msra.mxu0 0
  %5718 = vmatprep.subr.bf16.mxu0 0
  %5719 = vmatpush1.bf16.msra.mxu0 0
  %5720 = vmatprep.subr.bf16.mxu0 0
  %5721 = vmatpush1.bf16.msra.mxu0 0
  %5722 = vmatprep.subr.bf16.mxu0 0
  %5723 = vmatpush1.bf16.msra.mxu0 0
  %5724 = vmatprep.subr.bf16.mxu0 0
  %5725 = vmatpush1.bf16.msra.mxu0 0
  %5726 = vmatprep.subr.bf16.mxu0 0
  %5727 = vmatpush1.bf16.msra.mxu0 0
  %5728 = vmatprep.mubr.bf16.mxu0 0
  %5729 = vmatmul.mubr.bf16.gmra.mrb[0].mxu0 %v5679
  %v5730 = vpop.f32.mrb[0].mxu0
  %v5731 = vadd.f32 0.0, %v5730
  %v5732 = vpop.f32.mrb[0].mxu0
  %v5733 = vpop.f32.mrb[0].mxu0
  %v5734 = vadd.f32 0.0, %v5733
  %v5735 = vpop.f32.mrb[0].mxu0
  %5736 = vmatprep.mubr.bf16.mxu0 0
  %5737 = vmatmul.mubr.bf16.gmra.mrb[0].mxu0 %v5682
  %v5738 = vpop.f32.mrb[0].mxu0
  %v5739 = vadd.f32 0.0, %v5738
  %v5740 = vpop.f32.mrb[0].mxu0
  %v5741 = vpop.f32.mrb[0].mxu0
  %v5742 = vadd.f32 0.0, %v5741
  %v5743 = vpop.f32.mrb[0].mxu0
  %5744 = vmatprep.mubr.bf16.mxu0 0
  %5745 = vmatmul.mubr.bf16.gmra.mrb[0].mxu0 %v5685
  %v5746 = vpop.f32.mrb[0].mxu0
  %v5747 = vadd.f32 0.0, %v5746
  %v5748 = vpop.f32.mrb[0].mxu0
  %v5749 = vpop.f32.mrb[0].mxu0
  %v5750 = vadd.f32 0.0, %v5749
  %v5751 = vpop.f32.mrb[0].mxu0
  %5752 = vmatprep.mubr.bf16.mxu0 0
  %5753 = vmatmul.mubr.bf16.gmra.mrb[0].mxu0 %v5688
  %v5754 = vpop.f32.mrb[0].mxu0
  %v5755 = vadd.f32 0.0, %v5754
  %v5756 = vpop.f32.mrb[0].mxu0
  %v5757 = vpop.f32.mrb[0].mxu0
  %v5758 = vadd.f32 0.0, %v5757
  %v5759 = vpop.f32.mrb[0].mxu0
  %5760 = vmatprep.mubr.bf16.mxu0 0
  %5761 = vmatmul.mubr.bf16.gmra.mrb[0].mxu0 %v5691
  %v5762 = vpop.f32.mrb[0].mxu0
  %v5763 = vadd.f32 0.0, %v5762
  %v5764 = vpop.f32.mrb[0].mxu0
  %v5765 = vpop.f32.mrb[0].mxu0
  %v5766 = vpop.f32.mrb[0].mxu0
  %5767 = vdwg.mxu0
  %5768 = vrot.lane.b32.xlu0 %v4950, 80
  %v5769 = vpop.permute.xlu0 %5768
  %5770 = vrot.lane.b32.xlu0 %v4953, 80
  %v5771 = vpop.permute.xlu0 %5770
  %5772 = vrot.lane.b32.xlu0 %v4958, 80
  %v5773 = vpop.permute.xlu0 %5772
  %5774 = vrot.lane.b32.xlu0 %v4961, 80
  %v5775 = vpop.permute.xlu0 %5774
  %5776 = vrot.lane.b32.xlu0 %v4966, 80
  %v5777 = vpop.permute.xlu0 %5776
  %5778 = vrot.lane.b32.xlu0 %v4969, 80
  %v5779 = vpop.permute.xlu0 %5778
  %5780 = vrot.lane.b32.xlu0 %v4974, 80
  %v5781 = vpop.permute.xlu0 %5780
  %5782 = vrot.lane.b32.xlu0 %v4977, 80
  %v5783 = vpop.permute.xlu0 %5782
  %5784 = vrot.lane.b32.xlu0 %v4982, 80
  %v5785 = vpop.permute.xlu0 %5784
  %5795 = vxpose.xlu0.b32.start [1/16] %v5769, 128
  %5796 = vxpose.xlu0.b32.cont [2/16] %v5771, 128
  %5797 = vxpose.xlu0.b32.cont [3/16] %v5773, 128
  %5798 = vxpose.xlu0.b32.cont [4/16] %v5775, 128
  %5799 = vxpose.xlu0.b32.cont [5/16] %v5777, 128
  %5800 = vxpose.xlu0.b32.cont [6/16] %v5779, 128
  %5801 = vxpose.xlu0.b32.cont [7/16] %v5781, 128
  %5802 = vxpose.xlu0.b32.cont [8/16] %v5783, 128
  %5803 = vxpose.xlu0.b32.cont [9/16] %v5785, 128
  %5804 = vxpose.xlu0.b32.cont [10/16] 0.0, 128
  %5805 = vxpose.xlu0.b32.cont [11/16] 0.0, 128
  %5806 = vxpose.xlu0.b32.cont [12/16] 0.0, 128
  %5807 = vxpose.xlu0.b32.cont [13/16] 0.0, 128
  %5808 = vxpose.xlu0.b32.cont [14/16] 0.0, 128
  %5809 = vxpose.xlu0.b32.cont [15/16] 0.0, 128
  %5810 = vxpose.xlu0.b32.end [16/16] 0.0, 128
  %v5811 = vpop.trf.xlu0
  %v5812 = vpop.trf.xlu0
  %v5813 = vpop.trf.xlu0
  %v5814 = vpop.trf.xlu0
  %v5815 = vpop.trf.xlu0
  %v5816 = vpop.trf.xlu0
  %v5817 = vpop.trf.xlu0
  %v5818 = vpop.trf.xlu0
  %v5819 = vpop.trf.xlu0
  %v5820 = vpop.trf.xlu0
  %v5821 = vpop.trf.xlu0
  %v5822 = vpop.trf.xlu0
  %v5823 = vpop.trf.xlu0
  %v5824 = vpop.trf.xlu0
  %v5825 = vpop.trf.xlu0
  %v5826 = vpop.trf.xlu0
  %v5827 = vpack.c.bf16 %v5811, %v5811
  %5828 = vrot.lane.b32.xlu0 %v5055, 112
  %v5829 = vpop.permute.xlu0 %5828
  %5830 = vrot.lane.b32.xlu0 %v5056, 112
  %v5831 = vpop.permute.xlu0 %5830
  %5832 = vrot.lane.b32.xlu0 %v5057, 112
  %v5833 = vpop.permute.xlu0 %5832
  %5834 = vrot.lane.b32.xlu0 %v5058, 112
  %v5835 = vpop.permute.xlu0 %5834
  %5836 = vrot.lane.b32.xlu0 %v5059, 112
  %v5837 = vpop.permute.xlu0 %5836
  %v5839 = vsel %vm354, %v5829, 0
  %v5842 = vsel %vm354, %v5831, 0
  %v5845 = vsel %vm354, %v5833, 0
  %v5848 = vsel %vm354, %v5835, 0
  %v5851 = vsel %vm354, %v5837, 0
  %v5854 = vsel %vm364, %v5827, 0
  %5856 = vmatprep.subr.bf16.mxu0 0
  %5857 = vmatpush1.bf16.msra.mxu0 %v5854
  %5858 = vmatprep.subr.bf16.mxu0 0
  %5859 = vmatpush1.bf16.msra.mxu0 0
  %5860 = vmatprep.subr.bf16.mxu0 0
  %5861 = vmatpush1.bf16.msra.mxu0 0
  %5862 = vmatprep.subr.bf16.mxu0 0
  %5863 = vmatpush1.bf16.msra.mxu0 0
  %5864 = vmatprep.subr.bf16.mxu0 0
  %5865 = vmatpush1.bf16.msra.mxu0 0
  %5866 = vmatprep.subr.bf16.mxu0 0
  %5867 = vmatpush1.bf16.msra.mxu0 0
  %5868 = vmatprep.subr.bf16.mxu0 0
  %5869 = vmatpush1.bf16.msra.mxu0 0
  %5870 = vmatprep.subr.bf16.mxu0 0
  %5871 = vmatpush1.bf16.msra.mxu0 0
  %5872 = vmatprep.subr.bf16.mxu0 0
  %5873 = vmatpush1.bf16.msra.mxu0 0
  %5874 = vmatprep.subr.bf16.mxu0 0
  %5875 = vmatpush1.bf16.msra.mxu0 0
  %5876 = vmatprep.subr.bf16.mxu0 0
  %5877 = vmatpush1.bf16.msra.mxu0 0
  %5878 = vmatprep.subr.bf16.mxu0 0
  %5879 = vmatpush1.bf16.msra.mxu0 0
  %5880 = vmatprep.subr.bf16.mxu0 0
  %5881 = vmatpush1.bf16.msra.mxu0 0
  %5882 = vmatprep.subr.bf16.mxu0 0
  %5883 = vmatpush1.bf16.msra.mxu0 0
  %5884 = vmatprep.subr.bf16.mxu0 0
  %5885 = vmatpush1.bf16.msra.mxu0 0
  %5886 = vmatprep.subr.bf16.mxu0 0
  %5887 = vmatpush1.bf16.msra.mxu0 0
  %5888 = vmatprep.mubr.bf16.mxu0 0
  %5889 = vmatmul.mubr.bf16.gmra.mrb[0].mxu0 %v5839
  %v5890 = vpop.f32.mrb[0].mxu0
  %v5891 = vadd.f32 0.0, %v5890
  %v5892 = vpop.f32.mrb[0].mxu0
  %v5893 = vpop.f32.mrb[0].mxu0
  %v5894 = vadd.f32 0.0, %v5893
  %v5895 = vpop.f32.mrb[0].mxu0
  %5896 = vmatprep.mubr.bf16.mxu0 0
  %5897 = vmatmul.mubr.bf16.gmra.mrb[0].mxu0 %v5842
  %v5898 = vpop.f32.mrb[0].mxu0
  %v5899 = vadd.f32 0.0, %v5898
  %v5900 = vpop.f32.mrb[0].mxu0
  %v5901 = vpop.f32.mrb[0].mxu0
  %v5902 = vadd.f32 0.0, %v5901
  %v5903 = vpop.f32.mrb[0].mxu0
  %5904 = vmatprep.mubr.bf16.mxu0 0
  %5905 = vmatmul.mubr.bf16.gmra.mrb[0].mxu0 %v5845
  %v5906 = vpop.f32.mrb[0].mxu0
  %v5907 = vadd.f32 0.0, %v5906
  %v5908 = vpop.f32.mrb[0].mxu0
  %v5909 = vpop.f32.mrb[0].mxu0
  %v5910 = vadd.f32 0.0, %v5909
  %v5911 = vpop.f32.mrb[0].mxu0
  %5912 = vmatprep.mubr.bf16.mxu0 0
  %5913 = vmatmul.mubr.bf16.gmra.mrb[0].mxu0 %v5848
  %v5914 = vpop.f32.mrb[0].mxu0
  %v5915 = vadd.f32 0.0, %v5914
  %v5916 = vpop.f32.mrb[0].mxu0
  %v5917 = vpop.f32.mrb[0].mxu0
  %v5918 = vadd.f32 0.0, %v5917
  %v5919 = vpop.f32.mrb[0].mxu0
  %5920 = vmatprep.mubr.bf16.mxu0 0
  %5921 = vmatmul.mubr.bf16.gmra.mrb[0].mxu0 %v5851
  %v5922 = vpop.f32.mrb[0].mxu0
  %v5923 = vadd.f32 0.0, %v5922
  %v5924 = vpop.f32.mrb[0].mxu0
  %v5925 = vpop.f32.mrb[0].mxu0
  %v5926 = vpop.f32.mrb[0].mxu0
  %5927 = vdwg.mxu0
  %v5928 = vmul.f32 %v5891, 0.35355338
  %v5929 = vmul.f32 %v5894, 0.35355338
  %v5930 = vmul.f32 %v5899, 0.35355338
  %v5931 = vmul.f32 %v5902, 0.35355338
  %v5932 = vmul.f32 %v5907, 0.35355338
  %v5933 = vmul.f32 %v5910, 0.35355338
  %v5934 = vmul.f32 %v5915, 0.35355338
  %v5935 = vmul.f32 %v5918, 0.35355338
  %v5936 = vmul.f32 %v5923, 0.35355338
  %v5937 = vadd.f32 %v5928, %v2199
  %v5938 = vadd.f32 %v5929, %v2200
  %v5939 = vadd.f32 %v5930, %v2201
  %v5940 = vadd.f32 %v5931, %v2202
  %v5941 = vadd.f32 %v5932, %v2203
  %v5942 = vadd.f32 %v5933, %v2204
  %v5943 = vadd.f32 %v5934, %v2205
  %v5944 = vadd.f32 %v5935, %v2206
  %v5945 = vadd.f32 %v5936, %v2207
  %v5946 = vsel %vm2667, %v5937, -inf
  %5947 = vmax.xlane.f32.xlu0 %v5946
  %v5948 = vpop.xlane.xlu0 %5947
  %v5949 = vsel %vm2667, %v5938, -inf
  %5950 = vmax.xlane.f32.xlu0 %v5949
  %v5951 = vpop.xlane.xlu0 %5950
  %v5952 = vsel %vm2667, %v5939, -inf
  %5953 = vmax.xlane.f32.xlu0 %v5952
  %v5954 = vpop.xlane.xlu0 %5953
  %v5955 = vsel %vm2667, %v5940, -inf
  %5956 = vmax.xlane.f32.xlu0 %v5955
  %v5957 = vpop.xlane.xlu0 %5956
  %v5958 = vsel %vm2667, %v5941, -inf
  %5959 = vmax.xlane.f32.xlu0 %v5958
  %v5960 = vpop.xlane.xlu0 %5959
  %v5961 = vsel %vm2667, %v5942, -inf
  %5962 = vmax.xlane.f32.xlu0 %v5961
  %v5963 = vpop.xlane.xlu0 %5962
  %v5964 = vsel %vm2667, %v5943, -inf
  %5965 = vmax.xlane.f32.xlu0 %v5964
  %v5966 = vpop.xlane.xlu0 %5965
  %v5967 = vsel %vm2667, %v5944, -inf
  %5968 = vmax.xlane.f32.xlu0 %v5967
  %v5969 = vpop.xlane.xlu0 %5968
  %v5970 = vsel %vm2667, %v5945, -inf
  %5971 = vmax.xlane.f32.xlu0 %v5970
  %v5972 = vpop.xlane.xlu0 %5971
  %v5973 = vsub.f32 %v5937, %v5948
  %v5974 = vsub.f32 %v5938, %v5951
  %v5975 = vsub.f32 %v5939, %v5954
  %v5976 = vsub.f32 %v5940, %v5957
  %v5977 = vsub.f32 %v5941, %v5960
  %v5978 = vsub.f32 %v5942, %v5963
  %v5979 = vsub.f32 %v5943, %v5966
  %v5980 = vsub.f32 %v5944, %v5969
  %v5981 = vsub.f32 %v5945, %v5972
  %v5982 = vmul.f32 %v5973, 1.442695
  %v5983 = vpow.pop %v5982
  %v5984 = vmul.f32 %v5974, 1.442695
  %v5985 = vpow.pop %v5984
  %v5986 = vmul.f32 %v5975, 1.442695
  %v5987 = vpow.pop %v5986
  %v5988 = vmul.f32 %v5976, 1.442695
  %v5989 = vpow.pop %v5988
  %v5990 = vmul.f32 %v5977, 1.442695
  %v5991 = vpow.pop %v5990
  %v5992 = vmul.f32 %v5978, 1.442695
  %v5993 = vpow.pop %v5992
  %v5994 = vmul.f32 %v5979, 1.442695
  %v5995 = vpow.pop %v5994
  %v5996 = vmul.f32 %v5980, 1.442695
  %v5997 = vpow.pop %v5996
  %v5998 = vmul.f32 %v5981, 1.442695
  %v5999 = vpow.pop %v5998
  %v6000 = vsel %vm2667, %v5983, 0.0
  %6001 = vadd.xlane.f32.xlu0 %v6000
  %v6002 = vpop.xlane.xlu0 %6001
  %v6003 = vsel %vm2667, %v5985, 0.0
  %6004 = vadd.xlane.f32.xlu0 %v6003
  %v6005 = vpop.xlane.xlu0 %6004
  %v6006 = vsel %vm2667, %v5987, 0.0
  %6007 = vadd.xlane.f32.xlu0 %v6006
  %v6008 = vpop.xlane.xlu0 %6007
  %v6009 = vsel %vm2667, %v5989, 0.0
  %6010 = vadd.xlane.f32.xlu0 %v6009
  %v6011 = vpop.xlane.xlu0 %6010
  %v6012 = vsel %vm2667, %v5991, 0.0
  %6013 = vadd.xlane.f32.xlu0 %v6012
  %v6014 = vpop.xlane.xlu0 %6013
  %v6015 = vsel %vm2667, %v5993, 0.0
  %6016 = vadd.xlane.f32.xlu0 %v6015
  %v6017 = vpop.xlane.xlu0 %6016
  %v6018 = vsel %vm2667, %v5995, 0.0
  %6019 = vadd.xlane.f32.xlu0 %v6018
  %v6020 = vpop.xlane.xlu0 %6019
  %v6021 = vsel %vm2667, %v5997, 0.0
  %6022 = vadd.xlane.f32.xlu0 %v6021
  %v6023 = vpop.xlane.xlu0 %6022
  %v6024 = vsel %vm2667, %v5999, 0.0
  %6025 = vadd.xlane.f32.xlu0 %v6024
  %v6026 = vpop.xlane.xlu0 %6025
  %v6027 = vrcp.pop %v6002
  %v6028 = vrcp.pop %v6005
  %v6029 = vrcp.pop %v6008
  %v6030 = vrcp.pop %v6011
  %v6031 = vrcp.pop %v6014
  %v6032 = vrcp.pop %v6017
  %v6033 = vrcp.pop %v6020
  %v6034 = vrcp.pop %v6023
  %v6035 = vrcp.pop %v6026
  %v6036 = vmul.f32 %v5983, %v6027
  %v6037 = vmul.f32 %v5985, %v6028
  %v6038 = vmul.f32 %v5987, %v6029
  %v6039 = vmul.f32 %v5989, %v6030
  %v6040 = vmul.f32 %v5991, %v6031
  %v6041 = vmul.f32 %v5993, %v6032
  %v6042 = vmul.f32 %v5995, %v6033
  %v6043 = vmul.f32 %v5997, %v6034
  %v6044 = vmul.f32 %v5999, %v6035
  %v6045 = vpack.c.bf16 %v6037, %v6036
  %v6046 = vpack.c.bf16 %v6039, %v6038
  %v6047 = vpack.c.bf16 %v6041, %v6040
  %v6048 = vpack.c.bf16 %v6043, %v6042
  %v6049 = vpack.c.bf16 %v6044, %v6044
  %6050 = vrot.lane.b32.xlu0 %v5055, 48
  %v6051 = vpop.permute.xlu0 %6050
  %6052 = vrot.lane.b32.xlu0 %v5056, 48
  %v6053 = vpop.permute.xlu0 %6052
  %6054 = vrot.lane.b32.xlu0 %v5057, 48
  %v6055 = vpop.permute.xlu0 %6054
  %6056 = vrot.lane.b32.xlu0 %v5058, 48
  %v6057 = vpop.permute.xlu0 %6056
  %6058 = vrot.lane.b32.xlu0 %v5059, 48
  %v6059 = vpop.permute.xlu0 %6058
  %v6065 = vsel %vm2667, %v6045, 0
  %v6068 = vsel %vm2667, %v6046, 0
  %v6071 = vsel %vm2667, %v6047, 0
  %v6074 = vsel %vm2667, %v6048, 0
  %v6077 = vsel %vm2667, %v6049, 0
  %v6080 = vsel %vm364, %v6059, 0
  %6082 = vmatprep.subr.bf16.mxu0 0
  %6083 = vmatpush1.bf16.msra.mxu0 %v6051
  %6084 = vmatprep.subr.bf16.mxu0 0
  %6085 = vmatpush1.bf16.msra.mxu0 %v6053
  %6086 = vmatprep.subr.bf16.mxu0 0
  %6087 = vmatpush1.bf16.msra.mxu0 %v6055
  %6088 = vmatprep.subr.bf16.mxu0 0
  %6089 = vmatpush1.bf16.msra.mxu0 %v6057
  %6090 = vmatprep.subr.bf16.mxu0 0
  %6091 = vmatpush1.bf16.msra.mxu0 %v6080
  %6092 = vmatprep.subr.bf16.mxu0 0
  %6093 = vmatpush1.bf16.msra.mxu0 0
  %6094 = vmatprep.subr.bf16.mxu0 0
  %6095 = vmatpush1.bf16.msra.mxu0 0
  %6096 = vmatprep.subr.bf16.mxu0 0
  %6097 = vmatpush1.bf16.msra.mxu0 0
  %6098 = vmatprep.subr.bf16.mxu0 0
  %6099 = vmatpush1.bf16.msra.mxu0 0
  %6100 = vmatprep.subr.bf16.mxu0 0
  %6101 = vmatpush1.bf16.msra.mxu0 0
  %6102 = vmatprep.subr.bf16.mxu0 0
  %6103 = vmatpush1.bf16.msra.mxu0 0
  %6104 = vmatprep.subr.bf16.mxu0 0
  %6105 = vmatpush1.bf16.msra.mxu0 0
  %6106 = vmatprep.subr.bf16.mxu0 0
  %6107 = vmatpush1.bf16.msra.mxu0 0
  %6108 = vmatprep.subr.bf16.mxu0 0
  %6109 = vmatpush1.bf16.msra.mxu0 0
  %6110 = vmatprep.subr.bf16.mxu0 0
  %6111 = vmatpush1.bf16.msra.mxu0 0
  %6112 = vmatprep.subr.bf16.mxu0 0
  %6113 = vmatpush1.bf16.msra.mxu0 0
  %6114 = vmatprep.mubr.bf16.mxu0 0
  %6115 = vmatmul.mubr.bf16.gmra.mrb[0].mxu0 %v6065
  %v6116 = vpop.f32.mrb[0].mxu0
  %v6117 = vadd.f32 0.0, %v6116
  %v6118 = vpop.f32.mrb[0].mxu0
  %v6119 = vpop.f32.mrb[0].mxu0
  %v6120 = vadd.f32 0.0, %v6119
  %v6121 = vpop.f32.mrb[0].mxu0
  %6122 = vmatprep.mubr.bf16.mxu0 0
  %6123 = vmatmul.mubr.bf16.gmra.mrb[0].mxu0 %v6068
  %v6124 = vpop.f32.mrb[0].mxu0
  %v6125 = vadd.f32 0.0, %v6124
  %v6126 = vpop.f32.mrb[0].mxu0
  %v6127 = vpop.f32.mrb[0].mxu0
  %v6128 = vadd.f32 0.0, %v6127
  %v6129 = vpop.f32.mrb[0].mxu0
  %6130 = vmatprep.mubr.bf16.mxu0 0
  %6131 = vmatmul.mubr.bf16.gmra.mrb[0].mxu0 %v6071
  %v6132 = vpop.f32.mrb[0].mxu0
  %v6133 = vadd.f32 0.0, %v6132
  %v6134 = vpop.f32.mrb[0].mxu0
  %v6135 = vpop.f32.mrb[0].mxu0
  %v6136 = vadd.f32 0.0, %v6135
  %v6137 = vpop.f32.mrb[0].mxu0
  %6138 = vmatprep.mubr.bf16.mxu0 0
  %6139 = vmatmul.mubr.bf16.gmra.mrb[0].mxu0 %v6074
  %v6140 = vpop.f32.mrb[0].mxu0
  %v6141 = vadd.f32 0.0, %v6140
  %v6142 = vpop.f32.mrb[0].mxu0
  %v6143 = vpop.f32.mrb[0].mxu0
  %v6144 = vadd.f32 0.0, %v6143
  %v6145 = vpop.f32.mrb[0].mxu0
  %6146 = vmatprep.mubr.bf16.mxu0 0
  %6147 = vmatmul.mubr.bf16.gmra.mrb[0].mxu0 %v6077
  %v6148 = vpop.f32.mrb[0].mxu0
  %v6149 = vadd.f32 0.0, %v6148
  %v6150 = vpop.f32.mrb[0].mxu0
  %v6151 = vpop.f32.mrb[0].mxu0
  %v6152 = vpop.f32.mrb[0].mxu0
  %6153 = vdwg.mxu0
  %6154 = vrot.lane.b32.xlu0 %v4950, 72
  %v6155 = vpop.permute.xlu0 %6154
  %6156 = vrot.lane.b32.xlu0 %v4953, 72
  %v6157 = vpop.permute.xlu0 %6156
  %6158 = vrot.lane.b32.xlu0 %v4958, 72
  %v6159 = vpop.permute.xlu0 %6158
  %6160 = vrot.lane.b32.xlu0 %v4961, 72
  %v6161 = vpop.permute.xlu0 %6160
  %6162 = vrot.lane.b32.xlu0 %v4966, 72
  %v6163 = vpop.permute.xlu0 %6162
  %6164 = vrot.lane.b32.xlu0 %v4969, 72
  %v6165 = vpop.permute.xlu0 %6164
  %6166 = vrot.lane.b32.xlu0 %v4974, 72
  %v6167 = vpop.permute.xlu0 %6166
  %6168 = vrot.lane.b32.xlu0 %v4977, 72
  %v6169 = vpop.permute.xlu0 %6168
  %6170 = vrot.lane.b32.xlu0 %v4982, 72
  %v6171 = vpop.permute.xlu0 %6170
  %6181 = vxpose.xlu0.b32.start [1/16] %v6155, 128
  %6182 = vxpose.xlu0.b32.cont [2/16] %v6157, 128
  %6183 = vxpose.xlu0.b32.cont [3/16] %v6159, 128
  %6184 = vxpose.xlu0.b32.cont [4/16] %v6161, 128
  %6185 = vxpose.xlu0.b32.cont [5/16] %v6163, 128
  %6186 = vxpose.xlu0.b32.cont [6/16] %v6165, 128
  %6187 = vxpose.xlu0.b32.cont [7/16] %v6167, 128
  %6188 = vxpose.xlu0.b32.cont [8/16] %v6169, 128
  %6189 = vxpose.xlu0.b32.cont [9/16] %v6171, 128
  %6190 = vxpose.xlu0.b32.cont [10/16] 0.0, 128
  %6191 = vxpose.xlu0.b32.cont [11/16] 0.0, 128
  %6192 = vxpose.xlu0.b32.cont [12/16] 0.0, 128
  %6193 = vxpose.xlu0.b32.cont [13/16] 0.0, 128
  %6194 = vxpose.xlu0.b32.cont [14/16] 0.0, 128
  %6195 = vxpose.xlu0.b32.cont [15/16] 0.0, 128
  %6196 = vxpose.xlu0.b32.end [16/16] 0.0, 128
  %v6197 = vpop.trf.xlu0
  %v6198 = vpop.trf.xlu0
  %v6199 = vpop.trf.xlu0
  %v6200 = vpop.trf.xlu0
  %v6201 = vpop.trf.xlu0
  %v6202 = vpop.trf.xlu0
  %v6203 = vpop.trf.xlu0
  %v6204 = vpop.trf.xlu0
  %v6205 = vpop.trf.xlu0
  %v6206 = vpop.trf.xlu0
  %v6207 = vpop.trf.xlu0
  %v6208 = vpop.trf.xlu0
  %v6209 = vpop.trf.xlu0
  %v6210 = vpop.trf.xlu0
  %v6211 = vpop.trf.xlu0
  %v6212 = vpop.trf.xlu0
  %v6213 = vpack.c.bf16 %v6197, %v6197
  %6214 = vrot.lane.b32.xlu0 %v5055, 104
  %v6215 = vpop.permute.xlu0 %6214
  %6216 = vrot.lane.b32.xlu0 %v5056, 104
  %v6217 = vpop.permute.xlu0 %6216
  %6218 = vrot.lane.b32.xlu0 %v5057, 104
  %v6219 = vpop.permute.xlu0 %6218
  %6220 = vrot.lane.b32.xlu0 %v5058, 104
  %v6221 = vpop.permute.xlu0 %6220
  %6222 = vrot.lane.b32.xlu0 %v5059, 104
  %v6223 = vpop.permute.xlu0 %6222
  %v6225 = vsel %vm354, %v6215, 0
  %v6228 = vsel %vm354, %v6217, 0
  %v6231 = vsel %vm354, %v6219, 0
  %v6234 = vsel %vm354, %v6221, 0
  %v6237 = vsel %vm354, %v6223, 0
  %v6240 = vsel %vm364, %v6213, 0
  %6242 = vmatprep.subr.bf16.mxu0 0
  %6243 = vmatpush1.bf16.msra.mxu0 %v6240
  %6244 = vmatprep.subr.bf16.mxu0 0
  %6245 = vmatpush1.bf16.msra.mxu0 0
  %6246 = vmatprep.subr.bf16.mxu0 0
  %6247 = vmatpush1.bf16.msra.mxu0 0
  %6248 = vmatprep.subr.bf16.mxu0 0
  %6249 = vmatpush1.bf16.msra.mxu0 0
  %6250 = vmatprep.subr.bf16.mxu0 0
  %6251 = vmatpush1.bf16.msra.mxu0 0
  %6252 = vmatprep.subr.bf16.mxu0 0
  %6253 = vmatpush1.bf16.msra.mxu0 0
  %6254 = vmatprep.subr.bf16.mxu0 0
  %6255 = vmatpush1.bf16.msra.mxu0 0
  %6256 = vmatprep.subr.bf16.mxu0 0
  %6257 = vmatpush1.bf16.msra.mxu0 0
  %6258 = vmatprep.subr.bf16.mxu0 0
  %6259 = vmatpush1.bf16.msra.mxu0 0
  %6260 = vmatprep.subr.bf16.mxu0 0
  %6261 = vmatpush1.bf16.msra.mxu0 0
  %6262 = vmatprep.subr.bf16.mxu0 0
  %6263 = vmatpush1.bf16.msra.mxu0 0
  %6264 = vmatprep.subr.bf16.mxu0 0
  %6265 = vmatpush1.bf16.msra.mxu0 0
  %6266 = vmatprep.subr.bf16.mxu0 0
  %6267 = vmatpush1.bf16.msra.mxu0 0
  %6268 = vmatprep.subr.bf16.mxu0 0
  %6269 = vmatpush1.bf16.msra.mxu0 0
  %6270 = vmatprep.subr.bf16.mxu0 0
  %6271 = vmatpush1.bf16.msra.mxu0 0
  %6272 = vmatprep.subr.bf16.mxu0 0
  %6273 = vmatpush1.bf16.msra.mxu0 0
  %6274 = vmatprep.mubr.bf16.mxu0 0
  %6275 = vmatmul.mubr.bf16.gmra.mrb[0].mxu0 %v6225
  %v6276 = vpop.f32.mrb[0].mxu0
  %v6277 = vadd.f32 0.0, %v6276
  %v6278 = vpop.f32.mrb[0].mxu0
  %v6279 = vpop.f32.mrb[0].mxu0
  %v6280 = vadd.f32 0.0, %v6279
  %v6281 = vpop.f32.mrb[0].mxu0
  %6282 = vmatprep.mubr.bf16.mxu0 0
  %6283 = vmatmul.mubr.bf16.gmra.mrb[0].mxu0 %v6228
  %v6284 = vpop.f32.mrb[0].mxu0
  %v6285 = vadd.f32 0.0, %v6284
  %v6286 = vpop.f32.mrb[0].mxu0
  %v6287 = vpop.f32.mrb[0].mxu0
  %v6288 = vadd.f32 0.0, %v6287
  %v6289 = vpop.f32.mrb[0].mxu0
  %6290 = vmatprep.mubr.bf16.mxu0 0
  %6291 = vmatmul.mubr.bf16.gmra.mrb[0].mxu0 %v6231
  %v6292 = vpop.f32.mrb[0].mxu0
  %v6293 = vadd.f32 0.0, %v6292
  %v6294 = vpop.f32.mrb[0].mxu0
  %v6295 = vpop.f32.mrb[0].mxu0
  %v6296 = vadd.f32 0.0, %v6295
  %v6297 = vpop.f32.mrb[0].mxu0
  %6298 = vmatprep.mubr.bf16.mxu0 0
  %6299 = vmatmul.mubr.bf16.gmra.mrb[0].mxu0 %v6234
  %v6300 = vpop.f32.mrb[0].mxu0
  %v6301 = vadd.f32 0.0, %v6300
  %v6302 = vpop.f32.mrb[0].mxu0
  %v6303 = vpop.f32.mrb[0].mxu0
  %v6304 = vadd.f32 0.0, %v6303
  %v6305 = vpop.f32.mrb[0].mxu0
  %6306 = vmatprep.mubr.bf16.mxu0 0
  %6307 = vmatmul.mubr.bf16.gmra.mrb[0].mxu0 %v6237
  %v6308 = vpop.f32.mrb[0].mxu0
  %v6309 = vadd.f32 0.0, %v6308
  %v6310 = vpop.f32.mrb[0].mxu0
  %v6311 = vpop.f32.mrb[0].mxu0
  %v6312 = vpop.f32.mrb[0].mxu0
  %6313 = vdwg.mxu0
  %v6314 = vmul.f32 %v6277, 0.35355338
  %v6315 = vmul.f32 %v6280, 0.35355338
  %v6316 = vmul.f32 %v6285, 0.35355338
  %v6317 = vmul.f32 %v6288, 0.35355338
  %v6318 = vmul.f32 %v6293, 0.35355338
  %v6319 = vmul.f32 %v6296, 0.35355338
  %v6320 = vmul.f32 %v6301, 0.35355338
  %v6321 = vmul.f32 %v6304, 0.35355338
  %v6322 = vmul.f32 %v6309, 0.35355338
  %v6323 = vadd.f32 %v6314, %v2199
  %v6324 = vadd.f32 %v6315, %v2200
  %v6325 = vadd.f32 %v6316, %v2201
  %v6326 = vadd.f32 %v6317, %v2202
  %v6327 = vadd.f32 %v6318, %v2203
  %v6328 = vadd.f32 %v6319, %v2204
  %v6329 = vadd.f32 %v6320, %v2205
  %v6330 = vadd.f32 %v6321, %v2206
  %v6331 = vadd.f32 %v6322, %v2207
  %v6332 = vsel %vm2667, %v6323, -inf
  %6333 = vmax.xlane.f32.xlu0 %v6332
  %v6334 = vpop.xlane.xlu0 %6333
  %v6335 = vsel %vm2667, %v6324, -inf
  %6336 = vmax.xlane.f32.xlu0 %v6335
  %v6337 = vpop.xlane.xlu0 %6336
  %v6338 = vsel %vm2667, %v6325, -inf
  %6339 = vmax.xlane.f32.xlu0 %v6338
  %v6340 = vpop.xlane.xlu0 %6339
  %v6341 = vsel %vm2667, %v6326, -inf
  %6342 = vmax.xlane.f32.xlu0 %v6341
  %v6343 = vpop.xlane.xlu0 %6342
  %v6344 = vsel %vm2667, %v6327, -inf
  %6345 = vmax.xlane.f32.xlu0 %v6344
  %v6346 = vpop.xlane.xlu0 %6345
  %v6347 = vsel %vm2667, %v6328, -inf
  %6348 = vmax.xlane.f32.xlu0 %v6347
  %v6349 = vpop.xlane.xlu0 %6348
  %v6350 = vsel %vm2667, %v6329, -inf
  %6351 = vmax.xlane.f32.xlu0 %v6350
  %v6352 = vpop.xlane.xlu0 %6351
  %v6353 = vsel %vm2667, %v6330, -inf
  %6354 = vmax.xlane.f32.xlu0 %v6353
  %v6355 = vpop.xlane.xlu0 %6354
  %v6356 = vsel %vm2667, %v6331, -inf
  %6357 = vmax.xlane.f32.xlu0 %v6356
  %v6358 = vpop.xlane.xlu0 %6357
  %v6359 = vsub.f32 %v6323, %v6334
  %v6360 = vsub.f32 %v6324, %v6337
  %v6361 = vsub.f32 %v6325, %v6340
  %v6362 = vsub.f32 %v6326, %v6343
  %v6363 = vsub.f32 %v6327, %v6346
  %v6364 = vsub.f32 %v6328, %v6349
  %v6365 = vsub.f32 %v6329, %v6352
  %v6366 = vsub.f32 %v6330, %v6355
  %v6367 = vsub.f32 %v6331, %v6358
  %v6368 = vmul.f32 %v6359, 1.442695
  %v6369 = vpow.pop %v6368
  %v6370 = vmul.f32 %v6360, 1.442695
  %v6371 = vpow.pop %v6370
  %v6372 = vmul.f32 %v6361, 1.442695
  %v6373 = vpow.pop %v6372
  %v6374 = vmul.f32 %v6362, 1.442695
  %v6375 = vpow.pop %v6374
  %v6376 = vmul.f32 %v6363, 1.442695
  %v6377 = vpow.pop %v6376
  %v6378 = vmul.f32 %v6364, 1.442695
  %v6379 = vpow.pop %v6378
  %v6380 = vmul.f32 %v6365, 1.442695
  %v6381 = vpow.pop %v6380
  %v6382 = vmul.f32 %v6366, 1.442695
  %v6383 = vpow.pop %v6382
  %v6384 = vmul.f32 %v6367, 1.442695
  %v6385 = vpow.pop %v6384
  %v6386 = vsel %vm2667, %v6369, 0.0
  %6387 = vadd.xlane.f32.xlu0 %v6386
  %v6388 = vpop.xlane.xlu0 %6387
  %v6389 = vsel %vm2667, %v6371, 0.0
  %6390 = vadd.xlane.f32.xlu0 %v6389
  %v6391 = vpop.xlane.xlu0 %6390
  %v6392 = vsel %vm2667, %v6373, 0.0
  %6393 = vadd.xlane.f32.xlu0 %v6392
  %v6394 = vpop.xlane.xlu0 %6393
  %v6395 = vsel %vm2667, %v6375, 0.0
  %6396 = vadd.xlane.f32.xlu0 %v6395
  %v6397 = vpop.xlane.xlu0 %6396
  %v6398 = vsel %vm2667, %v6377, 0.0
  %6399 = vadd.xlane.f32.xlu0 %v6398
  %v6400 = vpop.xlane.xlu0 %6399
  %v6401 = vsel %vm2667, %v6379, 0.0
  %6402 = vadd.xlane.f32.xlu0 %v6401
  %v6403 = vpop.xlane.xlu0 %6402
  %v6404 = vsel %vm2667, %v6381, 0.0
  %6405 = vadd.xlane.f32.xlu0 %v6404
  %v6406 = vpop.xlane.xlu0 %6405
  %v6407 = vsel %vm2667, %v6383, 0.0
  %6408 = vadd.xlane.f32.xlu0 %v6407
  %v6409 = vpop.xlane.xlu0 %6408
  %v6410 = vsel %vm2667, %v6385, 0.0
  %6411 = vadd.xlane.f32.xlu0 %v6410
  %v6412 = vpop.xlane.xlu0 %6411
  %v6413 = vrcp.pop %v6388
  %v6414 = vrcp.pop %v6391
  %v6415 = vrcp.pop %v6394
  %v6416 = vrcp.pop %v6397
  %v6417 = vrcp.pop %v6400
  %v6418 = vrcp.pop %v6403
  %v6419 = vrcp.pop %v6406
  %v6420 = vrcp.pop %v6409
  %v6421 = vrcp.pop %v6412
  %v6422 = vmul.f32 %v6369, %v6413
  %v6423 = vmul.f32 %v6371, %v6414
  %v6424 = vmul.f32 %v6373, %v6415
  %v6425 = vmul.f32 %v6375, %v6416
  %v6426 = vmul.f32 %v6377, %v6417
  %v6427 = vmul.f32 %v6379, %v6418
  %v6428 = vmul.f32 %v6381, %v6419
  %v6429 = vmul.f32 %v6383, %v6420
  %v6430 = vmul.f32 %v6385, %v6421
  %v6431 = vpack.c.bf16 %v6423, %v6422
  %v6432 = vpack.c.bf16 %v6425, %v6424
  %v6433 = vpack.c.bf16 %v6427, %v6426
  %v6434 = vpack.c.bf16 %v6429, %v6428
  %v6435 = vpack.c.bf16 %v6430, %v6430
  %6436 = vrot.lane.b32.xlu0 %v5055, 40
  %v6437 = vpop.permute.xlu0 %6436
  %6438 = vrot.lane.b32.xlu0 %v5056, 40
  %v6439 = vpop.permute.xlu0 %6438
  %6440 = vrot.lane.b32.xlu0 %v5057, 40
  %v6441 = vpop.permute.xlu0 %6440
  %6442 = vrot.lane.b32.xlu0 %v5058, 40
  %v6443 = vpop.permute.xlu0 %6442
  %6444 = vrot.lane.b32.xlu0 %v5059, 40
  %v6445 = vpop.permute.xlu0 %6444
  %v6451 = vsel %vm2667, %v6431, 0
  %v6454 = vsel %vm2667, %v6432, 0
  %v6457 = vsel %vm2667, %v6433, 0
  %v6460 = vsel %vm2667, %v6434, 0
  %v6463 = vsel %vm2667, %v6435, 0
  %v6466 = vsel %vm364, %v6445, 0
  %6468 = vmatprep.subr.bf16.mxu0 0
  %6469 = vmatpush1.bf16.msra.mxu0 %v6437
  %6470 = vmatprep.subr.bf16.mxu0 0
  %6471 = vmatpush1.bf16.msra.mxu0 %v6439
  %6472 = vmatprep.subr.bf16.mxu0 0
  %6473 = vmatpush1.bf16.msra.mxu0 %v6441
  %6474 = vmatprep.subr.bf16.mxu0 0
  %6475 = vmatpush1.bf16.msra.mxu0 %v6443
  %6476 = vmatprep.subr.bf16.mxu0 0
  %6477 = vmatpush1.bf16.msra.mxu0 %v6466
  %6478 = vmatprep.subr.bf16.mxu0 0
  %6479 = vmatpush1.bf16.msra.mxu0 0
  %6480 = vmatprep.subr.bf16.mxu0 0
  %6481 = vmatpush1.bf16.msra.mxu0 0
  %6482 = vmatprep.subr.bf16.mxu0 0
  %6483 = vmatpush1.bf16.msra.mxu0 0
  %6484 = vmatprep.subr.bf16.mxu0 0
  %6485 = vmatpush1.bf16.msra.mxu0 0
  %6486 = vmatprep.subr.bf16.mxu0 0
  %6487 = vmatpush1.bf16.msra.mxu0 0
  %6488 = vmatprep.subr.bf16.mxu0 0
  %6489 = vmatpush1.bf16.msra.mxu0 0
  %6490 = vmatprep.subr.bf16.mxu0 0
  %6491 = vmatpush1.bf16.msra.mxu0 0
  %6492 = vmatprep.subr.bf16.mxu0 0
  %6493 = vmatpush1.bf16.msra.mxu0 0
  %6494 = vmatprep.subr.bf16.mxu0 0
  %6495 = vmatpush1.bf16.msra.mxu0 0
  %6496 = vmatprep.subr.bf16.mxu0 0
  %6497 = vmatpush1.bf16.msra.mxu0 0
  %6498 = vmatprep.subr.bf16.mxu0 0
  %6499 = vmatpush1.bf16.msra.mxu0 0
  %6500 = vmatprep.mubr.bf16.mxu0 0
  %6501 = vmatmul.mubr.bf16.gmra.mrb[0].mxu0 %v6451
  %v6502 = vpop.f32.mrb[0].mxu0
  %v6503 = vadd.f32 0.0, %v6502
  %v6504 = vpop.f32.mrb[0].mxu0
  %v6505 = vpop.f32.mrb[0].mxu0
  %v6506 = vadd.f32 0.0, %v6505
  %v6507 = vpop.f32.mrb[0].mxu0
  %6508 = vmatprep.mubr.bf16.mxu0 0
  %6509 = vmatmul.mubr.bf16.gmra.mrb[0].mxu0 %v6454
  %v6510 = vpop.f32.mrb[0].mxu0
  %v6511 = vadd.f32 0.0, %v6510
  %v6512 = vpop.f32.mrb[0].mxu0
  %v6513 = vpop.f32.mrb[0].mxu0
  %v6514 = vadd.f32 0.0, %v6513
  %v6515 = vpop.f32.mrb[0].mxu0
  %6516 = vmatprep.mubr.bf16.mxu0 0
  %6517 = vmatmul.mubr.bf16.gmra.mrb[0].mxu0 %v6457
  %v6518 = vpop.f32.mrb[0].mxu0
  %v6519 = vadd.f32 0.0, %v6518
  %v6520 = vpop.f32.mrb[0].mxu0
  %v6521 = vpop.f32.mrb[0].mxu0
  %v6522 = vadd.f32 0.0, %v6521
  %v6523 = vpop.f32.mrb[0].mxu0
  %6524 = vmatprep.mubr.bf16.mxu0 0
  %6525 = vmatmul.mubr.bf16.gmra.mrb[0].mxu0 %v6460
  %v6526 = vpop.f32.mrb[0].mxu0
  %v6527 = vadd.f32 0.0, %v6526
  %v6528 = vpop.f32.mrb[0].mxu0
  %v6529 = vpop.f32.mrb[0].mxu0
  %v6530 = vadd.f32 0.0, %v6529
  %v6531 = vpop.f32.mrb[0].mxu0
  %6532 = vmatprep.mubr.bf16.mxu0 0
  %6533 = vmatmul.mubr.bf16.gmra.mrb[0].mxu0 %v6463
  %v6534 = vpop.f32.mrb[0].mxu0
  %v6535 = vadd.f32 0.0, %v6534
  %v6536 = vpop.f32.mrb[0].mxu0
  %v6537 = vpop.f32.mrb[0].mxu0
  %v6538 = vpop.f32.mrb[0].mxu0
  %6539 = vdwg.mxu0
  %6549 = vrot.lane.b32.xlu0 %v5731, 8
  %v6550 = vpop.permute.xlu0 %6549
  %6551 = vrot.lane.b32.xlu0 %v5734, 8
  %v6552 = vpop.permute.xlu0 %6551
  %6553 = vrot.lane.b32.xlu0 %v5739, 8
  %v6554 = vpop.permute.xlu0 %6553
  %6555 = vrot.lane.b32.xlu0 %v5742, 8
  %v6556 = vpop.permute.xlu0 %6555
  %6557 = vrot.lane.b32.xlu0 %v5747, 8
  %v6558 = vpop.permute.xlu0 %6557
  %6559 = vrot.lane.b32.xlu0 %v5750, 8
  %v6560 = vpop.permute.xlu0 %6559
  %6561 = vrot.lane.b32.xlu0 %v5755, 8
  %v6562 = vpop.permute.xlu0 %6561
  %6563 = vrot.lane.b32.xlu0 %v5758, 8
  %v6564 = vpop.permute.xlu0 %6563
  %6565 = vrot.lane.b32.xlu0 %v5763, 8
  %v6566 = vpop.permute.xlu0 %6565
  %6585 = vrot.lane.b32.xlu0 %v6117, 16
  %v6586 = vpop.permute.xlu0 %6585
  %6587 = vrot.lane.b32.xlu0 %v6120, 16
  %v6588 = vpop.permute.xlu0 %6587
  %6589 = vrot.lane.b32.xlu0 %v6125, 16
  %v6590 = vpop.permute.xlu0 %6589
  %6591 = vrot.lane.b32.xlu0 %v6128, 16
  %v6592 = vpop.permute.xlu0 %6591
  %6593 = vrot.lane.b32.xlu0 %v6133, 16
  %v6594 = vpop.permute.xlu0 %6593
  %6595 = vrot.lane.b32.xlu0 %v6136, 16
  %v6596 = vpop.permute.xlu0 %6595
  %6597 = vrot.lane.b32.xlu0 %v6141, 16
  %v6598 = vpop.permute.xlu0 %6597
  %6599 = vrot.lane.b32.xlu0 %v6144, 16
  %v6600 = vpop.permute.xlu0 %6599
  %6601 = vrot.lane.b32.xlu0 %v6149, 16
  %v6602 = vpop.permute.xlu0 %6601
  %6621 = vrot.lane.b32.xlu0 %v6503, 24
  %v6622 = vpop.permute.xlu0 %6621
  %6623 = vrot.lane.b32.xlu0 %v6506, 24
  %v6624 = vpop.permute.xlu0 %6623
  %6625 = vrot.lane.b32.xlu0 %v6511, 24
  %v6626 = vpop.permute.xlu0 %6625
  %6627 = vrot.lane.b32.xlu0 %v6514, 24
  %v6628 = vpop.permute.xlu0 %6627
  %6629 = vrot.lane.b32.xlu0 %v6519, 24
  %v6630 = vpop.permute.xlu0 %6629
  %6631 = vrot.lane.b32.xlu0 %v6522, 24
  %v6632 = vpop.permute.xlu0 %6631
  %6633 = vrot.lane.b32.xlu0 %v6527, 24
  %v6634 = vpop.permute.xlu0 %6633
  %6635 = vrot.lane.b32.xlu0 %v6530, 24
  %v6636 = vpop.permute.xlu0 %6635
  %6637 = vrot.lane.b32.xlu0 %v6535, 24
  %v6638 = vpop.permute.xlu0 %6637
  %v6648 = vsel %vm354, %v5345, %v6550
  %v6649 = vsel %vm354, %v5348, %v6552
  %v6650 = vsel %vm354, %v5353, %v6554
  %v6651 = vsel %vm354, %v5356, %v6556
  %v6652 = vsel %vm354, %v5361, %v6558
  %v6653 = vsel %vm354, %v5364, %v6560
  %v6654 = vsel %vm354, %v5369, %v6562
  %v6655 = vsel %vm354, %v5372, %v6564
  %v6656 = vsel %vm354, %v5377, %v6566
  %v6657 = vsel %vm1437, %v6648, %v6586
  %v6658 = vsel %vm1437, %v6649, %v6588
  %v6659 = vsel %vm1437, %v6650, %v6590
  %v6660 = vsel %vm1437, %v6651, %v6592
  %v6661 = vsel %vm1437, %v6652, %v6594
  %v6662 = vsel %vm1437, %v6653, %v6596
  %v6663 = vsel %vm1437, %v6654, %v6598
  %v6664 = vsel %vm1437, %v6655, %v6600
  %v6665 = vsel %vm1437, %v6656, %v6602
  %v6666 = vsel %vm1443, %v6657, %v6622
  %v6667 = vsel %vm1443, %v6658, %v6624
  %v6668 = vsel %vm1443, %v6659, %v6626
  %v6669 = vsel %vm1443, %v6660, %v6628
  %v6670 = vsel %vm1443, %v6661, %v6630
  %v6671 = vsel %vm1443, %v6662, %v6632
  %v6672 = vsel %vm1443, %v6663, %v6634
  %v6673 = vsel %vm1443, %v6664, %v6636
  %v6674 = vsel %vm1443, %v6665, %v6638
  %v6675 = vpack.c.bf16 %v6667, %v6666
  %v6676 = vpack.c.bf16 %v6669, %v6668
  %v6677 = vpack.c.bf16 %v6671, %v6670
  %v6678 = vpack.c.bf16 %v6673, %v6672
  %v6679 = vpack.c.bf16 %v6674, %v6674
  %v6680 = vpack.c.bf16 %v4718, %v4717
  %v6681 = vpack.c.bf16 %v4720, %v4719
  %v6683 = vsel %vm138, %v6675, 0
  %v6686 = vsel %vm138, %v6676, 0
  %v6689 = vsel %vm138, %v6677, 0
  %v6692 = vsel %vm138, %v6678, 0
  %v6695 = vsel %vm138, %v6679, 0
  %6697 = vmatprep.subr.bf16.mxu0 0
  %6698 = vmatpush1.bf16.msra.mxu0 %v6680
  %6699 = vmatprep.subr.bf16.mxu0 0
  %6700 = vmatpush1.bf16.msra.mxu0 %v6681
  %6701 = vmatprep.subr.bf16.mxu0 0
  %6702 = vmatpush1.bf16.msra.mxu0 0
  %6703 = vmatprep.subr.bf16.mxu0 0
  %6704 = vmatpush1.bf16.msra.mxu0 0
  %6705 = vmatprep.subr.bf16.mxu0 0
  %6706 = vmatpush1.bf16.msra.mxu0 0
  %6707 = vmatprep.subr.bf16.mxu0 0
  %6708 = vmatpush1.bf16.msra.mxu0 0
  %6709 = vmatprep.subr.bf16.mxu0 0
  %6710 = vmatpush1.bf16.msra.mxu0 0
  %6711 = vmatprep.subr.bf16.mxu0 0
  %6712 = vmatpush1.bf16.msra.mxu0 0
  %6713 = vmatprep.subr.bf16.mxu0 0
  %6714 = vmatpush1.bf16.msra.mxu0 0
  %6715 = vmatprep.subr.bf16.mxu0 0
  %6716 = vmatpush1.bf16.msra.mxu0 0
  %6717 = vmatprep.subr.bf16.mxu0 0
  %6718 = vmatpush1.bf16.msra.mxu0 0
  %6719 = vmatprep.subr.bf16.mxu0 0
  %6720 = vmatpush1.bf16.msra.mxu0 0
  %6721 = vmatprep.subr.bf16.mxu0 0
  %6722 = vmatpush1.bf16.msra.mxu0 0
  %6723 = vmatprep.subr.bf16.mxu0 0
  %6724 = vmatpush1.bf16.msra.mxu0 0
  %6725 = vmatprep.subr.bf16.mxu0 0
  %6726 = vmatpush1.bf16.msra.mxu0 0
  %6727 = vmatprep.subr.bf16.mxu0 0
  %6728 = vmatpush1.bf16.msra.mxu0 0
  %6729 = vmatprep.mubr.bf16.mxu0 0
  %6730 = vmatmul.mubr.bf16.gmra.mrb[0].mxu0 %v6683
  %v6731 = vpop.f32.mrb[0].mxu0
  %v6732 = vadd.f32 0.0, %v6731
  %v6733 = vpop.f32.mrb[0].mxu0
  %v6734 = vpop.f32.mrb[0].mxu0
  %v6735 = vadd.f32 0.0, %v6734
  %v6736 = vpop.f32.mrb[0].mxu0
  %6737 = vmatprep.mubr.bf16.mxu0 0
  %6738 = vmatmul.mubr.bf16.gmra.mrb[0].mxu0 %v6686
  %v6739 = vpop.f32.mrb[0].mxu0
  %v6740 = vadd.f32 0.0, %v6739
  %v6741 = vpop.f32.mrb[0].mxu0
  %v6742 = vpop.f32.mrb[0].mxu0
  %v6743 = vadd.f32 0.0, %v6742
  %v6744 = vpop.f32.mrb[0].mxu0
  %6745 = vmatprep.mubr.bf16.mxu0 0
  %6746 = vmatmul.mubr.bf16.gmra.mrb[0].mxu0 %v6689
  %v6747 = vpop.f32.mrb[0].mxu0
  %v6748 = vadd.f32 0.0, %v6747
  %v6749 = vpop.f32.mrb[0].mxu0
  %v6750 = vpop.f32.mrb[0].mxu0
  %v6751 = vadd.f32 0.0, %v6750
  %v6752 = vpop.f32.mrb[0].mxu0
  %6753 = vmatprep.mubr.bf16.mxu0 0
  %6754 = vmatmul.mubr.bf16.gmra.mrb[0].mxu0 %v6692
  %v6755 = vpop.f32.mrb[0].mxu0
  %v6756 = vadd.f32 0.0, %v6755
  %v6757 = vpop.f32.mrb[0].mxu0
  %v6758 = vpop.f32.mrb[0].mxu0
  %v6759 = vadd.f32 0.0, %v6758
  %v6760 = vpop.f32.mrb[0].mxu0
  %6761 = vmatprep.mubr.bf16.mxu0 0
  %6762 = vmatmul.mubr.bf16.gmra.mrb[0].mxu0 %v6695
  %v6763 = vpop.f32.mrb[0].mxu0
  %v6764 = vadd.f32 0.0, %v6763
  %v6765 = vpop.f32.mrb[0].mxu0
  %v6766 = vpop.f32.mrb[0].mxu0
  %v6767 = vpop.f32.mrb[0].mxu0
  %6768 = vdwg.mxu0
  %v6769 = vadd.f32 %v4701, %v6732
  %v6770 = vadd.f32 %v4702, %v6735
  %v6771 = vadd.f32 %v4703, %v6740
  %v6772 = vadd.f32 %v4704, %v6743
  %v6773 = vadd.f32 %v4705, %v6748
  %v6774 = vadd.f32 %v4706, %v6751
  %v6775 = vadd.f32 %v4707, %v6756
  %v6776 = vadd.f32 %v4708, %v6759
  %v6777 = vadd.f32 %v4709, %v6764
  %v6778 = vlaneseq
  %v6779 = vshrl.u32 %v6778, 7
  %v6780 = vsub.s32 0, %v6779
  %v6781 = vrot.slane %v4721, %v6780
  %v6782 = vadd.f32 %v6769, %v6781
  %v6783 = vadd.f32 %v6770, %v6781
  %v6784 = vadd.f32 %v6771, %v6781
  %v6785 = vadd.f32 %v6772, %v6781
  %v6786 = vadd.f32 %v6773, %v6781
  %v6787 = vadd.f32 %v6774, %v6781
  %v6788 = vadd.f32 %v6775, %v6781
  %v6789 = vadd.f32 %v6776, %v6781
  %v6790 = vadd.f32 %v6777, %v6781
  %v6791 = vsel %vm138, %v6782, 0.0
  %6792 = vadd.xlane.f32.xlu0 %v6791
  %v6793 = vpop.xlane.xlu0 %6792
  %v6794 = vsel %vm138, %v6783, 0.0
  %6795 = vadd.xlane.f32.xlu0 %v6794
  %v6796 = vpop.xlane.xlu0 %6795
  %v6797 = vsel %vm138, %v6784, 0.0
  %6798 = vadd.xlane.f32.xlu0 %v6797
  %v6799 = vpop.xlane.xlu0 %6798
  %v6800 = vsel %vm138, %v6785, 0.0
  %6801 = vadd.xlane.f32.xlu0 %v6800
  %v6802 = vpop.xlane.xlu0 %6801
  %v6803 = vsel %vm138, %v6786, 0.0
  %6804 = vadd.xlane.f32.xlu0 %v6803
  %v6805 = vpop.xlane.xlu0 %6804
  %v6806 = vsel %vm138, %v6787, 0.0
  %6807 = vadd.xlane.f32.xlu0 %v6806
  %v6808 = vpop.xlane.xlu0 %6807
  %v6809 = vsel %vm138, %v6788, 0.0
  %6810 = vadd.xlane.f32.xlu0 %v6809
  %v6811 = vpop.xlane.xlu0 %6810
  %v6812 = vsel %vm138, %v6789, 0.0
  %6813 = vadd.xlane.f32.xlu0 %v6812
  %v6814 = vpop.xlane.xlu0 %6813
  %v6815 = vsel %vm138, %v6790, 0.0
  %6816 = vadd.xlane.f32.xlu0 %v6815
  %v6817 = vpop.xlane.xlu0 %6816
  %v6818 = vmul.f32 %v6793, %v155
  %v6819 = vmul.f32 %v6796, %v155
  %v6820 = vmul.f32 %v6799, %v155
  %v6821 = vmul.f32 %v6802, %v155
  %v6822 = vmul.f32 %v6805, %v155
  %v6823 = vmul.f32 %v6808, %v155
  %v6824 = vmul.f32 %v6811, %v155
  %v6825 = vmul.f32 %v6814, %v155
  %v6826 = vmul.f32 %v6817, %v155
  %v6827 = vsub.f32 %v6782, %v6818
  %v6828 = vsub.f32 %v6783, %v6819
  %v6829 = vsub.f32 %v6784, %v6820
  %v6830 = vsub.f32 %v6785, %v6821
  %v6831 = vsub.f32 %v6786, %v6822
  %v6832 = vsub.f32 %v6787, %v6823
  %v6833 = vsub.f32 %v6788, %v6824
  %v6834 = vsub.f32 %v6789, %v6825
  %v6835 = vsub.f32 %v6790, %v6826
  %v6836 = vmul.f32 %v6827, %v6827
  %v6837 = vmul.f32 %v6828, %v6828
  %v6838 = vmul.f32 %v6829, %v6829
  %v6839 = vmul.f32 %v6830, %v6830
  %v6840 = vmul.f32 %v6831, %v6831
  %v6841 = vmul.f32 %v6832, %v6832
  %v6842 = vmul.f32 %v6833, %v6833
  %v6843 = vmul.f32 %v6834, %v6834
  %v6844 = vmul.f32 %v6835, %v6835
  %v6845 = vsel %vm138, %v6836, 0.0
  %6846 = vadd.xlane.f32.xlu0 %v6845
  %v6847 = vpop.xlane.xlu0 %6846
  %v6848 = vsel %vm138, %v6837, 0.0
  %6849 = vadd.xlane.f32.xlu0 %v6848
  %v6850 = vpop.xlane.xlu0 %6849
  %v6851 = vsel %vm138, %v6838, 0.0
  %6852 = vadd.xlane.f32.xlu0 %v6851
  %v6853 = vpop.xlane.xlu0 %6852
  %v6854 = vsel %vm138, %v6839, 0.0
  %6855 = vadd.xlane.f32.xlu0 %v6854
  %v6856 = vpop.xlane.xlu0 %6855
  %v6857 = vsel %vm138, %v6840, 0.0
  %6858 = vadd.xlane.f32.xlu0 %v6857
  %v6859 = vpop.xlane.xlu0 %6858
  %v6860 = vsel %vm138, %v6841, 0.0
  %6861 = vadd.xlane.f32.xlu0 %v6860
  %v6862 = vpop.xlane.xlu0 %6861
  %v6863 = vsel %vm138, %v6842, 0.0
  %6864 = vadd.xlane.f32.xlu0 %v6863
  %v6865 = vpop.xlane.xlu0 %6864
  %v6866 = vsel %vm138, %v6843, 0.0
  %6867 = vadd.xlane.f32.xlu0 %v6866
  %v6868 = vpop.xlane.xlu0 %6867
  %v6869 = vsel %vm138, %v6844, 0.0
  %6870 = vadd.xlane.f32.xlu0 %v6869
  %v6871 = vpop.xlane.xlu0 %6870
  %v6872 = vmul.f32 %v6847, %v155
  %v6873 = vmul.f32 %v6850, %v155
  %v6874 = vmul.f32 %v6853, %v155
  %v6875 = vmul.f32 %v6856, %v155
  %v6876 = vmul.f32 %v6859, %v155
  %v6877 = vmul.f32 %v6862, %v155
  %v6878 = vmul.f32 %v6865, %v155
  %v6879 = vmul.f32 %v6868, %v155
  %v6880 = vmul.f32 %v6871, %v155
  %v6881 = vadd.f32 %v6872, 1e-05
  %v6882 = vadd.f32 %v6873, 1e-05
  %v6883 = vadd.f32 %v6874, 1e-05
  %v6884 = vadd.f32 %v6875, 1e-05
  %v6885 = vadd.f32 %v6876, 1e-05
  %v6886 = vadd.f32 %v6877, 1e-05
  %v6887 = vadd.f32 %v6878, 1e-05
  %v6888 = vadd.f32 %v6879, 1e-05
  %v6889 = vadd.f32 %v6880, 1e-05
  %v6890 = vrsqrt.pop %v6881
  %v6891 = vrsqrt.pop %v6882
  %v6892 = vrsqrt.pop %v6883
  %v6893 = vrsqrt.pop %v6884
  %v6894 = vrsqrt.pop %v6885
  %v6895 = vrsqrt.pop %v6886
  %v6896 = vrsqrt.pop %v6887
  %v6897 = vrsqrt.pop %v6888
  %v6898 = vrsqrt.pop %v6889
  %v6899 = vmul.f32 %v6827, %v6890
  %v6900 = vmul.f32 %v6828, %v6891
  %v6901 = vmul.f32 %v6829, %v6892
  %v6902 = vmul.f32 %v6830, %v6893
  %v6903 = vmul.f32 %v6831, %v6894
  %v6904 = vmul.f32 %v6832, %v6895
  %v6905 = vmul.f32 %v6833, %v6896
  %v6906 = vmul.f32 %v6834, %v6897
  %v6907 = vmul.f32 %v6835, %v6898
  %v6908 = vlaneseq
  %v6909 = vshrl.u32 %v6908, 7
  %v6910 = vsub.s32 0, %v6909
  %v6911 = vrot.slane %v4722, %v6910
  %v6912 = vmul.f32 %v6899, %v6911
  %v6913 = vmul.f32 %v6900, %v6911
  %v6914 = vmul.f32 %v6901, %v6911
  %v6915 = vmul.f32 %v6902, %v6911
  %v6916 = vmul.f32 %v6903, %v6911
  %v6917 = vmul.f32 %v6904, %v6911
  %v6918 = vmul.f32 %v6905, %v6911
  %v6919 = vmul.f32 %v6906, %v6911
  %v6920 = vmul.f32 %v6907, %v6911
  %v6921 = vlaneseq
  %v6922 = vshrl.u32 %v6921, 7
  %v6923 = vsub.s32 0, %v6922
  %v6924 = vrot.slane %v4723, %v6923
  %v6925 = vadd.f32 %v6912, %v6924
  %v6926 = vadd.f32 %v6913, %v6924
  %v6927 = vadd.f32 %v6914, %v6924
  %v6928 = vadd.f32 %v6915, %v6924
  %v6929 = vadd.f32 %v6916, %v6924
  %v6930 = vadd.f32 %v6917, %v6924
  %v6931 = vadd.f32 %v6918, %v6924
  %v6932 = vadd.f32 %v6919, %v6924
  %v6933 = vadd.f32 %v6920, %v6924
  %v6934 = vpack.c.bf16 %v6926, %v6925
  %v6935 = vpack.c.bf16 %v6928, %v6927
  %v6936 = vpack.c.bf16 %v6930, %v6929
  %v6937 = vpack.c.bf16 %v6932, %v6931
  %v6938 = vpack.c.bf16 %v6933, %v6933
  %v6939 = vpack.c.bf16 %v4725, %v4724
  %v6940 = vpack.c.bf16 %v4727, %v4726
  %v6941 = vlaneseq
  %v6942 = vshrl.u32 %v6941, 7
  %v6943 = vsub.s32 0, %v6942
  %v6944 = vrot.slane %v4728, %v6943
  %v6946 = vsel %vm138, %v6934, 0
  %v6949 = vsel %vm138, %v6935, 0
  %v6952 = vsel %vm138, %v6936, 0
  %v6955 = vsel %vm138, %v6937, 0
  %v6958 = vsel %vm138, %v6938, 0
  %6960 = vmatprep.subr.bf16.mxu0 0
  %6961 = vmatpush1.bf16.msra.mxu0 %v6939
  %6962 = vmatprep.subr.bf16.mxu0 0
  %6963 = vmatpush1.bf16.msra.mxu0 %v6940
  %6964 = vmatprep.subr.bf16.mxu0 0
  %6965 = vmatpush1.bf16.msra.mxu0 0
  %6966 = vmatprep.subr.bf16.mxu0 0
  %6967 = vmatpush1.bf16.msra.mxu0 0
  %6968 = vmatprep.subr.bf16.mxu0 0
  %6969 = vmatpush1.bf16.msra.mxu0 0
  %6970 = vmatprep.subr.bf16.mxu0 0
  %6971 = vmatpush1.bf16.msra.mxu0 0
  %6972 = vmatprep.subr.bf16.mxu0 0
  %6973 = vmatpush1.bf16.msra.mxu0 0
  %6974 = vmatprep.subr.bf16.mxu0 0
  %6975 = vmatpush1.bf16.msra.mxu0 0
  %6976 = vmatprep.subr.bf16.mxu0 0
  %6977 = vmatpush1.bf16.msra.mxu0 0
  %6978 = vmatprep.subr.bf16.mxu0 0
  %6979 = vmatpush1.bf16.msra.mxu0 0
  %6980 = vmatprep.subr.bf16.mxu0 0
  %6981 = vmatpush1.bf16.msra.mxu0 0
  %6982 = vmatprep.subr.bf16.mxu0 0
  %6983 = vmatpush1.bf16.msra.mxu0 0
  %6984 = vmatprep.subr.bf16.mxu0 0
  %6985 = vmatpush1.bf16.msra.mxu0 0
  %6986 = vmatprep.subr.bf16.mxu0 0
  %6987 = vmatpush1.bf16.msra.mxu0 0
  %6988 = vmatprep.subr.bf16.mxu0 0
  %6989 = vmatpush1.bf16.msra.mxu0 0
  %6990 = vmatprep.subr.bf16.mxu0 0
  %6991 = vmatpush1.bf16.msra.mxu0 0
  %6992 = vmatprep.mubr.bf16.mxu0 0
  %6993 = vmatmul.mubr.bf16.gmra.mrb[0].mxu0 %v6946
  %v6994 = vpop.f32.mrb[0].mxu0
  %v6995 = vadd.f32 %v6944, %v6994
  %v6996 = vpop.f32.mrb[0].mxu0
  %v6997 = vpop.f32.mrb[0].mxu0
  %v6998 = vadd.f32 %v6944, %v6997
  %v6999 = vpop.f32.mrb[0].mxu0
  %7000 = vmatprep.mubr.bf16.mxu0 0
  %7001 = vmatmul.mubr.bf16.gmra.mrb[0].mxu0 %v6949
  %v7002 = vpop.f32.mrb[0].mxu0
  %v7003 = vadd.f32 %v6944, %v7002
  %v7004 = vpop.f32.mrb[0].mxu0
  %v7005 = vpop.f32.mrb[0].mxu0
  %v7006 = vadd.f32 %v6944, %v7005
  %v7007 = vpop.f32.mrb[0].mxu0
  %7008 = vmatprep.mubr.bf16.mxu0 0
  %7009 = vmatmul.mubr.bf16.gmra.mrb[0].mxu0 %v6952
  %v7010 = vpop.f32.mrb[0].mxu0
  %v7011 = vadd.f32 %v6944, %v7010
  %v7012 = vpop.f32.mrb[0].mxu0
  %v7013 = vpop.f32.mrb[0].mxu0
  %v7014 = vadd.f32 %v6944, %v7013
  %v7015 = vpop.f32.mrb[0].mxu0
  %7016 = vmatprep.mubr.bf16.mxu0 0
  %7017 = vmatmul.mubr.bf16.gmra.mrb[0].mxu0 %v6955
  %v7018 = vpop.f32.mrb[0].mxu0
  %v7019 = vadd.f32 %v6944, %v7018
  %v7020 = vpop.f32.mrb[0].mxu0
  %v7021 = vpop.f32.mrb[0].mxu0
  %v7022 = vadd.f32 %v6944, %v7021
  %v7023 = vpop.f32.mrb[0].mxu0
  %7024 = vmatprep.mubr.bf16.mxu0 0
  %7025 = vmatmul.mubr.bf16.gmra.mrb[0].mxu0 %v6958
  %v7026 = vpop.f32.mrb[0].mxu0
  %v7027 = vadd.f32 %v6944, %v7026
  %v7028 = vpop.f32.mrb[0].mxu0
  %v7029 = vpop.f32.mrb[0].mxu0
  %v7030 = vpop.f32.mrb[0].mxu0
  %7031 = vdwg.mxu0
  %v7032 = vmul.f32 %v6995, 1.702
  %v7033 = vmul.f32 %v6998, 1.702
  %v7034 = vmul.f32 %v7003, 1.702
  %v7035 = vmul.f32 %v7006, 1.702
  %v7036 = vmul.f32 %v7011, 1.702
  %v7037 = vmul.f32 %v7014, 1.702
  %v7038 = vmul.f32 %v7019, 1.702
  %v7039 = vmul.f32 %v7022, 1.702
  %v7040 = vmul.f32 %v7027, 1.702
  %v7041 = vxor.u32 %v7032, 2147483648
  %v7042 = vxor.u32 %v7033, 2147483648
  %v7043 = vxor.u32 %v7034, 2147483648
  %v7044 = vxor.u32 %v7035, 2147483648
  %v7045 = vxor.u32 %v7036, 2147483648
  %v7046 = vxor.u32 %v7037, 2147483648
  %v7047 = vxor.u32 %v7038, 2147483648
  %v7048 = vxor.u32 %v7039, 2147483648
  %v7049 = vxor.u32 %v7040, 2147483648
  %v7050 = vmul.f32 %v7041, 1.442695
  %v7051 = vpow.pop %v7050
  %v7052 = vmul.f32 %v7042, 1.442695
  %v7053 = vpow.pop %v7052
  %v7054 = vmul.f32 %v7043, 1.442695
  %v7055 = vpow.pop %v7054
  %v7056 = vmul.f32 %v7044, 1.442695
  %v7057 = vpow.pop %v7056
  %v7058 = vmul.f32 %v7045, 1.442695
  %v7059 = vpow.pop %v7058
  %v7060 = vmul.f32 %v7046, 1.442695
  %v7061 = vpow.pop %v7060
  %v7062 = vmul.f32 %v7047, 1.442695
  %v7063 = vpow.pop %v7062
  %v7064 = vmul.f32 %v7048, 1.442695
  %v7065 = vpow.pop %v7064
  %v7066 = vmul.f32 %v7049, 1.442695
  %v7067 = vpow.pop %v7066
  %v7068 = vadd.f32 %v7051, 1.0
  %v7069 = vadd.f32 %v7053, 1.0
  %v7070 = vadd.f32 %v7055, 1.0
  %v7071 = vadd.f32 %v7057, 1.0
  %v7072 = vadd.f32 %v7059, 1.0
  %v7073 = vadd.f32 %v7061, 1.0
  %v7074 = vadd.f32 %v7063, 1.0
  %v7075 = vadd.f32 %v7065, 1.0
  %v7076 = vadd.f32 %v7067, 1.0
  %v7077 = vrcp.pop %v7068
  %v7078 = vmul.f32 1.0, %v7077
  %v7079 = vrcp.pop %v7069
  %v7080 = vmul.f32 1.0, %v7079
  %v7081 = vrcp.pop %v7070
  %v7082 = vmul.f32 1.0, %v7081
  %v7083 = vrcp.pop %v7071
  %v7084 = vmul.f32 1.0, %v7083
  %v7085 = vrcp.pop %v7072
  %v7086 = vmul.f32 1.0, %v7085
  %v7087 = vrcp.pop %v7073
  %v7088 = vmul.f32 1.0, %v7087
  %v7089 = vrcp.pop %v7074
  %v7090 = vmul.f32 1.0, %v7089
  %v7091 = vrcp.pop %v7075
  %v7092 = vmul.f32 1.0, %v7091
  %v7093 = vrcp.pop %v7076
  %v7094 = vmul.f32 1.0, %v7093
  %v7095 = vmul.f32 %v6995, %v7078
  %v7096 = vmul.f32 %v6998, %v7080
  %v7097 = vmul.f32 %v7003, %v7082
  %v7098 = vmul.f32 %v7006, %v7084
  %v7099 = vmul.f32 %v7011, %v7086
  %v7100 = vmul.f32 %v7014, %v7088
  %v7101 = vmul.f32 %v7019, %v7090
  %v7102 = vmul.f32 %v7022, %v7092
  %v7103 = vmul.f32 %v7027, %v7094
  %v7104 = vpack.c.bf16 %v7096, %v7095
  %v7105 = vpack.c.bf16 %v7098, %v7097
  %v7106 = vpack.c.bf16 %v7100, %v7099
  %v7107 = vpack.c.bf16 %v7102, %v7101
  %v7108 = vpack.c.bf16 %v7103, %v7103
  %v7109 = vpack.c.bf16 %v4730, %v4729
  %v7110 = vpack.c.bf16 %v4732, %v4731
  %v7111 = vpack.c.bf16 %v4734, %v4733
  %v7112 = vpack.c.bf16 %v4736, %v4735
  %v7113 = vpack.c.bf16 %v4738, %v4737
  %v7114 = vpack.c.bf16 %v4740, %v4739
  %v7115 = vpack.c.bf16 %v4742, %v4741
  %v7116 = vpack.c.bf16 %v4744, %v4743
  %7117 = vmatprep.subr.bf16.mxu0 0
  %7118 = vmatpush1.bf16.msra.mxu0 %v7109
  %7119 = vmatprep.subr.bf16.mxu0 0
  %7120 = vmatpush1.bf16.msra.mxu0 %v7110
  %7121 = vmatprep.subr.bf16.mxu0 0
  %7122 = vmatpush1.bf16.msra.mxu0 %v7111
  %7123 = vmatprep.subr.bf16.mxu0 0
  %7124 = vmatpush1.bf16.msra.mxu0 %v7112
  %7125 = vmatprep.subr.bf16.mxu0 0
  %7126 = vmatpush1.bf16.msra.mxu0 %v7113
  %7127 = vmatprep.subr.bf16.mxu0 0
  %7128 = vmatpush1.bf16.msra.mxu0 %v7114
  %7129 = vmatprep.subr.bf16.mxu0 0
  %7130 = vmatpush1.bf16.msra.mxu0 %v7115
  %7131 = vmatprep.subr.bf16.mxu0 0
  %7132 = vmatpush1.bf16.msra.mxu0 %v7116
  %7133 = vmatprep.subr.bf16.mxu0 0
  %7134 = vmatpush1.bf16.msra.mxu0 0
  %7135 = vmatprep.subr.bf16.mxu0 0
  %7136 = vmatpush1.bf16.msra.mxu0 0
  %7137 = vmatprep.subr.bf16.mxu0 0
  %7138 = vmatpush1.bf16.msra.mxu0 0
  %7139 = vmatprep.subr.bf16.mxu0 0
  %7140 = vmatpush1.bf16.msra.mxu0 0
  %7141 = vmatprep.subr.bf16.mxu0 0
  %7142 = vmatpush1.bf16.msra.mxu0 0
  %7143 = vmatprep.subr.bf16.mxu0 0
  %7144 = vmatpush1.bf16.msra.mxu0 0
  %7145 = vmatprep.subr.bf16.mxu0 0
  %7146 = vmatpush1.bf16.msra.mxu0 0
  %7147 = vmatprep.subr.bf16.mxu0 0
  %7148 = vmatpush1.bf16.msra.mxu0 0
  %7149 = vmatprep.mubr.bf16.mxu0 0
  %7150 = vmatmul.mubr.bf16.gmra.mrb[0].mxu0 %v7104
  %v7151 = vpop.f32.mrb[0].mxu0
  %v7152 = vadd.f32 0.0, %v7151
  %v7153 = vpop.f32.mrb[0].mxu0
  %v7154 = vpop.f32.mrb[0].mxu0
  %v7155 = vadd.f32 0.0, %v7154
  %v7156 = vpop.f32.mrb[0].mxu0
  %7157 = vmatprep.mubr.bf16.mxu0 0
  %7158 = vmatmul.mubr.bf16.gmra.mrb[0].mxu0 %v7105
  %v7159 = vpop.f32.mrb[0].mxu0
  %v7160 = vadd.f32 0.0, %v7159
  %v7161 = vpop.f32.mrb[0].mxu0
  %v7162 = vpop.f32.mrb[0].mxu0
  %v7163 = vadd.f32 0.0, %v7162
  %v7164 = vpop.f32.mrb[0].mxu0
  %7165 = vmatprep.mubr.bf16.mxu0 0
  %7166 = vmatmul.mubr.bf16.gmra.mrb[0].mxu0 %v7106
  %v7167 = vpop.f32.mrb[0].mxu0
  %v7168 = vadd.f32 0.0, %v7167
  %v7169 = vpop.f32.mrb[0].mxu0
  %v7170 = vpop.f32.mrb[0].mxu0
  %v7171 = vadd.f32 0.0, %v7170
  %v7172 = vpop.f32.mrb[0].mxu0
  %7173 = vmatprep.mubr.bf16.mxu0 0
  %7174 = vmatmul.mubr.bf16.gmra.mrb[0].mxu0 %v7107
  %v7175 = vpop.f32.mrb[0].mxu0
  %v7176 = vadd.f32 0.0, %v7175
  %v7177 = vpop.f32.mrb[0].mxu0
  %v7178 = vpop.f32.mrb[0].mxu0
  %v7179 = vadd.f32 0.0, %v7178
  %v7180 = vpop.f32.mrb[0].mxu0
  %7181 = vmatprep.mubr.bf16.mxu0 0
  %7182 = vmatmul.mubr.bf16.gmra.mrb[0].mxu0 %v7108
  %v7183 = vpop.f32.mrb[0].mxu0
  %v7184 = vadd.f32 0.0, %v7183
  %v7185 = vpop.f32.mrb[0].mxu0
  %v7186 = vpop.f32.mrb[0].mxu0
  %v7187 = vpop.f32.mrb[0].mxu0
  %7188 = vdwg.mxu0
  %v7189 = vadd.f32 %v6782, %v7152
  %v7190 = vadd.f32 %v6783, %v7155
  %v7191 = vadd.f32 %v6784, %v7160
  %v7192 = vadd.f32 %v6785, %v7163
  %v7193 = vadd.f32 %v6786, %v7168
  %v7194 = vadd.f32 %v6787, %v7171
  %v7195 = vadd.f32 %v6788, %v7176
  %v7196 = vadd.f32 %v6789, %v7179
  %v7197 = vadd.f32 %v6790, %v7184
  %v7198 = vlaneseq
  %v7199 = vshrl.u32 %v7198, 7
  %v7200 = vsub.s32 0, %v7199
  %v7201 = vrot.slane %v4745, %v7200
  %v7202 = vadd.f32 %v7189, %v7201
  %v7203 = vadd.f32 %v7190, %v7201
  %v7204 = vadd.f32 %v7191, %v7201
  %v7205 = vadd.f32 %v7192, %v7201
  %v7206 = vadd.f32 %v7193, %v7201
  %v7207 = vadd.f32 %v7194, %v7201
  %v7208 = vadd.f32 %v7195, %v7201
  %v7209 = vadd.f32 %v7196, %v7201
  %v7210 = vadd.f32 %v7197, %v7201
  %v7211 = vld [vmem:[%s0 + $0x1d0] sm:$0x1]
  %v7212 = vld [vmem:[%s0 + $0x1d8] sm:$0x1]
  %v7213 = vsel %vm138, %v7202, 0.0
  %7214 = vadd.xlane.f32.xlu0 %v7213
  %v7215 = vpop.xlane.xlu0 %7214
  %v7216 = vsel %vm138, %v7203, 0.0
  %7217 = vadd.xlane.f32.xlu0 %v7216
  %v7218 = vpop.xlane.xlu0 %7217
  %v7219 = vsel %vm138, %v7204, 0.0
  %7220 = vadd.xlane.f32.xlu0 %v7219
  %v7221 = vpop.xlane.xlu0 %7220
  %v7222 = vsel %vm138, %v7205, 0.0
  %7223 = vadd.xlane.f32.xlu0 %v7222
  %v7224 = vpop.xlane.xlu0 %7223
  %v7225 = vsel %vm138, %v7206, 0.0
  %7226 = vadd.xlane.f32.xlu0 %v7225
  %v7227 = vpop.xlane.xlu0 %7226
  %v7228 = vsel %vm138, %v7207, 0.0
  %7229 = vadd.xlane.f32.xlu0 %v7228
  %v7230 = vpop.xlane.xlu0 %7229
  %v7231 = vsel %vm138, %v7208, 0.0
  %7232 = vadd.xlane.f32.xlu0 %v7231
  %v7233 = vpop.xlane.xlu0 %7232
  %v7234 = vsel %vm138, %v7209, 0.0
  %7235 = vadd.xlane.f32.xlu0 %v7234
  %v7236 = vpop.xlane.xlu0 %7235
  %v7237 = vsel %vm138, %v7210, 0.0
  %7238 = vadd.xlane.f32.xlu0 %v7237
  %v7239 = vpop.xlane.xlu0 %7238
  %v7240 = vmul.f32 %v7215, %v155
  %v7241 = vmul.f32 %v7218, %v155
  %v7242 = vmul.f32 %v7221, %v155
  %v7243 = vmul.f32 %v7224, %v155
  %v7244 = vmul.f32 %v7227, %v155
  %v7245 = vmul.f32 %v7230, %v155
  %v7246 = vmul.f32 %v7233, %v155
  %v7247 = vmul.f32 %v7236, %v155
  %v7248 = vmul.f32 %v7239, %v155
  %v7249 = vsub.f32 %v7202, %v7240
  %v7250 = vsub.f32 %v7203, %v7241
  %v7251 = vsub.f32 %v7204, %v7242
  %v7252 = vsub.f32 %v7205, %v7243
  %v7253 = vsub.f32 %v7206, %v7244
  %v7254 = vsub.f32 %v7207, %v7245
  %v7255 = vsub.f32 %v7208, %v7246
  %v7256 = vsub.f32 %v7209, %v7247
  %v7257 = vsub.f32 %v7210, %v7248
  %v7258 = vmul.f32 %v7249, %v7249
  %v7259 = vmul.f32 %v7250, %v7250
  %v7260 = vmul.f32 %v7251, %v7251
  %v7261 = vmul.f32 %v7252, %v7252
  %v7262 = vmul.f32 %v7253, %v7253
  %v7263 = vmul.f32 %v7254, %v7254
  %v7264 = vmul.f32 %v7255, %v7255
  %v7265 = vmul.f32 %v7256, %v7256
  %v7266 = vmul.f32 %v7257, %v7257
  %v7267 = vsel %vm138, %v7258, 0.0
  %7268 = vadd.xlane.f32.xlu0 %v7267
  %v7269 = vpop.xlane.xlu0 %7268
  %v7270 = vsel %vm138, %v7259, 0.0
  %7271 = vadd.xlane.f32.xlu0 %v7270
  %v7272 = vpop.xlane.xlu0 %7271
  %v7273 = vsel %vm138, %v7260, 0.0
  %7274 = vadd.xlane.f32.xlu0 %v7273
  %v7275 = vpop.xlane.xlu0 %7274
  %v7276 = vsel %vm138, %v7261, 0.0
  %7277 = vadd.xlane.f32.xlu0 %v7276
  %v7278 = vpop.xlane.xlu0 %7277
  %v7279 = vsel %vm138, %v7262, 0.0
  %7280 = vadd.xlane.f32.xlu0 %v7279
  %v7281 = vpop.xlane.xlu0 %7280
  %v7282 = vsel %vm138, %v7263, 0.0
  %7283 = vadd.xlane.f32.xlu0 %v7282
  %v7284 = vpop.xlane.xlu0 %7283
  %v7285 = vsel %vm138, %v7264, 0.0
  %7286 = vadd.xlane.f32.xlu0 %v7285
  %v7287 = vpop.xlane.xlu0 %7286
  %v7288 = vsel %vm138, %v7265, 0.0
  %7289 = vadd.xlane.f32.xlu0 %v7288
  %v7290 = vpop.xlane.xlu0 %7289
  %v7291 = vsel %vm138, %v7266, 0.0
  %7292 = vadd.xlane.f32.xlu0 %v7291
  %v7293 = vpop.xlane.xlu0 %7292
  %v7294 = vmul.f32 %v7269, %v155
  %v7295 = vmul.f32 %v7272, %v155
  %v7296 = vmul.f32 %v7275, %v155
  %v7297 = vmul.f32 %v7278, %v155
  %v7298 = vmul.f32 %v7281, %v155
  %v7299 = vmul.f32 %v7284, %v155
  %v7300 = vmul.f32 %v7287, %v155
  %v7301 = vmul.f32 %v7290, %v155
  %v7302 = vmul.f32 %v7293, %v155
  %v7303 = vadd.f32 %v7294, 1e-05
  %v7304 = vadd.f32 %v7295, 1e-05
  %v7305 = vadd.f32 %v7296, 1e-05
  %v7306 = vadd.f32 %v7297, 1e-05
  %v7307 = vadd.f32 %v7298, 1e-05
  %v7308 = vadd.f32 %v7299, 1e-05
  %v7309 = vadd.f32 %v7300, 1e-05
  %v7310 = vadd.f32 %v7301, 1e-05
  %v7311 = vadd.f32 %v7302, 1e-05
  %v7312 = vrsqrt.pop %v7303
  %v7313 = vrsqrt.pop %v7304
  %v7314 = vrsqrt.pop %v7305
  %v7315 = vrsqrt.pop %v7306
  %v7316 = vrsqrt.pop %v7307
  %v7317 = vrsqrt.pop %v7308
  %v7318 = vrsqrt.pop %v7309
  %v7319 = vrsqrt.pop %v7310
  %v7320 = vrsqrt.pop %v7311
  %v7321 = vmul.f32 %v7249, %v7312
  %v7322 = vmul.f32 %v7250, %v7313
  %v7323 = vmul.f32 %v7251, %v7314
  %v7324 = vmul.f32 %v7252, %v7315
  %v7325 = vmul.f32 %v7253, %v7316
  %v7326 = vmul.f32 %v7254, %v7317
  %v7327 = vmul.f32 %v7255, %v7318
  %v7328 = vmul.f32 %v7256, %v7319
  %v7329 = vmul.f32 %v7257, %v7320
  %v7330 = vlaneseq
  %v7331 = vshrl.u32 %v7330, 7
  %v7332 = vsub.s32 0, %v7331
  %v7333 = vrot.slane %v7211, %v7332
  %v7334 = vmul.f32 %v7321, %v7333
  %v7335 = vmul.f32 %v7322, %v7333
  %v7336 = vmul.f32 %v7323, %v7333
  %v7337 = vmul.f32 %v7324, %v7333
  %v7338 = vmul.f32 %v7325, %v7333
  %v7339 = vmul.f32 %v7326, %v7333
  %v7340 = vmul.f32 %v7327, %v7333
  %v7341 = vmul.f32 %v7328, %v7333
  %v7342 = vmul.f32 %v7329, %v7333
  %v7343 = vlaneseq
  %v7344 = vshrl.u32 %v7343, 7
  %v7345 = vsub.s32 0, %v7344
  %v7346 = vrot.slane %v7212, %v7345
  %v7347 = vadd.f32 %v7334, %v7346
  %v7348 = vadd.f32 %v7335, %v7346
  %v7349 = vadd.f32 %v7336, %v7346
  %v7350 = vadd.f32 %v7337, %v7346
  %v7351 = vadd.f32 %v7338, %v7346
  %v7352 = vadd.f32 %v7339, %v7346
  %v7353 = vadd.f32 %v7340, %v7346
  %v7354 = vadd.f32 %v7341, %v7346
  %v7355 = vadd.f32 %v7342, %v7346
  %v7356 = vld [vmem:[%s0 + $0x1e0] sm:$0x3f]
  %v7358 = vsel %vm2667, %v7356, 0
  %7360 = vmatprep.subr.mxu0 0.0
  %7361 = vmatpush1.msra.mxu0 %v7347
  %7362 = vmatprep.subr.mxu0 0.0
  %7363 = vmatpush1.msra.mxu0 %v7348
  %7364 = vmatprep.subr.mxu0 0.0
  %7365 = vmatpush1.msra.mxu0 %v7349
  %7366 = vmatprep.subr.mxu0 0.0
  %7367 = vmatpush1.msra.mxu0 %v7350
  %7368 = vmatprep.subr.mxu0 0.0
  %7369 = vmatpush1.msra.mxu0 %v7351
  %7370 = vmatprep.subr.mxu0 0.0
  %7371 = vmatpush1.msra.mxu0 %v7352
  %7372 = vmatprep.subr.mxu0 0.0
  %7373 = vmatpush1.msra.mxu0 %v7353
  %7374 = vmatprep.subr.mxu0 0.0
  %7375 = vmatpush1.msra.mxu0 %v7354
  %7376 = vmatprep.subr.mxu0 0.0
  %7377 = vmatpush1.msra.mxu0 %v7355
  %7378 = vmatprep.subr.mxu0 0.0
  %7379 = vmatpush1.msra.mxu0 0.0
  %7380 = vmatprep.subr.mxu0 0.0
  %7381 = vmatpush1.msra.mxu0 0.0
  %7382 = vmatprep.subr.mxu0 0.0
  %7383 = vmatpush1.msra.mxu0 0.0
  %7384 = vmatprep.subr.mxu0 0.0
  %7385 = vmatpush1.msra.mxu0 0.0
  %7386 = vmatprep.subr.mxu0 0.0
  %7387 = vmatpush1.msra.mxu0 0.0
  %7388 = vmatprep.subr.mxu0 0.0
  %7389 = vmatpush1.msra.mxu0 0.0
  %7390 = vmatprep.subr.mxu0 0.0
  %7391 = vmatpush1.msra.mxu0 0.0
  %7392 = vmatprep.subr.mxu0 0.0
  %7393 = vmatpush1.msra.mxu0 0.0
  %7394 = vmatprep.subr.mxu0 0.0
  %7395 = vmatpush1.msra.mxu0 0.0
  %7396 = vmatprep.subr.mxu0 0.0
  %7397 = vmatpush1.msra.mxu0 0.0
  %7398 = vmatprep.subr.mxu0 0.0
  %7399 = vmatpush1.msra.mxu0 0.0
  %7400 = vmatprep.subr.mxu0 0.0
  %7401 = vmatpush1.msra.mxu0 0.0
  %7402 = vmatprep.subr.mxu0 0.0
  %7403 = vmatpush1.msra.mxu0 0.0
  %7404 = vmatprep.subr.mxu0 0.0
  %7405 = vmatpush1.msra.mxu0 0.0
  %7406 = vmatprep.subr.mxu0 0.0
  %7407 = vmatpush1.msra.mxu0 0.0
  %7408 = vmatprep.subr.mxu0 0.0
  %7409 = vmatpush1.msra.mxu0 0.0
  %7410 = vmatprep.subr.mxu0 0.0
  %7411 = vmatpush1.msra.mxu0 0.0
  %7412 = vmatprep.subr.mxu0 0.0
  %7413 = vmatpush1.msra.mxu0 0.0
  %7414 = vmatprep.subr.mxu0 0.0
  %7415 = vmatpush1.msra.mxu0 0.0
  %7416 = vmatprep.subr.mxu0 0.0
  %7417 = vmatpush1.msra.mxu0 0.0
  %7418 = vmatprep.subr.mxu0 0.0
  %7419 = vmatpush1.msra.mxu0 0.0
  %7420 = vmatprep.subr.mxu0 0.0
  %7421 = vmatpush1.msra.mxu0 0.0
  %7422 = vmatprep.subr.mxu0 0.0
  %7423 = vmatpush1.msra.mxu0 0.0
  %7424 = vmatprep.mubr.f32.mxu0 0.0
  %7425 = vmatmul.mubr.f32.gmra.mrb[0].mxu0 %v7358
  %v7426 = vpop.f32.mrb[0].mxu0
  %v7427 = vadd.f32 0.0, %v7426
  %v7428 = vpop.f32.mrb[0].mxu0
  %7429 = vdwg.mxu0
  %v7430 = vld [vmem:[%s0 + $0x1e8] sm:$0xff]
  %v7431 = vld [vmem:[%s0 + $0x1f0] sm:$0xff]
  %v7432 = vld [vmem:[%s0 + $0x1f8] sm:$0xff]
  %v7433 = vld [vmem:[%s0 + $0x200] sm:$0xff]
  %v7435 = vsel %vm138, %v7427, 0
  %7437 = vmatprep.subr.mxu0 0.0
  %7438 = vmatpush1.msra.mxu0 %v7430
  %7439 = vmatprep.subr.mxu0 0.0
  %7440 = vmatpush1.msra.mxu0 %v7431
  %7441 = vmatprep.subr.mxu0 0.0
  %7442 = vmatpush1.msra.mxu0 %v7432
  %7443 = vmatprep.subr.mxu0 0.0
  %7444 = vmatpush1.msra.mxu0 %v7433
  %7445 = vmatprep.subr.mxu0 0.0
  %7446 = vmatpush1.msra.mxu0 0.0
  %7447 = vmatprep.subr.mxu0 0.0
  %7448 = vmatpush1.msra.mxu0 0.0
  %7449 = vmatprep.subr.mxu0 0.0
  %7450 = vmatpush1.msra.mxu0 0.0
  %7451 = vmatprep.subr.mxu0 0.0
  %7452 = vmatpush1.msra.mxu0 0.0
  %7453 = vmatprep.subr.mxu0 0.0
  %7454 = vmatpush1.msra.mxu0 0.0
  %7455 = vmatprep.subr.mxu0 0.0
  %7456 = vmatpush1.msra.mxu0 0.0
  %7457 = vmatprep.subr.mxu0 0.0
  %7458 = vmatpush1.msra.mxu0 0.0
  %7459 = vmatprep.subr.mxu0 0.0
  %7460 = vmatpush1.msra.mxu0 0.0
  %7461 = vmatprep.subr.mxu0 0.0
  %7462 = vmatpush1.msra.mxu0 0.0
  %7463 = vmatprep.subr.mxu0 0.0
  %7464 = vmatpush1.msra.mxu0 0.0
  %7465 = vmatprep.subr.mxu0 0.0
  %7466 = vmatpush1.msra.mxu0 0.0
  %7467 = vmatprep.subr.mxu0 0.0
  %7468 = vmatpush1.msra.mxu0 0.0
  %7469 = vmatprep.subr.mxu0 0.0
  %7470 = vmatpush1.msra.mxu0 0.0
  %7471 = vmatprep.subr.mxu0 0.0
  %7472 = vmatpush1.msra.mxu0 0.0
  %7473 = vmatprep.subr.mxu0 0.0
  %7474 = vmatpush1.msra.mxu0 0.0
  %7475 = vmatprep.subr.mxu0 0.0
  %7476 = vmatpush1.msra.mxu0 0.0
  %7477 = vmatprep.subr.mxu0 0.0
  %7478 = vmatpush1.msra.mxu0 0.0
  %7479 = vmatprep.subr.mxu0 0.0
  %7480 = vmatpush1.msra.mxu0 0.0
  %7481 = vmatprep.subr.mxu0 0.0
  %7482 = vmatpush1.msra.mxu0 0.0
  %7483 = vmatprep.subr.mxu0 0.0
  %7484 = vmatpush1.msra.mxu0 0.0
  %7485 = vmatprep.subr.mxu0 0.0
  %7486 = vmatpush1.msra.mxu0 0.0
  %7487 = vmatprep.subr.mxu0 0.0
  %7488 = vmatpush1.msra.mxu0 0.0
  %7489 = vmatprep.subr.mxu0 0.0
  %7490 = vmatpush1.msra.mxu0 0.0
  %7491 = vmatprep.subr.mxu0 0.0
  %7492 = vmatpush1.msra.mxu0 0.0
  %7493 = vmatprep.subr.mxu0 0.0
  %7494 = vmatpush1.msra.mxu0 0.0
  %7495 = vmatprep.subr.mxu0 0.0
  %7496 = vmatpush1.msra.mxu0 0.0
  %7497 = vmatprep.subr.mxu0 0.0
  %7498 = vmatpush1.msra.mxu0 0.0
  %7499 = vmatprep.subr.mxu0 0.0
  %7500 = vmatpush1.msra.mxu0 0.0
  %7501 = vmatprep.mubr.f32.mxu0 0.0
  %7502 = vmatmul.mubr.f32.gmra.mrb[0].mxu0 %v7435
  %v7503 = vpop.f32.mrb[0].mxu0
  %v7504 = vadd.f32 0.0, %v7503
  %v7505 = vpop.f32.mrb[0].mxu0
  %7506 = vdwg.mxu0
  %v7507 = vmul.f32 %v7504, %v7504
  %vm7508 = vcmask 259072
  %v7509 = vsel %vm7508, %v7507, 0.0
  %7510 = vadd.xlane.f32.xlu0 %v7509
  %v7511 = vpop.xlane.xlu0 %7510
  %v7512 = vrsqrt.pop %v7511
  %v7513 = vmul.f32 %v7504, %v7512
  %v7515 = vsel %vm138, %v1910, 0
  %v7518 = vsel %vm138, %v7513, 0
  %7520 = vmatprep.subr.mxu0 0.0
  %7521 = vmatpush1.xpose.msra.mxu0 %v7518
  %7522 = vmatprep.subr.mxu0 0.0
  %7523 = vmatpush1.xpose.msra.mxu0 0.0
  %7524 = vmatprep.subr.mxu0 0.0
  %7525 = vmatpush1.xpose.msra.mxu0 0.0
  %7526 = vmatprep.subr.mxu0 0.0
  %7527 = vmatpush1.xpose.msra.mxu0 0.0
  %7528 = vmatprep.subr.mxu0 0.0
  %7529 = vmatpush1.xpose.msra.mxu0 0.0
  %7530 = vmatprep.subr.mxu0 0.0
  %7531 = vmatpush1.xpose.msra.mxu0 0.0
  %7532 = vmatprep.subr.mxu0 0.0
  %7533 = vmatpush1.xpose.msra.mxu0 0.0
  %7534 = vmatprep.subr.mxu0 0.0
  %7535 = vmatpush1.xpose.msra.mxu0 0.0
  %7536 = vmatprep.subr.mxu0 0.0
  %7537 = vmatpush1.xpose.msra.mxu0 0.0
  %7538 = vmatprep.subr.mxu0 0.0
  %7539 = vmatpush1.xpose.msra.mxu0 0.0
  %7540 = vmatprep.subr.mxu0 0.0
  %7541 = vmatpush1.xpose.msra.mxu0 0.0
  %7542 = vmatprep.subr.mxu0 0.0
  %7543 = vmatpush1.xpose.msra.mxu0 0.0
  %7544 = vmatprep.subr.mxu0 0.0
  %7545 = vmatpush1.xpose.msra.mxu0 0.0
  %7546 = vmatprep.subr.mxu0 0.0
  %7547 = vmatpush1.xpose.msra.mxu0 0.0
  %7548 = vmatprep.subr.mxu0 0.0
  %7549 = vmatpush1.xpose.msra.mxu0 0.0
  %7550 = vmatprep.subr.mxu0 0.0
  %7551 = vmatpush1.xpose.msra.mxu0 0.0
  %7552 = vmatprep.subr.mxu0 0.0
  %7553 = vmatpush1.xpose.msra.mxu0 0.0
  %7554 = vmatprep.subr.mxu0 0.0
  %7555 = vmatpush1.xpose.msra.mxu0 0.0
  %7556 = vmatprep.subr.mxu0 0.0
  %7557 = vmatpush1.xpose.msra.mxu0 0.0
  %7558 = vmatprep.subr.mxu0 0.0
  %7559 = vmatpush1.xpose.msra.mxu0 0.0
  %7560 = vmatprep.subr.mxu0 0.0
  %7561 = vmatpush1.xpose.msra.mxu0 0.0
  %7562 = vmatprep.subr.mxu0 0.0
  %7563 = vmatpush1.xpose.msra.mxu0 0.0
  %7564 = vmatprep.subr.mxu0 0.0
  %7565 = vmatpush1.xpose.msra.mxu0 0.0
  %7566 = vmatprep.subr.mxu0 0.0
  %7567 = vmatpush1.xpose.msra.mxu0 0.0
  %7568 = vmatprep.subr.mxu0 0.0
  %7569 = vmatpush1.xpose.msra.mxu0 0.0
  %7570 = vmatprep.subr.mxu0 0.0
  %7571 = vmatpush1.xpose.msra.mxu0 0.0
  %7572 = vmatprep.subr.mxu0 0.0
  %7573 = vmatpush1.xpose.msra.mxu0 0.0
  %7574 = vmatprep.subr.mxu0 0.0
  %7575 = vmatpush1.xpose.msra.mxu0 0.0
  %7576 = vmatprep.subr.mxu0 0.0
  %7577 = vmatpush1.xpose.msra.mxu0 0.0
  %7578 = vmatprep.subr.mxu0 0.0
  %7579 = vmatpush1.xpose.msra.mxu0 0.0
  %7580 = vmatprep.subr.mxu0 0.0
  %7581 = vmatpush1.xpose.msra.mxu0 0.0
  %7582 = vmatprep.subr.mxu0 0.0
  %7583 = vmatpush1.xpose.msra.mxu0 0.0
  %7584 = vmatprep.mubr.f32.mxu0 0.0
  %7585 = vmatmul.mubr.f32.gmra.mrb[0].mxu0 %v7515
  %v7586 = vpop.f32.mrb[0].mxu0
  %v7587 = vadd.f32 0.0, %v7586
  %v7588 = vpop.f32.mrb[0].mxu0
  %7589 = vdwg.mxu0
  %v7590 = vld [vmem:[%s0 + $0x208] sm:$0x3]
  %v7591 = vmul.f32 %v7587, %v7590
  %vm7592 = vcmask 41984
  %v7593 = vsel %vm7592, %v7591, 0.0
  %7594 = vadd.xlane.f32.xlu0 %v7593
  %v7595 = vpop.xlane.xlu0 %7594
  %v7596 = vrot.slane %v7595, 4
  %v7597 = vadd.f32 %v7595, %v7596
  %v7598 = vrot.slane %v7597, 2
  %v7599 = vadd.f32 %v7597, %v7598
  %v7600 = vrot.slane %v7599, 1
  %v7601 = vadd.f32 %v7599, %v7600
  %s7602 = vtos %v7601
  %v7603 = vld [vmem:[%s0 + $0x218] sm:$0x3]
  %vm7604 = vcmp.gt.f32.partialorder %v7603, 0.5
  %v7605 = vsel %vm7604, %v7587, -1e+30
  %v7606 = vsel %vm7592, %v7605, -inf
  %7607 = vmax.xlane.f32.xlu0 %v7606
  %v7608 = vpop.xlane.xlu0 %7607
  %vm7609 = vcmask 1024
  %v7610 = vsel %vm7609, %v7608, 0.0
  %7611 = vadd.xlane.f32.xlu0 %v7610
  %v7612 = vpop.xlane.xlu0 %7611
  %v7613 = vrot.slane %v7612, 4
  %v7614 = vadd.f32 %v7612, %v7613
  %v7615 = vrot.slane %v7614, 2
  %v7616 = vadd.f32 %v7614, %v7615
  %v7617 = vrot.slane %v7616, 1
  %v7618 = vadd.f32 %v7616, %v7617
  %s7619 = vtos %v7618
  %v7620 = vld [vmem:[%s0 + $0x210] sm:$0x3]
  %v7621 = vmul.f32 %v7587, %v7620
  %v7622 = vsel %vm7592, %v7621, 0.0
  %7623 = vadd.xlane.f32.xlu0 %v7622
  %v7624 = vpop.xlane.xlu0 %7623
  %v7625 = vrot.slane %v7624, 4
  %v7626 = vadd.f32 %v7624, %v7625
  %v7627 = vrot.slane %v7626, 2
  %v7628 = vadd.f32 %v7626, %v7627
  %v7629 = vrot.slane %v7628, 1
  %v7630 = vadd.f32 %v7628, %v7629
  %s7631 = vtos %v7630
  %s7632 = smul.f32 %s7631, 0.33333334
  %v7633 = vlaneseq
  %v7634 = vand.u32 %v7633, 127
  %vm7635 = vcmp.eq.s32.totalorder %v7634, 0
  %vm7636 = vcmp.eq.s32.totalorder %v7634, 1
  %v7637 = vstv %s7619
  %v7638 = vstv %s7632
  %v7639 = vsel %vm7636, %v7637, %v7638
  %v7640 = vstv %s7602
  %v7641 = vsel %vm7635, %v7640, %v7639
  %vm7642 = vcmask 16384
  %7643 = vst.msk [vmem:[%s1] sm:$0x1] %vm7642, %v7641
  // Predicated region
  $region6: #{custom_clip_forward.1} parent=0 // pred_check
    _
  $region7: #{custom_clip_forward.1} parent=0 // pred_check_branch
    %7645 = sbr.rel (0) target = $region9
  $region8: #{custom_clip_forward.1} parent=0 // pred_region
    _
  $region9: #{custom_clip_forward.1} parent=0 // pred_fallthru
    _
  // Predicated region
  $region10: #{custom_clip_forward.1} parent=0 // pred_check
    _
  $region11: #{custom_clip_forward.1} parent=0 // pred_check_branch
    %7647 = sbr.rel (0) target = $region13
  $region12: #{custom_clip_forward.1} parent=0 // pred_region
    _
  $region13: #{custom_clip_forward.1} parent=0 // pred_fallthru
    _

</llo_original>
